<compile_context>
chip_gen: v6e
topology: v6e:2x2x1
jax: 0.10.0
libtpu: 0.0.40
codegen_flags: <defaults>
</compile_context>

<pallas_src>
import numpy as np
import jax
import jax.numpy as jnp
from jax import lax
from jax.experimental import pallas as pl
from jax.experimental.pallas import tpu as pltpu

NEG_SLOPE = 0.01
BN_EPS = 1e-5
BF = jnp.bfloat16


def _lrelu(v):
    return jnp.where(v > 0, v, NEG_SLOPE * v)


def _softmax_rows(v, *, approx):
    m = jnp.max(v, axis=1, keepdims=True)
    e = jnp.exp(v - m)
    s = jnp.sum(e, axis=1, keepdims=True)
    if approx:
        return e * pl.reciprocal(s, approx=True)
    return e / s                     # exact divide (sum-to-one abundance constraint)


# --------------------------------------------------------------------------- #
# Pass-1 kernel: encoders + ChannelAttention + GFIc + full-batch gram reduce.
# --------------------------------------------------------------------------- #
def _make_pass1_kernel(tile, n_true, P, w_offs, b_offs, mid_w, need_mask):
    pad_mid = mid_w - 4 * P

    def kernel(x_ref, y_ref, wslab_ref, bslab_ref, mid_ref, att_ref, gram_a, gram_b):
        i = pl.program_id(0)

        def w(idx):                                   # bf16 (kin, kout) weight tile
            r, kin, kout = w_offs[idx]
            return wslab_ref[r:r + kin, 0:kout]

        def b(idx):                                   # f32 (1, kout) bias row
            r, kout = b_offs[idx]
            return bslab_ref[r:r + 1, 0:kout]

        def mm(a, idx):                               # bf16 MXU operands, f32 accumulate
            return jnp.dot(a.astype(BF), w(idx), preferred_element_type=jnp.float32)

        @pl.when(i == 0)
        def _():
            gram_a[...] = jnp.zeros_like(gram_a)
            gram_b[...] = jnp.zeros_like(gram_b)

        # ---- first (HSI) encoder: 4 conv blocks (BN folded, Dropout identity) ----
        h = _lrelu(mm(x_ref[...], 0) + b(0))
        h = _lrelu(mm(h, 1) + b(1))
        h = _lrelu(mm(h, 2) + b(2))
        f_hsi = mm(h, 3) + b(3)                                        # (T, P)

        # ---- second (LDR) encoder + ChannelAttention(k=1): avg == max on 1x1 ----
        l1 = _lrelu(mm(y_ref[...], 4) + b(4))
        f2 = _lrelu(mm(l1, 5) + b(5))
        wca = b(10)                                                    # (1, 1) scalar
        attn = _lrelu(wca * f2)
        f_ldr = jax.nn.sigmoid(attn + attn)                            # (T, P)

        # ---- GFIc shared weight, fused by sublane stacking (tile % 8 == 0) ----
        fab = mm(jnp.concatenate([f_hsi, f_ldr], axis=0), 7) + b(7)    # (2T, P)
        fa = fab[:tile]
        fb = fab[tile:]

        # ---- FULL-batch gram accumulation (two separate PxP, f32) ----
        if need_mask:
            rows = lax.broadcasted_iota(jnp.int32, (tile, 1), 0) + i * tile
            valid = (rows < n_true).astype(jnp.float32)
            fa_m = fa * valid
            fb_m = fb * valid
        else:
            fa_m, fb_m = fa, fb
        dn = (((0,), (0,)), ((), ()))
        gram_a[...] += lax.dot_general(fa_m, fa_m, dn, preferred_element_type=jnp.float32)
        gram_b[...] += lax.dot_general(fb_m, fb_m, dn, preferred_element_type=jnp.float32)

        # ---- packed per-tile intermediate: [f_hsi | f_ldr | fa | fb | pad] ----
        pieces = [f_hsi, f_ldr, fa, fb]
        if pad_mid:
            pieces.append(jnp.zeros((tile, pad_mid), jnp.float32))
        mid_ref[...] = jnp.concatenate(pieces, axis=1)

        # ---- attention softmaxes once, on the last grid step ----
        @pl.when(i == pl.num_programs(0) - 1)
        def _():
            att_ref[...] = jnp.concatenate(
                [_softmax_rows(gram_a[...], approx=True),
                 _softmax_rows(gram_b[...], approx=True)], axis=0)

    return kernel


# --------------------------------------------------------------------------- #
# Pass-2 kernel: LFI + GFI tail (H1/H2, FC) + abundance + decoder, per tile.
# --------------------------------------------------------------------------- #
def _make_pass2_kernel(tile, band, P, w_offs, b_offs, mid_w, out_w):
    pad_out = out_w - (P + band)

    def kernel(mid_ref, att_ref, wslab_ref, bslab_ref, out_ref):
        def w(idx):
            r, kin, kout = w_offs[idx]
            return wslab_ref[r:r + kin, 0:kout]

        def b(idx):
            r, kout = b_offs[idx]
            return bslab_ref[r:r + 1, 0:kout]

        def mm(a, idx):
            return jnp.dot(a.astype(BF), w(idx), preferred_element_type=jnp.float32)

        f_hsi = mid_ref[:, 0:P]
        f_ldr = mid_ref[:, P:2 * P]
        fa = mid_ref[:, 2 * P:3 * P]
        fb = mid_ref[:, 3 * P:4 * P]

        # ---- LFI: the [f_hsi | f_ldr] lanes are already contiguous in mid ----
        feat_lfi = _lrelu(mm(mid_ref[:, 0:2 * P], 6) + b(6))           # (T, P)

        att = att_ref[...]                                             # (2P, P)
        att_a = att[:P]
        att_b = att[P:]
        h1 = jnp.dot(fb.astype(BF), att_a.astype(BF), preferred_element_type=jnp.float32)
        h2 = jnp.dot(fa.astype(BF), att_b.astype(BF), preferred_element_type=jnp.float32)

        # ---- shared FC fused by sublane stacking ----
        fc12 = _lrelu(mm(jnp.concatenate([h1, h2], axis=0), 8) + b(8))  # (2T, P)
        gafm_a = fc12[:tile] + f_hsi
        gafm_b = fc12[tile:] + f_ldr

        # ---- abundance head (exact reciprocal: rows must sum to 1) ----
        logits = mm(jnp.concatenate([feat_lfi, gafm_a, gafm_b], axis=1), 9) + b(9)
        ab = _softmax_rows(logits, approx=False)                       # (T, P)

        # ---- decoder (1x1 conv, no bias) ----
        ydec = mm(ab, 10)                                              # (T, band)

        pieces = [ab, ydec]
        if pad_out:
            pieces.append(jnp.zeros((tile, pad_out), jnp.float32))
        out_ref[...] = jnp.concatenate(pieces, axis=1)

    return kernel


# --------------------------------------------------------------------------- #
# Parameter initialization (deterministic, torch-like layouts).
# --------------------------------------------------------------------------- #
def init_params(key, band, P, ldr_dim):
    keys = iter(jax.random.split(key, 64))

    def w(shape, scale=0.1):
        return (scale * jax.random.normal(next(keys), shape)).astype(jnp.float32)

    def bn(c):  # (gamma, beta, running_mean, running_var)
        return (
            (1.0 + 0.1 * jax.random.normal(next(keys), (c,))).astype(jnp.float32),
            (0.1 * jax.random.normal(next(keys), (c,))).astype(jnp.float32),
            (0.1 * jax.random.normal(next(keys), (c,))).astype(jnp.float32),
            (0.5 + jax.random.uniform(next(keys), (c,))).astype(jnp.float32),
        )

    p = {}
    p['h1_w'], p['h1_b'], p['h1_bn'] = w((32 * P, band, 3, 3)), w((32 * P,)), bn(32 * P)
    p['h2_w'], p['h2_b'], p['h2_bn'] = w((16 * P, 32 * P, 3, 3)), w((16 * P,)), bn(16 * P)
    p['h3_w'], p['h3_b'], p['h3_bn'] = w((4 * P, 16 * P, 3, 3)), w((4 * P,)), bn(4 * P)
    p['h4_w'], p['h4_b'] = w((P, 4 * P, 3, 3)), w((P,))
    p['l1_w'], p['l1_b'], p['l1_bn'] = w((P // 2, ldr_dim, 1, 1)), w((P // 2,)), bn(P // 2)
    p['l2_w'], p['l2_b'], p['l2_bn'] = w((P, P // 2, 1, 1)), w((P,)), bn(P)
    p['ca_w'] = w((1, 1, 1), scale=1.0)
    p['lfi_w'], p['lfi_b'], p['lfi_bn'] = w((P, 2 * P, 1, 1)), w((P,)), bn(P)
    p['gfi_w'], p['gfi_b'] = w((P, P, 1, 1)), w((P,))
    p['fc_w'], p['fc_b'], p['fc_bn'] = w((P, P)), w((P,)), bn(P)
    p['abun_w'], p['abun_b'] = w((P, 3 * P, 3, 3)), w((P,))
    p['dec_w'] = w((band, P, 1, 1))
    return p


# --------------------------------------------------------------------------- #
# Fold conv bias + eval-mode BN into effective (in, out) weights, then pack.
# --------------------------------------------------------------------------- #
def _fold(p):
    def center(w4):                       # (O, I, kh, kw) -> (I, O) centre tap
        kh = w4.shape[2]
        return jnp.transpose(w4[:, :, kh // 2, kh // 2])

    def fold_bn(w_io, bvec, bn_params):
        g, beta, mean, var = bn_params
        s = g / jnp.sqrt(var + BN_EPS)
        return w_io * s[None, :], (bvec - mean) * s + beta

    wh1, bh1 = fold_bn(center(p['h1_w']), p['h1_b'], p['h1_bn'])
    wh2, bh2 = fold_bn(center(p['h2_w']), p['h2_b'], p['h2_bn'])
    wh3, bh3 = fold_bn(center(p['h3_w']), p['h3_b'], p['h3_bn'])
    wh4, bh4 = center(p['h4_w']), p['h4_b']
    wl1, bl1 = fold_bn(center(p['l1_w']), p['l1_b'], p['l1_bn'])
    wl2, bl2 = fold_bn(center(p['l2_w']), p['l2_b'], p['l2_bn'])
    wlfi, blfi = fold_bn(center(p['lfi_w']), p['lfi_b'], p['lfi_bn'])
    wgfi, bgfi = center(p['gfi_w']), p['gfi_b']
    wfc, bfc = fold_bn(jnp.transpose(p['fc_w']), p['fc_b'], p['fc_bn'])
    wab, bab = center(p['abun_w']), p['abun_b']
    wdec = center(p['dec_w'])
    wca = p['ca_w'].reshape(1)

    weights = [wh1, wh2, wh3, wh4, wl1, wl2, wlfi, wgfi, wfc, wab, wdec]
    biases = [bh1, bh2, bh3, bh4, bl1, bl2, blfi, bgfi, bfc, bab, wca]   # wca -> slot 10
    return weights, biases


def _pack_weight_slab(weights, lane):
    """Pack (in,out) f32 mats into one bf16 (R, lane) slab; rows 16-aligned."""
    blocks, offs, r = [], [], 0
    for m in weights:
        kin, kout = int(m.shape[0]), int(m.shape[1])
        assert kout <= lane
        rpad = (-kin) % 16                          # bf16 packs 16 rows per vreg
        blk = jnp.zeros((kin + rpad, lane), jnp.float32).at[:kin, :kout].set(m)
        blocks.append(blk)
        offs.append((r, kin, kout))
        r += kin + rpad
    return jnp.concatenate(blocks, axis=0).astype(jnp.bfloat16), offs


def _pack_bias_slab(biases, lane):
    """One f32 (rows, lane) slab; bias i occupies row i, cols [0:len)."""
    n = len(biases)
    rows = n + ((-n) % 8)
    slab = jnp.zeros((rows, lane), jnp.float32)
    offs = []
    for i, v in enumerate(biases):
        slab = slab.at[i, : v.shape[0]].set(v)
        offs.append((i, int(v.shape[0])))
    return slab, offs


def _round_up(v, m):
    return -(-v // m) * m


# --------------------------------------------------------------------------- #
# Wrapper: two gridded pallas_calls + NCHW reshaping + output unpacking.
# --------------------------------------------------------------------------- #
def multi_forward(x_nchw, y_nchw, params, tile_n=512):
    N, band = x_nchw.shape[0], x_nchw.shape[1]
    ldr_dim = y_nchw.shape[1]
    P = params['dec_w'].shape[1]
    assert x_nchw.shape[2:] == (1, 1) and y_nchw.shape[2:] == (1, 1), \
        "Multi.forward only supports 1x1 spatial inputs"

    weights, biases = _fold(params)
    lane = max(128, _round_up(max(int(w.shape[1]) for w in weights), 128))
    wslab, w_offs = _pack_weight_slab(weights, lane)
    bslab, b_offs = _pack_bias_slab(biases, lane)

    # ---- N tiling (tile multiple of 8; last tile masked for the gram) ----
    tile = max(8, (min(tile_n, _round_up(N, 8)) // 8) * 8)
    n_pad = _round_up(N, tile)
    grid = (n_pad // tile,)
    need_mask = (n_pad != N)

    # bf16 streamed inputs (review: workload is HBM-bound; MXU casts to bf16 anyway)
    x2d = x_nchw.reshape(N, band).astype(jnp.bfloat16)
    y2d = y_nchw.reshape(N, ldr_dim).astype(jnp.bfloat16)
    if need_mask:
        x2d = jnp.pad(x2d, ((0, n_pad - N), (0, 0)))
        y2d = jnp.pad(y2d, ((0, n_pad - N), (0, 0)))

    mid_w = _round_up(4 * P, 128)             # [f_hsi | f_ldr | fa | fb | pad]
    out_w = _round_up(P + band, 128)          # [abun | Y | pad]

    # ---- explicit scoped-VMEM limit from the working set (v7x-safe cap) ----
    slab_bytes = wslab.size * 2 + bslab.size * 4
    interm_bytes = tile * (32 * P + 16 * P + 4 * P + 8 * P) * 4
    io1 = tile * (2 * band + 2 * ldr_dim + 4 * mid_w)
    io2 = tile * 4 * (mid_w + out_w)
    vmem1 = int(min(56 << 20, max(8 << 20, 3 * (2 * io1 + slab_bytes + interm_bytes))))
    vmem2 = int(min(56 << 20, max(8 << 20, 3 * (2 * io2 + slab_bytes + interm_bytes))))

    ce1 = pl.CostEstimate(
        flops=int(2 * n_pad * (band * 32 * P + 32 * P * 16 * P + 16 * P * 4 * P
                               + 4 * P * P + ldr_dim * max(P // 2, 1)
                               + max(P // 2, 1) * P + 2 * P * P + 2 * P * P)),
        transcendentals=int(n_pad * P + 4 * P * P),
        bytes_accessed=int(n_pad * 2 * (band + ldr_dim) + n_pad * 4 * mid_w + slab_bytes))
    ce2 = pl.CostEstimate(
        flops=int(2 * n_pad * (2 * P * P + 2 * P * P + 2 * P * P + 3 * P * P + P * band)),
        transcendentals=int(n_pad * P),
        bytes_accessed=int(n_pad * 4 * (mid_w + out_w) + slab_bytes))

    # ---------------- pass 1: encoders + GFIc + full-batch gram ----------------
    kernel1 = _make_pass1_kernel(tile, N, P, w_offs, b_offs, mid_w, need_mask)
    mid, att = pl.pallas_call(
        kernel1,
        grid=grid,
        out_shape=(jax.ShapeDtypeStruct((n_pad, mid_w), jnp.float32),
                   jax.ShapeDtypeStruct((2 * P, P), jnp.float32)),
        in_specs=[
            pl.BlockSpec((tile, band), lambda i: (i, 0)),
            pl.BlockSpec((tile, ldr_dim), lambda i: (i, 0)),
            pl.BlockSpec(wslab.shape, lambda i: (0, 0)),       # resident slab
            pl.BlockSpec(bslab.shape, lambda i: (0, 0)),       # resident slab
        ],
        out_specs=(
            pl.BlockSpec((tile, mid_w), lambda i: (i, 0)),
            pl.BlockSpec((2 * P, P), lambda i: (0, 0)),        # resident accumulator
        ),
        scratch_shapes=[pltpu.VMEM((P, P), jnp.float32),
                        pltpu.VMEM((P, P), jnp.float32)],
        compiler_params=pltpu.CompilerParams(
            dimension_semantics=("arbitrary",),                # full-batch reduction
            vmem_limit_bytes=vmem1),
        cost_estimate=ce1,
    )(x2d, y2d, wslab, bslab)

    # ---------------- pass 2: LFI / FC / abundance / decoder ------------------
    kernel2 = _make_pass2_kernel(tile, band, P, w_offs, b_offs, mid_w, out_w)
    out2 = pl.pallas_call(
        kernel2,
        grid=grid,
        out_shape=jax.ShapeDtypeStruct((n_pad, out_w), jnp.float32),
        in_specs=[
            pl.BlockSpec((tile, mid_w), lambda i: (i, 0)),
            pl.BlockSpec((2 * P, P), lambda i: (0, 0)),
            pl.BlockSpec(wslab.shape, lambda i: (0, 0)),
            pl.BlockSpec(bslab.shape, lambda i: (0, 0)),
        ],
        out_specs=pl.BlockSpec((tile, out_w), lambda i: (i, 0)),
        compiler_params=pltpu.CompilerParams(
            dimension_semantics=("parallel",),                 # megacore on v7x
            vmem_limit_bytes=vmem2),
        cost_estimate=ce2,
    )(mid, att, wslab, bslab)

    abun = out2[:N, :P].reshape(N, P, 1, 1)
    Y = out2[:N, P:P + band].reshape(N, band, 1, 1)
    feature_hsi = mid[:N, 0:P].reshape(N, P, 1, 1)
    feature_ldr = mid[:N, P:2 * P].reshape(N, P, 1, 1)
    EM_hat = params['dec_w']                                   # (band, P, 1, 1)
    return abun, Y, EM_hat, feature_hsi, feature_ldr


# --------------------------------------------------------------------------- #
# Pure-JAX f32 reference (eval-mode, faithful NCHW convs) for validation.
# --------------------------------------------------------------------------- #
def _reference_forward(x, y, p):
    def conv(xn, wt, b=None, pad=0):
        out = lax.conv_general_dilated(xn, wt, (1, 1), [(pad, pad), (pad, pad)],
                                       dimension_numbers=('NCHW', 'OIHW', 'NCHW'))
        if b is not None:
            out = out + b[None, :, None, None]
        return out

    def bn2d(xn, bn):
        g, beta, m, v = bn
        return ((xn - m[None, :, None, None]) / jnp.sqrt(v + BN_EPS)[None, :, None, None]
                * g[None, :, None, None] + beta[None, :, None, None])

    def bn1d(xn, bn):
        g, beta, m, v = bn
        return (xn - m) / jnp.sqrt(v + BN_EPS) * g + beta

    lr = _lrelu
    h = lr(bn2d(conv(x, p['h1_w'], p['h1_b'], 1), p['h1_bn']))
    h = lr(bn2d(conv(h, p['h2_w'], p['h2_b'], 1), p['h2_bn']))
    h = lr(bn2d(conv(h, p['h3_w'], p['h3_b'], 1), p['h3_bn']))
    f_hsi = conv(h, p['h4_w'], p['h4_b'], 1)

    g = lr(bn2d(conv(y, p['l1_w'], p['l1_b'], 0), p['l1_bn']))
    g = lr(bn2d(conv(g, p['l2_w'], p['l2_b'], 0), p['l2_bn']))
    w_ca = p['ca_w'][0, 0, 0]
    avg = jnp.mean(g, axis=(2, 3), keepdims=True)
    mx = jnp.max(g, axis=(2, 3), keepdims=True)
    f_ldr = jax.nn.sigmoid(lr(w_ca * avg) + lr(w_ca * mx))

    cat = jnp.concatenate([f_hsi, f_ldr], axis=1)
    feat_lfi = lr(bn2d(conv(cat, p['lfi_w'], p['lfi_b'], 0), p['lfi_bn']))

    fa = conv(f_hsi, p['gfi_w'], p['gfi_b'], 0)[:, :, 0, 0]
    fb = conv(f_ldr, p['gfi_w'], p['gfi_b'], 0)[:, :, 0, 0]
    att_a = jax.nn.softmax(fa.T @ fa, axis=1)
    att_b = jax.nn.softmax(fb.T @ fb, axis=1)

    def fc(v):
        return _lrelu(bn1d(v @ p['fc_w'].T + p['fc_b'], p['fc_bn']))

    gafm_a = fc(fb @ att_a) + f_hsi[:, :, 0, 0]
    gafm_b = fc(fa @ att_b) + f_ldr[:, :, 0, 0]
    feat_gfi = jnp.concatenate([gafm_a, gafm_b], axis=1)[:, :, None, None]

    feature = jnp.concatenate([feat_lfi, feat_gfi], axis=1)
    ab = jax.nn.softmax(conv(feature, p['abun_w'], p['abun_b'], 1), axis=1)
    Y = conv(ab, p['dec_w'], None, 0)
    return ab, Y, p['dec_w'], f_hsi, f_ldr


if __name__ == "__main__":
    band, P, ldr_dim = 32, 4, 4
    N = 1000                       # pixels (1x1 spatial) -> 2 grid tiles, masked tail
    key = jax.random.PRNGKey(0)
    kx, ky, kp = jax.random.split(key, 3)
    x = jax.random.normal(kx, (N, band, 1, 1), jnp.float32)
    y = jax.random.normal(ky, (N, ldr_dim, 1, 1), jnp.float32)
    params = init_params(kp, band, P, ldr_dim)

    outs = jax.block_until_ready(multi_forward(x, y, params, tile_n=512))
    refs = _reference_forward(x, y, params)

    # bf16 streamed inputs + bf16 MXU operands (per perf review) -> compare against
    # the pure-f32 reference with a correspondingly relaxed tolerance.
    for got, want in zip(outs, refs):
        np.testing.assert_allclose(np.asarray(got), np.asarray(want),
                                   rtol=5e-2, atol=5e-2)
    print("KERNEL_OK")
</pallas_src>

<mosaic_0001>
module attributes {stable_mosaic.version = 11 : i64} {
  func.func @kernel(%arg0: i32, %arg1: memref<512x32xbf16, #tpu.memory_space<vmem>>, %arg2: memref<512x4xbf16, #tpu.memory_space<vmem>>, %arg3: memref<352x128xbf16, #tpu.memory_space<vmem>>, %arg4: memref<16x128xf32, #tpu.memory_space<vmem>>, %arg5: memref<512x128xf32, #tpu.memory_space<vmem>>, %arg6: memref<8x4xf32, #tpu.memory_space<vmem>>, %arg7: memref<4x4xf32, #tpu.memory_space<vmem>>, %arg8: memref<4x4xf32, #tpu.memory_space<vmem>>) attributes {dimension_semantics = [#tpu.dimension_semantics<arbitrary>], iteration_bounds = array<i64: 2>, scalar_prefetch = 0 : i64, scratch_operands = 2 : i64, tpu.core_type = #tpu.core_type<tc>, window_params = [{transform_indices = @transform_0, window_bounds = array<i64: 512, 32>}, {transform_indices = @transform_1, window_bounds = array<i64: 512, 4>}, {pipeline_mode = #tpu.pipeline_mode<synchronous>, transform_indices = @transform_2, window_bounds = array<i64: 352, 128>}, {pipeline_mode = #tpu.pipeline_mode<synchronous>, transform_indices = @transform_3, window_bounds = array<i64: 16, 128>}, {transform_indices = @transform_4, window_bounds = array<i64: 512, 128>}, {pipeline_mode = #tpu.pipeline_mode<synchronous>, transform_indices = @transform_5, window_bounds = array<i64: 8, 4>}]} {
    %c0_i32 = arith.constant 0 : i32
    %0 = arith.cmpi eq, %arg0, %c0_i32 : i32
    %1 = arith.extui %0 : i1 to i32
    %c0_i32_0 = arith.constant 0 : i32
    %2 = arith.cmpi ne, %1, %c0_i32_0 : i32
    scf.if %2 {
      %cst_54 = arith.constant 0.000000e+00 : f32
      %113 = vector.broadcast %cst_54 : f32 to vector<4x4xf32>
      %c0_55 = arith.constant 0 : index
      %c0_56 = arith.constant 0 : index
      %114 = vector.load %arg7[%c0_55, %c0_56] : memref<4x4xf32, #tpu.memory_space<vmem>>, vector<4x4xf32>
      tpu.vector_store %arg7[%c0_55, %c0_56], %113 {strides = array<i32>} : memref<4x4xf32, #tpu.memory_space<vmem>>, vector<4x4xf32>,
      %cst_57 = arith.constant 0.000000e+00 : f32
      %115 = vector.broadcast %cst_57 : f32 to vector<4x4xf32>
      %c0_58 = arith.constant 0 : index
      %c0_59 = arith.constant 0 : index
      %116 = vector.load %arg8[%c0_58, %c0_59] : memref<4x4xf32, #tpu.memory_space<vmem>>, vector<4x4xf32>
      tpu.vector_store %arg8[%c0_58, %c0_59], %115 {strides = array<i32>} : memref<4x4xf32, #tpu.memory_space<vmem>>, vector<4x4xf32>,
    } else {
    }
    %c0 = arith.constant 0 : index
    %c0_1 = arith.constant 0 : index
    %3 = vector.load %arg1[%c0, %c0_1] : memref<512x32xbf16, #tpu.memory_space<vmem>>, vector<512x32xbf16>
    %c0_2 = arith.constant 0 : index
    %c0_3 = arith.constant 0 : index
    %4 = vector.load %arg3[%c0_2, %c0_3] : memref<352x128xbf16, #tpu.memory_space<vmem>>, vector<32x128xbf16>
    %cst = arith.constant dense<0.000000e+00> : vector<512x128xf32>
    %5 = tpu.matmul %3, %4, %cst {dimension_numbers = #tpu.dot_dimension_numbers<[1], [0], [0], [1], [0, 0, 1, 1], [], []>} : vector<512x32xbf16>, vector<32x128xbf16>, vector<512x128xf32> -> vector<512x128xf32>
    %c0_4 = arith.constant 0 : index
    %c0_5 = arith.constant 0 : index
    %6 = vector.load %arg4[%c0_4, %c0_5] : memref<16x128xf32, #tpu.memory_space<vmem>>, vector<1x128xf32>
    %7 = vector.broadcast %6 : vector<1x128xf32> to vector<512x128xf32>
    %8 = arith.addf %5, %7 : vector<512x128xf32>
    %cst_6 = arith.constant 0.000000e+00 : f32
    %9 = vector.broadcast %cst_6 : f32 to vector<512x128xf32>
    %10 = arith.cmpf ogt, %8, %9 : vector<512x128xf32>
    %cst_7 = arith.constant 0.00999999977 : f32
    %11 = vector.broadcast %cst_7 : f32 to vector<512x128xf32>
    %12 = arith.mulf %11, %8 : vector<512x128xf32>
    %13 = arith.select %10, %8, %12 : vector<512x128xi1>, vector<512x128xf32>
    %14 = arith.truncf %13 : vector<512x128xf32> to vector<512x128xbf16>
    %c32 = arith.constant 32 : index
    %c0_8 = arith.constant 0 : index
    %15 = vector.load %arg3[%c32, %c0_8] : memref<352x128xbf16, #tpu.memory_space<vmem>>, vector<128x64xbf16>
    %cst_9 = arith.constant dense<0.000000e+00> : vector<512x64xf32>
    %16 = tpu.matmul %14, %15, %cst_9 {dimension_numbers = #tpu.dot_dimension_numbers<[1], [0], [0], [1], [0, 0, 1, 1], [], []>} : vector<512x128xbf16>, vector<128x64xbf16>, vector<512x64xf32> -> vector<512x64xf32>
    %c1 = arith.constant 1 : index
    %c0_10 = arith.constant 0 : index
    %17 = vector.load %arg4[%c1, %c0_10] : memref<16x128xf32, #tpu.memory_space<vmem>>, vector<1x64xf32>
    %18 = vector.broadcast %17 : vector<1x64xf32> to vector<512x64xf32>
    %19 = arith.addf %16, %18 : vector<512x64xf32>
    %cst_11 = arith.constant 0.000000e+00 : f32
    %20 = vector.broadcast %cst_11 : f32 to vector<512x64xf32>
    %21 = arith.cmpf ogt, %19, %20 : vector<512x64xf32>
    %cst_12 = arith.constant 0.00999999977 : f32
    %22 = vector.broadcast %cst_12 : f32 to vector<512x64xf32>
    %23 = arith.mulf %22, %19 : vector<512x64xf32>
    %24 = arith.select %21, %19, %23 : vector<512x64xi1>, vector<512x64xf32>
    %25 = arith.truncf %24 : vector<512x64xf32> to vector<512x64xbf16>
    %c160 = arith.constant 160 : index
    %c0_13 = arith.constant 0 : index
    %26 = vector.load %arg3[%c160, %c0_13] : memref<352x128xbf16, #tpu.memory_space<vmem>>, vector<64x16xbf16>
    %cst_14 = arith.constant dense<0.000000e+00> : vector<512x16xf32>
    %27 = tpu.matmul %25, %26, %cst_14 {dimension_numbers = #tpu.dot_dimension_numbers<[1], [0], [0], [1], [0, 0, 1, 1], [], []>} : vector<512x64xbf16>, vector<64x16xbf16>, vector<512x16xf32> -> vector<512x16xf32>
    %c2 = arith.constant 2 : index
    %c0_15 = arith.constant 0 : index
    %28 = vector.load %arg4[%c2, %c0_15] : memref<16x128xf32, #tpu.memory_space<vmem>>, vector<1x16xf32>
    %29 = vector.broadcast %28 : vector<1x16xf32> to vector<512x16xf32>
    %30 = arith.addf %27, %29 : vector<512x16xf32>
    %cst_16 = arith.constant 0.000000e+00 : f32
    %31 = vector.broadcast %cst_16 : f32 to vector<512x16xf32>
    %32 = arith.cmpf ogt, %30, %31 : vector<512x16xf32>
    %cst_17 = arith.constant 0.00999999977 : f32
    %33 = vector.broadcast %cst_17 : f32 to vector<512x16xf32>
    %34 = arith.mulf %33, %30 : vector<512x16xf32>
    %35 = arith.select %32, %30, %34 : vector<512x16xi1>, vector<512x16xf32>
    %36 = arith.truncf %35 : vector<512x16xf32> to vector<512x16xbf16>
    %c224 = arith.constant 224 : index
    %c0_18 = arith.constant 0 : index
    %37 = vector.load %arg3[%c224, %c0_18] : memref<352x128xbf16, #tpu.memory_space<vmem>>, vector<16x4xbf16>
    %cst_19 = arith.constant dense<0.000000e+00> : vector<512x4xf32>
    %38 = tpu.matmul %36, %37, %cst_19 {dimension_numbers = #tpu.dot_dimension_numbers<[1], [0], [0], [1], [0, 0, 1, 1], [], []>} : vector<512x16xbf16>, vector<16x4xbf16>, vector<512x4xf32> -> vector<512x4xf32>
    %c3 = arith.constant 3 : index
    %c0_20 = arith.constant 0 : index
    %39 = vector.load %arg4[%c3, %c0_20] : memref<16x128xf32, #tpu.memory_space<vmem>>, vector<1x4xf32>
    %40 = vector.broadcast %39 : vector<1x4xf32> to vector<512x4xf32>
    %41 = arith.addf %38, %40 : vector<512x4xf32>
    %c0_21 = arith.constant 0 : index
    %c0_22 = arith.constant 0 : index
    %42 = vector.load %arg2[%c0_21, %c0_22] : memref<512x4xbf16, #tpu.memory_space<vmem>>, vector<512x4xbf16>
    %c240 = arith.constant 240 : index
    %c0_23 = arith.constant 0 : index
    %43 = vector.load %arg3[%c240, %c0_23] : memref<352x128xbf16, #tpu.memory_space<vmem>>, vector<4x2xbf16>
    %cst_24 = arith.constant dense<0.000000e+00> : vector<512x2xf32>
    %44 = tpu.matmul %42, %43, %cst_24 {dimension_numbers = #tpu.dot_dimension_numbers<[1], [0], [0], [1], [0, 0, 1, 1], [], []>} : vector<512x4xbf16>, vector<4x2xbf16>, vector<512x2xf32> -> vector<512x2xf32>
    %c4 = arith.constant 4 : index
    %c0_25 = arith.constant 0 : index
    %45 = vector.load %arg4[%c4, %c0_25] : memref<16x128xf32, #tpu.memory_space<vmem>>, vector<1x2xf32>
    %46 = vector.broadcast %45 : vector<1x2xf32> to vector<512x2xf32>
    %47 = arith.addf %44, %46 : vector<512x2xf32>
    %cst_26 = arith.constant 0.000000e+00 : f32
    %48 = vector.broadcast %cst_26 : f32 to vector<512x2xf32>
    %49 = arith.cmpf ogt, %47, %48 : vector<512x2xf32>
    %cst_27 = arith.constant 0.00999999977 : f32
    %50 = vector.broadcast %cst_27 : f32 to vector<512x2xf32>
    %51 = arith.mulf %50, %47 : vector<512x2xf32>
    %52 = arith.select %49, %47, %51 : vector<512x2xi1>, vector<512x2xf32>
    %53 = arith.truncf %52 : vector<512x2xf32> to vector<512x2xbf16>
    %c256 = arith.constant 256 : index
    %c0_28 = arith.constant 0 : index
    %54 = vector.load %arg3[%c256, %c0_28] : memref<352x128xbf16, #tpu.memory_space<vmem>>, vector<2x4xbf16>
    %cst_29 = arith.constant dense<0.000000e+00> : vector<512x4xf32>
    %55 = tpu.matmul %53, %54, %cst_29 {dimension_numbers = #tpu.dot_dimension_numbers<[1], [0], [0], [1], [0, 0, 1, 1], [], []>} : vector<512x2xbf16>, vector<2x4xbf16>, vector<512x4xf32> -> vector<512x4xf32>
    %c5 = arith.constant 5 : index
    %c0_30 = arith.constant 0 : index
    %56 = vector.load %arg4[%c5, %c0_30] : memref<16x128xf32, #tpu.memory_space<vmem>>, vector<1x4xf32>
    %57 = vector.broadcast %56 : vector<1x4xf32> to vector<512x4xf32>
    %58 = arith.addf %55, %57 : vector<512x4xf32>
    %cst_31 = arith.constant 0.000000e+00 : f32
    %59 = vector.broadcast %cst_31 : f32 to vector<512x4xf32>
    %60 = arith.cmpf ogt, %58, %59 : vector<512x4xf32>
    %cst_32 = arith.constant 0.00999999977 : f32
    %61 = vector.broadcast %cst_32 : f32 to vector<512x4xf32>
    %62 = arith.mulf %61, %58 : vector<512x4xf32>
    %63 = arith.select %60, %58, %62 : vector<512x4xi1>, vector<512x4xf32>
    %c10 = arith.constant 10 : index
    %c0_33 = arith.constant 0 : index
    %64 = vector.load %arg4[%c10, %c0_33] : memref<16x128xf32, #tpu.memory_space<vmem>>, vector<1x1xf32>
    %65 = vector.broadcast %64 : vector<1x1xf32> to vector<512x4xf32>
    %66 = arith.mulf %65, %63 : vector<512x4xf32>
    %cst_34 = arith.constant 0.000000e+00 : f32
    %67 = vector.broadcast %cst_34 : f32 to vector<512x4xf32>
    %68 = arith.cmpf ogt, %66, %67 : vector<512x4xf32>
    %cst_35 = arith.constant 0.00999999977 : f32
    %69 = vector.broadcast %cst_35 : f32 to vector<512x4xf32>
    %70 = arith.mulf %69, %66 : vector<512x4xf32>
    %71 = arith.select %68, %66, %70 : vector<512x4xi1>, vector<512x4xf32>
    %72 = arith.addf %71, %71 : vector<512x4xf32>
    %73 = arith.negf %72 : vector<512x4xf32>
    %74 = math.exp %73 : vector<512x4xf32>
    %cst_36 = arith.constant 1.000000e+00 : f32
    %75 = vector.broadcast %cst_36 : f32 to vector<512x4xf32>
    %76 = arith.addf %75, %74 : vector<512x4xf32>
    %77 = arith.divf %75, %76 : vector<512x4xf32>
    %78 = tpu.concatenate %41, %77 in 0 : vector<512x4xf32>, vector<512x4xf32> -> vector<1024x4xf32>
    %79 = arith.truncf %78 : vector<1024x4xf32> to vector<1024x4xbf16>
    %c288 = arith.constant 288 : index
    %c0_37 = arith.constant 0 : index
    %80 = vector.load %arg3[%c288, %c0_37] : memref<352x128xbf16, #tpu.memory_space<vmem>>, vector<4x4xbf16>
    %cst_38 = arith.constant dense<0.000000e+00> : vector<1024x4xf32>
    %81 = tpu.matmul %79, %80, %cst_38 {dimension_numbers = #tpu.dot_dimension_numbers<[1], [0], [0], [1], [0, 0, 1, 1], [], []>} : vector<1024x4xbf16>, vector<4x4xbf16>, vector<1024x4xf32> -> vector<1024x4xf32>
    %c7 = arith.constant 7 : index
    %c0_39 = arith.constant 0 : index
    %82 = vector.load %arg4[%c7, %c0_39] : memref<16x128xf32, #tpu.memory_space<vmem>>, vector<1x4xf32>
    %83 = vector.broadcast %82 : vector<1x4xf32> to vector<1024x4xf32>
    %84 = arith.addf %81, %83 : vector<1024x4xf32>
    %85 = vector.extract_strided_slice %84 {offsets = [0, 0], sizes = [512, 4], strides = [1, 1]} : vector<1024x4xf32> to vector<512x4xf32>
    %86 = vector.extract_strided_slice %84 {offsets = [512, 0], sizes = [512, 4], strides = [1, 1]} : vector<1024x4xf32> to vector<512x4xf32>
    %87 = tpu.iota {dimensions = array<i32: 0>} : vector<512x1xi32>
    %c512_i32 = arith.constant 512 : i32
    %88 = arith.muli %arg0, %c512_i32 : i32
    %89 = vector.broadcast %88 : i32 to vector<512x1xi32>
    %90 = arith.addi %87, %89 : vector<512x1xi32>
    %c1000_i32 = arith.constant 1000 : i32
    %91 = vector.broadcast %c1000_i32 : i32 to vector<512x1xi32>
    %92 = arith.cmpi slt, %90, %91 : vector<512x1xi32>
    %93 = arith.extui %92 : vector<512x1xi1> to vector<512x1xi32>
    %94 = arith.sitofp %93 : vector<512x1xi32> to vector<512x1xf32>
    %95 = vector.broadcast %94 : vector<512x1xf32> to vector<512x4xf32>
    %96 = arith.mulf %85, %95 : vector<512x4xf32>
    %97 = vector.broadcast %94 : vector<512x1xf32> to vector<512x4xf32>
    %98 = arith.mulf %86, %97 : vector<512x4xf32>
    %c0_40 = arith.constant 0 : index
    %c0_41 = arith.constant 0 : index
    %99 = vector.load %arg7[%c0_40, %c0_41] : memref<4x4xf32, #tpu.memory_space<vmem>>, vector<4x4xf32>
    %cst_42 = arith.constant dense<0.000000e+00> : vector<4x4xf32>
    %100 = tpu.matmul %96, %96, %cst_42 {dimension_numbers = #tpu.dot_dimension_numbers<[0], [0], [1], [1], [0, 1, 1, 1], [], []>} : vector<512x4xf32>, vector<512x4xf32>, vector<4x4xf32> -> vector<4x4xf32>
    %101 = arith.addf %99, %100 : vector<4x4xf32>
    %c0_43 = arith.constant 0 : index
    %c0_44 = arith.constant 0 : index
    %102 = vector.load %arg7[%c0_43, %c0_44] : memref<4x4xf32, #tpu.memory_space<vmem>>, vector<4x4xf32>
    tpu.vector_store %arg7[%c0_43, %c0_44], %101 {strides = array<i32>} : memref<4x4xf32, #tpu.memory_space<vmem>>, vector<4x4xf32>,
    %c0_45 = arith.constant 0 : index
    %c0_46 = arith.constant 0 : index
    %103 = vector.load %arg8[%c0_45, %c0_46] : memref<4x4xf32, #tpu.memory_space<vmem>>, vector<4x4xf32>
    %cst_47 = arith.constant dense<0.000000e+00> : vector<4x4xf32>
    %104 = tpu.matmul %98, %98, %cst_47 {dimension_numbers = #tpu.dot_dimension_numbers<[0], [0], [1], [1], [0, 1, 1, 1], [], []>} : vector<512x4xf32>, vector<512x4xf32>, vector<4x4xf32> -> vector<4x4xf32>
    %105 = arith.addf %103, %104 : vector<4x4xf32>
    %c0_48 = arith.constant 0 : index
    %c0_49 = arith.constant 0 : index
    %106 = vector.load %arg8[%c0_48, %c0_49] : memref<4x4xf32, #tpu.memory_space<vmem>>, vector<4x4xf32>
    tpu.vector_store %arg8[%c0_48, %c0_49], %105 {strides = array<i32>} : memref<4x4xf32, #tpu.memory_space<vmem>>, vector<4x4xf32>,
    %cst_50 = arith.constant 0.000000e+00 : f32
    %107 = vector.broadcast %cst_50 : f32 to vector<512x112xf32>
    %108 = tpu.concatenate %41, %77, %85, %86, %107 in 1 : vector<512x4xf32>, vector<512x4xf32>, vector<512x4xf32>, vector<512x4xf32>, vector<512x112xf32> -> vector<512x128xf32>
    %c0_51 = arith.constant 0 : index
    %c0_52 = arith.constant 0 : index
    %109 = vector.load %arg5[%c0_51, %c0_52] : memref<512x128xf32, #tpu.memory_space<vmem>>, vector<512x128xf32>
    tpu.vector_store %arg5[%c0_51, %c0_52], %108 {strides = array<i32>} : memref<512x128xf32, #tpu.memory_space<vmem>>, vector<512x128xf32>,
    %c1_i32 = arith.constant 1 : i32
    %110 = arith.cmpi eq, %arg0, %c1_i32 : i32
    %111 = arith.extui %110 : i1 to i32
    %c0_i32_53 = arith.constant 0 : i32
    %112 = arith.cmpi ne, %111, %c0_i32_53 : i32
    scf.if %112 {
      %c0_54 = arith.constant 0 : index
      %c0_55 = arith.constant 0 : index
      %113 = vector.load %arg7[%c0_54, %c0_55] : memref<4x4xf32, #tpu.memory_space<vmem>>, vector<4x4xf32>
      %cst_56 = arith.constant dense<0xFF800000> : vector<4xf32>
      %114 = vector.multi_reduction <maximumf>, %113, %cst_56 [1] : vector<4x4xf32> to vector<4xf32>
      %115 = vector.shape_cast %114 : vector<4xf32> to vector<4x1xf32>
      %116 = vector.broadcast %115 : vector<4x1xf32> to vector<4x4xf32>
      %117 = arith.subf %113, %116 : vector<4x4xf32>
      %118 = math.exp %117 : vector<4x4xf32>
      %cst_57 = arith.constant dense<0.000000e+00> : vector<4xf32>
      %119 = vector.multi_reduction <add>, %118, %cst_57 [1] : vector<4x4xf32> to vector<4xf32>
      %120 = vector.shape_cast %119 : vector<4xf32> to vector<4x1xf32>
      %121 = tpu.reciprocal %120 {approx = true} : vector<4x1xf32> -> vector<4x1xf32>
      %122 = vector.broadcast %121 : vector<4x1xf32> to vector<4x4xf32>
      %123 = arith.mulf %118, %122 : vector<4x4xf32>
      %c0_58 = arith.constant 0 : index
      %c0_59 = arith.constant 0 : index
      %124 = vector.load %arg8[%c0_58, %c0_59] : memref<4x4xf32, #tpu.memory_space<vmem>>, vector<4x4xf32>
      %cst_60 = arith.constant dense<0xFF800000> : vector<4xf32>
      %125 = vector.multi_reduction <maximumf>, %124, %cst_60 [1] : vector<4x4xf32> to vector<4xf32>
      %126 = vector.shape_cast %125 : vector<4xf32> to vector<4x1xf32>
      %127 = vector.broadcast %126 : vector<4x1xf32> to vector<4x4xf32>
      %128 = arith.subf %124, %127 : vector<4x4xf32>
      %129 = math.exp %128 : vector<4x4xf32>
      %cst_61 = arith.constant dense<0.000000e+00> : vector<4xf32>
      %130 = vector.multi_reduction <add>, %129, %cst_61 [1] : vector<4x4xf32> to vector<4xf32>
      %131 = vector.shape_cast %130 : vector<4xf32> to vector<4x1xf32>
      %132 = tpu.reciprocal %131 {approx = true} : vector<4x1xf32> -> vector<4x1xf32>
      %133 = vector.broadcast %132 : vector<4x1xf32> to vector<4x4xf32>
      %134 = arith.mulf %129, %133 : vector<4x4xf32>
      %135 = tpu.concatenate %123, %134 in 0 : vector<4x4xf32>, vector<4x4xf32> -> vector<8x4xf32>
      %c0_62 = arith.constant 0 : index
      %c0_63 = arith.constant 0 : index
      %136 = vector.load %arg6[%c0_62, %c0_63] : memref<8x4xf32, #tpu.memory_space<vmem>>, vector<8x4xf32>
      tpu.vector_store %arg6[%c0_62, %c0_63], %135 {strides = array<i32>} : memref<8x4xf32, #tpu.memory_space<vmem>>, vector<8x4xf32>,
    } else {
    }
    return
  }
  func.func @transform_0(%arg0: i32) -> (i32, i32) {
    %c0_i32 = arith.constant 0 : i32
    %c0_i32_0 = arith.constant 0 : i32
    return %arg0, %c0_i32 : i32, i32
  }
  func.func @transform_1(%arg0: i32) -> (i32, i32) {
    %c0_i32 = arith.constant 0 : i32
    %c0_i32_0 = arith.constant 0 : i32
    return %arg0, %c0_i32 : i32, i32
  }
  func.func @transform_2(%arg0: i32) -> (i32, i32) {
    %c0_i32 = arith.constant 0 : i32
    %c0_i32_0 = arith.constant 0 : i32
    %c0_i32_1 = arith.constant 0 : i32
    return %c0_i32, %c0_i32_0 : i32, i32
  }
  func.func @transform_3(%arg0: i32) -> (i32, i32) {
    %c0_i32 = arith.constant 0 : i32
    %c0_i32_0 = arith.constant 0 : i32
    %c0_i32_1 = arith.constant 0 : i32
    return %c0_i32, %c0_i32_0 : i32, i32
  }
  func.func @transform_4(%arg0: i32) -> (i32, i32) {
    %c0_i32 = arith.constant 0 : i32
    %c0_i32_0 = arith.constant 0 : i32
    return %arg0, %c0_i32 : i32, i32
  }
  func.func @transform_5(%arg0: i32) -> (i32, i32) {
    %c0_i32 = arith.constant 0 : i32
    %c0_i32_0 = arith.constant 0 : i32
    %c0_i32_1 = arith.constant 0 : i32
    return %c0_i32, %c0_i32_0 : i32, i32
  }
}

</mosaic_0001>

<llo_original>
// kernel: tpu_custom_call.1
$region0: #{tpu_custom_call.1}
  #allocation0 [shape = 'u32[]', space=smem, size = 0x4, offset = 0x4, fixed_abs, tag = 'smem constant byte address 0x4 - core index']
  #allocation1 [shape = 'u32[144,128]{1,0:T(1,128)}', space=vmem, size = 0x12000, scoped, tag = 'internal scratch']
  #allocation2 [shape = 'f32[4,4]{1,0:T(4,128)}', space=vmem, size = 0x800, scoped, tag = 'scratch operand']
  #allocation3 [shape = 'f32[4,4]{1,0:T(4,128)}', space=vmem, size = 0x800, scoped, tag = 'scratch operand']
  %s0 = inlined_call_operand.vmem [shape: bf16[1024,32], index: 0, kind: input, shape index: {}]
  %s1 = inlined_call_operand.vmem [shape: bf16[1024,4], index: 1, kind: input, shape index: {}]
  %s2 = inlined_call_operand.vmem [shape: bf16[352,128], index: 2, kind: input, shape index: {}]
  %s3 = inlined_call_operand.vmem [shape: f32[16,128], index: 3, kind: input, shape index: {}]
  %s4 = inlined_call_operand.hbm [shape: f32[1024,128], index: 4, kind: output, shape index: {0}]
  %s5 = inlined_call_operand.vmem [shape: f32[8,4], index: 5, kind: output, shape index: {1}]
  %6 = xla_tuple %s4, %s5
  %s7 = sld [smem:[#allocation0]]
  $region65: #{tpu_custom_call.1} parent=0
    _
  %s9 = ssub.s32 1, %s7
  %s10 = scalar_select 0, %s9, %s7
  $region1: #{tpu_custom_call.1} parent=0
    #allocation4 [shape = 'u8[524288]{0}', space=vmem, size = 0x80000, scoped, tag = 'output window, operand 0']
    #allocation5 [shape = 's32[2]{0}', space=sflag, size = 0x8, scoped, tag = 'scoped memory for tpu_custom_call.1']
    %11 = vsyncpa [#allocation5], 0
    %s12 = scalar_lea.sflag [#allocation5], 1
    %13 = vsyncpa %s12, 0
    loop: start=0, step=1, limit=4
    $region2: #{tpu_custom_call.1} parent=1 // loop_pre_header
      _
    $region3: #{tpu_custom_call.1} parent=1 // loop_header
      %s15 = sphi 0, %s19
      %p16 = scmp.ge.s32.totalorder %s15, 4
      %s25 = sphi 0, %s27
      %s28 = sphi 0, %s25
      %s29 = sphi 0, %s28
      %s45 = sphi 0, %s29
      %s51 = sphi 0, %s53
      %s54 = sphi 0, %s51
      %s55 = sphi 0, %s54
      %s71 = sphi 0, %s55
      %s75 = sphi 0, %s75
      %s77 = sphi 0, %s75
      %s78 = sphi 0, %s77
      %s92 = sphi 0, %s78
      %s96 = sphi 0, %s96
      %s98 = sphi 0, %s96
      %s99 = sphi 0, %s98
      %s113 = sphi 0, %s99
      %s119 = sphi 0, %s121
      %s122 = sphi 0, %s119
      %s123 = sphi 0, %s122
      %s139 = sphi 0, %s123
      %s143 = sphi 0, %s143
      %s145 = sphi 0, %s143
      %s146 = sphi 0, %s145
      %s160 = sphi 0, %s146
    $region4: #{tpu_custom_call.1} parent=1 // loop_header_branch
      %18 = sbr.rel (%p16) target = $region8
    $region5: #{tpu_custom_call.1} parent=1 // loop_body
      %s20 = ssub.s32 %s15, 1
      %s21 = ssub.s32 %s15, 2
      %s22 = sadd.s32 %s15, 1
      %s23 = ssub.s32 %s15, %s22
      %p24 = scmp.eq.s32.totalorder %s23, 0
      %s26 = sadd.s32 %s25, 1
      %s27 = scalar_select %p24, %s25, %s26
      %p30 = pneg %p24
      %p31 = scmp.eq.s32.totalorder %s15, 1
      %p32 = por %p30, %p31
      %p33 = scmp.ne.s32.totalorder %s25, %s28
      %p34 = scmp.eq.s32.totalorder %s15, 0
      %p35 = por %p33, %p34
      %p36 = scmp.ne.s32.totalorder %s25, %s28
      %p37 = scmp.eq.s32.totalorder %s20, 1
      %p38 = por %p36, %p37
      %p39 = scmp.ne.s32.totalorder %s28, %s29
      %p40 = scmp.eq.s32.totalorder %s20, 0
      %p41 = por %p39, %p40
      %p42 = scmp.ne.s32.totalorder %s28, %s29
      %p43 = scmp.eq.s32.totalorder %s21, 1
      %p44 = por %p42, %p43
      %p46 = scmp.ne.s32.totalorder %s29, %s45
      %p47 = scmp.eq.s32.totalorder %s21, 0
      %p48 = por %p46, %p47
      %s49 = ssub.s32 %s15, %s22
      %p50 = scmp.eq.s32.totalorder %s49, 0
      %s52 = sadd.s32 %s51, 1
      %s53 = scalar_select %p50, %s51, %s52
      %p56 = pneg %p50
      %p57 = scmp.eq.s32.totalorder %s15, 1
      %p58 = por %p56, %p57
      %p59 = scmp.ne.s32.totalorder %s51, %s54
      %p60 = scmp.eq.s32.totalorder %s15, 0
      %p61 = por %p59, %p60
      %p62 = scmp.ne.s32.totalorder %s51, %s54
      %p63 = scmp.eq.s32.totalorder %s20, 1
      %p64 = por %p62, %p63
      %p65 = scmp.ne.s32.totalorder %s54, %s55
      %p66 = scmp.eq.s32.totalorder %s20, 0
      %p67 = por %p65, %p66
      %p68 = scmp.ne.s32.totalorder %s54, %s55
      %p69 = scmp.eq.s32.totalorder %s21, 1
      %p70 = por %p68, %p69
      %p72 = scmp.ne.s32.totalorder %s55, %s71
      %p73 = scmp.eq.s32.totalorder %s21, 0
      %p74 = por %p72, %p73
      %s76 = sadd.s32 %s75, 1
      %p79 = scmp.eq.s32.totalorder %s15, 1
      %p80 = scmp.ne.s32.totalorder %s75, %s77
      %p81 = scmp.eq.s32.totalorder %s15, 0
      %p82 = por %p80, %p81
      %p83 = scmp.ne.s32.totalorder %s75, %s77
      %p84 = scmp.eq.s32.totalorder %s20, 1
      %p85 = por %p83, %p84
      %p86 = scmp.ne.s32.totalorder %s77, %s78
      %p87 = scmp.eq.s32.totalorder %s20, 0
      %p88 = por %p86, %p87
      %p89 = scmp.ne.s32.totalorder %s77, %s78
      %p90 = scmp.eq.s32.totalorder %s21, 1
      %p91 = por %p89, %p90
      %p93 = scmp.ne.s32.totalorder %s78, %s92
      %p94 = scmp.eq.s32.totalorder %s21, 0
      %p95 = por %p93, %p94
      %s97 = sadd.s32 %s96, 1
      %p100 = scmp.eq.s32.totalorder %s15, 1
      %p101 = scmp.ne.s32.totalorder %s96, %s98
      %p102 = scmp.eq.s32.totalorder %s15, 0
      %p103 = por %p101, %p102
      %p104 = scmp.ne.s32.totalorder %s96, %s98
      %p105 = scmp.eq.s32.totalorder %s20, 1
      %p106 = por %p104, %p105
      %p107 = scmp.ne.s32.totalorder %s98, %s99
      %p108 = scmp.eq.s32.totalorder %s20, 0
      %p109 = por %p107, %p108
      %p110 = scmp.ne.s32.totalorder %s98, %s99
      %p111 = scmp.eq.s32.totalorder %s21, 1
      %p112 = por %p110, %p111
      %p114 = scmp.ne.s32.totalorder %s99, %s113
      %p115 = scmp.eq.s32.totalorder %s21, 0
      %p116 = por %p114, %p115
      %s117 = ssub.s32 %s15, %s22
      %p118 = scmp.eq.s32.totalorder %s117, 0
      %s120 = sadd.s32 %s119, 1
      %s121 = scalar_select %p118, %s119, %s120
      %p124 = pneg %p118
      %p125 = scmp.eq.s32.totalorder %s15, 1
      %p126 = por %p124, %p125
      %p127 = scmp.ne.s32.totalorder %s119, %s122
      %p128 = scmp.eq.s32.totalorder %s15, 0
      %p129 = por %p127, %p128
      %p130 = scmp.ne.s32.totalorder %s119, %s122
      %p131 = scmp.eq.s32.totalorder %s20, 1
      %p132 = por %p130, %p131
      %p133 = scmp.ne.s32.totalorder %s122, %s123
      %p134 = scmp.eq.s32.totalorder %s20, 0
      %p135 = por %p133, %p134
      %p136 = scmp.ne.s32.totalorder %s122, %s123
      %p137 = scmp.eq.s32.totalorder %s21, 1
      %p138 = por %p136, %p137
      %p140 = scmp.ne.s32.totalorder %s123, %s139
      %p141 = scmp.eq.s32.totalorder %s21, 0
      %p142 = por %p140, %p141
      %s144 = sadd.s32 %s143, 1
      %p147 = scmp.eq.s32.totalorder %s15, 1
      %p148 = scmp.ne.s32.totalorder %s143, %s145
      %p149 = scmp.eq.s32.totalorder %s15, 0
      %p150 = por %p148, %p149
      %p151 = scmp.ne.s32.totalorder %s143, %s145
      %p152 = scmp.eq.s32.totalorder %s20, 1
      %p153 = por %p151, %p152
      %p154 = scmp.ne.s32.totalorder %s145, %s146
      %p155 = scmp.eq.s32.totalorder %s20, 0
      %p156 = por %p154, %p155
      %p157 = scmp.ne.s32.totalorder %s145, %s146
      %p158 = scmp.eq.s32.totalorder %s21, 1
      %p159 = por %p157, %p158
      %p161 = scmp.ne.s32.totalorder %s146, %s160
      %p162 = scmp.eq.s32.totalorder %s21, 0
      %p163 = por %p161, %p162
      %p164 = scmp.le.s32.totalorder 1, %s15
      %p165 = scmp.lt.s32.totalorder %s15, 3
      %p166 = pnand %p164, %p165
      %p167 = pneg %p166
      // Predicated region
      $region9: #{tpu_custom_call.1} parent=5 // pred_check
        _
      $region10: #{tpu_custom_call.1} parent=5 // pred_check_branch
        %169 = sbr.rel (%p166) target = $region12
      $region11: #{tpu_custom_call.1} parent=5 // pred_region
        %s170 = ssub.s32 %s15, 1
        // Predicated region
        $region13: #{tpu_custom_call.1} parent=11 // pred_check
          %p171 = pneg %p88
        $region14: #{tpu_custom_call.1} parent=11 // pred_check_branch
          %173 = sbr.rel (%p171) target = $region16
        $region15: #{tpu_custom_call.1} parent=11 // pred_region
          _
        $region16: #{tpu_custom_call.1} parent=11 // pred_fallthru
          _
        // Predicated region
        $region17: #{tpu_custom_call.1} parent=11 // pred_check
          %p174 = pneg %p109
        $region18: #{tpu_custom_call.1} parent=11 // pred_check_branch
          %176 = sbr.rel (%p174) target = $region20
        $region19: #{tpu_custom_call.1} parent=11 // pred_region
          _
        $region20: #{tpu_custom_call.1} parent=11 // pred_fallthru
          _
      $region12: #{tpu_custom_call.1} parent=5 // pred_fallthru
        _
      %p177 = scmp.lt.s32.totalorder %s15, 2
      // Predicated region
      $region21: #{tpu_custom_call.1} parent=5 // pred_check
        %p178 = pneg %p177
      $region22: #{tpu_custom_call.1} parent=5 // pred_check_branch
        %180 = sbr.rel (%p178) target = $region24
      $region23: #{tpu_custom_call.1} parent=5 // pred_region
        // Predicated region
        $region25: #{tpu_custom_call.1} parent=23 // pred_check
          %p181 = pneg %p35
        $region26: #{tpu_custom_call.1} parent=23 // pred_check_branch
          %183 = sbr.rel (%p181) target = $region28
        $region27: #{tpu_custom_call.1} parent=23 // pred_region
          %s184 = smul.u32 64, %s15
          %p185 = scmp.lt.s32.totalorder %s184, 127
          %s186 = scalar_select %p185, %s184, 127
          %s187 = smul.addr %s186, 4
          %s188 = scalar_lea.vmem %s0, %s187
          %s189 = smul.u32 64, %s15
        $region28: #{tpu_custom_call.1} parent=23 // pred_fallthru
          _
        // Predicated region
        $region29: #{tpu_custom_call.1} parent=23 // pred_check
          %p190 = pneg %p61
        $region30: #{tpu_custom_call.1} parent=23 // pred_check_branch
          %192 = sbr.rel (%p190) target = $region32
        $region31: #{tpu_custom_call.1} parent=23 // pred_region
          %s193 = smul.u32 64, %s15
          %p194 = scmp.lt.s32.totalorder %s193, 127
          %s195 = scalar_select %p194, %s193, 127
          %s196 = smul.addr %s195, 4
          %s197 = scalar_lea.vmem %s1, %s196
          %s198 = smul.u32 64, %s15
        $region32: #{tpu_custom_call.1} parent=23 // pred_fallthru
          _
      $region24: #{tpu_custom_call.1} parent=5 // pred_fallthru
        _
      %p199 = scmp.le.s32.totalorder 1, %s15
      %p200 = scmp.lt.s32.totalorder %s15, 3
      %p201 = pnand %p199, %p200
      %p202 = pneg %p201
      // Predicated region
      $region33: #{tpu_custom_call.1} parent=5 // pred_check
        _
      $region34: #{tpu_custom_call.1} parent=5 // pred_check_branch
        %204 = sbr.rel (%p201) target = $region36
      $region35: #{tpu_custom_call.1} parent=5 // pred_region
        %s205 = ssub.s32 %s15, 1
        %s206 = smul.u32 64, %s20
        %p207 = scmp.lt.s32.totalorder %s206, 127
        %s208 = scalar_select %p207, %s206, 127
        %s209 = smul.addr %s208, 4
        %s210 = scalar_lea.vmem %s0, %s209
        %p211 = pneg %p41
        %p212 = pneg %p38
        %s213 = smul.u32 64, %s20
        %p214 = scmp.lt.s32.totalorder %s213, 127
        %s215 = scalar_select %p214, %s213, 127
        %s216 = smul.addr %s215, 4
        %s217 = scalar_lea.vmem %s1, %s216
        %p218 = pneg %p67
        %p219 = pneg %p64
        %p220 = pneg %p88
        %p221 = pneg %p85
        %p222 = pneg %p109
        %p223 = pneg %p106
        %p224 = pneg %p135
        %p225 = pneg %p132
        %s226 = sand.u32 %s122, 1
        %s227 = scalar_lea.sflag [#allocation5], %s226
        %s228 = sand.u32 %s122, 1
        %s229 = smul.addr %s228, 512
        %s230 = scalar_lea.vmem [#allocation4], %s229
        %p231 = pneg %p156
        %p232 = pneg %p153
        %s233 = smul.u32 64, %s20
        %p234 = scmp.lt.s32.totalorder %s233, 127
        %s235 = scalar_select %p234, %s233, 127
        %s236 = smul.addr %s235, 4
        %s237 = scalar_lea.vmem %s0, %s236
        %s238 = smul.u32 64, %s20
        %s239 = smul.u32 64, %s20
        %p240 = scmp.lt.s32.totalorder %s239, 127
        %s241 = scalar_select %p240, %s239, 127
        %s242 = smul.addr %s241, 4
        %s243 = scalar_lea.vmem %s1, %s242
        %s244 = smul.u32 64, %s20
        %s245 = smul.u32 64, %s20
        %p247 = scmp.eq.s32.totalorder %s20, 0
        // Predicated region
        $region37: #{tpu_custom_call.1} parent=35 // pred_check
          %p248 = pneg %p247
        $region38: #{tpu_custom_call.1} parent=35 // pred_check_branch
          %250 = sbr.rel (%p248) target = $region40
        $region39: #{tpu_custom_call.1} parent=35 // pred_region
          %vm251 = vcmask 27648
          %252 = vst.msk [vmem:[#allocation2] sm:$0xf] %vm251, 0.0
          %253 = vst.msk [vmem:[#allocation3] sm:$0xf] %vm251, 0.0
        $region40: #{tpu_custom_call.1} parent=35 // pred_fallthru
          _
        %v254 = vld [vmem:[%s237] sm:$0xf]
        %v255 = vld [vmem:[%s237 + $0x4] sm:$0xf]
        %v256 = vld [vmem:[%s237 + $0x8] sm:$0xf]
        %v257 = vld [vmem:[%s237 + $0xc] sm:$0xf]
        %v258 = vld [vmem:[%s237 + $0x10] sm:$0xf]
        %v259 = vld [vmem:[%s237 + $0x14] sm:$0xf]
        %v260 = vld [vmem:[%s237 + $0x18] sm:$0xf]
        %v261 = vld [vmem:[%s237 + $0x1c] sm:$0xf]
        %v262 = vld [vmem:[%s237 + $0x20] sm:$0xf]
        %v263 = vld [vmem:[%s237 + $0x24] sm:$0xf]
        %v264 = vld [vmem:[%s237 + $0x28] sm:$0xf]
        %v265 = vld [vmem:[%s237 + $0x2c] sm:$0xf]
        %v266 = vld [vmem:[%s237 + $0x30] sm:$0xf]
        %v267 = vld [vmem:[%s237 + $0x34] sm:$0xf]
        %v268 = vld [vmem:[%s237 + $0x38] sm:$0xf]
        %v269 = vld [vmem:[%s237 + $0x3c] sm:$0xf]
        %v270 = vld [vmem:[%s237 + $0x40] sm:$0xf]
        %v271 = vld [vmem:[%s237 + $0x44] sm:$0xf]
        %v272 = vld [vmem:[%s237 + $0x48] sm:$0xf]
        %v273 = vld [vmem:[%s237 + $0x4c] sm:$0xf]
        %v274 = vld [vmem:[%s237 + $0x50] sm:$0xf]
        %v275 = vld [vmem:[%s237 + $0x54] sm:$0xf]
        %v276 = vld [vmem:[%s237 + $0x58] sm:$0xf]
        %v277 = vld [vmem:[%s237 + $0x5c] sm:$0xf]
        %v278 = vld [vmem:[%s237 + $0x60] sm:$0xf]
        %v279 = vld [vmem:[%s237 + $0x64] sm:$0xf]
        %v280 = vld [vmem:[%s237 + $0x68] sm:$0xf]
        %v281 = vld [vmem:[%s237 + $0x6c] sm:$0xf]
        %v282 = vld [vmem:[%s237 + $0x70] sm:$0xf]
        %v283 = vld [vmem:[%s237 + $0x74] sm:$0xf]
        %v284 = vld [vmem:[%s237 + $0x78] sm:$0xf]
        %v285 = vld [vmem:[%s237 + $0x7c] sm:$0xf]
        %v286 = vld [vmem:[%s237 + $0x80] sm:$0xf]
        %v287 = vld [vmem:[%s237 + $0x84] sm:$0xf]
        %v288 = vld [vmem:[%s237 + $0x88] sm:$0xf]
        %v289 = vld [vmem:[%s237 + $0x8c] sm:$0xf]
        %v290 = vld [vmem:[%s237 + $0x90] sm:$0xf]
        %v291 = vld [vmem:[%s237 + $0x94] sm:$0xf]
        %v292 = vld [vmem:[%s237 + $0x98] sm:$0xf]
        %v293 = vld [vmem:[%s237 + $0x9c] sm:$0xf]
        %v294 = vld [vmem:[%s237 + $0xa0] sm:$0xf]
        %v295 = vld [vmem:[%s237 + $0xa4] sm:$0xf]
        %v296 = vld [vmem:[%s237 + $0xa8] sm:$0xf]
        %v297 = vld [vmem:[%s237 + $0xac] sm:$0xf]
        %v298 = vld [vmem:[%s237 + $0xb0] sm:$0xf]
        %v299 = vld [vmem:[%s237 + $0xb4] sm:$0xf]
        %v300 = vld [vmem:[%s237 + $0xb8] sm:$0xf]
        %v301 = vld [vmem:[%s237 + $0xbc] sm:$0xf]
        %v302 = vld [vmem:[%s237 + $0xc0] sm:$0xf]
        %v303 = vld [vmem:[%s237 + $0xc4] sm:$0xf]
        %v304 = vld [vmem:[%s237 + $0xc8] sm:$0xf]
        %v305 = vld [vmem:[%s237 + $0xcc] sm:$0xf]
        %v306 = vld [vmem:[%s237 + $0xd0] sm:$0xf]
        %v307 = vld [vmem:[%s237 + $0xd4] sm:$0xf]
        %v308 = vld [vmem:[%s237 + $0xd8] sm:$0xf]
        %v309 = vld [vmem:[%s237 + $0xdc] sm:$0xf]
        %v310 = vld [vmem:[%s237 + $0xe0] sm:$0xf]
        %v311 = vld [vmem:[%s237 + $0xe4] sm:$0xf]
        %v312 = vld [vmem:[%s237 + $0xe8] sm:$0xf]
        %v313 = vld [vmem:[%s237 + $0xec] sm:$0xf]
        %v314 = vld [vmem:[%s237 + $0xf0] sm:$0xf]
        %v315 = vld [vmem:[%s237 + $0xf4] sm:$0xf]
        %v316 = vld [vmem:[%s237 + $0xf8] sm:$0xf]
        %v317 = vld [vmem:[%s237 + $0xfc] sm:$0xf]
        %v318 = vld [vmem:[%s2] sm:$0xf]
        %v319 = vld [vmem:[%s2 + $0x4] sm:$0xf]
        %v320 = vld [vmem:[%s2 + $0x8] sm:$0xf]
        %v321 = vld [vmem:[%s2 + $0xc] sm:$0xf]
        %v322 = vld [vmem:[%s3] sm:$0x1]
        %v323 = vlaneseq
        %v324 = vshrl.u32 %v323, 7
        %v325 = vsub.s32 0, %v324
        %v326 = vrot.slane %v322, %v325
        %v391 = vunpack.c.l.b16 %v254
        %v392 = vunpack.c.l.b16 %v255
        %v393 = vunpack.c.l.b16 %v256
        %v394 = vunpack.c.l.b16 %v257
        %v395 = vunpack.c.l.b16 %v258
        %v396 = vunpack.c.l.b16 %v259
        %v397 = vunpack.c.l.b16 %v260
        %v398 = vunpack.c.l.b16 %v261
        %v399 = vunpack.c.l.b16 %v262
        %v400 = vunpack.c.l.b16 %v263
        %v401 = vunpack.c.l.b16 %v264
        %v402 = vunpack.c.l.b16 %v265
        %v403 = vunpack.c.l.b16 %v266
        %v404 = vunpack.c.l.b16 %v267
        %v405 = vunpack.c.l.b16 %v268
        %v406 = vunpack.c.l.b16 %v269
        %v407 = vunpack.c.l.b16 %v270
        %v408 = vunpack.c.l.b16 %v271
        %v409 = vunpack.c.l.b16 %v272
        %v410 = vunpack.c.l.b16 %v273
        %v411 = vunpack.c.l.b16 %v274
        %v412 = vunpack.c.l.b16 %v275
        %v413 = vunpack.c.l.b16 %v276
        %v414 = vunpack.c.l.b16 %v277
        %v415 = vunpack.c.l.b16 %v278
        %v416 = vunpack.c.l.b16 %v279
        %v417 = vunpack.c.l.b16 %v280
        %v418 = vunpack.c.l.b16 %v281
        %v419 = vunpack.c.l.b16 %v282
        %v420 = vunpack.c.l.b16 %v283
        %v421 = vunpack.c.l.b16 %v284
        %v422 = vunpack.c.l.b16 %v285
        %v423 = vunpack.c.l.b16 %v286
        %v424 = vunpack.c.l.b16 %v287
        %v425 = vunpack.c.l.b16 %v288
        %v426 = vunpack.c.l.b16 %v289
        %v427 = vunpack.c.l.b16 %v290
        %v428 = vunpack.c.l.b16 %v291
        %v429 = vunpack.c.l.b16 %v292
        %v430 = vunpack.c.l.b16 %v293
        %v431 = vunpack.c.l.b16 %v294
        %v432 = vunpack.c.l.b16 %v295
        %v433 = vunpack.c.l.b16 %v296
        %v434 = vunpack.c.l.b16 %v297
        %v435 = vunpack.c.l.b16 %v298
        %v436 = vunpack.c.l.b16 %v299
        %v437 = vunpack.c.l.b16 %v300
        %v438 = vunpack.c.l.b16 %v301
        %v439 = vunpack.c.l.b16 %v302
        %v440 = vunpack.c.l.b16 %v303
        %v441 = vunpack.c.l.b16 %v304
        %v442 = vunpack.c.l.b16 %v305
        %v443 = vunpack.c.l.b16 %v306
        %v444 = vunpack.c.l.b16 %v307
        %v445 = vunpack.c.l.b16 %v308
        %v446 = vunpack.c.l.b16 %v309
        %v447 = vunpack.c.l.b16 %v310
        %v448 = vunpack.c.l.b16 %v311
        %v449 = vunpack.c.l.b16 %v312
        %v450 = vunpack.c.l.b16 %v313
        %v451 = vunpack.c.l.b16 %v314
        %v452 = vunpack.c.l.b16 %v315
        %v453 = vunpack.c.l.b16 %v316
        %v454 = vunpack.c.l.b16 %v317
        %v455 = vpack.c.b16 %v392, %v391
        %v456 = vpack.c.b16 %v394, %v393
        %v457 = vpack.c.b16 %v396, %v395
        %v458 = vpack.c.b16 %v398, %v397
        %v459 = vpack.c.b16 %v400, %v399
        %v460 = vpack.c.b16 %v402, %v401
        %v461 = vpack.c.b16 %v404, %v403
        %v462 = vpack.c.b16 %v406, %v405
        %v463 = vpack.c.b16 %v408, %v407
        %v464 = vpack.c.b16 %v410, %v409
        %v465 = vpack.c.b16 %v412, %v411
        %v466 = vpack.c.b16 %v414, %v413
        %v467 = vpack.c.b16 %v416, %v415
        %v468 = vpack.c.b16 %v418, %v417
        %v469 = vpack.c.b16 %v420, %v419
        %v470 = vpack.c.b16 %v422, %v421
        %v471 = vpack.c.b16 %v424, %v423
        %v472 = vpack.c.b16 %v426, %v425
        %v473 = vpack.c.b16 %v428, %v427
        %v474 = vpack.c.b16 %v430, %v429
        %v475 = vpack.c.b16 %v432, %v431
        %v476 = vpack.c.b16 %v434, %v433
        %v477 = vpack.c.b16 %v436, %v435
        %v478 = vpack.c.b16 %v438, %v437
        %v479 = vpack.c.b16 %v440, %v439
        %v480 = vpack.c.b16 %v442, %v441
        %v481 = vpack.c.b16 %v444, %v443
        %v482 = vpack.c.b16 %v446, %v445
        %v483 = vpack.c.b16 %v448, %v447
        %v484 = vpack.c.b16 %v450, %v449
        %v485 = vpack.c.b16 %v452, %v451
        %v486 = vpack.c.b16 %v454, %v453
        %v491 = vunpack.c.l.b16 %v318
        %v492 = vunpack.c.l.b16 %v319
        %v493 = vunpack.c.l.b16 %v320
        %v494 = vunpack.c.l.b16 %v321
        %v495 = vpack.c.b16 %v492, %v491
        %v496 = vpack.c.b16 %v494, %v493
        %vm499 = vcmask 261120
        %v501 = vsel %vm499, %v455, 0
        %v504 = vsel %vm499, %v456, 0
        %v507 = vsel %vm499, %v457, 0
        %v510 = vsel %vm499, %v458, 0
        %v513 = vsel %vm499, %v459, 0
        %v516 = vsel %vm499, %v460, 0
        %v519 = vsel %vm499, %v461, 0
        %v522 = vsel %vm499, %v462, 0
        %v525 = vsel %vm499, %v463, 0
        %v528 = vsel %vm499, %v464, 0
        %v531 = vsel %vm499, %v465, 0
        %v534 = vsel %vm499, %v466, 0
        %v537 = vsel %vm499, %v467, 0
        %v540 = vsel %vm499, %v468, 0
        %v543 = vsel %vm499, %v469, 0
        %v546 = vsel %vm499, %v470, 0
        %v549 = vsel %vm499, %v471, 0
        %v552 = vsel %vm499, %v472, 0
        %v555 = vsel %vm499, %v473, 0
        %v558 = vsel %vm499, %v474, 0
        %v561 = vsel %vm499, %v475, 0
        %v564 = vsel %vm499, %v476, 0
        %v567 = vsel %vm499, %v477, 0
        %v570 = vsel %vm499, %v478, 0
        %v573 = vsel %vm499, %v479, 0
        %v576 = vsel %vm499, %v480, 0
        %v579 = vsel %vm499, %v481, 0
        %v582 = vsel %vm499, %v482, 0
        %v585 = vsel %vm499, %v483, 0
        %v588 = vsel %vm499, %v484, 0
        %v591 = vsel %vm499, %v485, 0
        %v594 = vsel %vm499, %v486, 0
        %596 = vmatprep.subr.bf16.mxu0 0
        %597 = vmatpush1.bf16.msra.mxu0 0
        %598 = vmatprep.subr.bf16.mxu0 0
        %599 = vmatpush1.bf16.msra.mxu0 0
        %600 = vmatprep.subr.bf16.mxu0 0
        %601 = vmatpush1.bf16.msra.mxu0 0
        %602 = vmatprep.subr.bf16.mxu0 0
        %603 = vmatpush1.bf16.msra.mxu0 0
        %604 = vmatprep.subr.bf16.mxu0 0
        %605 = vmatpush1.bf16.msra.mxu0 0
        %606 = vmatprep.subr.bf16.mxu0 0
        %607 = vmatpush1.bf16.msra.mxu0 0
        %608 = vmatprep.subr.bf16.mxu0 0
        %609 = vmatpush1.bf16.msra.mxu0 %v496
        %610 = vmatprep.subr.bf16.mxu0 0
        %611 = vmatpush1.bf16.msra.mxu0 %v495
        %612 = vmatprep.subr.bf16.mxu0 0
        %613 = vmatpush2.bf16.msra.mxu0 0
        %614 = vmatprep.subr.bf16.mxu0 0
        %615 = vmatpush2.bf16.msra.mxu0 0
        %616 = vmatprep.subr.bf16.mxu0 0
        %617 = vmatpush2.bf16.msra.mxu0 0
        %618 = vmatprep.subr.bf16.mxu0 0
        %619 = vmatpush2.bf16.msra.mxu0 0
        %620 = vmatprep.subr.bf16.mxu0 0
        %621 = vmatpush2.bf16.msra.mxu0 0
        %622 = vmatprep.subr.bf16.mxu0 0
        %623 = vmatpush2.bf16.msra.mxu0 0
        %624 = vmatprep.subr.bf16.mxu0 0
        %625 = vmatpush2.bf16.msra.mxu0 0
        %626 = vmatprep.subr.bf16.mxu0 0
        %627 = vmatpush2.bf16.msra.mxu0 0
        %628 = vmatprep.mubr.bf16.mxu0 0
        %629 = vmatmul.mubr.bf16.gmra.mxu0 %v501
        %v630 = vpop.f32.mrf.mxu0
        %v631 = vadd.f32 %v326, %v630
        %v632 = vpop.f32.mrf.mxu0
        %v633 = vpop.f32.mrf.mxu0
        %v634 = vadd.f32 %v326, %v633
        %v635 = vpop.f32.mrf.mxu0
        %636 = vmatprep.mubr.bf16.mxu0 0
        %637 = vmatmul.mubr.bf16.gmra.mxu0 %v504
        %v638 = vpop.f32.mrf.mxu0
        %v639 = vadd.f32 %v326, %v638
        %v640 = vpop.f32.mrf.mxu0
        %v641 = vpop.f32.mrf.mxu0
        %v642 = vadd.f32 %v326, %v641
        %v643 = vpop.f32.mrf.mxu0
        %644 = vmatprep.mubr.bf16.mxu0 0
        %645 = vmatmul.mubr.bf16.gmra.mxu0 %v507
        %v646 = vpop.f32.mrf.mxu0
        %v647 = vadd.f32 %v326, %v646
        %v648 = vpop.f32.mrf.mxu0
        %v649 = vpop.f32.mrf.mxu0
        %v650 = vadd.f32 %v326, %v649
        %v651 = vpop.f32.mrf.mxu0
        %652 = vmatprep.mubr.bf16.mxu0 0
        %653 = vmatmul.mubr.bf16.gmra.mxu0 %v510
        %v654 = vpop.f32.mrf.mxu0
        %v655 = vadd.f32 %v326, %v654
        %v656 = vpop.f32.mrf.mxu0
        %v657 = vpop.f32.mrf.mxu0
        %v658 = vadd.f32 %v326, %v657
        %v659 = vpop.f32.mrf.mxu0
        %660 = vmatprep.mubr.bf16.mxu0 0
        %661 = vmatmul.mubr.bf16.gmra.mxu0 %v513
        %v662 = vpop.f32.mrf.mxu0
        %v663 = vadd.f32 %v326, %v662
        %v664 = vpop.f32.mrf.mxu0
        %v665 = vpop.f32.mrf.mxu0
        %v666 = vadd.f32 %v326, %v665
        %v667 = vpop.f32.mrf.mxu0
        %668 = vmatprep.mubr.bf16.mxu0 0
        %669 = vmatmul.mubr.bf16.gmra.mxu0 %v516
        %v670 = vpop.f32.mrf.mxu0
        %v671 = vadd.f32 %v326, %v670
        %v672 = vpop.f32.mrf.mxu0
        %v673 = vpop.f32.mrf.mxu0
        %v674 = vadd.f32 %v326, %v673
        %v675 = vpop.f32.mrf.mxu0
        %676 = vmatprep.mubr.bf16.mxu0 0
        %677 = vmatmul.mubr.bf16.gmra.mxu0 %v519
        %v678 = vpop.f32.mrf.mxu0
        %v679 = vadd.f32 %v326, %v678
        %v680 = vpop.f32.mrf.mxu0
        %v681 = vpop.f32.mrf.mxu0
        %v682 = vadd.f32 %v326, %v681
        %v683 = vpop.f32.mrf.mxu0
        %684 = vmatprep.mubr.bf16.mxu0 0
        %685 = vmatmul.mubr.bf16.gmra.mxu0 %v522
        %v686 = vpop.f32.mrf.mxu0
        %v687 = vadd.f32 %v326, %v686
        %v688 = vpop.f32.mrf.mxu0
        %v689 = vpop.f32.mrf.mxu0
        %v690 = vadd.f32 %v326, %v689
        %v691 = vpop.f32.mrf.mxu0
        %692 = vmatprep.mubr.bf16.mxu0 0
        %693 = vmatmul.mubr.bf16.gmra.mxu0 %v525
        %v694 = vpop.f32.mrf.mxu0
        %v695 = vadd.f32 %v326, %v694
        %v696 = vpop.f32.mrf.mxu0
        %v697 = vpop.f32.mrf.mxu0
        %v698 = vadd.f32 %v326, %v697
        %v699 = vpop.f32.mrf.mxu0
        %700 = vmatprep.mubr.bf16.mxu0 0
        %701 = vmatmul.mubr.bf16.gmra.mxu0 %v528
        %v702 = vpop.f32.mrf.mxu0
        %v703 = vadd.f32 %v326, %v702
        %v704 = vpop.f32.mrf.mxu0
        %v705 = vpop.f32.mrf.mxu0
        %v706 = vadd.f32 %v326, %v705
        %v707 = vpop.f32.mrf.mxu0
        %708 = vmatprep.mubr.bf16.mxu0 0
        %709 = vmatmul.mubr.bf16.gmra.mxu0 %v531
        %v710 = vpop.f32.mrf.mxu0
        %v711 = vadd.f32 %v326, %v710
        %v712 = vpop.f32.mrf.mxu0
        %v713 = vpop.f32.mrf.mxu0
        %v714 = vadd.f32 %v326, %v713
        %v715 = vpop.f32.mrf.mxu0
        %716 = vmatprep.mubr.bf16.mxu0 0
        %717 = vmatmul.mubr.bf16.gmra.mxu0 %v534
        %v718 = vpop.f32.mrf.mxu0
        %v719 = vadd.f32 %v326, %v718
        %v720 = vpop.f32.mrf.mxu0
        %v721 = vpop.f32.mrf.mxu0
        %v722 = vadd.f32 %v326, %v721
        %v723 = vpop.f32.mrf.mxu0
        %724 = vmatprep.mubr.bf16.mxu0 0
        %725 = vmatmul.mubr.bf16.gmra.mxu0 %v537
        %v726 = vpop.f32.mrf.mxu0
        %v727 = vadd.f32 %v326, %v726
        %v728 = vpop.f32.mrf.mxu0
        %v729 = vpop.f32.mrf.mxu0
        %v730 = vadd.f32 %v326, %v729
        %v731 = vpop.f32.mrf.mxu0
        %732 = vmatprep.mubr.bf16.mxu0 0
        %733 = vmatmul.mubr.bf16.gmra.mxu0 %v540
        %v734 = vpop.f32.mrf.mxu0
        %v735 = vadd.f32 %v326, %v734
        %v736 = vpop.f32.mrf.mxu0
        %v737 = vpop.f32.mrf.mxu0
        %v738 = vadd.f32 %v326, %v737
        %v739 = vpop.f32.mrf.mxu0
        %740 = vmatprep.mubr.bf16.mxu0 0
        %741 = vmatmul.mubr.bf16.gmra.mxu0 %v543
        %v742 = vpop.f32.mrf.mxu0
        %v743 = vadd.f32 %v326, %v742
        %v744 = vpop.f32.mrf.mxu0
        %v745 = vpop.f32.mrf.mxu0
        %v746 = vadd.f32 %v326, %v745
        %v747 = vpop.f32.mrf.mxu0
        %748 = vmatprep.mubr.bf16.mxu0 0
        %749 = vmatmul.mubr.bf16.gmra.mxu0 %v546
        %v750 = vpop.f32.mrf.mxu0
        %v751 = vadd.f32 %v326, %v750
        %v752 = vpop.f32.mrf.mxu0
        %v753 = vpop.f32.mrf.mxu0
        %v754 = vadd.f32 %v326, %v753
        %v755 = vpop.f32.mrf.mxu0
        %756 = vmatprep.mubr.bf16.mxu0 0
        %757 = vmatmul.mubr.bf16.gmra.mxu0 %v549
        %v758 = vpop.f32.mrf.mxu0
        %v759 = vadd.f32 %v326, %v758
        %v760 = vpop.f32.mrf.mxu0
        %v761 = vpop.f32.mrf.mxu0
        %v762 = vadd.f32 %v326, %v761
        %v763 = vpop.f32.mrf.mxu0
        %764 = vmatprep.mubr.bf16.mxu0 0
        %765 = vmatmul.mubr.bf16.gmra.mxu0 %v552
        %v766 = vpop.f32.mrf.mxu0
        %v767 = vadd.f32 %v326, %v766
        %v768 = vpop.f32.mrf.mxu0
        %v769 = vpop.f32.mrf.mxu0
        %v770 = vadd.f32 %v326, %v769
        %v771 = vpop.f32.mrf.mxu0
        %772 = vmatprep.mubr.bf16.mxu0 0
        %773 = vmatmul.mubr.bf16.gmra.mxu0 %v555
        %v774 = vpop.f32.mrf.mxu0
        %v775 = vadd.f32 %v326, %v774
        %v776 = vpop.f32.mrf.mxu0
        %v777 = vpop.f32.mrf.mxu0
        %v778 = vadd.f32 %v326, %v777
        %v779 = vpop.f32.mrf.mxu0
        %780 = vmatprep.mubr.bf16.mxu0 0
        %781 = vmatmul.mubr.bf16.gmra.mxu0 %v558
        %v782 = vpop.f32.mrf.mxu0
        %v783 = vadd.f32 %v326, %v782
        %v784 = vpop.f32.mrf.mxu0
        %v785 = vpop.f32.mrf.mxu0
        %v786 = vadd.f32 %v326, %v785
        %v787 = vpop.f32.mrf.mxu0
        %788 = vmatprep.mubr.bf16.mxu0 0
        %789 = vmatmul.mubr.bf16.gmra.mxu0 %v561
        %v790 = vpop.f32.mrf.mxu0
        %v791 = vadd.f32 %v326, %v790
        %v792 = vpop.f32.mrf.mxu0
        %v793 = vpop.f32.mrf.mxu0
        %v794 = vadd.f32 %v326, %v793
        %v795 = vpop.f32.mrf.mxu0
        %796 = vmatprep.mubr.bf16.mxu0 0
        %797 = vmatmul.mubr.bf16.gmra.mxu0 %v564
        %v798 = vpop.f32.mrf.mxu0
        %v799 = vadd.f32 %v326, %v798
        %v800 = vpop.f32.mrf.mxu0
        %v801 = vpop.f32.mrf.mxu0
        %v802 = vadd.f32 %v326, %v801
        %v803 = vpop.f32.mrf.mxu0
        %804 = vmatprep.mubr.bf16.mxu0 0
        %805 = vmatmul.mubr.bf16.gmra.mxu0 %v567
        %v806 = vpop.f32.mrf.mxu0
        %v807 = vadd.f32 %v326, %v806
        %v808 = vpop.f32.mrf.mxu0
        %v809 = vpop.f32.mrf.mxu0
        %v810 = vadd.f32 %v326, %v809
        %v811 = vpop.f32.mrf.mxu0
        %812 = vmatprep.mubr.bf16.mxu0 0
        %813 = vmatmul.mubr.bf16.gmra.mxu0 %v570
        %v814 = vpop.f32.mrf.mxu0
        %v815 = vadd.f32 %v326, %v814
        %v816 = vpop.f32.mrf.mxu0
        %v817 = vpop.f32.mrf.mxu0
        %v818 = vadd.f32 %v326, %v817
        %v819 = vpop.f32.mrf.mxu0
        %820 = vmatprep.mubr.bf16.mxu0 0
        %821 = vmatmul.mubr.bf16.gmra.mxu0 %v573
        %v822 = vpop.f32.mrf.mxu0
        %v823 = vadd.f32 %v326, %v822
        %v824 = vpop.f32.mrf.mxu0
        %v825 = vpop.f32.mrf.mxu0
        %v826 = vadd.f32 %v326, %v825
        %v827 = vpop.f32.mrf.mxu0
        %828 = vmatprep.mubr.bf16.mxu0 0
        %829 = vmatmul.mubr.bf16.gmra.mxu0 %v576
        %v830 = vpop.f32.mrf.mxu0
        %v831 = vadd.f32 %v326, %v830
        %v832 = vpop.f32.mrf.mxu0
        %v833 = vpop.f32.mrf.mxu0
        %v834 = vadd.f32 %v326, %v833
        %v835 = vpop.f32.mrf.mxu0
        %836 = vmatprep.mubr.bf16.mxu0 0
        %837 = vmatmul.mubr.bf16.gmra.mxu0 %v579
        %v838 = vpop.f32.mrf.mxu0
        %v839 = vadd.f32 %v326, %v838
        %v840 = vpop.f32.mrf.mxu0
        %v841 = vpop.f32.mrf.mxu0
        %v842 = vadd.f32 %v326, %v841
        %v843 = vpop.f32.mrf.mxu0
        %844 = vmatprep.mubr.bf16.mxu0 0
        %845 = vmatmul.mubr.bf16.gmra.mxu0 %v582
        %v846 = vpop.f32.mrf.mxu0
        %v847 = vadd.f32 %v326, %v846
        %v848 = vpop.f32.mrf.mxu0
        %v849 = vpop.f32.mrf.mxu0
        %v850 = vadd.f32 %v326, %v849
        %v851 = vpop.f32.mrf.mxu0
        %852 = vmatprep.mubr.bf16.mxu0 0
        %853 = vmatmul.mubr.bf16.gmra.mxu0 %v585
        %v854 = vpop.f32.mrf.mxu0
        %v855 = vadd.f32 %v326, %v854
        %v856 = vpop.f32.mrf.mxu0
        %v857 = vpop.f32.mrf.mxu0
        %v858 = vadd.f32 %v326, %v857
        %v859 = vpop.f32.mrf.mxu0
        %860 = vmatprep.mubr.bf16.mxu0 0
        %861 = vmatmul.mubr.bf16.gmra.mxu0 %v588
        %v862 = vpop.f32.mrf.mxu0
        %v863 = vadd.f32 %v326, %v862
        %v864 = vpop.f32.mrf.mxu0
        %v865 = vpop.f32.mrf.mxu0
        %v866 = vadd.f32 %v326, %v865
        %v867 = vpop.f32.mrf.mxu0
        %868 = vmatprep.mubr.bf16.mxu0 0
        %869 = vmatmul.mubr.bf16.gmra.mxu0 %v591
        %v870 = vpop.f32.mrf.mxu0
        %v871 = vadd.f32 %v326, %v870
        %v872 = vpop.f32.mrf.mxu0
        %v873 = vpop.f32.mrf.mxu0
        %v874 = vadd.f32 %v326, %v873
        %v875 = vpop.f32.mrf.mxu0
        %876 = vmatprep.mubr.bf16.mxu0 0
        %877 = vmatmul.mubr.bf16.gmra.mxu0 %v594
        %v878 = vpop.f32.mrf.mxu0
        %v879 = vadd.f32 %v326, %v878
        %v880 = vpop.f32.mrf.mxu0
        %v881 = vpop.f32.mrf.mxu0
        %v882 = vadd.f32 %v326, %v881
        %v883 = vpop.f32.mrf.mxu0
        %884 = vdwg.mxu0
        %vm885 = vcmp.gt.f32.partialorder %v631, 0.0
        %vm886 = vcmp.gt.f32.partialorder %v634, 0.0
        %vm887 = vcmp.gt.f32.partialorder %v639, 0.0
        %vm888 = vcmp.gt.f32.partialorder %v642, 0.0
        %vm889 = vcmp.gt.f32.partialorder %v647, 0.0
        %vm890 = vcmp.gt.f32.partialorder %v650, 0.0
        %vm891 = vcmp.gt.f32.partialorder %v655, 0.0
        %vm892 = vcmp.gt.f32.partialorder %v658, 0.0
        %vm893 = vcmp.gt.f32.partialorder %v663, 0.0
        %vm894 = vcmp.gt.f32.partialorder %v666, 0.0
        %vm895 = vcmp.gt.f32.partialorder %v671, 0.0
        %vm896 = vcmp.gt.f32.partialorder %v674, 0.0
        %vm897 = vcmp.gt.f32.partialorder %v679, 0.0
        %vm898 = vcmp.gt.f32.partialorder %v682, 0.0
        %vm899 = vcmp.gt.f32.partialorder %v687, 0.0
        %vm900 = vcmp.gt.f32.partialorder %v690, 0.0
        %vm901 = vcmp.gt.f32.partialorder %v695, 0.0
        %vm902 = vcmp.gt.f32.partialorder %v698, 0.0
        %vm903 = vcmp.gt.f32.partialorder %v703, 0.0
        %vm904 = vcmp.gt.f32.partialorder %v706, 0.0
        %vm905 = vcmp.gt.f32.partialorder %v711, 0.0
        %vm906 = vcmp.gt.f32.partialorder %v714, 0.0
        %vm907 = vcmp.gt.f32.partialorder %v719, 0.0
        %vm908 = vcmp.gt.f32.partialorder %v722, 0.0
        %vm909 = vcmp.gt.f32.partialorder %v727, 0.0
        %vm910 = vcmp.gt.f32.partialorder %v730, 0.0
        %vm911 = vcmp.gt.f32.partialorder %v735, 0.0
        %vm912 = vcmp.gt.f32.partialorder %v738, 0.0
        %vm913 = vcmp.gt.f32.partialorder %v743, 0.0
        %vm914 = vcmp.gt.f32.partialorder %v746, 0.0
        %vm915 = vcmp.gt.f32.partialorder %v751, 0.0
        %vm916 = vcmp.gt.f32.partialorder %v754, 0.0
        %vm917 = vcmp.gt.f32.partialorder %v759, 0.0
        %vm918 = vcmp.gt.f32.partialorder %v762, 0.0
        %vm919 = vcmp.gt.f32.partialorder %v767, 0.0
        %vm920 = vcmp.gt.f32.partialorder %v770, 0.0
        %vm921 = vcmp.gt.f32.partialorder %v775, 0.0
        %vm922 = vcmp.gt.f32.partialorder %v778, 0.0
        %vm923 = vcmp.gt.f32.partialorder %v783, 0.0
        %vm924 = vcmp.gt.f32.partialorder %v786, 0.0
        %vm925 = vcmp.gt.f32.partialorder %v791, 0.0
        %vm926 = vcmp.gt.f32.partialorder %v794, 0.0
        %vm927 = vcmp.gt.f32.partialorder %v799, 0.0
        %vm928 = vcmp.gt.f32.partialorder %v802, 0.0
        %vm929 = vcmp.gt.f32.partialorder %v807, 0.0
        %vm930 = vcmp.gt.f32.partialorder %v810, 0.0
        %vm931 = vcmp.gt.f32.partialorder %v815, 0.0
        %vm932 = vcmp.gt.f32.partialorder %v818, 0.0
        %vm933 = vcmp.gt.f32.partialorder %v823, 0.0
        %vm934 = vcmp.gt.f32.partialorder %v826, 0.0
        %vm935 = vcmp.gt.f32.partialorder %v831, 0.0
        %vm936 = vcmp.gt.f32.partialorder %v834, 0.0
        %vm937 = vcmp.gt.f32.partialorder %v839, 0.0
        %vm938 = vcmp.gt.f32.partialorder %v842, 0.0
        %vm939 = vcmp.gt.f32.partialorder %v847, 0.0
        %vm940 = vcmp.gt.f32.partialorder %v850, 0.0
        %vm941 = vcmp.gt.f32.partialorder %v855, 0.0
        %vm942 = vcmp.gt.f32.partialorder %v858, 0.0
        %vm943 = vcmp.gt.f32.partialorder %v863, 0.0
        %vm944 = vcmp.gt.f32.partialorder %v866, 0.0
        %vm945 = vcmp.gt.f32.partialorder %v871, 0.0
        %vm946 = vcmp.gt.f32.partialorder %v874, 0.0
        %vm947 = vcmp.gt.f32.partialorder %v879, 0.0
        %vm948 = vcmp.gt.f32.partialorder %v882, 0.0
        %v949 = vmul.f32 %v631, 0.01
        %v950 = vmul.f32 %v634, 0.01
        %v951 = vmul.f32 %v639, 0.01
        %v952 = vmul.f32 %v642, 0.01
        %v953 = vmul.f32 %v647, 0.01
        %v954 = vmul.f32 %v650, 0.01
        %v955 = vmul.f32 %v655, 0.01
        %v956 = vmul.f32 %v658, 0.01
        %v957 = vmul.f32 %v663, 0.01
        %v958 = vmul.f32 %v666, 0.01
        %v959 = vmul.f32 %v671, 0.01
        %v960 = vmul.f32 %v674, 0.01
        %v961 = vmul.f32 %v679, 0.01
        %v962 = vmul.f32 %v682, 0.01
        %v963 = vmul.f32 %v687, 0.01
        %v964 = vmul.f32 %v690, 0.01
        %v965 = vmul.f32 %v695, 0.01
        %v966 = vmul.f32 %v698, 0.01
        %v967 = vmul.f32 %v703, 0.01
        %v968 = vmul.f32 %v706, 0.01
        %v969 = vmul.f32 %v711, 0.01
        %v970 = vmul.f32 %v714, 0.01
        %v971 = vmul.f32 %v719, 0.01
        %v972 = vmul.f32 %v722, 0.01
        %v973 = vmul.f32 %v727, 0.01
        %v974 = vmul.f32 %v730, 0.01
        %v975 = vmul.f32 %v735, 0.01
        %v976 = vmul.f32 %v738, 0.01
        %v977 = vmul.f32 %v743, 0.01
        %v978 = vmul.f32 %v746, 0.01
        %v979 = vmul.f32 %v751, 0.01
        %v980 = vmul.f32 %v754, 0.01
        %v981 = vmul.f32 %v759, 0.01
        %v982 = vmul.f32 %v762, 0.01
        %v983 = vmul.f32 %v767, 0.01
        %v984 = vmul.f32 %v770, 0.01
        %v985 = vmul.f32 %v775, 0.01
        %v986 = vmul.f32 %v778, 0.01
        %v987 = vmul.f32 %v783, 0.01
        %v988 = vmul.f32 %v786, 0.01
        %v989 = vmul.f32 %v791, 0.01
        %v990 = vmul.f32 %v794, 0.01
        %v991 = vmul.f32 %v799, 0.01
        %v992 = vmul.f32 %v802, 0.01
        %v993 = vmul.f32 %v807, 0.01
        %v994 = vmul.f32 %v810, 0.01
        %v995 = vmul.f32 %v815, 0.01
        %v996 = vmul.f32 %v818, 0.01
        %v997 = vmul.f32 %v823, 0.01
        %v998 = vmul.f32 %v826, 0.01
        %v999 = vmul.f32 %v831, 0.01
        %v1000 = vmul.f32 %v834, 0.01
        %v1001 = vmul.f32 %v839, 0.01
        %v1002 = vmul.f32 %v842, 0.01
        %v1003 = vmul.f32 %v847, 0.01
        %v1004 = vmul.f32 %v850, 0.01
        %v1005 = vmul.f32 %v855, 0.01
        %v1006 = vmul.f32 %v858, 0.01
        %v1007 = vmul.f32 %v863, 0.01
        %v1008 = vmul.f32 %v866, 0.01
        %v1009 = vmul.f32 %v871, 0.01
        %v1010 = vmul.f32 %v874, 0.01
        %v1011 = vmul.f32 %v879, 0.01
        %v1012 = vmul.f32 %v882, 0.01
        %v1013 = vsel %vm885, %v631, %v949
        %v1014 = vsel %vm886, %v634, %v950
        %v1015 = vsel %vm887, %v639, %v951
        %v1016 = vsel %vm888, %v642, %v952
        %v1017 = vsel %vm889, %v647, %v953
        %v1018 = vsel %vm890, %v650, %v954
        %v1019 = vsel %vm891, %v655, %v955
        %v1020 = vsel %vm892, %v658, %v956
        %v1021 = vsel %vm893, %v663, %v957
        %v1022 = vsel %vm894, %v666, %v958
        %v1023 = vsel %vm895, %v671, %v959
        %v1024 = vsel %vm896, %v674, %v960
        %v1025 = vsel %vm897, %v679, %v961
        %v1026 = vsel %vm898, %v682, %v962
        %v1027 = vsel %vm899, %v687, %v963
        %v1028 = vsel %vm900, %v690, %v964
        %v1029 = vsel %vm901, %v695, %v965
        %v1030 = vsel %vm902, %v698, %v966
        %v1031 = vsel %vm903, %v703, %v967
        %v1032 = vsel %vm904, %v706, %v968
        %v1033 = vsel %vm905, %v711, %v969
        %v1034 = vsel %vm906, %v714, %v970
        %v1035 = vsel %vm907, %v719, %v971
        %v1036 = vsel %vm908, %v722, %v972
        %v1037 = vsel %vm909, %v727, %v973
        %v1038 = vsel %vm910, %v730, %v974
        %v1039 = vsel %vm911, %v735, %v975
        %v1040 = vsel %vm912, %v738, %v976
        %v1041 = vsel %vm913, %v743, %v977
        %v1042 = vsel %vm914, %v746, %v978
        %v1043 = vsel %vm915, %v751, %v979
        %v1044 = vsel %vm916, %v754, %v980
        %v1045 = vsel %vm917, %v759, %v981
        %v1046 = vsel %vm918, %v762, %v982
        %v1047 = vsel %vm919, %v767, %v983
        %v1048 = vsel %vm920, %v770, %v984
        %v1049 = vsel %vm921, %v775, %v985
        %v1050 = vsel %vm922, %v778, %v986
        %v1051 = vsel %vm923, %v783, %v987
        %v1052 = vsel %vm924, %v786, %v988
        %v1053 = vsel %vm925, %v791, %v989
        %v1054 = vsel %vm926, %v794, %v990
        %v1055 = vsel %vm927, %v799, %v991
        %v1056 = vsel %vm928, %v802, %v992
        %v1057 = vsel %vm929, %v807, %v993
        %v1058 = vsel %vm930, %v810, %v994
        %v1059 = vsel %vm931, %v815, %v995
        %v1060 = vsel %vm932, %v818, %v996
        %v1061 = vsel %vm933, %v823, %v997
        %v1062 = vsel %vm934, %v826, %v998
        %v1063 = vsel %vm935, %v831, %v999
        %v1064 = vsel %vm936, %v834, %v1000
        %v1065 = vsel %vm937, %v839, %v1001
        %v1066 = vsel %vm938, %v842, %v1002
        %v1067 = vsel %vm939, %v847, %v1003
        %v1068 = vsel %vm940, %v850, %v1004
        %v1069 = vsel %vm941, %v855, %v1005
        %v1070 = vsel %vm942, %v858, %v1006
        %v1071 = vsel %vm943, %v863, %v1007
        %v1072 = vsel %vm944, %v866, %v1008
        %v1073 = vsel %vm945, %v871, %v1009
        %v1074 = vsel %vm946, %v874, %v1010
        %v1075 = vsel %vm947, %v879, %v1011
        %v1076 = vsel %vm948, %v882, %v1012
        %v1077 = vpack.c.bf16 %v1014, %v1013
        %v1078 = vpack.c.bf16 %v1016, %v1015
        %v1079 = vpack.c.bf16 %v1018, %v1017
        %v1080 = vpack.c.bf16 %v1020, %v1019
        %v1081 = vpack.c.bf16 %v1022, %v1021
        %v1082 = vpack.c.bf16 %v1024, %v1023
        %v1083 = vpack.c.bf16 %v1026, %v1025
        %v1084 = vpack.c.bf16 %v1028, %v1027
        %v1085 = vpack.c.bf16 %v1030, %v1029
        %v1086 = vpack.c.bf16 %v1032, %v1031
        %v1087 = vpack.c.bf16 %v1034, %v1033
        %v1088 = vpack.c.bf16 %v1036, %v1035
        %v1089 = vpack.c.bf16 %v1038, %v1037
        %v1090 = vpack.c.bf16 %v1040, %v1039
        %v1091 = vpack.c.bf16 %v1042, %v1041
        %v1092 = vpack.c.bf16 %v1044, %v1043
        %v1093 = vpack.c.bf16 %v1046, %v1045
        %v1094 = vpack.c.bf16 %v1048, %v1047
        %v1095 = vpack.c.bf16 %v1050, %v1049
        %v1096 = vpack.c.bf16 %v1052, %v1051
        %v1097 = vpack.c.bf16 %v1054, %v1053
        %v1098 = vpack.c.bf16 %v1056, %v1055
        %v1099 = vpack.c.bf16 %v1058, %v1057
        %v1100 = vpack.c.bf16 %v1060, %v1059
        %v1101 = vpack.c.bf16 %v1062, %v1061
        %v1102 = vpack.c.bf16 %v1064, %v1063
        %v1103 = vpack.c.bf16 %v1066, %v1065
        %v1104 = vpack.c.bf16 %v1068, %v1067
        %v1105 = vpack.c.bf16 %v1070, %v1069
        %v1106 = vpack.c.bf16 %v1072, %v1071
        %v1107 = vpack.c.bf16 %v1074, %v1073
        %v1108 = vpack.c.bf16 %v1076, %v1075
        %v1109 = vld [vmem:[%s2 + $0x10] sm:$0xf]
        %v1110 = vld [vmem:[%s2 + $0x14] sm:$0xf]
        %v1111 = vld [vmem:[%s2 + $0x18] sm:$0xf]
        %v1112 = vld [vmem:[%s2 + $0x1c] sm:$0xf]
        %v1113 = vld [vmem:[%s2 + $0x20] sm:$0xf]
        %v1114 = vld [vmem:[%s2 + $0x24] sm:$0xf]
        %v1115 = vld [vmem:[%s2 + $0x28] sm:$0xf]
        %v1116 = vld [vmem:[%s2 + $0x2c] sm:$0xf]
        %v1117 = vld [vmem:[%s2 + $0x30] sm:$0xf]
        %v1118 = vld [vmem:[%s2 + $0x34] sm:$0xf]
        %v1119 = vld [vmem:[%s2 + $0x38] sm:$0xf]
        %v1120 = vld [vmem:[%s2 + $0x3c] sm:$0xf]
        %v1121 = vld [vmem:[%s2 + $0x40] sm:$0xf]
        %v1122 = vld [vmem:[%s2 + $0x44] sm:$0xf]
        %v1123 = vld [vmem:[%s2 + $0x48] sm:$0xf]
        %v1124 = vld [vmem:[%s2 + $0x4c] sm:$0xf]
        %v1125 = vld [vmem:[%s3 + $0x1] sm:$0x1]
        %v1126 = vlaneseq
        %v1127 = vshrl.u32 %v1126, 7
        %v1128 = vsub.s32 0, %v1127
        %v1129 = vrot.slane %v1125, %v1128
        %v1146 = vunpack.c.l.b16 %v1109
        %v1147 = vunpack.c.l.b16 %v1110
        %v1148 = vunpack.c.l.b16 %v1111
        %v1149 = vunpack.c.l.b16 %v1112
        %v1150 = vunpack.c.l.b16 %v1113
        %v1151 = vunpack.c.l.b16 %v1114
        %v1152 = vunpack.c.l.b16 %v1115
        %v1153 = vunpack.c.l.b16 %v1116
        %v1154 = vunpack.c.l.b16 %v1117
        %v1155 = vunpack.c.l.b16 %v1118
        %v1156 = vunpack.c.l.b16 %v1119
        %v1157 = vunpack.c.l.b16 %v1120
        %v1158 = vunpack.c.l.b16 %v1121
        %v1159 = vunpack.c.l.b16 %v1122
        %v1160 = vunpack.c.l.b16 %v1123
        %v1161 = vunpack.c.l.b16 %v1124
        %v1162 = vpack.c.b16 %v1147, %v1146
        %v1163 = vpack.c.b16 %v1149, %v1148
        %v1164 = vpack.c.b16 %v1151, %v1150
        %v1165 = vpack.c.b16 %v1153, %v1152
        %v1166 = vpack.c.b16 %v1155, %v1154
        %v1167 = vpack.c.b16 %v1157, %v1156
        %v1168 = vpack.c.b16 %v1159, %v1158
        %v1169 = vpack.c.b16 %v1161, %v1160
        %1178 = vmatprep.subr.bf16.mxu0 0
        %1179 = vmatpush1.bf16.msra.mxu0 %v1169
        %1180 = vmatprep.subr.bf16.mxu0 0
        %1181 = vmatpush1.bf16.msra.mxu0 %v1168
        %1182 = vmatprep.subr.bf16.mxu0 0
        %1183 = vmatpush1.bf16.msra.mxu0 %v1167
        %1184 = vmatprep.subr.bf16.mxu0 0
        %1185 = vmatpush1.bf16.msra.mxu0 %v1166
        %1186 = vmatprep.subr.bf16.mxu0 0
        %1187 = vmatpush1.bf16.msra.mxu0 %v1165
        %1188 = vmatprep.subr.bf16.mxu0 0
        %1189 = vmatpush1.bf16.msra.mxu0 %v1164
        %1190 = vmatprep.subr.bf16.mxu0 0
        %1191 = vmatpush1.bf16.msra.mxu0 %v1163
        %1192 = vmatprep.subr.bf16.mxu0 0
        %1193 = vmatpush1.bf16.msra.mxu0 %v1162
        %1194 = vmatprep.subr.bf16.mxu0 0
        %1195 = vmatpush2.bf16.msra.mxu0 0
        %1196 = vmatprep.subr.bf16.mxu0 0
        %1197 = vmatpush2.bf16.msra.mxu0 0
        %1198 = vmatprep.subr.bf16.mxu0 0
        %1199 = vmatpush2.bf16.msra.mxu0 0
        %1200 = vmatprep.subr.bf16.mxu0 0
        %1201 = vmatpush2.bf16.msra.mxu0 0
        %1202 = vmatprep.subr.bf16.mxu0 0
        %1203 = vmatpush2.bf16.msra.mxu0 0
        %1204 = vmatprep.subr.bf16.mxu0 0
        %1205 = vmatpush2.bf16.msra.mxu0 0
        %1206 = vmatprep.subr.bf16.mxu0 0
        %1207 = vmatpush2.bf16.msra.mxu0 0
        %1208 = vmatprep.subr.bf16.mxu0 0
        %1209 = vmatpush2.bf16.msra.mxu0 0
        %1210 = vmatprep.mubr.bf16.mxu0 0
        %1211 = vmatmul.mubr.bf16.gmra.mxu0 %v1077
        %v1212 = vpop.f32.mrf.mxu0
        %v1213 = vadd.f32 %v1129, %v1212
        %v1214 = vpop.f32.mrf.mxu0
        %v1215 = vpop.f32.mrf.mxu0
        %v1216 = vadd.f32 %v1129, %v1215
        %v1217 = vpop.f32.mrf.mxu0
        %1218 = vmatprep.mubr.bf16.mxu0 0
        %1219 = vmatmul.mubr.bf16.gmra.mxu0 %v1078
        %v1220 = vpop.f32.mrf.mxu0
        %v1221 = vadd.f32 %v1129, %v1220
        %v1222 = vpop.f32.mrf.mxu0
        %v1223 = vpop.f32.mrf.mxu0
        %v1224 = vadd.f32 %v1129, %v1223
        %v1225 = vpop.f32.mrf.mxu0
        %1226 = vmatprep.mubr.bf16.mxu0 0
        %1227 = vmatmul.mubr.bf16.gmra.mxu0 %v1079
        %v1228 = vpop.f32.mrf.mxu0
        %v1229 = vadd.f32 %v1129, %v1228
        %v1230 = vpop.f32.mrf.mxu0
        %v1231 = vpop.f32.mrf.mxu0
        %v1232 = vadd.f32 %v1129, %v1231
        %v1233 = vpop.f32.mrf.mxu0
        %1234 = vmatprep.mubr.bf16.mxu0 0
        %1235 = vmatmul.mubr.bf16.gmra.mxu0 %v1080
        %v1236 = vpop.f32.mrf.mxu0
        %v1237 = vadd.f32 %v1129, %v1236
        %v1238 = vpop.f32.mrf.mxu0
        %v1239 = vpop.f32.mrf.mxu0
        %v1240 = vadd.f32 %v1129, %v1239
        %v1241 = vpop.f32.mrf.mxu0
        %1242 = vmatprep.mubr.bf16.mxu0 0
        %1243 = vmatmul.mubr.bf16.gmra.mxu0 %v1081
        %v1244 = vpop.f32.mrf.mxu0
        %v1245 = vadd.f32 %v1129, %v1244
        %v1246 = vpop.f32.mrf.mxu0
        %v1247 = vpop.f32.mrf.mxu0
        %v1248 = vadd.f32 %v1129, %v1247
        %v1249 = vpop.f32.mrf.mxu0
        %1250 = vmatprep.mubr.bf16.mxu0 0
        %1251 = vmatmul.mubr.bf16.gmra.mxu0 %v1082
        %v1252 = vpop.f32.mrf.mxu0
        %v1253 = vadd.f32 %v1129, %v1252
        %v1254 = vpop.f32.mrf.mxu0
        %v1255 = vpop.f32.mrf.mxu0
        %v1256 = vadd.f32 %v1129, %v1255
        %v1257 = vpop.f32.mrf.mxu0
        %1258 = vmatprep.mubr.bf16.mxu0 0
        %1259 = vmatmul.mubr.bf16.gmra.mxu0 %v1083
        %v1260 = vpop.f32.mrf.mxu0
        %v1261 = vadd.f32 %v1129, %v1260
        %v1262 = vpop.f32.mrf.mxu0
        %v1263 = vpop.f32.mrf.mxu0
        %v1264 = vadd.f32 %v1129, %v1263
        %v1265 = vpop.f32.mrf.mxu0
        %1266 = vmatprep.mubr.bf16.mxu0 0
        %1267 = vmatmul.mubr.bf16.gmra.mxu0 %v1084
        %v1268 = vpop.f32.mrf.mxu0
        %v1269 = vadd.f32 %v1129, %v1268
        %v1270 = vpop.f32.mrf.mxu0
        %v1271 = vpop.f32.mrf.mxu0
        %v1272 = vadd.f32 %v1129, %v1271
        %v1273 = vpop.f32.mrf.mxu0
        %1274 = vmatprep.mubr.bf16.mxu0 0
        %1275 = vmatmul.mubr.bf16.gmra.mxu0 %v1085
        %v1276 = vpop.f32.mrf.mxu0
        %v1277 = vadd.f32 %v1129, %v1276
        %v1278 = vpop.f32.mrf.mxu0
        %v1279 = vpop.f32.mrf.mxu0
        %v1280 = vadd.f32 %v1129, %v1279
        %v1281 = vpop.f32.mrf.mxu0
        %1282 = vmatprep.mubr.bf16.mxu0 0
        %1283 = vmatmul.mubr.bf16.gmra.mxu0 %v1086
        %v1284 = vpop.f32.mrf.mxu0
        %v1285 = vadd.f32 %v1129, %v1284
        %v1286 = vpop.f32.mrf.mxu0
        %v1287 = vpop.f32.mrf.mxu0
        %v1288 = vadd.f32 %v1129, %v1287
        %v1289 = vpop.f32.mrf.mxu0
        %1290 = vmatprep.mubr.bf16.mxu0 0
        %1291 = vmatmul.mubr.bf16.gmra.mxu0 %v1087
        %v1292 = vpop.f32.mrf.mxu0
        %v1293 = vadd.f32 %v1129, %v1292
        %v1294 = vpop.f32.mrf.mxu0
        %v1295 = vpop.f32.mrf.mxu0
        %v1296 = vadd.f32 %v1129, %v1295
        %v1297 = vpop.f32.mrf.mxu0
        %1298 = vmatprep.mubr.bf16.mxu0 0
        %1299 = vmatmul.mubr.bf16.gmra.mxu0 %v1088
        %v1300 = vpop.f32.mrf.mxu0
        %v1301 = vadd.f32 %v1129, %v1300
        %v1302 = vpop.f32.mrf.mxu0
        %v1303 = vpop.f32.mrf.mxu0
        %v1304 = vadd.f32 %v1129, %v1303
        %v1305 = vpop.f32.mrf.mxu0
        %1306 = vmatprep.mubr.bf16.mxu0 0
        %1307 = vmatmul.mubr.bf16.gmra.mxu0 %v1089
        %v1308 = vpop.f32.mrf.mxu0
        %v1309 = vadd.f32 %v1129, %v1308
        %v1310 = vpop.f32.mrf.mxu0
        %v1311 = vpop.f32.mrf.mxu0
        %v1312 = vadd.f32 %v1129, %v1311
        %v1313 = vpop.f32.mrf.mxu0
        %1314 = vmatprep.mubr.bf16.mxu0 0
        %1315 = vmatmul.mubr.bf16.gmra.mxu0 %v1090
        %v1316 = vpop.f32.mrf.mxu0
        %v1317 = vadd.f32 %v1129, %v1316
        %v1318 = vpop.f32.mrf.mxu0
        %v1319 = vpop.f32.mrf.mxu0
        %v1320 = vadd.f32 %v1129, %v1319
        %v1321 = vpop.f32.mrf.mxu0
        %1322 = vmatprep.mubr.bf16.mxu0 0
        %1323 = vmatmul.mubr.bf16.gmra.mxu0 %v1091
        %v1324 = vpop.f32.mrf.mxu0
        %v1325 = vadd.f32 %v1129, %v1324
        %v1326 = vpop.f32.mrf.mxu0
        %v1327 = vpop.f32.mrf.mxu0
        %v1328 = vadd.f32 %v1129, %v1327
        %v1329 = vpop.f32.mrf.mxu0
        %1330 = vmatprep.mubr.bf16.mxu0 0
        %1331 = vmatmul.mubr.bf16.gmra.mxu0 %v1092
        %v1332 = vpop.f32.mrf.mxu0
        %v1333 = vadd.f32 %v1129, %v1332
        %v1334 = vpop.f32.mrf.mxu0
        %v1335 = vpop.f32.mrf.mxu0
        %v1336 = vadd.f32 %v1129, %v1335
        %v1337 = vpop.f32.mrf.mxu0
        %1338 = vmatprep.mubr.bf16.mxu0 0
        %1339 = vmatmul.mubr.bf16.gmra.mxu0 %v1093
        %v1340 = vpop.f32.mrf.mxu0
        %v1341 = vadd.f32 %v1129, %v1340
        %v1342 = vpop.f32.mrf.mxu0
        %v1343 = vpop.f32.mrf.mxu0
        %v1344 = vadd.f32 %v1129, %v1343
        %v1345 = vpop.f32.mrf.mxu0
        %1346 = vmatprep.mubr.bf16.mxu0 0
        %1347 = vmatmul.mubr.bf16.gmra.mxu0 %v1094
        %v1348 = vpop.f32.mrf.mxu0
        %v1349 = vadd.f32 %v1129, %v1348
        %v1350 = vpop.f32.mrf.mxu0
        %v1351 = vpop.f32.mrf.mxu0
        %v1352 = vadd.f32 %v1129, %v1351
        %v1353 = vpop.f32.mrf.mxu0
        %1354 = vmatprep.mubr.bf16.mxu0 0
        %1355 = vmatmul.mubr.bf16.gmra.mxu0 %v1095
        %v1356 = vpop.f32.mrf.mxu0
        %v1357 = vadd.f32 %v1129, %v1356
        %v1358 = vpop.f32.mrf.mxu0
        %v1359 = vpop.f32.mrf.mxu0
        %v1360 = vadd.f32 %v1129, %v1359
        %v1361 = vpop.f32.mrf.mxu0
        %1362 = vmatprep.mubr.bf16.mxu0 0
        %1363 = vmatmul.mubr.bf16.gmra.mxu0 %v1096
        %v1364 = vpop.f32.mrf.mxu0
        %v1365 = vadd.f32 %v1129, %v1364
        %v1366 = vpop.f32.mrf.mxu0
        %v1367 = vpop.f32.mrf.mxu0
        %v1368 = vadd.f32 %v1129, %v1367
        %v1369 = vpop.f32.mrf.mxu0
        %1370 = vmatprep.mubr.bf16.mxu0 0
        %1371 = vmatmul.mubr.bf16.gmra.mxu0 %v1097
        %v1372 = vpop.f32.mrf.mxu0
        %v1373 = vadd.f32 %v1129, %v1372
        %v1374 = vpop.f32.mrf.mxu0
        %v1375 = vpop.f32.mrf.mxu0
        %v1376 = vadd.f32 %v1129, %v1375
        %v1377 = vpop.f32.mrf.mxu0
        %1378 = vmatprep.mubr.bf16.mxu0 0
        %1379 = vmatmul.mubr.bf16.gmra.mxu0 %v1098
        %v1380 = vpop.f32.mrf.mxu0
        %v1381 = vadd.f32 %v1129, %v1380
        %v1382 = vpop.f32.mrf.mxu0
        %v1383 = vpop.f32.mrf.mxu0
        %v1384 = vadd.f32 %v1129, %v1383
        %v1385 = vpop.f32.mrf.mxu0
        %1386 = vmatprep.mubr.bf16.mxu0 0
        %1387 = vmatmul.mubr.bf16.gmra.mxu0 %v1099
        %v1388 = vpop.f32.mrf.mxu0
        %v1389 = vadd.f32 %v1129, %v1388
        %v1390 = vpop.f32.mrf.mxu0
        %v1391 = vpop.f32.mrf.mxu0
        %v1392 = vadd.f32 %v1129, %v1391
        %v1393 = vpop.f32.mrf.mxu0
        %1394 = vmatprep.mubr.bf16.mxu0 0
        %1395 = vmatmul.mubr.bf16.gmra.mxu0 %v1100
        %v1396 = vpop.f32.mrf.mxu0
        %v1397 = vadd.f32 %v1129, %v1396
        %v1398 = vpop.f32.mrf.mxu0
        %v1399 = vpop.f32.mrf.mxu0
        %v1400 = vadd.f32 %v1129, %v1399
        %v1401 = vpop.f32.mrf.mxu0
        %1402 = vmatprep.mubr.bf16.mxu0 0
        %1403 = vmatmul.mubr.bf16.gmra.mxu0 %v1101
        %v1404 = vpop.f32.mrf.mxu0
        %v1405 = vadd.f32 %v1129, %v1404
        %v1406 = vpop.f32.mrf.mxu0
        %v1407 = vpop.f32.mrf.mxu0
        %v1408 = vadd.f32 %v1129, %v1407
        %v1409 = vpop.f32.mrf.mxu0
        %1410 = vmatprep.mubr.bf16.mxu0 0
        %1411 = vmatmul.mubr.bf16.gmra.mxu0 %v1102
        %v1412 = vpop.f32.mrf.mxu0
        %v1413 = vadd.f32 %v1129, %v1412
        %v1414 = vpop.f32.mrf.mxu0
        %v1415 = vpop.f32.mrf.mxu0
        %v1416 = vadd.f32 %v1129, %v1415
        %v1417 = vpop.f32.mrf.mxu0
        %1418 = vmatprep.mubr.bf16.mxu0 0
        %1419 = vmatmul.mubr.bf16.gmra.mxu0 %v1103
        %v1420 = vpop.f32.mrf.mxu0
        %v1421 = vadd.f32 %v1129, %v1420
        %v1422 = vpop.f32.mrf.mxu0
        %v1423 = vpop.f32.mrf.mxu0
        %v1424 = vadd.f32 %v1129, %v1423
        %v1425 = vpop.f32.mrf.mxu0
        %1426 = vmatprep.mubr.bf16.mxu0 0
        %1427 = vmatmul.mubr.bf16.gmra.mxu0 %v1104
        %v1428 = vpop.f32.mrf.mxu0
        %v1429 = vadd.f32 %v1129, %v1428
        %v1430 = vpop.f32.mrf.mxu0
        %v1431 = vpop.f32.mrf.mxu0
        %v1432 = vadd.f32 %v1129, %v1431
        %v1433 = vpop.f32.mrf.mxu0
        %1434 = vmatprep.mubr.bf16.mxu0 0
        %1435 = vmatmul.mubr.bf16.gmra.mxu0 %v1105
        %v1436 = vpop.f32.mrf.mxu0
        %v1437 = vadd.f32 %v1129, %v1436
        %v1438 = vpop.f32.mrf.mxu0
        %v1439 = vpop.f32.mrf.mxu0
        %v1440 = vadd.f32 %v1129, %v1439
        %v1441 = vpop.f32.mrf.mxu0
        %1442 = vmatprep.mubr.bf16.mxu0 0
        %1443 = vmatmul.mubr.bf16.gmra.mxu0 %v1106
        %v1444 = vpop.f32.mrf.mxu0
        %v1445 = vadd.f32 %v1129, %v1444
        %v1446 = vpop.f32.mrf.mxu0
        %v1447 = vpop.f32.mrf.mxu0
        %v1448 = vadd.f32 %v1129, %v1447
        %v1449 = vpop.f32.mrf.mxu0
        %1450 = vmatprep.mubr.bf16.mxu0 0
        %1451 = vmatmul.mubr.bf16.gmra.mxu0 %v1107
        %v1452 = vpop.f32.mrf.mxu0
        %v1453 = vadd.f32 %v1129, %v1452
        %v1454 = vpop.f32.mrf.mxu0
        %v1455 = vpop.f32.mrf.mxu0
        %v1456 = vadd.f32 %v1129, %v1455
        %v1457 = vpop.f32.mrf.mxu0
        %1458 = vmatprep.mubr.bf16.mxu0 0
        %1459 = vmatmul.mubr.bf16.gmra.mxu0 %v1108
        %v1460 = vpop.f32.mrf.mxu0
        %v1461 = vadd.f32 %v1129, %v1460
        %v1462 = vpop.f32.mrf.mxu0
        %v1463 = vpop.f32.mrf.mxu0
        %v1464 = vadd.f32 %v1129, %v1463
        %v1465 = vpop.f32.mrf.mxu0
        %1466 = vdwg.mxu0
        %vm1467 = vcmp.gt.f32.partialorder %v1213, 0.0
        %vm1468 = vcmp.gt.f32.partialorder %v1216, 0.0
        %vm1469 = vcmp.gt.f32.partialorder %v1221, 0.0
        %vm1470 = vcmp.gt.f32.partialorder %v1224, 0.0
        %vm1471 = vcmp.gt.f32.partialorder %v1229, 0.0
        %vm1472 = vcmp.gt.f32.partialorder %v1232, 0.0
        %vm1473 = vcmp.gt.f32.partialorder %v1237, 0.0
        %vm1474 = vcmp.gt.f32.partialorder %v1240, 0.0
        %vm1475 = vcmp.gt.f32.partialorder %v1245, 0.0
        %vm1476 = vcmp.gt.f32.partialorder %v1248, 0.0
        %vm1477 = vcmp.gt.f32.partialorder %v1253, 0.0
        %vm1478 = vcmp.gt.f32.partialorder %v1256, 0.0
        %vm1479 = vcmp.gt.f32.partialorder %v1261, 0.0
        %vm1480 = vcmp.gt.f32.partialorder %v1264, 0.0
        %vm1481 = vcmp.gt.f32.partialorder %v1269, 0.0
        %vm1482 = vcmp.gt.f32.partialorder %v1272, 0.0
        %vm1483 = vcmp.gt.f32.partialorder %v1277, 0.0
        %vm1484 = vcmp.gt.f32.partialorder %v1280, 0.0
        %vm1485 = vcmp.gt.f32.partialorder %v1285, 0.0
        %vm1486 = vcmp.gt.f32.partialorder %v1288, 0.0
        %vm1487 = vcmp.gt.f32.partialorder %v1293, 0.0
        %vm1488 = vcmp.gt.f32.partialorder %v1296, 0.0
        %vm1489 = vcmp.gt.f32.partialorder %v1301, 0.0
        %vm1490 = vcmp.gt.f32.partialorder %v1304, 0.0
        %vm1491 = vcmp.gt.f32.partialorder %v1309, 0.0
        %vm1492 = vcmp.gt.f32.partialorder %v1312, 0.0
        %vm1493 = vcmp.gt.f32.partialorder %v1317, 0.0
        %vm1494 = vcmp.gt.f32.partialorder %v1320, 0.0
        %vm1495 = vcmp.gt.f32.partialorder %v1325, 0.0
        %vm1496 = vcmp.gt.f32.partialorder %v1328, 0.0
        %vm1497 = vcmp.gt.f32.partialorder %v1333, 0.0
        %vm1498 = vcmp.gt.f32.partialorder %v1336, 0.0
        %vm1499 = vcmp.gt.f32.partialorder %v1341, 0.0
        %vm1500 = vcmp.gt.f32.partialorder %v1344, 0.0
        %vm1501 = vcmp.gt.f32.partialorder %v1349, 0.0
        %vm1502 = vcmp.gt.f32.partialorder %v1352, 0.0
        %vm1503 = vcmp.gt.f32.partialorder %v1357, 0.0
        %vm1504 = vcmp.gt.f32.partialorder %v1360, 0.0
        %vm1505 = vcmp.gt.f32.partialorder %v1365, 0.0
        %vm1506 = vcmp.gt.f32.partialorder %v1368, 0.0
        %vm1507 = vcmp.gt.f32.partialorder %v1373, 0.0
        %vm1508 = vcmp.gt.f32.partialorder %v1376, 0.0
        %vm1509 = vcmp.gt.f32.partialorder %v1381, 0.0
        %vm1510 = vcmp.gt.f32.partialorder %v1384, 0.0
        %vm1511 = vcmp.gt.f32.partialorder %v1389, 0.0
        %vm1512 = vcmp.gt.f32.partialorder %v1392, 0.0
        %vm1513 = vcmp.gt.f32.partialorder %v1397, 0.0
        %vm1514 = vcmp.gt.f32.partialorder %v1400, 0.0
        %vm1515 = vcmp.gt.f32.partialorder %v1405, 0.0
        %vm1516 = vcmp.gt.f32.partialorder %v1408, 0.0
        %vm1517 = vcmp.gt.f32.partialorder %v1413, 0.0
        %vm1518 = vcmp.gt.f32.partialorder %v1416, 0.0
        %vm1519 = vcmp.gt.f32.partialorder %v1421, 0.0
        %vm1520 = vcmp.gt.f32.partialorder %v1424, 0.0
        %vm1521 = vcmp.gt.f32.partialorder %v1429, 0.0
        %vm1522 = vcmp.gt.f32.partialorder %v1432, 0.0
        %vm1523 = vcmp.gt.f32.partialorder %v1437, 0.0
        %vm1524 = vcmp.gt.f32.partialorder %v1440, 0.0
        %vm1525 = vcmp.gt.f32.partialorder %v1445, 0.0
        %vm1526 = vcmp.gt.f32.partialorder %v1448, 0.0
        %vm1527 = vcmp.gt.f32.partialorder %v1453, 0.0
        %vm1528 = vcmp.gt.f32.partialorder %v1456, 0.0
        %vm1529 = vcmp.gt.f32.partialorder %v1461, 0.0
        %vm1530 = vcmp.gt.f32.partialorder %v1464, 0.0
        %v1531 = vmul.f32 %v1213, 0.01
        %v1532 = vmul.f32 %v1216, 0.01
        %v1533 = vmul.f32 %v1221, 0.01
        %v1534 = vmul.f32 %v1224, 0.01
        %v1535 = vmul.f32 %v1229, 0.01
        %v1536 = vmul.f32 %v1232, 0.01
        %v1537 = vmul.f32 %v1237, 0.01
        %v1538 = vmul.f32 %v1240, 0.01
        %v1539 = vmul.f32 %v1245, 0.01
        %v1540 = vmul.f32 %v1248, 0.01
        %v1541 = vmul.f32 %v1253, 0.01
        %v1542 = vmul.f32 %v1256, 0.01
        %v1543 = vmul.f32 %v1261, 0.01
        %v1544 = vmul.f32 %v1264, 0.01
        %v1545 = vmul.f32 %v1269, 0.01
        %v1546 = vmul.f32 %v1272, 0.01
        %v1547 = vmul.f32 %v1277, 0.01
        %v1548 = vmul.f32 %v1280, 0.01
        %v1549 = vmul.f32 %v1285, 0.01
        %v1550 = vmul.f32 %v1288, 0.01
        %v1551 = vmul.f32 %v1293, 0.01
        %v1552 = vmul.f32 %v1296, 0.01
        %v1553 = vmul.f32 %v1301, 0.01
        %v1554 = vmul.f32 %v1304, 0.01
        %v1555 = vmul.f32 %v1309, 0.01
        %v1556 = vmul.f32 %v1312, 0.01
        %v1557 = vmul.f32 %v1317, 0.01
        %v1558 = vmul.f32 %v1320, 0.01
        %v1559 = vmul.f32 %v1325, 0.01
        %v1560 = vmul.f32 %v1328, 0.01
        %v1561 = vmul.f32 %v1333, 0.01
        %v1562 = vmul.f32 %v1336, 0.01
        %v1563 = vmul.f32 %v1341, 0.01
        %v1564 = vmul.f32 %v1344, 0.01
        %v1565 = vmul.f32 %v1349, 0.01
        %v1566 = vmul.f32 %v1352, 0.01
        %v1567 = vmul.f32 %v1357, 0.01
        %v1568 = vmul.f32 %v1360, 0.01
        %v1569 = vmul.f32 %v1365, 0.01
        %v1570 = vmul.f32 %v1368, 0.01
        %v1571 = vmul.f32 %v1373, 0.01
        %v1572 = vmul.f32 %v1376, 0.01
        %v1573 = vmul.f32 %v1381, 0.01
        %v1574 = vmul.f32 %v1384, 0.01
        %v1575 = vmul.f32 %v1389, 0.01
        %v1576 = vmul.f32 %v1392, 0.01
        %v1577 = vmul.f32 %v1397, 0.01
        %v1578 = vmul.f32 %v1400, 0.01
        %v1579 = vmul.f32 %v1405, 0.01
        %v1580 = vmul.f32 %v1408, 0.01
        %v1581 = vmul.f32 %v1413, 0.01
        %v1582 = vmul.f32 %v1416, 0.01
        %v1583 = vmul.f32 %v1421, 0.01
        %v1584 = vmul.f32 %v1424, 0.01
        %v1585 = vmul.f32 %v1429, 0.01
        %v1586 = vmul.f32 %v1432, 0.01
        %v1587 = vmul.f32 %v1437, 0.01
        %v1588 = vmul.f32 %v1440, 0.01
        %v1589 = vmul.f32 %v1445, 0.01
        %v1590 = vmul.f32 %v1448, 0.01
        %v1591 = vmul.f32 %v1453, 0.01
        %v1592 = vmul.f32 %v1456, 0.01
        %v1593 = vmul.f32 %v1461, 0.01
        %v1594 = vmul.f32 %v1464, 0.01
        %v1595 = vsel %vm1467, %v1213, %v1531
        %v1596 = vsel %vm1468, %v1216, %v1532
        %v1597 = vsel %vm1469, %v1221, %v1533
        %v1598 = vsel %vm1470, %v1224, %v1534
        %v1599 = vsel %vm1471, %v1229, %v1535
        %v1600 = vsel %vm1472, %v1232, %v1536
        %v1601 = vsel %vm1473, %v1237, %v1537
        %v1602 = vsel %vm1474, %v1240, %v1538
        %v1603 = vsel %vm1475, %v1245, %v1539
        %v1604 = vsel %vm1476, %v1248, %v1540
        %v1605 = vsel %vm1477, %v1253, %v1541
        %v1606 = vsel %vm1478, %v1256, %v1542
        %v1607 = vsel %vm1479, %v1261, %v1543
        %v1608 = vsel %vm1480, %v1264, %v1544
        %v1609 = vsel %vm1481, %v1269, %v1545
        %v1610 = vsel %vm1482, %v1272, %v1546
        %v1611 = vsel %vm1483, %v1277, %v1547
        %v1612 = vsel %vm1484, %v1280, %v1548
        %v1613 = vsel %vm1485, %v1285, %v1549
        %v1614 = vsel %vm1486, %v1288, %v1550
        %v1615 = vsel %vm1487, %v1293, %v1551
        %v1616 = vsel %vm1488, %v1296, %v1552
        %v1617 = vsel %vm1489, %v1301, %v1553
        %v1618 = vsel %vm1490, %v1304, %v1554
        %v1619 = vsel %vm1491, %v1309, %v1555
        %v1620 = vsel %vm1492, %v1312, %v1556
        %v1621 = vsel %vm1493, %v1317, %v1557
        %v1622 = vsel %vm1494, %v1320, %v1558
        %v1623 = vsel %vm1495, %v1325, %v1559
        %v1624 = vsel %vm1496, %v1328, %v1560
        %v1625 = vsel %vm1497, %v1333, %v1561
        %v1626 = vsel %vm1498, %v1336, %v1562
        %v1627 = vsel %vm1499, %v1341, %v1563
        %v1628 = vsel %vm1500, %v1344, %v1564
        %v1629 = vsel %vm1501, %v1349, %v1565
        %v1630 = vsel %vm1502, %v1352, %v1566
        %v1631 = vsel %vm1503, %v1357, %v1567
        %v1632 = vsel %vm1504, %v1360, %v1568
        %v1633 = vsel %vm1505, %v1365, %v1569
        %v1634 = vsel %vm1506, %v1368, %v1570
        %v1635 = vsel %vm1507, %v1373, %v1571
        %v1636 = vsel %vm1508, %v1376, %v1572
        %v1637 = vsel %vm1509, %v1381, %v1573
        %v1638 = vsel %vm1510, %v1384, %v1574
        %v1639 = vsel %vm1511, %v1389, %v1575
        %v1640 = vsel %vm1512, %v1392, %v1576
        %v1641 = vsel %vm1513, %v1397, %v1577
        %v1642 = vsel %vm1514, %v1400, %v1578
        %v1643 = vsel %vm1515, %v1405, %v1579
        %v1644 = vsel %vm1516, %v1408, %v1580
        %v1645 = vsel %vm1517, %v1413, %v1581
        %v1646 = vsel %vm1518, %v1416, %v1582
        %v1647 = vsel %vm1519, %v1421, %v1583
        %v1648 = vsel %vm1520, %v1424, %v1584
        %v1649 = vsel %vm1521, %v1429, %v1585
        %v1650 = vsel %vm1522, %v1432, %v1586
        %v1651 = vsel %vm1523, %v1437, %v1587
        %v1652 = vsel %vm1524, %v1440, %v1588
        %v1653 = vsel %vm1525, %v1445, %v1589
        %v1654 = vsel %vm1526, %v1448, %v1590
        %v1655 = vsel %vm1527, %v1453, %v1591
        %v1656 = vsel %vm1528, %v1456, %v1592
        %v1657 = vsel %vm1529, %v1461, %v1593
        %v1658 = vsel %vm1530, %v1464, %v1594
        %v1659 = vpack.c.bf16 %v1596, %v1595
        %v1660 = vpack.c.bf16 %v1598, %v1597
        %v1661 = vpack.c.bf16 %v1600, %v1599
        %v1662 = vpack.c.bf16 %v1602, %v1601
        %v1663 = vpack.c.bf16 %v1604, %v1603
        %v1664 = vpack.c.bf16 %v1606, %v1605
        %v1665 = vpack.c.bf16 %v1608, %v1607
        %v1666 = vpack.c.bf16 %v1610, %v1609
        %v1667 = vpack.c.bf16 %v1612, %v1611
        %v1668 = vpack.c.bf16 %v1614, %v1613
        %v1669 = vpack.c.bf16 %v1616, %v1615
        %v1670 = vpack.c.bf16 %v1618, %v1617
        %v1671 = vpack.c.bf16 %v1620, %v1619
        %v1672 = vpack.c.bf16 %v1622, %v1621
        %v1673 = vpack.c.bf16 %v1624, %v1623
        %v1674 = vpack.c.bf16 %v1626, %v1625
        %v1675 = vpack.c.bf16 %v1628, %v1627
        %v1676 = vpack.c.bf16 %v1630, %v1629
        %v1677 = vpack.c.bf16 %v1632, %v1631
        %v1678 = vpack.c.bf16 %v1634, %v1633
        %v1679 = vpack.c.bf16 %v1636, %v1635
        %v1680 = vpack.c.bf16 %v1638, %v1637
        %v1681 = vpack.c.bf16 %v1640, %v1639
        %v1682 = vpack.c.bf16 %v1642, %v1641
        %v1683 = vpack.c.bf16 %v1644, %v1643
        %v1684 = vpack.c.bf16 %v1646, %v1645
        %v1685 = vpack.c.bf16 %v1648, %v1647
        %v1686 = vpack.c.bf16 %v1650, %v1649
        %v1687 = vpack.c.bf16 %v1652, %v1651
        %v1688 = vpack.c.bf16 %v1654, %v1653
        %v1689 = vpack.c.bf16 %v1656, %v1655
        %v1690 = vpack.c.bf16 %v1658, %v1657
        %v1691 = vld [vmem:[%s2 + $0x50] sm:$0xf]
        %v1692 = vld [vmem:[%s2 + $0x54] sm:$0xf]
        %v1693 = vld [vmem:[%s2 + $0x58] sm:$0xf]
        %v1694 = vld [vmem:[%s2 + $0x5c] sm:$0xf]
        %v1695 = vld [vmem:[%s2 + $0x60] sm:$0xf]
        %v1696 = vld [vmem:[%s2 + $0x64] sm:$0xf]
        %v1697 = vld [vmem:[%s2 + $0x68] sm:$0xf]
        %v1698 = vld [vmem:[%s2 + $0x6c] sm:$0xf]
        %v1699 = vld [vmem:[%s3 + $0x2] sm:$0x1]
        %v1700 = vlaneseq
        %v1701 = vshrl.u32 %v1700, 7
        %v1702 = vsub.s32 0, %v1701
        %v1703 = vrot.slane %v1699, %v1702
        %v1712 = vunpack.c.l.b16 %v1691
        %v1713 = vunpack.c.l.b16 %v1692
        %v1714 = vunpack.c.l.b16 %v1693
        %v1715 = vunpack.c.l.b16 %v1694
        %v1716 = vunpack.c.l.b16 %v1695
        %v1717 = vunpack.c.l.b16 %v1696
        %v1718 = vunpack.c.l.b16 %v1697
        %v1719 = vunpack.c.l.b16 %v1698
        %v1720 = vpack.c.b16 %v1713, %v1712
        %v1721 = vpack.c.b16 %v1715, %v1714
        %v1722 = vpack.c.b16 %v1717, %v1716
        %v1723 = vpack.c.b16 %v1719, %v1718
        %vm1728 = vcmask 523264
        %v1730 = vsel %vm1728, %v1659, 0
        %v1733 = vsel %vm1728, %v1660, 0
        %v1736 = vsel %vm1728, %v1661, 0
        %v1739 = vsel %vm1728, %v1662, 0
        %v1742 = vsel %vm1728, %v1663, 0
        %v1745 = vsel %vm1728, %v1664, 0
        %v1748 = vsel %vm1728, %v1665, 0
        %v1751 = vsel %vm1728, %v1666, 0
        %v1754 = vsel %vm1728, %v1667, 0
        %v1757 = vsel %vm1728, %v1668, 0
        %v1760 = vsel %vm1728, %v1669, 0
        %v1763 = vsel %vm1728, %v1670, 0
        %v1766 = vsel %vm1728, %v1671, 0
        %v1769 = vsel %vm1728, %v1672, 0
        %v1772 = vsel %vm1728, %v1673, 0
        %v1775 = vsel %vm1728, %v1674, 0
        %v1778 = vsel %vm1728, %v1675, 0
        %v1781 = vsel %vm1728, %v1676, 0
        %v1784 = vsel %vm1728, %v1677, 0
        %v1787 = vsel %vm1728, %v1678, 0
        %v1790 = vsel %vm1728, %v1679, 0
        %v1793 = vsel %vm1728, %v1680, 0
        %v1796 = vsel %vm1728, %v1681, 0
        %v1799 = vsel %vm1728, %v1682, 0
        %v1802 = vsel %vm1728, %v1683, 0
        %v1805 = vsel %vm1728, %v1684, 0
        %v1808 = vsel %vm1728, %v1685, 0
        %v1811 = vsel %vm1728, %v1686, 0
        %v1814 = vsel %vm1728, %v1687, 0
        %v1817 = vsel %vm1728, %v1688, 0
        %v1820 = vsel %vm1728, %v1689, 0
        %v1823 = vsel %vm1728, %v1690, 0
        %1825 = vmatprep.subr.bf16.mxu0 0
        %1826 = vmatpush1.bf16.msra.mxu0 0
        %1827 = vmatprep.subr.bf16.mxu0 0
        %1828 = vmatpush1.bf16.msra.mxu0 0
        %1829 = vmatprep.subr.bf16.mxu0 0
        %1830 = vmatpush1.bf16.msra.mxu0 0
        %1831 = vmatprep.subr.bf16.mxu0 0
        %1832 = vmatpush1.bf16.msra.mxu0 0
        %1833 = vmatprep.subr.bf16.mxu0 0
        %1834 = vmatpush1.bf16.msra.mxu0 %v1723
        %1835 = vmatprep.subr.bf16.mxu0 0
        %1836 = vmatpush1.bf16.msra.mxu0 %v1722
        %1837 = vmatprep.subr.bf16.mxu0 0
        %1838 = vmatpush1.bf16.msra.mxu0 %v1721
        %1839 = vmatprep.subr.bf16.mxu0 0
        %1840 = vmatpush1.bf16.msra.mxu0 %v1720
        %1841 = vmatprep.subr.bf16.mxu0 0
        %1842 = vmatpush2.bf16.msra.mxu0 0
        %1843 = vmatprep.subr.bf16.mxu0 0
        %1844 = vmatpush2.bf16.msra.mxu0 0
        %1845 = vmatprep.subr.bf16.mxu0 0
        %1846 = vmatpush2.bf16.msra.mxu0 0
        %1847 = vmatprep.subr.bf16.mxu0 0
        %1848 = vmatpush2.bf16.msra.mxu0 0
        %1849 = vmatprep.subr.bf16.mxu0 0
        %1850 = vmatpush2.bf16.msra.mxu0 0
        %1851 = vmatprep.subr.bf16.mxu0 0
        %1852 = vmatpush2.bf16.msra.mxu0 0
        %1853 = vmatprep.subr.bf16.mxu0 0
        %1854 = vmatpush2.bf16.msra.mxu0 0
        %1855 = vmatprep.subr.bf16.mxu0 0
        %1856 = vmatpush2.bf16.msra.mxu0 0
        %1857 = vmatprep.mubr.bf16.mxu0 0
        %1858 = vmatmul.mubr.bf16.gmra.mxu0 %v1730
        %v1859 = vpop.f32.mrf.mxu0
        %v1860 = vadd.f32 %v1703, %v1859
        %v1861 = vpop.f32.mrf.mxu0
        %v1862 = vpop.f32.mrf.mxu0
        %v1863 = vadd.f32 %v1703, %v1862
        %v1864 = vpop.f32.mrf.mxu0
        %1865 = vmatprep.mubr.bf16.mxu0 0
        %1866 = vmatmul.mubr.bf16.gmra.mxu0 %v1733
        %v1867 = vpop.f32.mrf.mxu0
        %v1868 = vadd.f32 %v1703, %v1867
        %v1869 = vpop.f32.mrf.mxu0
        %v1870 = vpop.f32.mrf.mxu0
        %v1871 = vadd.f32 %v1703, %v1870
        %v1872 = vpop.f32.mrf.mxu0
        %1873 = vmatprep.mubr.bf16.mxu0 0
        %1874 = vmatmul.mubr.bf16.gmra.mxu0 %v1736
        %v1875 = vpop.f32.mrf.mxu0
        %v1876 = vadd.f32 %v1703, %v1875
        %v1877 = vpop.f32.mrf.mxu0
        %v1878 = vpop.f32.mrf.mxu0
        %v1879 = vadd.f32 %v1703, %v1878
        %v1880 = vpop.f32.mrf.mxu0
        %1881 = vmatprep.mubr.bf16.mxu0 0
        %1882 = vmatmul.mubr.bf16.gmra.mxu0 %v1739
        %v1883 = vpop.f32.mrf.mxu0
        %v1884 = vadd.f32 %v1703, %v1883
        %v1885 = vpop.f32.mrf.mxu0
        %v1886 = vpop.f32.mrf.mxu0
        %v1887 = vadd.f32 %v1703, %v1886
        %v1888 = vpop.f32.mrf.mxu0
        %1889 = vmatprep.mubr.bf16.mxu0 0
        %1890 = vmatmul.mubr.bf16.gmra.mxu0 %v1742
        %v1891 = vpop.f32.mrf.mxu0
        %v1892 = vadd.f32 %v1703, %v1891
        %v1893 = vpop.f32.mrf.mxu0
        %v1894 = vpop.f32.mrf.mxu0
        %v1895 = vadd.f32 %v1703, %v1894
        %v1896 = vpop.f32.mrf.mxu0
        %1897 = vmatprep.mubr.bf16.mxu0 0
        %1898 = vmatmul.mubr.bf16.gmra.mxu0 %v1745
        %v1899 = vpop.f32.mrf.mxu0
        %v1900 = vadd.f32 %v1703, %v1899
        %v1901 = vpop.f32.mrf.mxu0
        %v1902 = vpop.f32.mrf.mxu0
        %v1903 = vadd.f32 %v1703, %v1902
        %v1904 = vpop.f32.mrf.mxu0
        %1905 = vmatprep.mubr.bf16.mxu0 0
        %1906 = vmatmul.mubr.bf16.gmra.mxu0 %v1748
        %v1907 = vpop.f32.mrf.mxu0
        %v1908 = vadd.f32 %v1703, %v1907
        %v1909 = vpop.f32.mrf.mxu0
        %v1910 = vpop.f32.mrf.mxu0
        %v1911 = vadd.f32 %v1703, %v1910
        %v1912 = vpop.f32.mrf.mxu0
        %1913 = vmatprep.mubr.bf16.mxu0 0
        %1914 = vmatmul.mubr.bf16.gmra.mxu0 %v1751
        %v1915 = vpop.f32.mrf.mxu0
        %v1916 = vadd.f32 %v1703, %v1915
        %v1917 = vpop.f32.mrf.mxu0
        %v1918 = vpop.f32.mrf.mxu0
        %v1919 = vadd.f32 %v1703, %v1918
        %v1920 = vpop.f32.mrf.mxu0
        %1921 = vmatprep.mubr.bf16.mxu0 0
        %1922 = vmatmul.mubr.bf16.gmra.mxu0 %v1754
        %v1923 = vpop.f32.mrf.mxu0
        %v1924 = vadd.f32 %v1703, %v1923
        %v1925 = vpop.f32.mrf.mxu0
        %v1926 = vpop.f32.mrf.mxu0
        %v1927 = vadd.f32 %v1703, %v1926
        %v1928 = vpop.f32.mrf.mxu0
        %1929 = vmatprep.mubr.bf16.mxu0 0
        %1930 = vmatmul.mubr.bf16.gmra.mxu0 %v1757
        %v1931 = vpop.f32.mrf.mxu0
        %v1932 = vadd.f32 %v1703, %v1931
        %v1933 = vpop.f32.mrf.mxu0
        %v1934 = vpop.f32.mrf.mxu0
        %v1935 = vadd.f32 %v1703, %v1934
        %v1936 = vpop.f32.mrf.mxu0
        %1937 = vmatprep.mubr.bf16.mxu0 0
        %1938 = vmatmul.mubr.bf16.gmra.mxu0 %v1760
        %v1939 = vpop.f32.mrf.mxu0
        %v1940 = vadd.f32 %v1703, %v1939
        %v1941 = vpop.f32.mrf.mxu0
        %v1942 = vpop.f32.mrf.mxu0
        %v1943 = vadd.f32 %v1703, %v1942
        %v1944 = vpop.f32.mrf.mxu0
        %1945 = vmatprep.mubr.bf16.mxu0 0
        %1946 = vmatmul.mubr.bf16.gmra.mxu0 %v1763
        %v1947 = vpop.f32.mrf.mxu0
        %v1948 = vadd.f32 %v1703, %v1947
        %v1949 = vpop.f32.mrf.mxu0
        %v1950 = vpop.f32.mrf.mxu0
        %v1951 = vadd.f32 %v1703, %v1950
        %v1952 = vpop.f32.mrf.mxu0
        %1953 = vmatprep.mubr.bf16.mxu0 0
        %1954 = vmatmul.mubr.bf16.gmra.mxu0 %v1766
        %v1955 = vpop.f32.mrf.mxu0
        %v1956 = vadd.f32 %v1703, %v1955
        %v1957 = vpop.f32.mrf.mxu0
        %v1958 = vpop.f32.mrf.mxu0
        %v1959 = vadd.f32 %v1703, %v1958
        %v1960 = vpop.f32.mrf.mxu0
        %1961 = vmatprep.mubr.bf16.mxu0 0
        %1962 = vmatmul.mubr.bf16.gmra.mxu0 %v1769
        %v1963 = vpop.f32.mrf.mxu0
        %v1964 = vadd.f32 %v1703, %v1963
        %v1965 = vpop.f32.mrf.mxu0
        %v1966 = vpop.f32.mrf.mxu0
        %v1967 = vadd.f32 %v1703, %v1966
        %v1968 = vpop.f32.mrf.mxu0
        %1969 = vmatprep.mubr.bf16.mxu0 0
        %1970 = vmatmul.mubr.bf16.gmra.mxu0 %v1772
        %v1971 = vpop.f32.mrf.mxu0
        %v1972 = vadd.f32 %v1703, %v1971
        %v1973 = vpop.f32.mrf.mxu0
        %v1974 = vpop.f32.mrf.mxu0
        %v1975 = vadd.f32 %v1703, %v1974
        %v1976 = vpop.f32.mrf.mxu0
        %1977 = vmatprep.mubr.bf16.mxu0 0
        %1978 = vmatmul.mubr.bf16.gmra.mxu0 %v1775
        %v1979 = vpop.f32.mrf.mxu0
        %v1980 = vadd.f32 %v1703, %v1979
        %v1981 = vpop.f32.mrf.mxu0
        %v1982 = vpop.f32.mrf.mxu0
        %v1983 = vadd.f32 %v1703, %v1982
        %v1984 = vpop.f32.mrf.mxu0
        %1985 = vmatprep.mubr.bf16.mxu0 0
        %1986 = vmatmul.mubr.bf16.gmra.mxu0 %v1778
        %v1987 = vpop.f32.mrf.mxu0
        %v1988 = vadd.f32 %v1703, %v1987
        %v1989 = vpop.f32.mrf.mxu0
        %v1990 = vpop.f32.mrf.mxu0
        %v1991 = vadd.f32 %v1703, %v1990
        %v1992 = vpop.f32.mrf.mxu0
        %1993 = vmatprep.mubr.bf16.mxu0 0
        %1994 = vmatmul.mubr.bf16.gmra.mxu0 %v1781
        %v1995 = vpop.f32.mrf.mxu0
        %v1996 = vadd.f32 %v1703, %v1995
        %v1997 = vpop.f32.mrf.mxu0
        %v1998 = vpop.f32.mrf.mxu0
        %v1999 = vadd.f32 %v1703, %v1998
        %v2000 = vpop.f32.mrf.mxu0
        %2001 = vmatprep.mubr.bf16.mxu0 0
        %2002 = vmatmul.mubr.bf16.gmra.mxu0 %v1784
        %v2003 = vpop.f32.mrf.mxu0
        %v2004 = vadd.f32 %v1703, %v2003
        %v2005 = vpop.f32.mrf.mxu0
        %v2006 = vpop.f32.mrf.mxu0
        %v2007 = vadd.f32 %v1703, %v2006
        %v2008 = vpop.f32.mrf.mxu0
        %2009 = vmatprep.mubr.bf16.mxu0 0
        %2010 = vmatmul.mubr.bf16.gmra.mxu0 %v1787
        %v2011 = vpop.f32.mrf.mxu0
        %v2012 = vadd.f32 %v1703, %v2011
        %v2013 = vpop.f32.mrf.mxu0
        %v2014 = vpop.f32.mrf.mxu0
        %v2015 = vadd.f32 %v1703, %v2014
        %v2016 = vpop.f32.mrf.mxu0
        %2017 = vmatprep.mubr.bf16.mxu0 0
        %2018 = vmatmul.mubr.bf16.gmra.mxu0 %v1790
        %v2019 = vpop.f32.mrf.mxu0
        %v2020 = vadd.f32 %v1703, %v2019
        %v2021 = vpop.f32.mrf.mxu0
        %v2022 = vpop.f32.mrf.mxu0
        %v2023 = vadd.f32 %v1703, %v2022
        %v2024 = vpop.f32.mrf.mxu0
        %2025 = vmatprep.mubr.bf16.mxu0 0
        %2026 = vmatmul.mubr.bf16.gmra.mxu0 %v1793
        %v2027 = vpop.f32.mrf.mxu0
        %v2028 = vadd.f32 %v1703, %v2027
        %v2029 = vpop.f32.mrf.mxu0
        %v2030 = vpop.f32.mrf.mxu0
        %v2031 = vadd.f32 %v1703, %v2030
        %v2032 = vpop.f32.mrf.mxu0
        %2033 = vmatprep.mubr.bf16.mxu0 0
        %2034 = vmatmul.mubr.bf16.gmra.mxu0 %v1796
        %v2035 = vpop.f32.mrf.mxu0
        %v2036 = vadd.f32 %v1703, %v2035
        %v2037 = vpop.f32.mrf.mxu0
        %v2038 = vpop.f32.mrf.mxu0
        %v2039 = vadd.f32 %v1703, %v2038
        %v2040 = vpop.f32.mrf.mxu0
        %2041 = vmatprep.mubr.bf16.mxu0 0
        %2042 = vmatmul.mubr.bf16.gmra.mxu0 %v1799
        %v2043 = vpop.f32.mrf.mxu0
        %v2044 = vadd.f32 %v1703, %v2043
        %v2045 = vpop.f32.mrf.mxu0
        %v2046 = vpop.f32.mrf.mxu0
        %v2047 = vadd.f32 %v1703, %v2046
        %v2048 = vpop.f32.mrf.mxu0
        %2049 = vmatprep.mubr.bf16.mxu0 0
        %2050 = vmatmul.mubr.bf16.gmra.mxu0 %v1802
        %v2051 = vpop.f32.mrf.mxu0
        %v2052 = vadd.f32 %v1703, %v2051
        %v2053 = vpop.f32.mrf.mxu0
        %v2054 = vpop.f32.mrf.mxu0
        %v2055 = vadd.f32 %v1703, %v2054
        %v2056 = vpop.f32.mrf.mxu0
        %2057 = vmatprep.mubr.bf16.mxu0 0
        %2058 = vmatmul.mubr.bf16.gmra.mxu0 %v1805
        %v2059 = vpop.f32.mrf.mxu0
        %v2060 = vadd.f32 %v1703, %v2059
        %v2061 = vpop.f32.mrf.mxu0
        %v2062 = vpop.f32.mrf.mxu0
        %v2063 = vadd.f32 %v1703, %v2062
        %v2064 = vpop.f32.mrf.mxu0
        %2065 = vmatprep.mubr.bf16.mxu0 0
        %2066 = vmatmul.mubr.bf16.gmra.mxu0 %v1808
        %v2067 = vpop.f32.mrf.mxu0
        %v2068 = vadd.f32 %v1703, %v2067
        %v2069 = vpop.f32.mrf.mxu0
        %v2070 = vpop.f32.mrf.mxu0
        %v2071 = vadd.f32 %v1703, %v2070
        %v2072 = vpop.f32.mrf.mxu0
        %2073 = vmatprep.mubr.bf16.mxu0 0
        %2074 = vmatmul.mubr.bf16.gmra.mxu0 %v1811
        %v2075 = vpop.f32.mrf.mxu0
        %v2076 = vadd.f32 %v1703, %v2075
        %v2077 = vpop.f32.mrf.mxu0
        %v2078 = vpop.f32.mrf.mxu0
        %v2079 = vadd.f32 %v1703, %v2078
        %v2080 = vpop.f32.mrf.mxu0
        %2081 = vmatprep.mubr.bf16.mxu0 0
        %2082 = vmatmul.mubr.bf16.gmra.mxu0 %v1814
        %v2083 = vpop.f32.mrf.mxu0
        %v2084 = vadd.f32 %v1703, %v2083
        %v2085 = vpop.f32.mrf.mxu0
        %v2086 = vpop.f32.mrf.mxu0
        %v2087 = vadd.f32 %v1703, %v2086
        %v2088 = vpop.f32.mrf.mxu0
        %2089 = vmatprep.mubr.bf16.mxu0 0
        %2090 = vmatmul.mubr.bf16.gmra.mxu0 %v1817
        %v2091 = vpop.f32.mrf.mxu0
        %v2092 = vadd.f32 %v1703, %v2091
        %v2093 = vpop.f32.mrf.mxu0
        %v2094 = vpop.f32.mrf.mxu0
        %v2095 = vadd.f32 %v1703, %v2094
        %v2096 = vpop.f32.mrf.mxu0
        %2097 = vmatprep.mubr.bf16.mxu0 0
        %2098 = vmatmul.mubr.bf16.gmra.mxu0 %v1820
        %v2099 = vpop.f32.mrf.mxu0
        %v2100 = vadd.f32 %v1703, %v2099
        %v2101 = vpop.f32.mrf.mxu0
        %v2102 = vpop.f32.mrf.mxu0
        %v2103 = vadd.f32 %v1703, %v2102
        %v2104 = vpop.f32.mrf.mxu0
        %2105 = vmatprep.mubr.bf16.mxu0 0
        %2106 = vmatmul.mubr.bf16.gmra.mxu0 %v1823
        %v2107 = vpop.f32.mrf.mxu0
        %v2108 = vadd.f32 %v1703, %v2107
        %v2109 = vpop.f32.mrf.mxu0
        %v2110 = vpop.f32.mrf.mxu0
        %v2111 = vadd.f32 %v1703, %v2110
        %v2112 = vpop.f32.mrf.mxu0
        %2113 = vdwg.mxu0
        %vm2114 = vcmp.gt.f32.partialorder %v1860, 0.0
        %vm2115 = vcmp.gt.f32.partialorder %v1863, 0.0
        %vm2116 = vcmp.gt.f32.partialorder %v1868, 0.0
        %vm2117 = vcmp.gt.f32.partialorder %v1871, 0.0
        %vm2118 = vcmp.gt.f32.partialorder %v1876, 0.0
        %vm2119 = vcmp.gt.f32.partialorder %v1879, 0.0
        %vm2120 = vcmp.gt.f32.partialorder %v1884, 0.0
        %vm2121 = vcmp.gt.f32.partialorder %v1887, 0.0
        %vm2122 = vcmp.gt.f32.partialorder %v1892, 0.0
        %vm2123 = vcmp.gt.f32.partialorder %v1895, 0.0
        %vm2124 = vcmp.gt.f32.partialorder %v1900, 0.0
        %vm2125 = vcmp.gt.f32.partialorder %v1903, 0.0
        %vm2126 = vcmp.gt.f32.partialorder %v1908, 0.0
        %vm2127 = vcmp.gt.f32.partialorder %v1911, 0.0
        %vm2128 = vcmp.gt.f32.partialorder %v1916, 0.0
        %vm2129 = vcmp.gt.f32.partialorder %v1919, 0.0
        %vm2130 = vcmp.gt.f32.partialorder %v1924, 0.0
        %vm2131 = vcmp.gt.f32.partialorder %v1927, 0.0
        %vm2132 = vcmp.gt.f32.partialorder %v1932, 0.0
        %vm2133 = vcmp.gt.f32.partialorder %v1935, 0.0
        %vm2134 = vcmp.gt.f32.partialorder %v1940, 0.0
        %vm2135 = vcmp.gt.f32.partialorder %v1943, 0.0
        %vm2136 = vcmp.gt.f32.partialorder %v1948, 0.0
        %vm2137 = vcmp.gt.f32.partialorder %v1951, 0.0
        %vm2138 = vcmp.gt.f32.partialorder %v1956, 0.0
        %vm2139 = vcmp.gt.f32.partialorder %v1959, 0.0
        %vm2140 = vcmp.gt.f32.partialorder %v1964, 0.0
        %vm2141 = vcmp.gt.f32.partialorder %v1967, 0.0
        %vm2142 = vcmp.gt.f32.partialorder %v1972, 0.0
        %vm2143 = vcmp.gt.f32.partialorder %v1975, 0.0
        %vm2144 = vcmp.gt.f32.partialorder %v1980, 0.0
        %vm2145 = vcmp.gt.f32.partialorder %v1983, 0.0
        %vm2146 = vcmp.gt.f32.partialorder %v1988, 0.0
        %vm2147 = vcmp.gt.f32.partialorder %v1991, 0.0
        %vm2148 = vcmp.gt.f32.partialorder %v1996, 0.0
        %vm2149 = vcmp.gt.f32.partialorder %v1999, 0.0
        %vm2150 = vcmp.gt.f32.partialorder %v2004, 0.0
        %vm2151 = vcmp.gt.f32.partialorder %v2007, 0.0
        %vm2152 = vcmp.gt.f32.partialorder %v2012, 0.0
        %vm2153 = vcmp.gt.f32.partialorder %v2015, 0.0
        %vm2154 = vcmp.gt.f32.partialorder %v2020, 0.0
        %vm2155 = vcmp.gt.f32.partialorder %v2023, 0.0
        %vm2156 = vcmp.gt.f32.partialorder %v2028, 0.0
        %vm2157 = vcmp.gt.f32.partialorder %v2031, 0.0
        %vm2158 = vcmp.gt.f32.partialorder %v2036, 0.0
        %vm2159 = vcmp.gt.f32.partialorder %v2039, 0.0
        %vm2160 = vcmp.gt.f32.partialorder %v2044, 0.0
        %vm2161 = vcmp.gt.f32.partialorder %v2047, 0.0
        %vm2162 = vcmp.gt.f32.partialorder %v2052, 0.0
        %vm2163 = vcmp.gt.f32.partialorder %v2055, 0.0
        %vm2164 = vcmp.gt.f32.partialorder %v2060, 0.0
        %vm2165 = vcmp.gt.f32.partialorder %v2063, 0.0
        %vm2166 = vcmp.gt.f32.partialorder %v2068, 0.0
        %vm2167 = vcmp.gt.f32.partialorder %v2071, 0.0
        %vm2168 = vcmp.gt.f32.partialorder %v2076, 0.0
        %vm2169 = vcmp.gt.f32.partialorder %v2079, 0.0
        %vm2170 = vcmp.gt.f32.partialorder %v2084, 0.0
        %vm2171 = vcmp.gt.f32.partialorder %v2087, 0.0
        %vm2172 = vcmp.gt.f32.partialorder %v2092, 0.0
        %vm2173 = vcmp.gt.f32.partialorder %v2095, 0.0
        %vm2174 = vcmp.gt.f32.partialorder %v2100, 0.0
        %vm2175 = vcmp.gt.f32.partialorder %v2103, 0.0
        %vm2176 = vcmp.gt.f32.partialorder %v2108, 0.0
        %vm2177 = vcmp.gt.f32.partialorder %v2111, 0.0
        %v2178 = vmul.f32 %v1860, 0.01
        %v2179 = vmul.f32 %v1863, 0.01
        %v2180 = vmul.f32 %v1868, 0.01
        %v2181 = vmul.f32 %v1871, 0.01
        %v2182 = vmul.f32 %v1876, 0.01
        %v2183 = vmul.f32 %v1879, 0.01
        %v2184 = vmul.f32 %v1884, 0.01
        %v2185 = vmul.f32 %v1887, 0.01
        %v2186 = vmul.f32 %v1892, 0.01
        %v2187 = vmul.f32 %v1895, 0.01
        %v2188 = vmul.f32 %v1900, 0.01
        %v2189 = vmul.f32 %v1903, 0.01
        %v2190 = vmul.f32 %v1908, 0.01
        %v2191 = vmul.f32 %v1911, 0.01
        %v2192 = vmul.f32 %v1916, 0.01
        %v2193 = vmul.f32 %v1919, 0.01
        %v2194 = vmul.f32 %v1924, 0.01
        %v2195 = vmul.f32 %v1927, 0.01
        %v2196 = vmul.f32 %v1932, 0.01
        %v2197 = vmul.f32 %v1935, 0.01
        %v2198 = vmul.f32 %v1940, 0.01
        %v2199 = vmul.f32 %v1943, 0.01
        %v2200 = vmul.f32 %v1948, 0.01
        %v2201 = vmul.f32 %v1951, 0.01
        %v2202 = vmul.f32 %v1956, 0.01
        %v2203 = vmul.f32 %v1959, 0.01
        %v2204 = vmul.f32 %v1964, 0.01
        %v2205 = vmul.f32 %v1967, 0.01
        %v2206 = vmul.f32 %v1972, 0.01
        %v2207 = vmul.f32 %v1975, 0.01
        %v2208 = vmul.f32 %v1980, 0.01
        %v2209 = vmul.f32 %v1983, 0.01
        %v2210 = vmul.f32 %v1988, 0.01
        %v2211 = vmul.f32 %v1991, 0.01
        %v2212 = vmul.f32 %v1996, 0.01
        %v2213 = vmul.f32 %v1999, 0.01
        %v2214 = vmul.f32 %v2004, 0.01
        %v2215 = vmul.f32 %v2007, 0.01
        %v2216 = vmul.f32 %v2012, 0.01
        %v2217 = vmul.f32 %v2015, 0.01
        %v2218 = vmul.f32 %v2020, 0.01
        %v2219 = vmul.f32 %v2023, 0.01
        %v2220 = vmul.f32 %v2028, 0.01
        %v2221 = vmul.f32 %v2031, 0.01
        %v2222 = vmul.f32 %v2036, 0.01
        %v2223 = vmul.f32 %v2039, 0.01
        %v2224 = vmul.f32 %v2044, 0.01
        %v2225 = vmul.f32 %v2047, 0.01
        %v2226 = vmul.f32 %v2052, 0.01
        %v2227 = vmul.f32 %v2055, 0.01
        %v2228 = vmul.f32 %v2060, 0.01
        %v2229 = vmul.f32 %v2063, 0.01
        %v2230 = vmul.f32 %v2068, 0.01
        %v2231 = vmul.f32 %v2071, 0.01
        %v2232 = vmul.f32 %v2076, 0.01
        %v2233 = vmul.f32 %v2079, 0.01
        %v2234 = vmul.f32 %v2084, 0.01
        %v2235 = vmul.f32 %v2087, 0.01
        %v2236 = vmul.f32 %v2092, 0.01
        %v2237 = vmul.f32 %v2095, 0.01
        %v2238 = vmul.f32 %v2100, 0.01
        %v2239 = vmul.f32 %v2103, 0.01
        %v2240 = vmul.f32 %v2108, 0.01
        %v2241 = vmul.f32 %v2111, 0.01
        %v2242 = vsel %vm2114, %v1860, %v2178
        %v2243 = vsel %vm2115, %v1863, %v2179
        %v2244 = vsel %vm2116, %v1868, %v2180
        %v2245 = vsel %vm2117, %v1871, %v2181
        %v2246 = vsel %vm2118, %v1876, %v2182
        %v2247 = vsel %vm2119, %v1879, %v2183
        %v2248 = vsel %vm2120, %v1884, %v2184
        %v2249 = vsel %vm2121, %v1887, %v2185
        %v2250 = vsel %vm2122, %v1892, %v2186
        %v2251 = vsel %vm2123, %v1895, %v2187
        %v2252 = vsel %vm2124, %v1900, %v2188
        %v2253 = vsel %vm2125, %v1903, %v2189
        %v2254 = vsel %vm2126, %v1908, %v2190
        %v2255 = vsel %vm2127, %v1911, %v2191
        %v2256 = vsel %vm2128, %v1916, %v2192
        %v2257 = vsel %vm2129, %v1919, %v2193
        %v2258 = vsel %vm2130, %v1924, %v2194
        %v2259 = vsel %vm2131, %v1927, %v2195
        %v2260 = vsel %vm2132, %v1932, %v2196
        %v2261 = vsel %vm2133, %v1935, %v2197
        %v2262 = vsel %vm2134, %v1940, %v2198
        %v2263 = vsel %vm2135, %v1943, %v2199
        %v2264 = vsel %vm2136, %v1948, %v2200
        %v2265 = vsel %vm2137, %v1951, %v2201
        %v2266 = vsel %vm2138, %v1956, %v2202
        %v2267 = vsel %vm2139, %v1959, %v2203
        %v2268 = vsel %vm2140, %v1964, %v2204
        %v2269 = vsel %vm2141, %v1967, %v2205
        %v2270 = vsel %vm2142, %v1972, %v2206
        %v2271 = vsel %vm2143, %v1975, %v2207
        %v2272 = vsel %vm2144, %v1980, %v2208
        %v2273 = vsel %vm2145, %v1983, %v2209
        %v2274 = vsel %vm2146, %v1988, %v2210
        %v2275 = vsel %vm2147, %v1991, %v2211
        %v2276 = vsel %vm2148, %v1996, %v2212
        %v2277 = vsel %vm2149, %v1999, %v2213
        %v2278 = vsel %vm2150, %v2004, %v2214
        %v2279 = vsel %vm2151, %v2007, %v2215
        %v2280 = vsel %vm2152, %v2012, %v2216
        %v2281 = vsel %vm2153, %v2015, %v2217
        %v2282 = vsel %vm2154, %v2020, %v2218
        %v2283 = vsel %vm2155, %v2023, %v2219
        %v2284 = vsel %vm2156, %v2028, %v2220
        %v2285 = vsel %vm2157, %v2031, %v2221
        %v2286 = vsel %vm2158, %v2036, %v2222
        %v2287 = vsel %vm2159, %v2039, %v2223
        %v2288 = vsel %vm2160, %v2044, %v2224
        %v2289 = vsel %vm2161, %v2047, %v2225
        %v2290 = vsel %vm2162, %v2052, %v2226
        %v2291 = vsel %vm2163, %v2055, %v2227
        %v2292 = vsel %vm2164, %v2060, %v2228
        %v2293 = vsel %vm2165, %v2063, %v2229
        %v2294 = vsel %vm2166, %v2068, %v2230
        %v2295 = vsel %vm2167, %v2071, %v2231
        %v2296 = vsel %vm2168, %v2076, %v2232
        %v2297 = vsel %vm2169, %v2079, %v2233
        %v2298 = vsel %vm2170, %v2084, %v2234
        %v2299 = vsel %vm2171, %v2087, %v2235
        %v2300 = vsel %vm2172, %v2092, %v2236
        %v2301 = vsel %vm2173, %v2095, %v2237
        %v2302 = vsel %vm2174, %v2100, %v2238
        %v2303 = vsel %vm2175, %v2103, %v2239
        %v2304 = vsel %vm2176, %v2108, %v2240
        %v2305 = vsel %vm2177, %v2111, %v2241
        %v2306 = vpack.c.bf16 %v2243, %v2242
        %v2307 = vpack.c.bf16 %v2245, %v2244
        %v2308 = vpack.c.bf16 %v2247, %v2246
        %v2309 = vpack.c.bf16 %v2249, %v2248
        %v2310 = vpack.c.bf16 %v2251, %v2250
        %v2311 = vpack.c.bf16 %v2253, %v2252
        %v2312 = vpack.c.bf16 %v2255, %v2254
        %v2313 = vpack.c.bf16 %v2257, %v2256
        %v2314 = vpack.c.bf16 %v2259, %v2258
        %v2315 = vpack.c.bf16 %v2261, %v2260
        %v2316 = vpack.c.bf16 %v2263, %v2262
        %v2317 = vpack.c.bf16 %v2265, %v2264
        %v2318 = vpack.c.bf16 %v2267, %v2266
        %v2319 = vpack.c.bf16 %v2269, %v2268
        %v2320 = vpack.c.bf16 %v2271, %v2270
        %v2321 = vpack.c.bf16 %v2273, %v2272
        %v2322 = vpack.c.bf16 %v2275, %v2274
        %v2323 = vpack.c.bf16 %v2277, %v2276
        %v2324 = vpack.c.bf16 %v2279, %v2278
        %v2325 = vpack.c.bf16 %v2281, %v2280
        %v2326 = vpack.c.bf16 %v2283, %v2282
        %v2327 = vpack.c.bf16 %v2285, %v2284
        %v2328 = vpack.c.bf16 %v2287, %v2286
        %v2329 = vpack.c.bf16 %v2289, %v2288
        %v2330 = vpack.c.bf16 %v2291, %v2290
        %v2331 = vpack.c.bf16 %v2293, %v2292
        %v2332 = vpack.c.bf16 %v2295, %v2294
        %v2333 = vpack.c.bf16 %v2297, %v2296
        %v2334 = vpack.c.bf16 %v2299, %v2298
        %v2335 = vpack.c.bf16 %v2301, %v2300
        %v2336 = vpack.c.bf16 %v2303, %v2302
        %v2337 = vpack.c.bf16 %v2305, %v2304
        %v2338 = vld [vmem:[%s2 + $0x70] sm:$0xf]
        %v2339 = vld [vmem:[%s2 + $0x74] sm:$0xf]
        %v2340 = vld [vmem:[%s3 + $0x3] sm:$0x1]
        %v2341 = vlaneseq
        %v2342 = vshrl.u32 %v2341, 7
        %v2343 = vsub.s32 0, %v2342
        %v2344 = vrot.slane %v2340, %v2343
        %v2347 = vunpack.c.l.b16 %v2338
        %v2348 = vunpack.c.l.b16 %v2339
        %v2349 = vpack.c.b16 %v2348, %v2347
        %vm2351 = vcmask 130048
        %v2353 = vsel %vm2351, %v2306, 0
        %v2356 = vsel %vm2351, %v2307, 0
        %v2359 = vsel %vm2351, %v2308, 0
        %v2362 = vsel %vm2351, %v2309, 0
        %v2365 = vsel %vm2351, %v2310, 0
        %v2368 = vsel %vm2351, %v2311, 0
        %v2371 = vsel %vm2351, %v2312, 0
        %v2374 = vsel %vm2351, %v2313, 0
        %v2377 = vsel %vm2351, %v2314, 0
        %v2380 = vsel %vm2351, %v2315, 0
        %v2383 = vsel %vm2351, %v2316, 0
        %v2386 = vsel %vm2351, %v2317, 0
        %v2389 = vsel %vm2351, %v2318, 0
        %v2392 = vsel %vm2351, %v2319, 0
        %v2395 = vsel %vm2351, %v2320, 0
        %v2398 = vsel %vm2351, %v2321, 0
        %v2401 = vsel %vm2351, %v2322, 0
        %v2404 = vsel %vm2351, %v2323, 0
        %v2407 = vsel %vm2351, %v2324, 0
        %v2410 = vsel %vm2351, %v2325, 0
        %v2413 = vsel %vm2351, %v2326, 0
        %v2416 = vsel %vm2351, %v2327, 0
        %v2419 = vsel %vm2351, %v2328, 0
        %v2422 = vsel %vm2351, %v2329, 0
        %v2425 = vsel %vm2351, %v2330, 0
        %v2428 = vsel %vm2351, %v2331, 0
        %v2431 = vsel %vm2351, %v2332, 0
        %v2434 = vsel %vm2351, %v2333, 0
        %v2437 = vsel %vm2351, %v2334, 0
        %v2440 = vsel %vm2351, %v2335, 0
        %v2443 = vsel %vm2351, %v2336, 0
        %v2446 = vsel %vm2351, %v2337, 0
        %2448 = vmatprep.subr.bf16.mxu0 0
        %2449 = vmatpush1.bf16.msra.mxu0 0
        %2450 = vmatprep.subr.bf16.mxu0 0
        %2451 = vmatpush1.bf16.msra.mxu0 0
        %2452 = vmatprep.subr.bf16.mxu0 0
        %2453 = vmatpush1.bf16.msra.mxu0 0
        %2454 = vmatprep.subr.bf16.mxu0 0
        %2455 = vmatpush1.bf16.msra.mxu0 0
        %2456 = vmatprep.subr.bf16.mxu0 0
        %2457 = vmatpush1.bf16.msra.mxu0 0
        %2458 = vmatprep.subr.bf16.mxu0 0
        %2459 = vmatpush1.bf16.msra.mxu0 0
        %2460 = vmatprep.subr.bf16.mxu0 0
        %2461 = vmatpush1.bf16.msra.mxu0 0
        %2462 = vmatprep.subr.bf16.mxu0 0
        %2463 = vmatpush1.bf16.msra.mxu0 %v2349
        %2464 = vmatprep.subr.bf16.mxu0 0
        %2465 = vmatpush2.bf16.msra.mxu0 0
        %2466 = vmatprep.subr.bf16.mxu0 0
        %2467 = vmatpush2.bf16.msra.mxu0 0
        %2468 = vmatprep.subr.bf16.mxu0 0
        %2469 = vmatpush2.bf16.msra.mxu0 0
        %2470 = vmatprep.subr.bf16.mxu0 0
        %2471 = vmatpush2.bf16.msra.mxu0 0
        %2472 = vmatprep.subr.bf16.mxu0 0
        %2473 = vmatpush2.bf16.msra.mxu0 0
        %2474 = vmatprep.subr.bf16.mxu0 0
        %2475 = vmatpush2.bf16.msra.mxu0 0
        %2476 = vmatprep.subr.bf16.mxu0 0
        %2477 = vmatpush2.bf16.msra.mxu0 0
        %2478 = vmatprep.subr.bf16.mxu0 0
        %2479 = vmatpush2.bf16.msra.mxu0 0
        %2480 = vmatprep.mubr.bf16.mxu0 0
        %2481 = vmatmul.mubr.bf16.gmra.mxu0 %v2353
        %v2482 = vpop.f32.mrf.mxu0
        %v2483 = vadd.f32 %v2344, %v2482
        %v2484 = vpop.f32.mrf.mxu0
        %v2485 = vpop.f32.mrf.mxu0
        %v2486 = vadd.f32 %v2344, %v2485
        %v2487 = vpop.f32.mrf.mxu0
        %2488 = vmatprep.mubr.bf16.mxu0 0
        %2489 = vmatmul.mubr.bf16.gmra.mxu0 %v2356
        %v2490 = vpop.f32.mrf.mxu0
        %v2491 = vadd.f32 %v2344, %v2490
        %v2492 = vpop.f32.mrf.mxu0
        %v2493 = vpop.f32.mrf.mxu0
        %v2494 = vadd.f32 %v2344, %v2493
        %v2495 = vpop.f32.mrf.mxu0
        %2496 = vmatprep.mubr.bf16.mxu0 0
        %2497 = vmatmul.mubr.bf16.gmra.mxu0 %v2359
        %v2498 = vpop.f32.mrf.mxu0
        %v2499 = vadd.f32 %v2344, %v2498
        %v2500 = vpop.f32.mrf.mxu0
        %v2501 = vpop.f32.mrf.mxu0
        %v2502 = vadd.f32 %v2344, %v2501
        %v2503 = vpop.f32.mrf.mxu0
        %2504 = vmatprep.mubr.bf16.mxu0 0
        %2505 = vmatmul.mubr.bf16.gmra.mxu0 %v2362
        %v2506 = vpop.f32.mrf.mxu0
        %v2507 = vadd.f32 %v2344, %v2506
        %v2508 = vpop.f32.mrf.mxu0
        %v2509 = vpop.f32.mrf.mxu0
        %v2510 = vadd.f32 %v2344, %v2509
        %v2511 = vpop.f32.mrf.mxu0
        %2512 = vmatprep.mubr.bf16.mxu0 0
        %2513 = vmatmul.mubr.bf16.gmra.mxu0 %v2365
        %v2514 = vpop.f32.mrf.mxu0
        %v2515 = vadd.f32 %v2344, %v2514
        %v2516 = vpop.f32.mrf.mxu0
        %v2517 = vpop.f32.mrf.mxu0
        %v2518 = vadd.f32 %v2344, %v2517
        %v2519 = vpop.f32.mrf.mxu0
        %2520 = vmatprep.mubr.bf16.mxu0 0
        %2521 = vmatmul.mubr.bf16.gmra.mxu0 %v2368
        %v2522 = vpop.f32.mrf.mxu0
        %v2523 = vadd.f32 %v2344, %v2522
        %v2524 = vpop.f32.mrf.mxu0
        %v2525 = vpop.f32.mrf.mxu0
        %v2526 = vadd.f32 %v2344, %v2525
        %v2527 = vpop.f32.mrf.mxu0
        %2528 = vmatprep.mubr.bf16.mxu0 0
        %2529 = vmatmul.mubr.bf16.gmra.mxu0 %v2371
        %v2530 = vpop.f32.mrf.mxu0
        %v2531 = vadd.f32 %v2344, %v2530
        %v2532 = vpop.f32.mrf.mxu0
        %v2533 = vpop.f32.mrf.mxu0
        %v2534 = vadd.f32 %v2344, %v2533
        %v2535 = vpop.f32.mrf.mxu0
        %2536 = vmatprep.mubr.bf16.mxu0 0
        %2537 = vmatmul.mubr.bf16.gmra.mxu0 %v2374
        %v2538 = vpop.f32.mrf.mxu0
        %v2539 = vadd.f32 %v2344, %v2538
        %v2540 = vpop.f32.mrf.mxu0
        %v2541 = vpop.f32.mrf.mxu0
        %v2542 = vadd.f32 %v2344, %v2541
        %v2543 = vpop.f32.mrf.mxu0
        %2544 = vmatprep.mubr.bf16.mxu0 0
        %2545 = vmatmul.mubr.bf16.gmra.mxu0 %v2377
        %v2546 = vpop.f32.mrf.mxu0
        %v2547 = vadd.f32 %v2344, %v2546
        %v2548 = vpop.f32.mrf.mxu0
        %v2549 = vpop.f32.mrf.mxu0
        %v2550 = vadd.f32 %v2344, %v2549
        %v2551 = vpop.f32.mrf.mxu0
        %2552 = vmatprep.mubr.bf16.mxu0 0
        %2553 = vmatmul.mubr.bf16.gmra.mxu0 %v2380
        %v2554 = vpop.f32.mrf.mxu0
        %v2555 = vadd.f32 %v2344, %v2554
        %v2556 = vpop.f32.mrf.mxu0
        %v2557 = vpop.f32.mrf.mxu0
        %v2558 = vadd.f32 %v2344, %v2557
        %v2559 = vpop.f32.mrf.mxu0
        %2560 = vmatprep.mubr.bf16.mxu0 0
        %2561 = vmatmul.mubr.bf16.gmra.mxu0 %v2383
        %v2562 = vpop.f32.mrf.mxu0
        %v2563 = vadd.f32 %v2344, %v2562
        %v2564 = vpop.f32.mrf.mxu0
        %v2565 = vpop.f32.mrf.mxu0
        %v2566 = vadd.f32 %v2344, %v2565
        %v2567 = vpop.f32.mrf.mxu0
        %2568 = vmatprep.mubr.bf16.mxu0 0
        %2569 = vmatmul.mubr.bf16.gmra.mxu0 %v2386
        %v2570 = vpop.f32.mrf.mxu0
        %v2571 = vadd.f32 %v2344, %v2570
        %v2572 = vpop.f32.mrf.mxu0
        %v2573 = vpop.f32.mrf.mxu0
        %v2574 = vadd.f32 %v2344, %v2573
        %v2575 = vpop.f32.mrf.mxu0
        %2576 = vmatprep.mubr.bf16.mxu0 0
        %2577 = vmatmul.mubr.bf16.gmra.mxu0 %v2389
        %v2578 = vpop.f32.mrf.mxu0
        %v2579 = vadd.f32 %v2344, %v2578
        %v2580 = vpop.f32.mrf.mxu0
        %v2581 = vpop.f32.mrf.mxu0
        %v2582 = vadd.f32 %v2344, %v2581
        %v2583 = vpop.f32.mrf.mxu0
        %2584 = vmatprep.mubr.bf16.mxu0 0
        %2585 = vmatmul.mubr.bf16.gmra.mxu0 %v2392
        %v2586 = vpop.f32.mrf.mxu0
        %v2587 = vadd.f32 %v2344, %v2586
        %v2588 = vpop.f32.mrf.mxu0
        %v2589 = vpop.f32.mrf.mxu0
        %v2590 = vadd.f32 %v2344, %v2589
        %v2591 = vpop.f32.mrf.mxu0
        %2592 = vmatprep.mubr.bf16.mxu0 0
        %2593 = vmatmul.mubr.bf16.gmra.mxu0 %v2395
        %v2594 = vpop.f32.mrf.mxu0
        %v2595 = vadd.f32 %v2344, %v2594
        %v2596 = vpop.f32.mrf.mxu0
        %v2597 = vpop.f32.mrf.mxu0
        %v2598 = vadd.f32 %v2344, %v2597
        %v2599 = vpop.f32.mrf.mxu0
        %2600 = vmatprep.mubr.bf16.mxu0 0
        %2601 = vmatmul.mubr.bf16.gmra.mxu0 %v2398
        %v2602 = vpop.f32.mrf.mxu0
        %v2603 = vadd.f32 %v2344, %v2602
        %v2604 = vpop.f32.mrf.mxu0
        %v2605 = vpop.f32.mrf.mxu0
        %v2606 = vadd.f32 %v2344, %v2605
        %v2607 = vpop.f32.mrf.mxu0
        %2608 = vmatprep.mubr.bf16.mxu0 0
        %2609 = vmatmul.mubr.bf16.gmra.mxu0 %v2401
        %v2610 = vpop.f32.mrf.mxu0
        %v2611 = vadd.f32 %v2344, %v2610
        %v2612 = vpop.f32.mrf.mxu0
        %v2613 = vpop.f32.mrf.mxu0
        %v2614 = vadd.f32 %v2344, %v2613
        %v2615 = vpop.f32.mrf.mxu0
        %2616 = vmatprep.mubr.bf16.mxu0 0
        %2617 = vmatmul.mubr.bf16.gmra.mxu0 %v2404
        %v2618 = vpop.f32.mrf.mxu0
        %v2619 = vadd.f32 %v2344, %v2618
        %v2620 = vpop.f32.mrf.mxu0
        %v2621 = vpop.f32.mrf.mxu0
        %v2622 = vadd.f32 %v2344, %v2621
        %v2623 = vpop.f32.mrf.mxu0
        %2624 = vmatprep.mubr.bf16.mxu0 0
        %2625 = vmatmul.mubr.bf16.gmra.mxu0 %v2407
        %v2626 = vpop.f32.mrf.mxu0
        %v2627 = vadd.f32 %v2344, %v2626
        %v2628 = vpop.f32.mrf.mxu0
        %v2629 = vpop.f32.mrf.mxu0
        %v2630 = vadd.f32 %v2344, %v2629
        %v2631 = vpop.f32.mrf.mxu0
        %2632 = vmatprep.mubr.bf16.mxu0 0
        %2633 = vmatmul.mubr.bf16.gmra.mxu0 %v2410
        %v2634 = vpop.f32.mrf.mxu0
        %v2635 = vadd.f32 %v2344, %v2634
        %v2636 = vpop.f32.mrf.mxu0
        %v2637 = vpop.f32.mrf.mxu0
        %v2638 = vadd.f32 %v2344, %v2637
        %v2639 = vpop.f32.mrf.mxu0
        %2640 = vmatprep.mubr.bf16.mxu0 0
        %2641 = vmatmul.mubr.bf16.gmra.mxu0 %v2413
        %v2642 = vpop.f32.mrf.mxu0
        %v2643 = vadd.f32 %v2344, %v2642
        %v2644 = vpop.f32.mrf.mxu0
        %v2645 = vpop.f32.mrf.mxu0
        %v2646 = vadd.f32 %v2344, %v2645
        %v2647 = vpop.f32.mrf.mxu0
        %2648 = vmatprep.mubr.bf16.mxu0 0
        %2649 = vmatmul.mubr.bf16.gmra.mxu0 %v2416
        %v2650 = vpop.f32.mrf.mxu0
        %v2651 = vadd.f32 %v2344, %v2650
        %v2652 = vpop.f32.mrf.mxu0
        %v2653 = vpop.f32.mrf.mxu0
        %v2654 = vadd.f32 %v2344, %v2653
        %v2655 = vpop.f32.mrf.mxu0
        %2656 = vmatprep.mubr.bf16.mxu0 0
        %2657 = vmatmul.mubr.bf16.gmra.mxu0 %v2419
        %v2658 = vpop.f32.mrf.mxu0
        %v2659 = vadd.f32 %v2344, %v2658
        %v2660 = vpop.f32.mrf.mxu0
        %v2661 = vpop.f32.mrf.mxu0
        %v2662 = vadd.f32 %v2344, %v2661
        %v2663 = vpop.f32.mrf.mxu0
        %2664 = vmatprep.mubr.bf16.mxu0 0
        %2665 = vmatmul.mubr.bf16.gmra.mxu0 %v2422
        %v2666 = vpop.f32.mrf.mxu0
        %v2667 = vadd.f32 %v2344, %v2666
        %v2668 = vpop.f32.mrf.mxu0
        %v2669 = vpop.f32.mrf.mxu0
        %v2670 = vadd.f32 %v2344, %v2669
        %v2671 = vpop.f32.mrf.mxu0
        %2672 = vmatprep.mubr.bf16.mxu0 0
        %2673 = vmatmul.mubr.bf16.gmra.mxu0 %v2425
        %v2674 = vpop.f32.mrf.mxu0
        %v2675 = vadd.f32 %v2344, %v2674
        %v2676 = vpop.f32.mrf.mxu0
        %v2677 = vpop.f32.mrf.mxu0
        %v2678 = vadd.f32 %v2344, %v2677
        %v2679 = vpop.f32.mrf.mxu0
        %2680 = vmatprep.mubr.bf16.mxu0 0
        %2681 = vmatmul.mubr.bf16.gmra.mxu0 %v2428
        %v2682 = vpop.f32.mrf.mxu0
        %v2683 = vadd.f32 %v2344, %v2682
        %v2684 = vpop.f32.mrf.mxu0
        %v2685 = vpop.f32.mrf.mxu0
        %v2686 = vadd.f32 %v2344, %v2685
        %v2687 = vpop.f32.mrf.mxu0
        %2688 = vmatprep.mubr.bf16.mxu0 0
        %2689 = vmatmul.mubr.bf16.gmra.mxu0 %v2431
        %v2690 = vpop.f32.mrf.mxu0
        %v2691 = vadd.f32 %v2344, %v2690
        %v2692 = vpop.f32.mrf.mxu0
        %v2693 = vpop.f32.mrf.mxu0
        %v2694 = vadd.f32 %v2344, %v2693
        %v2695 = vpop.f32.mrf.mxu0
        %2696 = vmatprep.mubr.bf16.mxu0 0
        %2697 = vmatmul.mubr.bf16.gmra.mxu0 %v2434
        %v2698 = vpop.f32.mrf.mxu0
        %v2699 = vadd.f32 %v2344, %v2698
        %v2700 = vpop.f32.mrf.mxu0
        %v2701 = vpop.f32.mrf.mxu0
        %v2702 = vadd.f32 %v2344, %v2701
        %v2703 = vpop.f32.mrf.mxu0
        %2704 = vmatprep.mubr.bf16.mxu0 0
        %2705 = vmatmul.mubr.bf16.gmra.mxu0 %v2437
        %v2706 = vpop.f32.mrf.mxu0
        %v2707 = vadd.f32 %v2344, %v2706
        %v2708 = vpop.f32.mrf.mxu0
        %v2709 = vpop.f32.mrf.mxu0
        %v2710 = vadd.f32 %v2344, %v2709
        %v2711 = vpop.f32.mrf.mxu0
        %2712 = vmatprep.mubr.bf16.mxu0 0
        %2713 = vmatmul.mubr.bf16.gmra.mxu0 %v2440
        %v2714 = vpop.f32.mrf.mxu0
        %v2715 = vadd.f32 %v2344, %v2714
        %v2716 = vpop.f32.mrf.mxu0
        %v2717 = vpop.f32.mrf.mxu0
        %v2718 = vadd.f32 %v2344, %v2717
        %v2719 = vpop.f32.mrf.mxu0
        %2720 = vmatprep.mubr.bf16.mxu0 0
        %2721 = vmatmul.mubr.bf16.gmra.mxu0 %v2443
        %v2722 = vpop.f32.mrf.mxu0
        %v2723 = vadd.f32 %v2344, %v2722
        %v2724 = vpop.f32.mrf.mxu0
        %v2725 = vpop.f32.mrf.mxu0
        %v2726 = vadd.f32 %v2344, %v2725
        %v2727 = vpop.f32.mrf.mxu0
        %2728 = vmatprep.mubr.bf16.mxu0 0
        %2729 = vmatmul.mubr.bf16.gmra.mxu0 %v2446
        %v2730 = vpop.f32.mrf.mxu0
        %v2731 = vadd.f32 %v2344, %v2730
        %v2732 = vpop.f32.mrf.mxu0
        %v2733 = vpop.f32.mrf.mxu0
        %v2734 = vadd.f32 %v2344, %v2733
        %v2735 = vpop.f32.mrf.mxu0
        %2736 = vdwg.mxu0
        %v2737 = vld [vmem:[%s243] sm:$0xf]
        %v2738 = vld [vmem:[%s243 + $0x4] sm:$0xf]
        %v2739 = vld [vmem:[%s243 + $0x8] sm:$0xf]
        %v2740 = vld [vmem:[%s243 + $0xc] sm:$0xf]
        %v2741 = vld [vmem:[%s243 + $0x10] sm:$0xf]
        %v2742 = vld [vmem:[%s243 + $0x14] sm:$0xf]
        %v2743 = vld [vmem:[%s243 + $0x18] sm:$0xf]
        %v2744 = vld [vmem:[%s243 + $0x1c] sm:$0xf]
        %v2745 = vld [vmem:[%s243 + $0x20] sm:$0xf]
        %v2746 = vld [vmem:[%s243 + $0x24] sm:$0xf]
        %v2747 = vld [vmem:[%s243 + $0x28] sm:$0xf]
        %v2748 = vld [vmem:[%s243 + $0x2c] sm:$0xf]
        %v2749 = vld [vmem:[%s243 + $0x30] sm:$0xf]
        %v2750 = vld [vmem:[%s243 + $0x34] sm:$0xf]
        %v2751 = vld [vmem:[%s243 + $0x38] sm:$0xf]
        %v2752 = vld [vmem:[%s243 + $0x3c] sm:$0xf]
        %v2753 = vld [vmem:[%s243 + $0x40] sm:$0xf]
        %v2754 = vld [vmem:[%s243 + $0x44] sm:$0xf]
        %v2755 = vld [vmem:[%s243 + $0x48] sm:$0xf]
        %v2756 = vld [vmem:[%s243 + $0x4c] sm:$0xf]
        %v2757 = vld [vmem:[%s243 + $0x50] sm:$0xf]
        %v2758 = vld [vmem:[%s243 + $0x54] sm:$0xf]
        %v2759 = vld [vmem:[%s243 + $0x58] sm:$0xf]
        %v2760 = vld [vmem:[%s243 + $0x5c] sm:$0xf]
        %v2761 = vld [vmem:[%s243 + $0x60] sm:$0xf]
        %v2762 = vld [vmem:[%s243 + $0x64] sm:$0xf]
        %v2763 = vld [vmem:[%s243 + $0x68] sm:$0xf]
        %v2764 = vld [vmem:[%s243 + $0x6c] sm:$0xf]
        %v2765 = vld [vmem:[%s243 + $0x70] sm:$0xf]
        %v2766 = vld [vmem:[%s243 + $0x74] sm:$0xf]
        %v2767 = vld [vmem:[%s243 + $0x78] sm:$0xf]
        %v2768 = vld [vmem:[%s243 + $0x7c] sm:$0xf]
        %v2769 = vld [vmem:[%s243 + $0x80] sm:$0xf]
        %v2770 = vld [vmem:[%s243 + $0x84] sm:$0xf]
        %v2771 = vld [vmem:[%s243 + $0x88] sm:$0xf]
        %v2772 = vld [vmem:[%s243 + $0x8c] sm:$0xf]
        %v2773 = vld [vmem:[%s243 + $0x90] sm:$0xf]
        %v2774 = vld [vmem:[%s243 + $0x94] sm:$0xf]
        %v2775 = vld [vmem:[%s243 + $0x98] sm:$0xf]
        %v2776 = vld [vmem:[%s243 + $0x9c] sm:$0xf]
        %v2777 = vld [vmem:[%s243 + $0xa0] sm:$0xf]
        %v2778 = vld [vmem:[%s243 + $0xa4] sm:$0xf]
        %v2779 = vld [vmem:[%s243 + $0xa8] sm:$0xf]
        %v2780 = vld [vmem:[%s243 + $0xac] sm:$0xf]
        %v2781 = vld [vmem:[%s243 + $0xb0] sm:$0xf]
        %v2782 = vld [vmem:[%s243 + $0xb4] sm:$0xf]
        %v2783 = vld [vmem:[%s243 + $0xb8] sm:$0xf]
        %v2784 = vld [vmem:[%s243 + $0xbc] sm:$0xf]
        %v2785 = vld [vmem:[%s243 + $0xc0] sm:$0xf]
        %v2786 = vld [vmem:[%s243 + $0xc4] sm:$0xf]
        %v2787 = vld [vmem:[%s243 + $0xc8] sm:$0xf]
        %v2788 = vld [vmem:[%s243 + $0xcc] sm:$0xf]
        %v2789 = vld [vmem:[%s243 + $0xd0] sm:$0xf]
        %v2790 = vld [vmem:[%s243 + $0xd4] sm:$0xf]
        %v2791 = vld [vmem:[%s243 + $0xd8] sm:$0xf]
        %v2792 = vld [vmem:[%s243 + $0xdc] sm:$0xf]
        %v2793 = vld [vmem:[%s243 + $0xe0] sm:$0xf]
        %v2794 = vld [vmem:[%s243 + $0xe4] sm:$0xf]
        %v2795 = vld [vmem:[%s243 + $0xe8] sm:$0xf]
        %v2796 = vld [vmem:[%s243 + $0xec] sm:$0xf]
        %v2797 = vld [vmem:[%s243 + $0xf0] sm:$0xf]
        %v2798 = vld [vmem:[%s243 + $0xf4] sm:$0xf]
        %v2799 = vld [vmem:[%s243 + $0xf8] sm:$0xf]
        %v2800 = vld [vmem:[%s243 + $0xfc] sm:$0xf]
        %v2801 = vld [vmem:[%s2 + $0x78] sm:$0x3]
        %v2802 = vld [vmem:[%s3 + $0x4] sm:$0x1]
        %v2803 = vlaneseq
        %v2804 = vshrl.u32 %v2803, 7
        %v2805 = vsub.s32 0, %v2804
        %v2806 = vrot.slane %v2802, %v2805
        %v2871 = vunpack.c.l.b16 %v2737
        %v2872 = vunpack.c.l.b16 %v2738
        %v2873 = vunpack.c.l.b16 %v2739
        %v2874 = vunpack.c.l.b16 %v2740
        %v2875 = vunpack.c.l.b16 %v2741
        %v2876 = vunpack.c.l.b16 %v2742
        %v2877 = vunpack.c.l.b16 %v2743
        %v2878 = vunpack.c.l.b16 %v2744
        %v2879 = vunpack.c.l.b16 %v2745
        %v2880 = vunpack.c.l.b16 %v2746
        %v2881 = vunpack.c.l.b16 %v2747
        %v2882 = vunpack.c.l.b16 %v2748
        %v2883 = vunpack.c.l.b16 %v2749
        %v2884 = vunpack.c.l.b16 %v2750
        %v2885 = vunpack.c.l.b16 %v2751
        %v2886 = vunpack.c.l.b16 %v2752
        %v2887 = vunpack.c.l.b16 %v2753
        %v2888 = vunpack.c.l.b16 %v2754
        %v2889 = vunpack.c.l.b16 %v2755
        %v2890 = vunpack.c.l.b16 %v2756
        %v2891 = vunpack.c.l.b16 %v2757
        %v2892 = vunpack.c.l.b16 %v2758
        %v2893 = vunpack.c.l.b16 %v2759
        %v2894 = vunpack.c.l.b16 %v2760
        %v2895 = vunpack.c.l.b16 %v2761
        %v2896 = vunpack.c.l.b16 %v2762
        %v2897 = vunpack.c.l.b16 %v2763
        %v2898 = vunpack.c.l.b16 %v2764
        %v2899 = vunpack.c.l.b16 %v2765
        %v2900 = vunpack.c.l.b16 %v2766
        %v2901 = vunpack.c.l.b16 %v2767
        %v2902 = vunpack.c.l.b16 %v2768
        %v2903 = vunpack.c.l.b16 %v2769
        %v2904 = vunpack.c.l.b16 %v2770
        %v2905 = vunpack.c.l.b16 %v2771
        %v2906 = vunpack.c.l.b16 %v2772
        %v2907 = vunpack.c.l.b16 %v2773
        %v2908 = vunpack.c.l.b16 %v2774
        %v2909 = vunpack.c.l.b16 %v2775
        %v2910 = vunpack.c.l.b16 %v2776
        %v2911 = vunpack.c.l.b16 %v2777
        %v2912 = vunpack.c.l.b16 %v2778
        %v2913 = vunpack.c.l.b16 %v2779
        %v2914 = vunpack.c.l.b16 %v2780
        %v2915 = vunpack.c.l.b16 %v2781
        %v2916 = vunpack.c.l.b16 %v2782
        %v2917 = vunpack.c.l.b16 %v2783
        %v2918 = vunpack.c.l.b16 %v2784
        %v2919 = vunpack.c.l.b16 %v2785
        %v2920 = vunpack.c.l.b16 %v2786
        %v2921 = vunpack.c.l.b16 %v2787
        %v2922 = vunpack.c.l.b16 %v2788
        %v2923 = vunpack.c.l.b16 %v2789
        %v2924 = vunpack.c.l.b16 %v2790
        %v2925 = vunpack.c.l.b16 %v2791
        %v2926 = vunpack.c.l.b16 %v2792
        %v2927 = vunpack.c.l.b16 %v2793
        %v2928 = vunpack.c.l.b16 %v2794
        %v2929 = vunpack.c.l.b16 %v2795
        %v2930 = vunpack.c.l.b16 %v2796
        %v2931 = vunpack.c.l.b16 %v2797
        %v2932 = vunpack.c.l.b16 %v2798
        %v2933 = vunpack.c.l.b16 %v2799
        %v2934 = vunpack.c.l.b16 %v2800
        %v2935 = vpack.c.b16 %v2872, %v2871
        %v2936 = vpack.c.b16 %v2874, %v2873
        %v2937 = vpack.c.b16 %v2876, %v2875
        %v2938 = vpack.c.b16 %v2878, %v2877
        %v2939 = vpack.c.b16 %v2880, %v2879
        %v2940 = vpack.c.b16 %v2882, %v2881
        %v2941 = vpack.c.b16 %v2884, %v2883
        %v2942 = vpack.c.b16 %v2886, %v2885
        %v2943 = vpack.c.b16 %v2888, %v2887
        %v2944 = vpack.c.b16 %v2890, %v2889
        %v2945 = vpack.c.b16 %v2892, %v2891
        %v2946 = vpack.c.b16 %v2894, %v2893
        %v2947 = vpack.c.b16 %v2896, %v2895
        %v2948 = vpack.c.b16 %v2898, %v2897
        %v2949 = vpack.c.b16 %v2900, %v2899
        %v2950 = vpack.c.b16 %v2902, %v2901
        %v2951 = vpack.c.b16 %v2904, %v2903
        %v2952 = vpack.c.b16 %v2906, %v2905
        %v2953 = vpack.c.b16 %v2908, %v2907
        %v2954 = vpack.c.b16 %v2910, %v2909
        %v2955 = vpack.c.b16 %v2912, %v2911
        %v2956 = vpack.c.b16 %v2914, %v2913
        %v2957 = vpack.c.b16 %v2916, %v2915
        %v2958 = vpack.c.b16 %v2918, %v2917
        %v2959 = vpack.c.b16 %v2920, %v2919
        %v2960 = vpack.c.b16 %v2922, %v2921
        %v2961 = vpack.c.b16 %v2924, %v2923
        %v2962 = vpack.c.b16 %v2926, %v2925
        %v2963 = vpack.c.b16 %v2928, %v2927
        %v2964 = vpack.c.b16 %v2930, %v2929
        %v2965 = vpack.c.b16 %v2932, %v2931
        %v2966 = vpack.c.b16 %v2934, %v2933
        %vm2967 = vcmask 31744
        %v2969 = vsel %vm2967, %v2935, 0
        %v2972 = vsel %vm2967, %v2936, 0
        %v2975 = vsel %vm2967, %v2937, 0
        %v2978 = vsel %vm2967, %v2938, 0
        %v2981 = vsel %vm2967, %v2939, 0
        %v2984 = vsel %vm2967, %v2940, 0
        %v2987 = vsel %vm2967, %v2941, 0
        %v2990 = vsel %vm2967, %v2942, 0
        %v2993 = vsel %vm2967, %v2943, 0
        %v2996 = vsel %vm2967, %v2944, 0
        %v2999 = vsel %vm2967, %v2945, 0
        %v3002 = vsel %vm2967, %v2946, 0
        %v3005 = vsel %vm2967, %v2947, 0
        %v3008 = vsel %vm2967, %v2948, 0
        %v3011 = vsel %vm2967, %v2949, 0
        %v3014 = vsel %vm2967, %v2950, 0
        %v3017 = vsel %vm2967, %v2951, 0
        %v3020 = vsel %vm2967, %v2952, 0
        %v3023 = vsel %vm2967, %v2953, 0
        %v3026 = vsel %vm2967, %v2954, 0
        %v3029 = vsel %vm2967, %v2955, 0
        %v3032 = vsel %vm2967, %v2956, 0
        %v3035 = vsel %vm2967, %v2957, 0
        %v3038 = vsel %vm2967, %v2958, 0
        %v3041 = vsel %vm2967, %v2959, 0
        %v3044 = vsel %vm2967, %v2960, 0
        %v3047 = vsel %vm2967, %v2961, 0
        %v3050 = vsel %vm2967, %v2962, 0
        %v3053 = vsel %vm2967, %v2963, 0
        %v3056 = vsel %vm2967, %v2964, 0
        %v3059 = vsel %vm2967, %v2965, 0
        %v3062 = vsel %vm2967, %v2966, 0
        %vm3064 = vcmask 1041408
        %v3066 = vsel %vm3064, %v2801, 0
        %3068 = vmatprep.subr.bf16.mxu0 0
        %3069 = vmatpush1.bf16.msra.mxu0 0
        %3070 = vmatprep.subr.bf16.mxu0 0
        %3071 = vmatpush1.bf16.msra.mxu0 0
        %3072 = vmatprep.subr.bf16.mxu0 0
        %3073 = vmatpush1.bf16.msra.mxu0 0
        %3074 = vmatprep.subr.bf16.mxu0 0
        %3075 = vmatpush1.bf16.msra.mxu0 0
        %3076 = vmatprep.subr.bf16.mxu0 0
        %3077 = vmatpush1.bf16.msra.mxu0 0
        %3078 = vmatprep.subr.bf16.mxu0 0
        %3079 = vmatpush1.bf16.msra.mxu0 0
        %3080 = vmatprep.subr.bf16.mxu0 0
        %3081 = vmatpush1.bf16.msra.mxu0 0
        %3082 = vmatprep.subr.bf16.mxu0 0
        %3083 = vmatpush1.bf16.msra.mxu0 %v3066
        %3084 = vmatprep.subr.bf16.mxu0 0
        %3085 = vmatpush2.bf16.msra.mxu0 0
        %3086 = vmatprep.subr.bf16.mxu0 0
        %3087 = vmatpush2.bf16.msra.mxu0 0
        %3088 = vmatprep.subr.bf16.mxu0 0
        %3089 = vmatpush2.bf16.msra.mxu0 0
        %3090 = vmatprep.subr.bf16.mxu0 0
        %3091 = vmatpush2.bf16.msra.mxu0 0
        %3092 = vmatprep.subr.bf16.mxu0 0
        %3093 = vmatpush2.bf16.msra.mxu0 0
        %3094 = vmatprep.subr.bf16.mxu0 0
        %3095 = vmatpush2.bf16.msra.mxu0 0
        %3096 = vmatprep.subr.bf16.mxu0 0
        %3097 = vmatpush2.bf16.msra.mxu0 0
        %3098 = vmatprep.subr.bf16.mxu0 0
        %3099 = vmatpush2.bf16.msra.mxu0 0
        %3100 = vmatprep.mubr.bf16.mxu0 0
        %3101 = vmatmul.mubr.bf16.gmra.mxu0 %v2969
        %v3102 = vpop.f32.mrf.mxu0
        %v3103 = vadd.f32 %v2806, %v3102
        %v3104 = vpop.f32.mrf.mxu0
        %v3105 = vpop.f32.mrf.mxu0
        %v3106 = vadd.f32 %v2806, %v3105
        %v3107 = vpop.f32.mrf.mxu0
        %3108 = vmatprep.mubr.bf16.mxu0 0
        %3109 = vmatmul.mubr.bf16.gmra.mxu0 %v2972
        %v3110 = vpop.f32.mrf.mxu0
        %v3111 = vadd.f32 %v2806, %v3110
        %v3112 = vpop.f32.mrf.mxu0
        %v3113 = vpop.f32.mrf.mxu0
        %v3114 = vadd.f32 %v2806, %v3113
        %v3115 = vpop.f32.mrf.mxu0
        %3116 = vmatprep.mubr.bf16.mxu0 0
        %3117 = vmatmul.mubr.bf16.gmra.mxu0 %v2975
        %v3118 = vpop.f32.mrf.mxu0
        %v3119 = vadd.f32 %v2806, %v3118
        %v3120 = vpop.f32.mrf.mxu0
        %v3121 = vpop.f32.mrf.mxu0
        %v3122 = vadd.f32 %v2806, %v3121
        %v3123 = vpop.f32.mrf.mxu0
        %3124 = vmatprep.mubr.bf16.mxu0 0
        %3125 = vmatmul.mubr.bf16.gmra.mxu0 %v2978
        %v3126 = vpop.f32.mrf.mxu0
        %v3127 = vadd.f32 %v2806, %v3126
        %v3128 = vpop.f32.mrf.mxu0
        %v3129 = vpop.f32.mrf.mxu0
        %v3130 = vadd.f32 %v2806, %v3129
        %v3131 = vpop.f32.mrf.mxu0
        %3132 = vmatprep.mubr.bf16.mxu0 0
        %3133 = vmatmul.mubr.bf16.gmra.mxu0 %v2981
        %v3134 = vpop.f32.mrf.mxu0
        %v3135 = vadd.f32 %v2806, %v3134
        %v3136 = vpop.f32.mrf.mxu0
        %v3137 = vpop.f32.mrf.mxu0
        %v3138 = vadd.f32 %v2806, %v3137
        %v3139 = vpop.f32.mrf.mxu0
        %3140 = vmatprep.mubr.bf16.mxu0 0
        %3141 = vmatmul.mubr.bf16.gmra.mxu0 %v2984
        %v3142 = vpop.f32.mrf.mxu0
        %v3143 = vadd.f32 %v2806, %v3142
        %v3144 = vpop.f32.mrf.mxu0
        %v3145 = vpop.f32.mrf.mxu0
        %v3146 = vadd.f32 %v2806, %v3145
        %v3147 = vpop.f32.mrf.mxu0
        %3148 = vmatprep.mubr.bf16.mxu0 0
        %3149 = vmatmul.mubr.bf16.gmra.mxu0 %v2987
        %v3150 = vpop.f32.mrf.mxu0
        %v3151 = vadd.f32 %v2806, %v3150
        %v3152 = vpop.f32.mrf.mxu0
        %v3153 = vpop.f32.mrf.mxu0
        %v3154 = vadd.f32 %v2806, %v3153
        %v3155 = vpop.f32.mrf.mxu0
        %3156 = vmatprep.mubr.bf16.mxu0 0
        %3157 = vmatmul.mubr.bf16.gmra.mxu0 %v2990
        %v3158 = vpop.f32.mrf.mxu0
        %v3159 = vadd.f32 %v2806, %v3158
        %v3160 = vpop.f32.mrf.mxu0
        %v3161 = vpop.f32.mrf.mxu0
        %v3162 = vadd.f32 %v2806, %v3161
        %v3163 = vpop.f32.mrf.mxu0
        %3164 = vmatprep.mubr.bf16.mxu0 0
        %3165 = vmatmul.mubr.bf16.gmra.mxu0 %v2993
        %v3166 = vpop.f32.mrf.mxu0
        %v3167 = vadd.f32 %v2806, %v3166
        %v3168 = vpop.f32.mrf.mxu0
        %v3169 = vpop.f32.mrf.mxu0
        %v3170 = vadd.f32 %v2806, %v3169
        %v3171 = vpop.f32.mrf.mxu0
        %3172 = vmatprep.mubr.bf16.mxu0 0
        %3173 = vmatmul.mubr.bf16.gmra.mxu0 %v2996
        %v3174 = vpop.f32.mrf.mxu0
        %v3175 = vadd.f32 %v2806, %v3174
        %v3176 = vpop.f32.mrf.mxu0
        %v3177 = vpop.f32.mrf.mxu0
        %v3178 = vadd.f32 %v2806, %v3177
        %v3179 = vpop.f32.mrf.mxu0
        %3180 = vmatprep.mubr.bf16.mxu0 0
        %3181 = vmatmul.mubr.bf16.gmra.mxu0 %v2999
        %v3182 = vpop.f32.mrf.mxu0
        %v3183 = vadd.f32 %v2806, %v3182
        %v3184 = vpop.f32.mrf.mxu0
        %v3185 = vpop.f32.mrf.mxu0
        %v3186 = vadd.f32 %v2806, %v3185
        %v3187 = vpop.f32.mrf.mxu0
        %3188 = vmatprep.mubr.bf16.mxu0 0
        %3189 = vmatmul.mubr.bf16.gmra.mxu0 %v3002
        %v3190 = vpop.f32.mrf.mxu0
        %v3191 = vadd.f32 %v2806, %v3190
        %v3192 = vpop.f32.mrf.mxu0
        %v3193 = vpop.f32.mrf.mxu0
        %v3194 = vadd.f32 %v2806, %v3193
        %v3195 = vpop.f32.mrf.mxu0
        %3196 = vmatprep.mubr.bf16.mxu0 0
        %3197 = vmatmul.mubr.bf16.gmra.mxu0 %v3005
        %v3198 = vpop.f32.mrf.mxu0
        %v3199 = vadd.f32 %v2806, %v3198
        %v3200 = vpop.f32.mrf.mxu0
        %v3201 = vpop.f32.mrf.mxu0
        %v3202 = vadd.f32 %v2806, %v3201
        %v3203 = vpop.f32.mrf.mxu0
        %3204 = vmatprep.mubr.bf16.mxu0 0
        %3205 = vmatmul.mubr.bf16.gmra.mxu0 %v3008
        %v3206 = vpop.f32.mrf.mxu0
        %v3207 = vadd.f32 %v2806, %v3206
        %v3208 = vpop.f32.mrf.mxu0
        %v3209 = vpop.f32.mrf.mxu0
        %v3210 = vadd.f32 %v2806, %v3209
        %v3211 = vpop.f32.mrf.mxu0
        %3212 = vmatprep.mubr.bf16.mxu0 0
        %3213 = vmatmul.mubr.bf16.gmra.mxu0 %v3011
        %v3214 = vpop.f32.mrf.mxu0
        %v3215 = vadd.f32 %v2806, %v3214
        %v3216 = vpop.f32.mrf.mxu0
        %v3217 = vpop.f32.mrf.mxu0
        %v3218 = vadd.f32 %v2806, %v3217
        %v3219 = vpop.f32.mrf.mxu0
        %3220 = vmatprep.mubr.bf16.mxu0 0
        %3221 = vmatmul.mubr.bf16.gmra.mxu0 %v3014
        %v3222 = vpop.f32.mrf.mxu0
        %v3223 = vadd.f32 %v2806, %v3222
        %v3224 = vpop.f32.mrf.mxu0
        %v3225 = vpop.f32.mrf.mxu0
        %v3226 = vadd.f32 %v2806, %v3225
        %v3227 = vpop.f32.mrf.mxu0
        %3228 = vmatprep.mubr.bf16.mxu0 0
        %3229 = vmatmul.mubr.bf16.gmra.mxu0 %v3017
        %v3230 = vpop.f32.mrf.mxu0
        %v3231 = vadd.f32 %v2806, %v3230
        %v3232 = vpop.f32.mrf.mxu0
        %v3233 = vpop.f32.mrf.mxu0
        %v3234 = vadd.f32 %v2806, %v3233
        %v3235 = vpop.f32.mrf.mxu0
        %3236 = vmatprep.mubr.bf16.mxu0 0
        %3237 = vmatmul.mubr.bf16.gmra.mxu0 %v3020
        %v3238 = vpop.f32.mrf.mxu0
        %v3239 = vadd.f32 %v2806, %v3238
        %v3240 = vpop.f32.mrf.mxu0
        %v3241 = vpop.f32.mrf.mxu0
        %v3242 = vadd.f32 %v2806, %v3241
        %v3243 = vpop.f32.mrf.mxu0
        %3244 = vmatprep.mubr.bf16.mxu0 0
        %3245 = vmatmul.mubr.bf16.gmra.mxu0 %v3023
        %v3246 = vpop.f32.mrf.mxu0
        %v3247 = vadd.f32 %v2806, %v3246
        %v3248 = vpop.f32.mrf.mxu0
        %v3249 = vpop.f32.mrf.mxu0
        %v3250 = vadd.f32 %v2806, %v3249
        %v3251 = vpop.f32.mrf.mxu0
        %3252 = vmatprep.mubr.bf16.mxu0 0
        %3253 = vmatmul.mubr.bf16.gmra.mxu0 %v3026
        %v3254 = vpop.f32.mrf.mxu0
        %v3255 = vadd.f32 %v2806, %v3254
        %v3256 = vpop.f32.mrf.mxu0
        %v3257 = vpop.f32.mrf.mxu0
        %v3258 = vadd.f32 %v2806, %v3257
        %v3259 = vpop.f32.mrf.mxu0
        %3260 = vmatprep.mubr.bf16.mxu0 0
        %3261 = vmatmul.mubr.bf16.gmra.mxu0 %v3029
        %v3262 = vpop.f32.mrf.mxu0
        %v3263 = vadd.f32 %v2806, %v3262
        %v3264 = vpop.f32.mrf.mxu0
        %v3265 = vpop.f32.mrf.mxu0
        %v3266 = vadd.f32 %v2806, %v3265
        %v3267 = vpop.f32.mrf.mxu0
        %3268 = vmatprep.mubr.bf16.mxu0 0
        %3269 = vmatmul.mubr.bf16.gmra.mxu0 %v3032
        %v3270 = vpop.f32.mrf.mxu0
        %v3271 = vadd.f32 %v2806, %v3270
        %v3272 = vpop.f32.mrf.mxu0
        %v3273 = vpop.f32.mrf.mxu0
        %v3274 = vadd.f32 %v2806, %v3273
        %v3275 = vpop.f32.mrf.mxu0
        %3276 = vmatprep.mubr.bf16.mxu0 0
        %3277 = vmatmul.mubr.bf16.gmra.mxu0 %v3035
        %v3278 = vpop.f32.mrf.mxu0
        %v3279 = vadd.f32 %v2806, %v3278
        %v3280 = vpop.f32.mrf.mxu0
        %v3281 = vpop.f32.mrf.mxu0
        %v3282 = vadd.f32 %v2806, %v3281
        %v3283 = vpop.f32.mrf.mxu0
        %3284 = vmatprep.mubr.bf16.mxu0 0
        %3285 = vmatmul.mubr.bf16.gmra.mxu0 %v3038
        %v3286 = vpop.f32.mrf.mxu0
        %v3287 = vadd.f32 %v2806, %v3286
        %v3288 = vpop.f32.mrf.mxu0
        %v3289 = vpop.f32.mrf.mxu0
        %v3290 = vadd.f32 %v2806, %v3289
        %v3291 = vpop.f32.mrf.mxu0
        %3292 = vmatprep.mubr.bf16.mxu0 0
        %3293 = vmatmul.mubr.bf16.gmra.mxu0 %v3041
        %v3294 = vpop.f32.mrf.mxu0
        %v3295 = vadd.f32 %v2806, %v3294
        %v3296 = vpop.f32.mrf.mxu0
        %v3297 = vpop.f32.mrf.mxu0
        %v3298 = vadd.f32 %v2806, %v3297
        %v3299 = vpop.f32.mrf.mxu0
        %3300 = vmatprep.mubr.bf16.mxu0 0
        %3301 = vmatmul.mubr.bf16.gmra.mxu0 %v3044
        %v3302 = vpop.f32.mrf.mxu0
        %v3303 = vadd.f32 %v2806, %v3302
        %v3304 = vpop.f32.mrf.mxu0
        %v3305 = vpop.f32.mrf.mxu0
        %v3306 = vadd.f32 %v2806, %v3305
        %v3307 = vpop.f32.mrf.mxu0
        %3308 = vmatprep.mubr.bf16.mxu0 0
        %3309 = vmatmul.mubr.bf16.gmra.mxu0 %v3047
        %v3310 = vpop.f32.mrf.mxu0
        %v3311 = vadd.f32 %v2806, %v3310
        %v3312 = vpop.f32.mrf.mxu0
        %v3313 = vpop.f32.mrf.mxu0
        %v3314 = vadd.f32 %v2806, %v3313
        %v3315 = vpop.f32.mrf.mxu0
        %3316 = vmatprep.mubr.bf16.mxu0 0
        %3317 = vmatmul.mubr.bf16.gmra.mxu0 %v3050
        %v3318 = vpop.f32.mrf.mxu0
        %v3319 = vadd.f32 %v2806, %v3318
        %v3320 = vpop.f32.mrf.mxu0
        %v3321 = vpop.f32.mrf.mxu0
        %v3322 = vadd.f32 %v2806, %v3321
        %v3323 = vpop.f32.mrf.mxu0
        %3324 = vmatprep.mubr.bf16.mxu0 0
        %3325 = vmatmul.mubr.bf16.gmra.mxu0 %v3053
        %v3326 = vpop.f32.mrf.mxu0
        %v3327 = vadd.f32 %v2806, %v3326
        %v3328 = vpop.f32.mrf.mxu0
        %v3329 = vpop.f32.mrf.mxu0
        %v3330 = vadd.f32 %v2806, %v3329
        %v3331 = vpop.f32.mrf.mxu0
        %3332 = vmatprep.mubr.bf16.mxu0 0
        %3333 = vmatmul.mubr.bf16.gmra.mxu0 %v3056
        %v3334 = vpop.f32.mrf.mxu0
        %v3335 = vadd.f32 %v2806, %v3334
        %v3336 = vpop.f32.mrf.mxu0
        %v3337 = vpop.f32.mrf.mxu0
        %v3338 = vadd.f32 %v2806, %v3337
        %v3339 = vpop.f32.mrf.mxu0
        %3340 = vmatprep.mubr.bf16.mxu0 0
        %3341 = vmatmul.mubr.bf16.gmra.mxu0 %v3059
        %v3342 = vpop.f32.mrf.mxu0
        %v3343 = vadd.f32 %v2806, %v3342
        %v3344 = vpop.f32.mrf.mxu0
        %v3345 = vpop.f32.mrf.mxu0
        %v3346 = vadd.f32 %v2806, %v3345
        %v3347 = vpop.f32.mrf.mxu0
        %3348 = vmatprep.mubr.bf16.mxu0 0
        %3349 = vmatmul.mubr.bf16.gmra.mxu0 %v3062
        %v3350 = vpop.f32.mrf.mxu0
        %v3351 = vadd.f32 %v2806, %v3350
        %v3352 = vpop.f32.mrf.mxu0
        %v3353 = vpop.f32.mrf.mxu0
        %v3354 = vadd.f32 %v2806, %v3353
        %v3355 = vpop.f32.mrf.mxu0
        %3356 = vdwg.mxu0
        %vm3357 = vcmp.gt.f32.partialorder %v3103, 0.0
        %vm3358 = vcmp.gt.f32.partialorder %v3106, 0.0
        %vm3359 = vcmp.gt.f32.partialorder %v3111, 0.0
        %vm3360 = vcmp.gt.f32.partialorder %v3114, 0.0
        %vm3361 = vcmp.gt.f32.partialorder %v3119, 0.0
        %vm3362 = vcmp.gt.f32.partialorder %v3122, 0.0
        %vm3363 = vcmp.gt.f32.partialorder %v3127, 0.0
        %vm3364 = vcmp.gt.f32.partialorder %v3130, 0.0
        %vm3365 = vcmp.gt.f32.partialorder %v3135, 0.0
        %vm3366 = vcmp.gt.f32.partialorder %v3138, 0.0
        %vm3367 = vcmp.gt.f32.partialorder %v3143, 0.0
        %vm3368 = vcmp.gt.f32.partialorder %v3146, 0.0
        %vm3369 = vcmp.gt.f32.partialorder %v3151, 0.0
        %vm3370 = vcmp.gt.f32.partialorder %v3154, 0.0
        %vm3371 = vcmp.gt.f32.partialorder %v3159, 0.0
        %vm3372 = vcmp.gt.f32.partialorder %v3162, 0.0
        %vm3373 = vcmp.gt.f32.partialorder %v3167, 0.0
        %vm3374 = vcmp.gt.f32.partialorder %v3170, 0.0
        %vm3375 = vcmp.gt.f32.partialorder %v3175, 0.0
        %vm3376 = vcmp.gt.f32.partialorder %v3178, 0.0
        %vm3377 = vcmp.gt.f32.partialorder %v3183, 0.0
        %vm3378 = vcmp.gt.f32.partialorder %v3186, 0.0
        %vm3379 = vcmp.gt.f32.partialorder %v3191, 0.0
        %vm3380 = vcmp.gt.f32.partialorder %v3194, 0.0
        %vm3381 = vcmp.gt.f32.partialorder %v3199, 0.0
        %vm3382 = vcmp.gt.f32.partialorder %v3202, 0.0
        %vm3383 = vcmp.gt.f32.partialorder %v3207, 0.0
        %vm3384 = vcmp.gt.f32.partialorder %v3210, 0.0
        %vm3385 = vcmp.gt.f32.partialorder %v3215, 0.0
        %vm3386 = vcmp.gt.f32.partialorder %v3218, 0.0
        %vm3387 = vcmp.gt.f32.partialorder %v3223, 0.0
        %vm3388 = vcmp.gt.f32.partialorder %v3226, 0.0
        %vm3389 = vcmp.gt.f32.partialorder %v3231, 0.0
        %vm3390 = vcmp.gt.f32.partialorder %v3234, 0.0
        %vm3391 = vcmp.gt.f32.partialorder %v3239, 0.0
        %vm3392 = vcmp.gt.f32.partialorder %v3242, 0.0
        %vm3393 = vcmp.gt.f32.partialorder %v3247, 0.0
        %vm3394 = vcmp.gt.f32.partialorder %v3250, 0.0
        %vm3395 = vcmp.gt.f32.partialorder %v3255, 0.0
        %vm3396 = vcmp.gt.f32.partialorder %v3258, 0.0
        %vm3397 = vcmp.gt.f32.partialorder %v3263, 0.0
        %vm3398 = vcmp.gt.f32.partialorder %v3266, 0.0
        %vm3399 = vcmp.gt.f32.partialorder %v3271, 0.0
        %vm3400 = vcmp.gt.f32.partialorder %v3274, 0.0
        %vm3401 = vcmp.gt.f32.partialorder %v3279, 0.0
        %vm3402 = vcmp.gt.f32.partialorder %v3282, 0.0
        %vm3403 = vcmp.gt.f32.partialorder %v3287, 0.0
        %vm3404 = vcmp.gt.f32.partialorder %v3290, 0.0
        %vm3405 = vcmp.gt.f32.partialorder %v3295, 0.0
        %vm3406 = vcmp.gt.f32.partialorder %v3298, 0.0
        %vm3407 = vcmp.gt.f32.partialorder %v3303, 0.0
        %vm3408 = vcmp.gt.f32.partialorder %v3306, 0.0
        %vm3409 = vcmp.gt.f32.partialorder %v3311, 0.0
        %vm3410 = vcmp.gt.f32.partialorder %v3314, 0.0
        %vm3411 = vcmp.gt.f32.partialorder %v3319, 0.0
        %vm3412 = vcmp.gt.f32.partialorder %v3322, 0.0
        %vm3413 = vcmp.gt.f32.partialorder %v3327, 0.0
        %vm3414 = vcmp.gt.f32.partialorder %v3330, 0.0
        %vm3415 = vcmp.gt.f32.partialorder %v3335, 0.0
        %vm3416 = vcmp.gt.f32.partialorder %v3338, 0.0
        %vm3417 = vcmp.gt.f32.partialorder %v3343, 0.0
        %vm3418 = vcmp.gt.f32.partialorder %v3346, 0.0
        %vm3419 = vcmp.gt.f32.partialorder %v3351, 0.0
        %vm3420 = vcmp.gt.f32.partialorder %v3354, 0.0
        %v3421 = vmul.f32 %v3103, 0.01
        %v3422 = vmul.f32 %v3106, 0.01
        %v3423 = vmul.f32 %v3111, 0.01
        %v3424 = vmul.f32 %v3114, 0.01
        %v3425 = vmul.f32 %v3119, 0.01
        %v3426 = vmul.f32 %v3122, 0.01
        %v3427 = vmul.f32 %v3127, 0.01
        %v3428 = vmul.f32 %v3130, 0.01
        %v3429 = vmul.f32 %v3135, 0.01
        %v3430 = vmul.f32 %v3138, 0.01
        %v3431 = vmul.f32 %v3143, 0.01
        %v3432 = vmul.f32 %v3146, 0.01
        %v3433 = vmul.f32 %v3151, 0.01
        %v3434 = vmul.f32 %v3154, 0.01
        %v3435 = vmul.f32 %v3159, 0.01
        %v3436 = vmul.f32 %v3162, 0.01
        %v3437 = vmul.f32 %v3167, 0.01
        %v3438 = vmul.f32 %v3170, 0.01
        %v3439 = vmul.f32 %v3175, 0.01
        %v3440 = vmul.f32 %v3178, 0.01
        %v3441 = vmul.f32 %v3183, 0.01
        %v3442 = vmul.f32 %v3186, 0.01
        %v3443 = vmul.f32 %v3191, 0.01
        %v3444 = vmul.f32 %v3194, 0.01
        %v3445 = vmul.f32 %v3199, 0.01
        %v3446 = vmul.f32 %v3202, 0.01
        %v3447 = vmul.f32 %v3207, 0.01
        %v3448 = vmul.f32 %v3210, 0.01
        %v3449 = vmul.f32 %v3215, 0.01
        %v3450 = vmul.f32 %v3218, 0.01
        %v3451 = vmul.f32 %v3223, 0.01
        %v3452 = vmul.f32 %v3226, 0.01
        %v3453 = vmul.f32 %v3231, 0.01
        %v3454 = vmul.f32 %v3234, 0.01
        %v3455 = vmul.f32 %v3239, 0.01
        %v3456 = vmul.f32 %v3242, 0.01
        %v3457 = vmul.f32 %v3247, 0.01
        %v3458 = vmul.f32 %v3250, 0.01
        %v3459 = vmul.f32 %v3255, 0.01
        %v3460 = vmul.f32 %v3258, 0.01
        %v3461 = vmul.f32 %v3263, 0.01
        %v3462 = vmul.f32 %v3266, 0.01
        %v3463 = vmul.f32 %v3271, 0.01
        %v3464 = vmul.f32 %v3274, 0.01
        %v3465 = vmul.f32 %v3279, 0.01
        %v3466 = vmul.f32 %v3282, 0.01
        %v3467 = vmul.f32 %v3287, 0.01
        %v3468 = vmul.f32 %v3290, 0.01
        %v3469 = vmul.f32 %v3295, 0.01
        %v3470 = vmul.f32 %v3298, 0.01
        %v3471 = vmul.f32 %v3303, 0.01
        %v3472 = vmul.f32 %v3306, 0.01
        %v3473 = vmul.f32 %v3311, 0.01
        %v3474 = vmul.f32 %v3314, 0.01
        %v3475 = vmul.f32 %v3319, 0.01
        %v3476 = vmul.f32 %v3322, 0.01
        %v3477 = vmul.f32 %v3327, 0.01
        %v3478 = vmul.f32 %v3330, 0.01
        %v3479 = vmul.f32 %v3335, 0.01
        %v3480 = vmul.f32 %v3338, 0.01
        %v3481 = vmul.f32 %v3343, 0.01
        %v3482 = vmul.f32 %v3346, 0.01
        %v3483 = vmul.f32 %v3351, 0.01
        %v3484 = vmul.f32 %v3354, 0.01
        %v3485 = vsel %vm3357, %v3103, %v3421
        %v3486 = vsel %vm3358, %v3106, %v3422
        %v3487 = vsel %vm3359, %v3111, %v3423
        %v3488 = vsel %vm3360, %v3114, %v3424
        %v3489 = vsel %vm3361, %v3119, %v3425
        %v3490 = vsel %vm3362, %v3122, %v3426
        %v3491 = vsel %vm3363, %v3127, %v3427
        %v3492 = vsel %vm3364, %v3130, %v3428
        %v3493 = vsel %vm3365, %v3135, %v3429
        %v3494 = vsel %vm3366, %v3138, %v3430
        %v3495 = vsel %vm3367, %v3143, %v3431
        %v3496 = vsel %vm3368, %v3146, %v3432
        %v3497 = vsel %vm3369, %v3151, %v3433
        %v3498 = vsel %vm3370, %v3154, %v3434
        %v3499 = vsel %vm3371, %v3159, %v3435
        %v3500 = vsel %vm3372, %v3162, %v3436
        %v3501 = vsel %vm3373, %v3167, %v3437
        %v3502 = vsel %vm3374, %v3170, %v3438
        %v3503 = vsel %vm3375, %v3175, %v3439
        %v3504 = vsel %vm3376, %v3178, %v3440
        %v3505 = vsel %vm3377, %v3183, %v3441
        %v3506 = vsel %vm3378, %v3186, %v3442
        %v3507 = vsel %vm3379, %v3191, %v3443
        %v3508 = vsel %vm3380, %v3194, %v3444
        %v3509 = vsel %vm3381, %v3199, %v3445
        %v3510 = vsel %vm3382, %v3202, %v3446
        %v3511 = vsel %vm3383, %v3207, %v3447
        %v3512 = vsel %vm3384, %v3210, %v3448
        %v3513 = vsel %vm3385, %v3215, %v3449
        %v3514 = vsel %vm3386, %v3218, %v3450
        %v3515 = vsel %vm3387, %v3223, %v3451
        %v3516 = vsel %vm3388, %v3226, %v3452
        %v3517 = vsel %vm3389, %v3231, %v3453
        %v3518 = vsel %vm3390, %v3234, %v3454
        %v3519 = vsel %vm3391, %v3239, %v3455
        %v3520 = vsel %vm3392, %v3242, %v3456
        %v3521 = vsel %vm3393, %v3247, %v3457
        %v3522 = vsel %vm3394, %v3250, %v3458
        %v3523 = vsel %vm3395, %v3255, %v3459
        %v3524 = vsel %vm3396, %v3258, %v3460
        %v3525 = vsel %vm3397, %v3263, %v3461
        %v3526 = vsel %vm3398, %v3266, %v3462
        %v3527 = vsel %vm3399, %v3271, %v3463
        %v3528 = vsel %vm3400, %v3274, %v3464
        %v3529 = vsel %vm3401, %v3279, %v3465
        %v3530 = vsel %vm3402, %v3282, %v3466
        %v3531 = vsel %vm3403, %v3287, %v3467
        %v3532 = vsel %vm3404, %v3290, %v3468
        %v3533 = vsel %vm3405, %v3295, %v3469
        %v3534 = vsel %vm3406, %v3298, %v3470
        %v3535 = vsel %vm3407, %v3303, %v3471
        %v3536 = vsel %vm3408, %v3306, %v3472
        %v3537 = vsel %vm3409, %v3311, %v3473
        %v3538 = vsel %vm3410, %v3314, %v3474
        %v3539 = vsel %vm3411, %v3319, %v3475
        %v3540 = vsel %vm3412, %v3322, %v3476
        %v3541 = vsel %vm3413, %v3327, %v3477
        %v3542 = vsel %vm3414, %v3330, %v3478
        %v3543 = vsel %vm3415, %v3335, %v3479
        %v3544 = vsel %vm3416, %v3338, %v3480
        %v3545 = vsel %vm3417, %v3343, %v3481
        %v3546 = vsel %vm3418, %v3346, %v3482
        %v3547 = vsel %vm3419, %v3351, %v3483
        %v3548 = vsel %vm3420, %v3354, %v3484
        %v3549 = vpack.c.bf16 %v3486, %v3485
        %v3550 = vpack.c.bf16 %v3488, %v3487
        %v3551 = vpack.c.bf16 %v3490, %v3489
        %v3552 = vpack.c.bf16 %v3492, %v3491
        %v3553 = vpack.c.bf16 %v3494, %v3493
        %v3554 = vpack.c.bf16 %v3496, %v3495
        %v3555 = vpack.c.bf16 %v3498, %v3497
        %v3556 = vpack.c.bf16 %v3500, %v3499
        %v3557 = vpack.c.bf16 %v3502, %v3501
        %v3558 = vpack.c.bf16 %v3504, %v3503
        %v3559 = vpack.c.bf16 %v3506, %v3505
        %v3560 = vpack.c.bf16 %v3508, %v3507
        %v3561 = vpack.c.bf16 %v3510, %v3509
        %v3562 = vpack.c.bf16 %v3512, %v3511
        %v3563 = vpack.c.bf16 %v3514, %v3513
        %v3564 = vpack.c.bf16 %v3516, %v3515
        %v3565 = vpack.c.bf16 %v3518, %v3517
        %v3566 = vpack.c.bf16 %v3520, %v3519
        %v3567 = vpack.c.bf16 %v3522, %v3521
        %v3568 = vpack.c.bf16 %v3524, %v3523
        %v3569 = vpack.c.bf16 %v3526, %v3525
        %v3570 = vpack.c.bf16 %v3528, %v3527
        %v3571 = vpack.c.bf16 %v3530, %v3529
        %v3572 = vpack.c.bf16 %v3532, %v3531
        %v3573 = vpack.c.bf16 %v3534, %v3533
        %v3574 = vpack.c.bf16 %v3536, %v3535
        %v3575 = vpack.c.bf16 %v3538, %v3537
        %v3576 = vpack.c.bf16 %v3540, %v3539
        %v3577 = vpack.c.bf16 %v3542, %v3541
        %v3578 = vpack.c.bf16 %v3544, %v3543
        %v3579 = vpack.c.bf16 %v3546, %v3545
        %v3580 = vpack.c.bf16 %v3548, %v3547
        %v3581 = vld [vmem:[%s2 + $0x80] sm:$0x1]
        %v3582 = vld [vmem:[%s3 + $0x5] sm:$0x1]
        %v3583 = vlaneseq
        %v3584 = vshrl.u32 %v3583, 7
        %v3585 = vsub.s32 0, %v3584
        %v3586 = vrot.slane %v3582, %v3585
        %vm3587 = vcmask 15360
        %v3589 = vsel %vm3587, %v3549, 0
        %v3592 = vsel %vm3587, %v3550, 0
        %v3595 = vsel %vm3587, %v3551, 0
        %v3598 = vsel %vm3587, %v3552, 0
        %v3601 = vsel %vm3587, %v3553, 0
        %v3604 = vsel %vm3587, %v3554, 0
        %v3607 = vsel %vm3587, %v3555, 0
        %v3610 = vsel %vm3587, %v3556, 0
        %v3613 = vsel %vm3587, %v3557, 0
        %v3616 = vsel %vm3587, %v3558, 0
        %v3619 = vsel %vm3587, %v3559, 0
        %v3622 = vsel %vm3587, %v3560, 0
        %v3625 = vsel %vm3587, %v3561, 0
        %v3628 = vsel %vm3587, %v3562, 0
        %v3631 = vsel %vm3587, %v3563, 0
        %v3634 = vsel %vm3587, %v3564, 0
        %v3637 = vsel %vm3587, %v3565, 0
        %v3640 = vsel %vm3587, %v3566, 0
        %v3643 = vsel %vm3587, %v3567, 0
        %v3646 = vsel %vm3587, %v3568, 0
        %v3649 = vsel %vm3587, %v3569, 0
        %v3652 = vsel %vm3587, %v3570, 0
        %v3655 = vsel %vm3587, %v3571, 0
        %v3658 = vsel %vm3587, %v3572, 0
        %v3661 = vsel %vm3587, %v3573, 0
        %v3664 = vsel %vm3587, %v3574, 0
        %v3667 = vsel %vm3587, %v3575, 0
        %v3670 = vsel %vm3587, %v3576, 0
        %v3673 = vsel %vm3587, %v3577, 0
        %v3676 = vsel %vm3587, %v3578, 0
        %v3679 = vsel %vm3587, %v3579, 0
        %v3682 = vsel %vm3587, %v3580, 0
        %vm3684 = vcmask 1040384
        %v3686 = vsel %vm3684, %v3581, 0
        %3688 = vmatprep.subr.bf16.mxu0 0
        %3689 = vmatpush1.bf16.msra.mxu0 0
        %3690 = vmatprep.subr.bf16.mxu0 0
        %3691 = vmatpush1.bf16.msra.mxu0 0
        %3692 = vmatprep.subr.bf16.mxu0 0
        %3693 = vmatpush1.bf16.msra.mxu0 0
        %3694 = vmatprep.subr.bf16.mxu0 0
        %3695 = vmatpush1.bf16.msra.mxu0 0
        %3696 = vmatprep.subr.bf16.mxu0 0
        %3697 = vmatpush1.bf16.msra.mxu0 0
        %3698 = vmatprep.subr.bf16.mxu0 0
        %3699 = vmatpush1.bf16.msra.mxu0 0
        %3700 = vmatprep.subr.bf16.mxu0 0
        %3701 = vmatpush1.bf16.msra.mxu0 0
        %3702 = vmatprep.subr.bf16.mxu0 0
        %3703 = vmatpush1.bf16.msra.mxu0 %v3686
        %3704 = vmatprep.subr.bf16.mxu0 0
        %3705 = vmatpush2.bf16.msra.mxu0 0
        %3706 = vmatprep.subr.bf16.mxu0 0
        %3707 = vmatpush2.bf16.msra.mxu0 0
        %3708 = vmatprep.subr.bf16.mxu0 0
        %3709 = vmatpush2.bf16.msra.mxu0 0
        %3710 = vmatprep.subr.bf16.mxu0 0
        %3711 = vmatpush2.bf16.msra.mxu0 0
        %3712 = vmatprep.subr.bf16.mxu0 0
        %3713 = vmatpush2.bf16.msra.mxu0 0
        %3714 = vmatprep.subr.bf16.mxu0 0
        %3715 = vmatpush2.bf16.msra.mxu0 0
        %3716 = vmatprep.subr.bf16.mxu0 0
        %3717 = vmatpush2.bf16.msra.mxu0 0
        %3718 = vmatprep.subr.bf16.mxu0 0
        %3719 = vmatpush2.bf16.msra.mxu0 0
        %3720 = vmatprep.mubr.bf16.mxu0 0
        %3721 = vmatmul.mubr.bf16.gmra.mxu0 %v3589
        %v3722 = vpop.f32.mrf.mxu0
        %v3723 = vadd.f32 %v3586, %v3722
        %v3724 = vpop.f32.mrf.mxu0
        %v3725 = vpop.f32.mrf.mxu0
        %v3726 = vadd.f32 %v3586, %v3725
        %v3727 = vpop.f32.mrf.mxu0
        %3728 = vmatprep.mubr.bf16.mxu0 0
        %3729 = vmatmul.mubr.bf16.gmra.mxu0 %v3592
        %v3730 = vpop.f32.mrf.mxu0
        %v3731 = vadd.f32 %v3586, %v3730
        %v3732 = vpop.f32.mrf.mxu0
        %v3733 = vpop.f32.mrf.mxu0
        %v3734 = vadd.f32 %v3586, %v3733
        %v3735 = vpop.f32.mrf.mxu0
        %3736 = vmatprep.mubr.bf16.mxu0 0
        %3737 = vmatmul.mubr.bf16.gmra.mxu0 %v3595
        %v3738 = vpop.f32.mrf.mxu0
        %v3739 = vadd.f32 %v3586, %v3738
        %v3740 = vpop.f32.mrf.mxu0
        %v3741 = vpop.f32.mrf.mxu0
        %v3742 = vadd.f32 %v3586, %v3741
        %v3743 = vpop.f32.mrf.mxu0
        %3744 = vmatprep.mubr.bf16.mxu0 0
        %3745 = vmatmul.mubr.bf16.gmra.mxu0 %v3598
        %v3746 = vpop.f32.mrf.mxu0
        %v3747 = vadd.f32 %v3586, %v3746
        %v3748 = vpop.f32.mrf.mxu0
        %v3749 = vpop.f32.mrf.mxu0
        %v3750 = vadd.f32 %v3586, %v3749
        %v3751 = vpop.f32.mrf.mxu0
        %3752 = vmatprep.mubr.bf16.mxu0 0
        %3753 = vmatmul.mubr.bf16.gmra.mxu0 %v3601
        %v3754 = vpop.f32.mrf.mxu0
        %v3755 = vadd.f32 %v3586, %v3754
        %v3756 = vpop.f32.mrf.mxu0
        %v3757 = vpop.f32.mrf.mxu0
        %v3758 = vadd.f32 %v3586, %v3757
        %v3759 = vpop.f32.mrf.mxu0
        %3760 = vmatprep.mubr.bf16.mxu0 0
        %3761 = vmatmul.mubr.bf16.gmra.mxu0 %v3604
        %v3762 = vpop.f32.mrf.mxu0
        %v3763 = vadd.f32 %v3586, %v3762
        %v3764 = vpop.f32.mrf.mxu0
        %v3765 = vpop.f32.mrf.mxu0
        %v3766 = vadd.f32 %v3586, %v3765
        %v3767 = vpop.f32.mrf.mxu0
        %3768 = vmatprep.mubr.bf16.mxu0 0
        %3769 = vmatmul.mubr.bf16.gmra.mxu0 %v3607
        %v3770 = vpop.f32.mrf.mxu0
        %v3771 = vadd.f32 %v3586, %v3770
        %v3772 = vpop.f32.mrf.mxu0
        %v3773 = vpop.f32.mrf.mxu0
        %v3774 = vadd.f32 %v3586, %v3773
        %v3775 = vpop.f32.mrf.mxu0
        %3776 = vmatprep.mubr.bf16.mxu0 0
        %3777 = vmatmul.mubr.bf16.gmra.mxu0 %v3610
        %v3778 = vpop.f32.mrf.mxu0
        %v3779 = vadd.f32 %v3586, %v3778
        %v3780 = vpop.f32.mrf.mxu0
        %v3781 = vpop.f32.mrf.mxu0
        %v3782 = vadd.f32 %v3586, %v3781
        %v3783 = vpop.f32.mrf.mxu0
        %3784 = vmatprep.mubr.bf16.mxu0 0
        %3785 = vmatmul.mubr.bf16.gmra.mxu0 %v3613
        %v3786 = vpop.f32.mrf.mxu0
        %v3787 = vadd.f32 %v3586, %v3786
        %v3788 = vpop.f32.mrf.mxu0
        %v3789 = vpop.f32.mrf.mxu0
        %v3790 = vadd.f32 %v3586, %v3789
        %v3791 = vpop.f32.mrf.mxu0
        %3792 = vmatprep.mubr.bf16.mxu0 0
        %3793 = vmatmul.mubr.bf16.gmra.mxu0 %v3616
        %v3794 = vpop.f32.mrf.mxu0
        %v3795 = vadd.f32 %v3586, %v3794
        %v3796 = vpop.f32.mrf.mxu0
        %v3797 = vpop.f32.mrf.mxu0
        %v3798 = vadd.f32 %v3586, %v3797
        %v3799 = vpop.f32.mrf.mxu0
        %3800 = vmatprep.mubr.bf16.mxu0 0
        %3801 = vmatmul.mubr.bf16.gmra.mxu0 %v3619
        %v3802 = vpop.f32.mrf.mxu0
        %v3803 = vadd.f32 %v3586, %v3802
        %v3804 = vpop.f32.mrf.mxu0
        %v3805 = vpop.f32.mrf.mxu0
        %v3806 = vadd.f32 %v3586, %v3805
        %v3807 = vpop.f32.mrf.mxu0
        %3808 = vmatprep.mubr.bf16.mxu0 0
        %3809 = vmatmul.mubr.bf16.gmra.mxu0 %v3622
        %v3810 = vpop.f32.mrf.mxu0
        %v3811 = vadd.f32 %v3586, %v3810
        %v3812 = vpop.f32.mrf.mxu0
        %v3813 = vpop.f32.mrf.mxu0
        %v3814 = vadd.f32 %v3586, %v3813
        %v3815 = vpop.f32.mrf.mxu0
        %3816 = vmatprep.mubr.bf16.mxu0 0
        %3817 = vmatmul.mubr.bf16.gmra.mxu0 %v3625
        %v3818 = vpop.f32.mrf.mxu0
        %v3819 = vadd.f32 %v3586, %v3818
        %v3820 = vpop.f32.mrf.mxu0
        %v3821 = vpop.f32.mrf.mxu0
        %v3822 = vadd.f32 %v3586, %v3821
        %v3823 = vpop.f32.mrf.mxu0
        %3824 = vmatprep.mubr.bf16.mxu0 0
        %3825 = vmatmul.mubr.bf16.gmra.mxu0 %v3628
        %v3826 = vpop.f32.mrf.mxu0
        %v3827 = vadd.f32 %v3586, %v3826
        %v3828 = vpop.f32.mrf.mxu0
        %v3829 = vpop.f32.mrf.mxu0
        %v3830 = vadd.f32 %v3586, %v3829
        %v3831 = vpop.f32.mrf.mxu0
        %3832 = vmatprep.mubr.bf16.mxu0 0
        %3833 = vmatmul.mubr.bf16.gmra.mxu0 %v3631
        %v3834 = vpop.f32.mrf.mxu0
        %v3835 = vadd.f32 %v3586, %v3834
        %v3836 = vpop.f32.mrf.mxu0
        %v3837 = vpop.f32.mrf.mxu0
        %v3838 = vadd.f32 %v3586, %v3837
        %v3839 = vpop.f32.mrf.mxu0
        %3840 = vmatprep.mubr.bf16.mxu0 0
        %3841 = vmatmul.mubr.bf16.gmra.mxu0 %v3634
        %v3842 = vpop.f32.mrf.mxu0
        %v3843 = vadd.f32 %v3586, %v3842
        %v3844 = vpop.f32.mrf.mxu0
        %v3845 = vpop.f32.mrf.mxu0
        %v3846 = vadd.f32 %v3586, %v3845
        %v3847 = vpop.f32.mrf.mxu0
        %3848 = vmatprep.mubr.bf16.mxu0 0
        %3849 = vmatmul.mubr.bf16.gmra.mxu0 %v3637
        %v3850 = vpop.f32.mrf.mxu0
        %v3851 = vadd.f32 %v3586, %v3850
        %v3852 = vpop.f32.mrf.mxu0
        %v3853 = vpop.f32.mrf.mxu0
        %v3854 = vadd.f32 %v3586, %v3853
        %v3855 = vpop.f32.mrf.mxu0
        %3856 = vmatprep.mubr.bf16.mxu0 0
        %3857 = vmatmul.mubr.bf16.gmra.mxu0 %v3640
        %v3858 = vpop.f32.mrf.mxu0
        %v3859 = vadd.f32 %v3586, %v3858
        %v3860 = vpop.f32.mrf.mxu0
        %v3861 = vpop.f32.mrf.mxu0
        %v3862 = vadd.f32 %v3586, %v3861
        %v3863 = vpop.f32.mrf.mxu0
        %3864 = vmatprep.mubr.bf16.mxu0 0
        %3865 = vmatmul.mubr.bf16.gmra.mxu0 %v3643
        %v3866 = vpop.f32.mrf.mxu0
        %v3867 = vadd.f32 %v3586, %v3866
        %v3868 = vpop.f32.mrf.mxu0
        %v3869 = vpop.f32.mrf.mxu0
        %v3870 = vadd.f32 %v3586, %v3869
        %v3871 = vpop.f32.mrf.mxu0
        %3872 = vmatprep.mubr.bf16.mxu0 0
        %3873 = vmatmul.mubr.bf16.gmra.mxu0 %v3646
        %v3874 = vpop.f32.mrf.mxu0
        %v3875 = vadd.f32 %v3586, %v3874
        %v3876 = vpop.f32.mrf.mxu0
        %v3877 = vpop.f32.mrf.mxu0
        %v3878 = vadd.f32 %v3586, %v3877
        %v3879 = vpop.f32.mrf.mxu0
        %3880 = vmatprep.mubr.bf16.mxu0 0
        %3881 = vmatmul.mubr.bf16.gmra.mxu0 %v3649
        %v3882 = vpop.f32.mrf.mxu0
        %v3883 = vadd.f32 %v3586, %v3882
        %v3884 = vpop.f32.mrf.mxu0
        %v3885 = vpop.f32.mrf.mxu0
        %v3886 = vadd.f32 %v3586, %v3885
        %v3887 = vpop.f32.mrf.mxu0
        %3888 = vmatprep.mubr.bf16.mxu0 0
        %3889 = vmatmul.mubr.bf16.gmra.mxu0 %v3652
        %v3890 = vpop.f32.mrf.mxu0
        %v3891 = vadd.f32 %v3586, %v3890
        %v3892 = vpop.f32.mrf.mxu0
        %v3893 = vpop.f32.mrf.mxu0
        %v3894 = vadd.f32 %v3586, %v3893
        %v3895 = vpop.f32.mrf.mxu0
        %3896 = vmatprep.mubr.bf16.mxu0 0
        %3897 = vmatmul.mubr.bf16.gmra.mxu0 %v3655
        %v3898 = vpop.f32.mrf.mxu0
        %v3899 = vadd.f32 %v3586, %v3898
        %v3900 = vpop.f32.mrf.mxu0
        %v3901 = vpop.f32.mrf.mxu0
        %v3902 = vadd.f32 %v3586, %v3901
        %v3903 = vpop.f32.mrf.mxu0
        %3904 = vmatprep.mubr.bf16.mxu0 0
        %3905 = vmatmul.mubr.bf16.gmra.mxu0 %v3658
        %v3906 = vpop.f32.mrf.mxu0
        %v3907 = vadd.f32 %v3586, %v3906
        %v3908 = vpop.f32.mrf.mxu0
        %v3909 = vpop.f32.mrf.mxu0
        %v3910 = vadd.f32 %v3586, %v3909
        %v3911 = vpop.f32.mrf.mxu0
        %3912 = vmatprep.mubr.bf16.mxu0 0
        %3913 = vmatmul.mubr.bf16.gmra.mxu0 %v3661
        %v3914 = vpop.f32.mrf.mxu0
        %v3915 = vadd.f32 %v3586, %v3914
        %v3916 = vpop.f32.mrf.mxu0
        %v3917 = vpop.f32.mrf.mxu0
        %v3918 = vadd.f32 %v3586, %v3917
        %v3919 = vpop.f32.mrf.mxu0
        %3920 = vmatprep.mubr.bf16.mxu0 0
        %3921 = vmatmul.mubr.bf16.gmra.mxu0 %v3664
        %v3922 = vpop.f32.mrf.mxu0
        %v3923 = vadd.f32 %v3586, %v3922
        %v3924 = vpop.f32.mrf.mxu0
        %v3925 = vpop.f32.mrf.mxu0
        %v3926 = vadd.f32 %v3586, %v3925
        %v3927 = vpop.f32.mrf.mxu0
        %3928 = vmatprep.mubr.bf16.mxu0 0
        %3929 = vmatmul.mubr.bf16.gmra.mxu0 %v3667
        %v3930 = vpop.f32.mrf.mxu0
        %v3931 = vadd.f32 %v3586, %v3930
        %v3932 = vpop.f32.mrf.mxu0
        %v3933 = vpop.f32.mrf.mxu0
        %v3934 = vadd.f32 %v3586, %v3933
        %v3935 = vpop.f32.mrf.mxu0
        %3936 = vmatprep.mubr.bf16.mxu0 0
        %3937 = vmatmul.mubr.bf16.gmra.mxu0 %v3670
        %v3938 = vpop.f32.mrf.mxu0
        %v3939 = vadd.f32 %v3586, %v3938
        %v3940 = vpop.f32.mrf.mxu0
        %v3941 = vpop.f32.mrf.mxu0
        %v3942 = vadd.f32 %v3586, %v3941
        %v3943 = vpop.f32.mrf.mxu0
        %3944 = vmatprep.mubr.bf16.mxu0 0
        %3945 = vmatmul.mubr.bf16.gmra.mxu0 %v3673
        %v3946 = vpop.f32.mrf.mxu0
        %v3947 = vadd.f32 %v3586, %v3946
        %v3948 = vpop.f32.mrf.mxu0
        %v3949 = vpop.f32.mrf.mxu0
        %v3950 = vadd.f32 %v3586, %v3949
        %v3951 = vpop.f32.mrf.mxu0
        %3952 = vmatprep.mubr.bf16.mxu0 0
        %3953 = vmatmul.mubr.bf16.gmra.mxu0 %v3676
        %v3954 = vpop.f32.mrf.mxu0
        %v3955 = vadd.f32 %v3586, %v3954
        %v3956 = vpop.f32.mrf.mxu0
        %v3957 = vpop.f32.mrf.mxu0
        %v3958 = vadd.f32 %v3586, %v3957
        %v3959 = vpop.f32.mrf.mxu0
        %3960 = vmatprep.mubr.bf16.mxu0 0
        %3961 = vmatmul.mubr.bf16.gmra.mxu0 %v3679
        %v3962 = vpop.f32.mrf.mxu0
        %v3963 = vadd.f32 %v3586, %v3962
        %v3964 = vpop.f32.mrf.mxu0
        %v3965 = vpop.f32.mrf.mxu0
        %v3966 = vadd.f32 %v3586, %v3965
        %v3967 = vpop.f32.mrf.mxu0
        %3968 = vmatprep.mubr.bf16.mxu0 0
        %3969 = vmatmul.mubr.bf16.gmra.mxu0 %v3682
        %v3970 = vpop.f32.mrf.mxu0
        %v3971 = vadd.f32 %v3586, %v3970
        %v3972 = vpop.f32.mrf.mxu0
        %v3973 = vpop.f32.mrf.mxu0
        %v3974 = vadd.f32 %v3586, %v3973
        %v3975 = vpop.f32.mrf.mxu0
        %3976 = vdwg.mxu0
        %vm3977 = vcmp.gt.f32.partialorder %v3723, 0.0
        %vm3978 = vcmp.gt.f32.partialorder %v3726, 0.0
        %vm3979 = vcmp.gt.f32.partialorder %v3731, 0.0
        %vm3980 = vcmp.gt.f32.partialorder %v3734, 0.0
        %vm3981 = vcmp.gt.f32.partialorder %v3739, 0.0
        %vm3982 = vcmp.gt.f32.partialorder %v3742, 0.0
        %vm3983 = vcmp.gt.f32.partialorder %v3747, 0.0
        %vm3984 = vcmp.gt.f32.partialorder %v3750, 0.0
        %vm3985 = vcmp.gt.f32.partialorder %v3755, 0.0
        %vm3986 = vcmp.gt.f32.partialorder %v3758, 0.0
        %vm3987 = vcmp.gt.f32.partialorder %v3763, 0.0
        %vm3988 = vcmp.gt.f32.partialorder %v3766, 0.0
        %vm3989 = vcmp.gt.f32.partialorder %v3771, 0.0
        %vm3990 = vcmp.gt.f32.partialorder %v3774, 0.0
        %vm3991 = vcmp.gt.f32.partialorder %v3779, 0.0
        %vm3992 = vcmp.gt.f32.partialorder %v3782, 0.0
        %vm3993 = vcmp.gt.f32.partialorder %v3787, 0.0
        %vm3994 = vcmp.gt.f32.partialorder %v3790, 0.0
        %vm3995 = vcmp.gt.f32.partialorder %v3795, 0.0
        %vm3996 = vcmp.gt.f32.partialorder %v3798, 0.0
        %vm3997 = vcmp.gt.f32.partialorder %v3803, 0.0
        %vm3998 = vcmp.gt.f32.partialorder %v3806, 0.0
        %vm3999 = vcmp.gt.f32.partialorder %v3811, 0.0
        %vm4000 = vcmp.gt.f32.partialorder %v3814, 0.0
        %vm4001 = vcmp.gt.f32.partialorder %v3819, 0.0
        %vm4002 = vcmp.gt.f32.partialorder %v3822, 0.0
        %vm4003 = vcmp.gt.f32.partialorder %v3827, 0.0
        %vm4004 = vcmp.gt.f32.partialorder %v3830, 0.0
        %vm4005 = vcmp.gt.f32.partialorder %v3835, 0.0
        %vm4006 = vcmp.gt.f32.partialorder %v3838, 0.0
        %vm4007 = vcmp.gt.f32.partialorder %v3843, 0.0
        %vm4008 = vcmp.gt.f32.partialorder %v3846, 0.0
        %vm4009 = vcmp.gt.f32.partialorder %v3851, 0.0
        %vm4010 = vcmp.gt.f32.partialorder %v3854, 0.0
        %vm4011 = vcmp.gt.f32.partialorder %v3859, 0.0
        %vm4012 = vcmp.gt.f32.partialorder %v3862, 0.0
        %vm4013 = vcmp.gt.f32.partialorder %v3867, 0.0
        %vm4014 = vcmp.gt.f32.partialorder %v3870, 0.0
        %vm4015 = vcmp.gt.f32.partialorder %v3875, 0.0
        %vm4016 = vcmp.gt.f32.partialorder %v3878, 0.0
        %vm4017 = vcmp.gt.f32.partialorder %v3883, 0.0
        %vm4018 = vcmp.gt.f32.partialorder %v3886, 0.0
        %vm4019 = vcmp.gt.f32.partialorder %v3891, 0.0
        %vm4020 = vcmp.gt.f32.partialorder %v3894, 0.0
        %vm4021 = vcmp.gt.f32.partialorder %v3899, 0.0
        %vm4022 = vcmp.gt.f32.partialorder %v3902, 0.0
        %vm4023 = vcmp.gt.f32.partialorder %v3907, 0.0
        %vm4024 = vcmp.gt.f32.partialorder %v3910, 0.0
        %vm4025 = vcmp.gt.f32.partialorder %v3915, 0.0
        %vm4026 = vcmp.gt.f32.partialorder %v3918, 0.0
        %vm4027 = vcmp.gt.f32.partialorder %v3923, 0.0
        %vm4028 = vcmp.gt.f32.partialorder %v3926, 0.0
        %vm4029 = vcmp.gt.f32.partialorder %v3931, 0.0
        %vm4030 = vcmp.gt.f32.partialorder %v3934, 0.0
        %vm4031 = vcmp.gt.f32.partialorder %v3939, 0.0
        %vm4032 = vcmp.gt.f32.partialorder %v3942, 0.0
        %vm4033 = vcmp.gt.f32.partialorder %v3947, 0.0
        %vm4034 = vcmp.gt.f32.partialorder %v3950, 0.0
        %vm4035 = vcmp.gt.f32.partialorder %v3955, 0.0
        %vm4036 = vcmp.gt.f32.partialorder %v3958, 0.0
        %vm4037 = vcmp.gt.f32.partialorder %v3963, 0.0
        %vm4038 = vcmp.gt.f32.partialorder %v3966, 0.0
        %vm4039 = vcmp.gt.f32.partialorder %v3971, 0.0
        %vm4040 = vcmp.gt.f32.partialorder %v3974, 0.0
        %v4041 = vmul.f32 %v3723, 0.01
        %v4042 = vmul.f32 %v3726, 0.01
        %v4043 = vmul.f32 %v3731, 0.01
        %v4044 = vmul.f32 %v3734, 0.01
        %v4045 = vmul.f32 %v3739, 0.01
        %v4046 = vmul.f32 %v3742, 0.01
        %v4047 = vmul.f32 %v3747, 0.01
        %v4048 = vmul.f32 %v3750, 0.01
        %v4049 = vmul.f32 %v3755, 0.01
        %v4050 = vmul.f32 %v3758, 0.01
        %v4051 = vmul.f32 %v3763, 0.01
        %v4052 = vmul.f32 %v3766, 0.01
        %v4053 = vmul.f32 %v3771, 0.01
        %v4054 = vmul.f32 %v3774, 0.01
        %v4055 = vmul.f32 %v3779, 0.01
        %v4056 = vmul.f32 %v3782, 0.01
        %v4057 = vmul.f32 %v3787, 0.01
        %v4058 = vmul.f32 %v3790, 0.01
        %v4059 = vmul.f32 %v3795, 0.01
        %v4060 = vmul.f32 %v3798, 0.01
        %v4061 = vmul.f32 %v3803, 0.01
        %v4062 = vmul.f32 %v3806, 0.01
        %v4063 = vmul.f32 %v3811, 0.01
        %v4064 = vmul.f32 %v3814, 0.01
        %v4065 = vmul.f32 %v3819, 0.01
        %v4066 = vmul.f32 %v3822, 0.01
        %v4067 = vmul.f32 %v3827, 0.01
        %v4068 = vmul.f32 %v3830, 0.01
        %v4069 = vmul.f32 %v3835, 0.01
        %v4070 = vmul.f32 %v3838, 0.01
        %v4071 = vmul.f32 %v3843, 0.01
        %v4072 = vmul.f32 %v3846, 0.01
        %v4073 = vmul.f32 %v3851, 0.01
        %v4074 = vmul.f32 %v3854, 0.01
        %v4075 = vmul.f32 %v3859, 0.01
        %v4076 = vmul.f32 %v3862, 0.01
        %v4077 = vmul.f32 %v3867, 0.01
        %v4078 = vmul.f32 %v3870, 0.01
        %v4079 = vmul.f32 %v3875, 0.01
        %v4080 = vmul.f32 %v3878, 0.01
        %v4081 = vmul.f32 %v3883, 0.01
        %v4082 = vmul.f32 %v3886, 0.01
        %v4083 = vmul.f32 %v3891, 0.01
        %v4084 = vmul.f32 %v3894, 0.01
        %v4085 = vmul.f32 %v3899, 0.01
        %v4086 = vmul.f32 %v3902, 0.01
        %v4087 = vmul.f32 %v3907, 0.01
        %v4088 = vmul.f32 %v3910, 0.01
        %v4089 = vmul.f32 %v3915, 0.01
        %v4090 = vmul.f32 %v3918, 0.01
        %v4091 = vmul.f32 %v3923, 0.01
        %v4092 = vmul.f32 %v3926, 0.01
        %v4093 = vmul.f32 %v3931, 0.01
        %v4094 = vmul.f32 %v3934, 0.01
        %v4095 = vmul.f32 %v3939, 0.01
        %v4096 = vmul.f32 %v3942, 0.01
        %v4097 = vmul.f32 %v3947, 0.01
        %v4098 = vmul.f32 %v3950, 0.01
        %v4099 = vmul.f32 %v3955, 0.01
        %v4100 = vmul.f32 %v3958, 0.01
        %v4101 = vmul.f32 %v3963, 0.01
        %v4102 = vmul.f32 %v3966, 0.01
        %v4103 = vmul.f32 %v3971, 0.01
        %v4104 = vmul.f32 %v3974, 0.01
        %v4105 = vsel %vm3977, %v3723, %v4041
        %v4106 = vsel %vm3978, %v3726, %v4042
        %v4107 = vsel %vm3979, %v3731, %v4043
        %v4108 = vsel %vm3980, %v3734, %v4044
        %v4109 = vsel %vm3981, %v3739, %v4045
        %v4110 = vsel %vm3982, %v3742, %v4046
        %v4111 = vsel %vm3983, %v3747, %v4047
        %v4112 = vsel %vm3984, %v3750, %v4048
        %v4113 = vsel %vm3985, %v3755, %v4049
        %v4114 = vsel %vm3986, %v3758, %v4050
        %v4115 = vsel %vm3987, %v3763, %v4051
        %v4116 = vsel %vm3988, %v3766, %v4052
        %v4117 = vsel %vm3989, %v3771, %v4053
        %v4118 = vsel %vm3990, %v3774, %v4054
        %v4119 = vsel %vm3991, %v3779, %v4055
        %v4120 = vsel %vm3992, %v3782, %v4056
        %v4121 = vsel %vm3993, %v3787, %v4057
        %v4122 = vsel %vm3994, %v3790, %v4058
        %v4123 = vsel %vm3995, %v3795, %v4059
        %v4124 = vsel %vm3996, %v3798, %v4060
        %v4125 = vsel %vm3997, %v3803, %v4061
        %v4126 = vsel %vm3998, %v3806, %v4062
        %v4127 = vsel %vm3999, %v3811, %v4063
        %v4128 = vsel %vm4000, %v3814, %v4064
        %v4129 = vsel %vm4001, %v3819, %v4065
        %v4130 = vsel %vm4002, %v3822, %v4066
        %v4131 = vsel %vm4003, %v3827, %v4067
        %v4132 = vsel %vm4004, %v3830, %v4068
        %v4133 = vsel %vm4005, %v3835, %v4069
        %v4134 = vsel %vm4006, %v3838, %v4070
        %v4135 = vsel %vm4007, %v3843, %v4071
        %v4136 = vsel %vm4008, %v3846, %v4072
        %v4137 = vsel %vm4009, %v3851, %v4073
        %v4138 = vsel %vm4010, %v3854, %v4074
        %v4139 = vsel %vm4011, %v3859, %v4075
        %v4140 = vsel %vm4012, %v3862, %v4076
        %v4141 = vsel %vm4013, %v3867, %v4077
        %v4142 = vsel %vm4014, %v3870, %v4078
        %v4143 = vsel %vm4015, %v3875, %v4079
        %v4144 = vsel %vm4016, %v3878, %v4080
        %v4145 = vsel %vm4017, %v3883, %v4081
        %v4146 = vsel %vm4018, %v3886, %v4082
        %v4147 = vsel %vm4019, %v3891, %v4083
        %v4148 = vsel %vm4020, %v3894, %v4084
        %v4149 = vsel %vm4021, %v3899, %v4085
        %v4150 = vsel %vm4022, %v3902, %v4086
        %v4151 = vsel %vm4023, %v3907, %v4087
        %v4152 = vsel %vm4024, %v3910, %v4088
        %v4153 = vsel %vm4025, %v3915, %v4089
        %v4154 = vsel %vm4026, %v3918, %v4090
        %v4155 = vsel %vm4027, %v3923, %v4091
        %v4156 = vsel %vm4028, %v3926, %v4092
        %v4157 = vsel %vm4029, %v3931, %v4093
        %v4158 = vsel %vm4030, %v3934, %v4094
        %v4159 = vsel %vm4031, %v3939, %v4095
        %v4160 = vsel %vm4032, %v3942, %v4096
        %v4161 = vsel %vm4033, %v3947, %v4097
        %v4162 = vsel %vm4034, %v3950, %v4098
        %v4163 = vsel %vm4035, %v3955, %v4099
        %v4164 = vsel %vm4036, %v3958, %v4100
        %v4165 = vsel %vm4037, %v3963, %v4101
        %v4166 = vsel %vm4038, %v3966, %v4102
        %v4167 = vsel %vm4039, %v3971, %v4103
        %v4168 = vsel %vm4040, %v3974, %v4104
        %v4169 = vld [vmem:[%s3 + $0xa] sm:$0x1]
        %s4171 = vtos %v4169
        %v4172 = vstv %s4171
        %v4174 = vmul.f32 %v4172, %v4105
        %v4175 = vmul.f32 %v4172, %v4106
        %v4176 = vmul.f32 %v4172, %v4107
        %v4177 = vmul.f32 %v4172, %v4108
        %v4178 = vmul.f32 %v4172, %v4109
        %v4179 = vmul.f32 %v4172, %v4110
        %v4180 = vmul.f32 %v4172, %v4111
        %v4181 = vmul.f32 %v4172, %v4112
        %v4182 = vmul.f32 %v4172, %v4113
        %v4183 = vmul.f32 %v4172, %v4114
        %v4184 = vmul.f32 %v4172, %v4115
        %v4185 = vmul.f32 %v4172, %v4116
        %v4186 = vmul.f32 %v4172, %v4117
        %v4187 = vmul.f32 %v4172, %v4118
        %v4188 = vmul.f32 %v4172, %v4119
        %v4189 = vmul.f32 %v4172, %v4120
        %v4190 = vmul.f32 %v4172, %v4121
        %v4191 = vmul.f32 %v4172, %v4122
        %v4192 = vmul.f32 %v4172, %v4123
        %v4193 = vmul.f32 %v4172, %v4124
        %v4194 = vmul.f32 %v4172, %v4125
        %v4195 = vmul.f32 %v4172, %v4126
        %v4196 = vmul.f32 %v4172, %v4127
        %v4197 = vmul.f32 %v4172, %v4128
        %v4198 = vmul.f32 %v4172, %v4129
        %v4199 = vmul.f32 %v4172, %v4130
        %v4200 = vmul.f32 %v4172, %v4131
        %v4201 = vmul.f32 %v4172, %v4132
        %v4202 = vmul.f32 %v4172, %v4133
        %v4203 = vmul.f32 %v4172, %v4134
        %v4204 = vmul.f32 %v4172, %v4135
        %v4205 = vmul.f32 %v4172, %v4136
        %v4206 = vmul.f32 %v4172, %v4137
        %v4207 = vmul.f32 %v4172, %v4138
        %v4208 = vmul.f32 %v4172, %v4139
        %v4209 = vmul.f32 %v4172, %v4140
        %v4210 = vmul.f32 %v4172, %v4141
        %v4211 = vmul.f32 %v4172, %v4142
        %v4212 = vmul.f32 %v4172, %v4143
        %v4213 = vmul.f32 %v4172, %v4144
        %v4214 = vmul.f32 %v4172, %v4145
        %v4215 = vmul.f32 %v4172, %v4146
        %v4216 = vmul.f32 %v4172, %v4147
        %v4217 = vmul.f32 %v4172, %v4148
        %v4218 = vmul.f32 %v4172, %v4149
        %v4219 = vmul.f32 %v4172, %v4150
        %v4220 = vmul.f32 %v4172, %v4151
        %v4221 = vmul.f32 %v4172, %v4152
        %v4222 = vmul.f32 %v4172, %v4153
        %v4223 = vmul.f32 %v4172, %v4154
        %v4224 = vmul.f32 %v4172, %v4155
        %v4225 = vmul.f32 %v4172, %v4156
        %v4226 = vmul.f32 %v4172, %v4157
        %v4227 = vmul.f32 %v4172, %v4158
        %v4228 = vmul.f32 %v4172, %v4159
        %v4229 = vmul.f32 %v4172, %v4160
        %v4230 = vmul.f32 %v4172, %v4161
        %v4231 = vmul.f32 %v4172, %v4162
        %v4232 = vmul.f32 %v4172, %v4163
        %v4233 = vmul.f32 %v4172, %v4164
        %v4234 = vmul.f32 %v4172, %v4165
        %v4235 = vmul.f32 %v4172, %v4166
        %v4236 = vmul.f32 %v4172, %v4167
        %v4237 = vmul.f32 %v4172, %v4168
        %vm4238 = vcmp.gt.f32.partialorder %v4174, 0.0
        %vm4239 = vcmp.gt.f32.partialorder %v4175, 0.0
        %vm4240 = vcmp.gt.f32.partialorder %v4176, 0.0
        %vm4241 = vcmp.gt.f32.partialorder %v4177, 0.0
        %vm4242 = vcmp.gt.f32.partialorder %v4178, 0.0
        %vm4243 = vcmp.gt.f32.partialorder %v4179, 0.0
        %vm4244 = vcmp.gt.f32.partialorder %v4180, 0.0
        %vm4245 = vcmp.gt.f32.partialorder %v4181, 0.0
        %vm4246 = vcmp.gt.f32.partialorder %v4182, 0.0
        %vm4247 = vcmp.gt.f32.partialorder %v4183, 0.0
        %vm4248 = vcmp.gt.f32.partialorder %v4184, 0.0
        %vm4249 = vcmp.gt.f32.partialorder %v4185, 0.0
        %vm4250 = vcmp.gt.f32.partialorder %v4186, 0.0
        %vm4251 = vcmp.gt.f32.partialorder %v4187, 0.0
        %vm4252 = vcmp.gt.f32.partialorder %v4188, 0.0
        %vm4253 = vcmp.gt.f32.partialorder %v4189, 0.0
        %vm4254 = vcmp.gt.f32.partialorder %v4190, 0.0
        %vm4255 = vcmp.gt.f32.partialorder %v4191, 0.0
        %vm4256 = vcmp.gt.f32.partialorder %v4192, 0.0
        %vm4257 = vcmp.gt.f32.partialorder %v4193, 0.0
        %vm4258 = vcmp.gt.f32.partialorder %v4194, 0.0
        %vm4259 = vcmp.gt.f32.partialorder %v4195, 0.0
        %vm4260 = vcmp.gt.f32.partialorder %v4196, 0.0
        %vm4261 = vcmp.gt.f32.partialorder %v4197, 0.0
        %vm4262 = vcmp.gt.f32.partialorder %v4198, 0.0
        %vm4263 = vcmp.gt.f32.partialorder %v4199, 0.0
        %vm4264 = vcmp.gt.f32.partialorder %v4200, 0.0
        %vm4265 = vcmp.gt.f32.partialorder %v4201, 0.0
        %vm4266 = vcmp.gt.f32.partialorder %v4202, 0.0
        %vm4267 = vcmp.gt.f32.partialorder %v4203, 0.0
        %vm4268 = vcmp.gt.f32.partialorder %v4204, 0.0
        %vm4269 = vcmp.gt.f32.partialorder %v4205, 0.0
        %vm4270 = vcmp.gt.f32.partialorder %v4206, 0.0
        %vm4271 = vcmp.gt.f32.partialorder %v4207, 0.0
        %vm4272 = vcmp.gt.f32.partialorder %v4208, 0.0
        %vm4273 = vcmp.gt.f32.partialorder %v4209, 0.0
        %vm4274 = vcmp.gt.f32.partialorder %v4210, 0.0
        %vm4275 = vcmp.gt.f32.partialorder %v4211, 0.0
        %vm4276 = vcmp.gt.f32.partialorder %v4212, 0.0
        %vm4277 = vcmp.gt.f32.partialorder %v4213, 0.0
        %vm4278 = vcmp.gt.f32.partialorder %v4214, 0.0
        %vm4279 = vcmp.gt.f32.partialorder %v4215, 0.0
        %vm4280 = vcmp.gt.f32.partialorder %v4216, 0.0
        %vm4281 = vcmp.gt.f32.partialorder %v4217, 0.0
        %vm4282 = vcmp.gt.f32.partialorder %v4218, 0.0
        %vm4283 = vcmp.gt.f32.partialorder %v4219, 0.0
        %vm4284 = vcmp.gt.f32.partialorder %v4220, 0.0
        %vm4285 = vcmp.gt.f32.partialorder %v4221, 0.0
        %vm4286 = vcmp.gt.f32.partialorder %v4222, 0.0
        %vm4287 = vcmp.gt.f32.partialorder %v4223, 0.0
        %vm4288 = vcmp.gt.f32.partialorder %v4224, 0.0
        %vm4289 = vcmp.gt.f32.partialorder %v4225, 0.0
        %vm4290 = vcmp.gt.f32.partialorder %v4226, 0.0
        %vm4291 = vcmp.gt.f32.partialorder %v4227, 0.0
        %vm4292 = vcmp.gt.f32.partialorder %v4228, 0.0
        %vm4293 = vcmp.gt.f32.partialorder %v4229, 0.0
        %vm4294 = vcmp.gt.f32.partialorder %v4230, 0.0
        %vm4295 = vcmp.gt.f32.partialorder %v4231, 0.0
        %vm4296 = vcmp.gt.f32.partialorder %v4232, 0.0
        %vm4297 = vcmp.gt.f32.partialorder %v4233, 0.0
        %vm4298 = vcmp.gt.f32.partialorder %v4234, 0.0
        %vm4299 = vcmp.gt.f32.partialorder %v4235, 0.0
        %vm4300 = vcmp.gt.f32.partialorder %v4236, 0.0
        %vm4301 = vcmp.gt.f32.partialorder %v4237, 0.0
        %v4302 = vmul.f32 %v4174, 0.01
        %v4303 = vmul.f32 %v4175, 0.01
        %v4304 = vmul.f32 %v4176, 0.01
        %v4305 = vmul.f32 %v4177, 0.01
        %v4306 = vmul.f32 %v4178, 0.01
        %v4307 = vmul.f32 %v4179, 0.01
        %v4308 = vmul.f32 %v4180, 0.01
        %v4309 = vmul.f32 %v4181, 0.01
        %v4310 = vmul.f32 %v4182, 0.01
        %v4311 = vmul.f32 %v4183, 0.01
        %v4312 = vmul.f32 %v4184, 0.01
        %v4313 = vmul.f32 %v4185, 0.01
        %v4314 = vmul.f32 %v4186, 0.01
        %v4315 = vmul.f32 %v4187, 0.01
        %v4316 = vmul.f32 %v4188, 0.01
        %v4317 = vmul.f32 %v4189, 0.01
        %v4318 = vmul.f32 %v4190, 0.01
        %v4319 = vmul.f32 %v4191, 0.01
        %v4320 = vmul.f32 %v4192, 0.01
        %v4321 = vmul.f32 %v4193, 0.01
        %v4322 = vmul.f32 %v4194, 0.01
        %v4323 = vmul.f32 %v4195, 0.01
        %v4324 = vmul.f32 %v4196, 0.01
        %v4325 = vmul.f32 %v4197, 0.01
        %v4326 = vmul.f32 %v4198, 0.01
        %v4327 = vmul.f32 %v4199, 0.01
        %v4328 = vmul.f32 %v4200, 0.01
        %v4329 = vmul.f32 %v4201, 0.01
        %v4330 = vmul.f32 %v4202, 0.01
        %v4331 = vmul.f32 %v4203, 0.01
        %v4332 = vmul.f32 %v4204, 0.01
        %v4333 = vmul.f32 %v4205, 0.01
        %v4334 = vmul.f32 %v4206, 0.01
        %v4335 = vmul.f32 %v4207, 0.01
        %v4336 = vmul.f32 %v4208, 0.01
        %v4337 = vmul.f32 %v4209, 0.01
        %v4338 = vmul.f32 %v4210, 0.01
        %v4339 = vmul.f32 %v4211, 0.01
        %v4340 = vmul.f32 %v4212, 0.01
        %v4341 = vmul.f32 %v4213, 0.01
        %v4342 = vmul.f32 %v4214, 0.01
        %v4343 = vmul.f32 %v4215, 0.01
        %v4344 = vmul.f32 %v4216, 0.01
        %v4345 = vmul.f32 %v4217, 0.01
        %v4346 = vmul.f32 %v4218, 0.01
        %v4347 = vmul.f32 %v4219, 0.01
        %v4348 = vmul.f32 %v4220, 0.01
        %v4349 = vmul.f32 %v4221, 0.01
        %v4350 = vmul.f32 %v4222, 0.01
        %v4351 = vmul.f32 %v4223, 0.01
        %v4352 = vmul.f32 %v4224, 0.01
        %v4353 = vmul.f32 %v4225, 0.01
        %v4354 = vmul.f32 %v4226, 0.01
        %v4355 = vmul.f32 %v4227, 0.01
        %v4356 = vmul.f32 %v4228, 0.01
        %v4357 = vmul.f32 %v4229, 0.01
        %v4358 = vmul.f32 %v4230, 0.01
        %v4359 = vmul.f32 %v4231, 0.01
        %v4360 = vmul.f32 %v4232, 0.01
        %v4361 = vmul.f32 %v4233, 0.01
        %v4362 = vmul.f32 %v4234, 0.01
        %v4363 = vmul.f32 %v4235, 0.01
        %v4364 = vmul.f32 %v4236, 0.01
        %v4365 = vmul.f32 %v4237, 0.01
        %v4366 = vsel %vm4238, %v4174, %v4302
        %v4367 = vsel %vm4239, %v4175, %v4303
        %v4368 = vsel %vm4240, %v4176, %v4304
        %v4369 = vsel %vm4241, %v4177, %v4305
        %v4370 = vsel %vm4242, %v4178, %v4306
        %v4371 = vsel %vm4243, %v4179, %v4307
        %v4372 = vsel %vm4244, %v4180, %v4308
        %v4373 = vsel %vm4245, %v4181, %v4309
        %v4374 = vsel %vm4246, %v4182, %v4310
        %v4375 = vsel %vm4247, %v4183, %v4311
        %v4376 = vsel %vm4248, %v4184, %v4312
        %v4377 = vsel %vm4249, %v4185, %v4313
        %v4378 = vsel %vm4250, %v4186, %v4314
        %v4379 = vsel %vm4251, %v4187, %v4315
        %v4380 = vsel %vm4252, %v4188, %v4316
        %v4381 = vsel %vm4253, %v4189, %v4317
        %v4382 = vsel %vm4254, %v4190, %v4318
        %v4383 = vsel %vm4255, %v4191, %v4319
        %v4384 = vsel %vm4256, %v4192, %v4320
        %v4385 = vsel %vm4257, %v4193, %v4321
        %v4386 = vsel %vm4258, %v4194, %v4322
        %v4387 = vsel %vm4259, %v4195, %v4323
        %v4388 = vsel %vm4260, %v4196, %v4324
        %v4389 = vsel %vm4261, %v4197, %v4325
        %v4390 = vsel %vm4262, %v4198, %v4326
        %v4391 = vsel %vm4263, %v4199, %v4327
        %v4392 = vsel %vm4264, %v4200, %v4328
        %v4393 = vsel %vm4265, %v4201, %v4329
        %v4394 = vsel %vm4266, %v4202, %v4330
        %v4395 = vsel %vm4267, %v4203, %v4331
        %v4396 = vsel %vm4268, %v4204, %v4332
        %v4397 = vsel %vm4269, %v4205, %v4333
        %v4398 = vsel %vm4270, %v4206, %v4334
        %v4399 = vsel %vm4271, %v4207, %v4335
        %v4400 = vsel %vm4272, %v4208, %v4336
        %v4401 = vsel %vm4273, %v4209, %v4337
        %v4402 = vsel %vm4274, %v4210, %v4338
        %v4403 = vsel %vm4275, %v4211, %v4339
        %v4404 = vsel %vm4276, %v4212, %v4340
        %v4405 = vsel %vm4277, %v4213, %v4341
        %v4406 = vsel %vm4278, %v4214, %v4342
        %v4407 = vsel %vm4279, %v4215, %v4343
        %v4408 = vsel %vm4280, %v4216, %v4344
        %v4409 = vsel %vm4281, %v4217, %v4345
        %v4410 = vsel %vm4282, %v4218, %v4346
        %v4411 = vsel %vm4283, %v4219, %v4347
        %v4412 = vsel %vm4284, %v4220, %v4348
        %v4413 = vsel %vm4285, %v4221, %v4349
        %v4414 = vsel %vm4286, %v4222, %v4350
        %v4415 = vsel %vm4287, %v4223, %v4351
        %v4416 = vsel %vm4288, %v4224, %v4352
        %v4417 = vsel %vm4289, %v4225, %v4353
        %v4418 = vsel %vm4290, %v4226, %v4354
        %v4419 = vsel %vm4291, %v4227, %v4355
        %v4420 = vsel %vm4292, %v4228, %v4356
        %v4421 = vsel %vm4293, %v4229, %v4357
        %v4422 = vsel %vm4294, %v4230, %v4358
        %v4423 = vsel %vm4295, %v4231, %v4359
        %v4424 = vsel %vm4296, %v4232, %v4360
        %v4425 = vsel %vm4297, %v4233, %v4361
        %v4426 = vsel %vm4298, %v4234, %v4362
        %v4427 = vsel %vm4299, %v4235, %v4363
        %v4428 = vsel %vm4300, %v4236, %v4364
        %v4429 = vsel %vm4301, %v4237, %v4365
        %v4430 = vadd.f32 %v4366, %v4366
        %v4431 = vadd.f32 %v4367, %v4367
        %v4432 = vadd.f32 %v4368, %v4368
        %v4433 = vadd.f32 %v4369, %v4369
        %v4434 = vadd.f32 %v4370, %v4370
        %v4435 = vadd.f32 %v4371, %v4371
        %v4436 = vadd.f32 %v4372, %v4372
        %v4437 = vadd.f32 %v4373, %v4373
        %v4438 = vadd.f32 %v4374, %v4374
        %v4439 = vadd.f32 %v4375, %v4375
        %v4440 = vadd.f32 %v4376, %v4376
        %v4441 = vadd.f32 %v4377, %v4377
        %v4442 = vadd.f32 %v4378, %v4378
        %v4443 = vadd.f32 %v4379, %v4379
        %v4444 = vadd.f32 %v4380, %v4380
        %v4445 = vadd.f32 %v4381, %v4381
        %v4446 = vadd.f32 %v4382, %v4382
        %v4447 = vadd.f32 %v4383, %v4383
        %v4448 = vadd.f32 %v4384, %v4384
        %v4449 = vadd.f32 %v4385, %v4385
        %v4450 = vadd.f32 %v4386, %v4386
        %v4451 = vadd.f32 %v4387, %v4387
        %v4452 = vadd.f32 %v4388, %v4388
        %v4453 = vadd.f32 %v4389, %v4389
        %v4454 = vadd.f32 %v4390, %v4390
        %v4455 = vadd.f32 %v4391, %v4391
        %v4456 = vadd.f32 %v4392, %v4392
        %v4457 = vadd.f32 %v4393, %v4393
        %v4458 = vadd.f32 %v4394, %v4394
        %v4459 = vadd.f32 %v4395, %v4395
        %v4460 = vadd.f32 %v4396, %v4396
        %v4461 = vadd.f32 %v4397, %v4397
        %v4462 = vadd.f32 %v4398, %v4398
        %v4463 = vadd.f32 %v4399, %v4399
        %v4464 = vadd.f32 %v4400, %v4400
        %v4465 = vadd.f32 %v4401, %v4401
        %v4466 = vadd.f32 %v4402, %v4402
        %v4467 = vadd.f32 %v4403, %v4403
        %v4468 = vadd.f32 %v4404, %v4404
        %v4469 = vadd.f32 %v4405, %v4405
        %v4470 = vadd.f32 %v4406, %v4406
        %v4471 = vadd.f32 %v4407, %v4407
        %v4472 = vadd.f32 %v4408, %v4408
        %v4473 = vadd.f32 %v4409, %v4409
        %v4474 = vadd.f32 %v4410, %v4410
        %v4475 = vadd.f32 %v4411, %v4411
        %v4476 = vadd.f32 %v4412, %v4412
        %v4477 = vadd.f32 %v4413, %v4413
        %v4478 = vadd.f32 %v4414, %v4414
        %v4479 = vadd.f32 %v4415, %v4415
        %v4480 = vadd.f32 %v4416, %v4416
        %v4481 = vadd.f32 %v4417, %v4417
        %v4482 = vadd.f32 %v4418, %v4418
        %v4483 = vadd.f32 %v4419, %v4419
        %v4484 = vadd.f32 %v4420, %v4420
        %v4485 = vadd.f32 %v4421, %v4421
        %v4486 = vadd.f32 %v4422, %v4422
        %v4487 = vadd.f32 %v4423, %v4423
        %v4488 = vadd.f32 %v4424, %v4424
        %v4489 = vadd.f32 %v4425, %v4425
        %v4490 = vadd.f32 %v4426, %v4426
        %v4491 = vadd.f32 %v4427, %v4427
        %v4492 = vadd.f32 %v4428, %v4428
        %v4493 = vadd.f32 %v4429, %v4429
        %v4494 = vxor.u32 %v4430, 2147483648
        %v4495 = vxor.u32 %v4431, 2147483648
        %v4496 = vxor.u32 %v4432, 2147483648
        %v4497 = vxor.u32 %v4433, 2147483648
        %v4498 = vxor.u32 %v4434, 2147483648
        %v4499 = vxor.u32 %v4435, 2147483648
        %v4500 = vxor.u32 %v4436, 2147483648
        %v4501 = vxor.u32 %v4437, 2147483648
        %v4502 = vxor.u32 %v4438, 2147483648
        %v4503 = vxor.u32 %v4439, 2147483648
        %v4504 = vxor.u32 %v4440, 2147483648
        %v4505 = vxor.u32 %v4441, 2147483648
        %v4506 = vxor.u32 %v4442, 2147483648
        %v4507 = vxor.u32 %v4443, 2147483648
        %v4508 = vxor.u32 %v4444, 2147483648
        %v4509 = vxor.u32 %v4445, 2147483648
        %v4510 = vxor.u32 %v4446, 2147483648
        %v4511 = vxor.u32 %v4447, 2147483648
        %v4512 = vxor.u32 %v4448, 2147483648
        %v4513 = vxor.u32 %v4449, 2147483648
        %v4514 = vxor.u32 %v4450, 2147483648
        %v4515 = vxor.u32 %v4451, 2147483648
        %v4516 = vxor.u32 %v4452, 2147483648
        %v4517 = vxor.u32 %v4453, 2147483648
        %v4518 = vxor.u32 %v4454, 2147483648
        %v4519 = vxor.u32 %v4455, 2147483648
        %v4520 = vxor.u32 %v4456, 2147483648
        %v4521 = vxor.u32 %v4457, 2147483648
        %v4522 = vxor.u32 %v4458, 2147483648
        %v4523 = vxor.u32 %v4459, 2147483648
        %v4524 = vxor.u32 %v4460, 2147483648
        %v4525 = vxor.u32 %v4461, 2147483648
        %v4526 = vxor.u32 %v4462, 2147483648
        %v4527 = vxor.u32 %v4463, 2147483648
        %v4528 = vxor.u32 %v4464, 2147483648
        %v4529 = vxor.u32 %v4465, 2147483648
        %v4530 = vxor.u32 %v4466, 2147483648
        %v4531 = vxor.u32 %v4467, 2147483648
        %v4532 = vxor.u32 %v4468, 2147483648
        %v4533 = vxor.u32 %v4469, 2147483648
        %v4534 = vxor.u32 %v4470, 2147483648
        %v4535 = vxor.u32 %v4471, 2147483648
        %v4536 = vxor.u32 %v4472, 2147483648
        %v4537 = vxor.u32 %v4473, 2147483648
        %v4538 = vxor.u32 %v4474, 2147483648
        %v4539 = vxor.u32 %v4475, 2147483648
        %v4540 = vxor.u32 %v4476, 2147483648
        %v4541 = vxor.u32 %v4477, 2147483648
        %v4542 = vxor.u32 %v4478, 2147483648
        %v4543 = vxor.u32 %v4479, 2147483648
        %v4544 = vxor.u32 %v4480, 2147483648
        %v4545 = vxor.u32 %v4481, 2147483648
        %v4546 = vxor.u32 %v4482, 2147483648
        %v4547 = vxor.u32 %v4483, 2147483648
        %v4548 = vxor.u32 %v4484, 2147483648
        %v4549 = vxor.u32 %v4485, 2147483648
        %v4550 = vxor.u32 %v4486, 2147483648
        %v4551 = vxor.u32 %v4487, 2147483648
        %v4552 = vxor.u32 %v4488, 2147483648
        %v4553 = vxor.u32 %v4489, 2147483648
        %v4554 = vxor.u32 %v4490, 2147483648
        %v4555 = vxor.u32 %v4491, 2147483648
        %v4556 = vxor.u32 %v4492, 2147483648
        %v4557 = vxor.u32 %v4493, 2147483648
        %v4558 = vmul.f32 %v4494, 1.442695
        %v4559 = vpow.pop %v4558
        %v4560 = vmul.f32 %v4495, 1.442695
        %v4561 = vpow.pop %v4560
        %v4562 = vmul.f32 %v4496, 1.442695
        %v4563 = vpow.pop %v4562
        %v4564 = vmul.f32 %v4497, 1.442695
        %v4565 = vpow.pop %v4564
        %v4566 = vmul.f32 %v4498, 1.442695
        %v4567 = vpow.pop %v4566
        %v4568 = vmul.f32 %v4499, 1.442695
        %v4569 = vpow.pop %v4568
        %v4570 = vmul.f32 %v4500, 1.442695
        %v4571 = vpow.pop %v4570
        %v4572 = vmul.f32 %v4501, 1.442695
        %v4573 = vpow.pop %v4572
        %v4574 = vmul.f32 %v4502, 1.442695
        %v4575 = vpow.pop %v4574
        %v4576 = vmul.f32 %v4503, 1.442695
        %v4577 = vpow.pop %v4576
        %v4578 = vmul.f32 %v4504, 1.442695
        %v4579 = vpow.pop %v4578
        %v4580 = vmul.f32 %v4505, 1.442695
        %v4581 = vpow.pop %v4580
        %v4582 = vmul.f32 %v4506, 1.442695
        %v4583 = vpow.pop %v4582
        %v4584 = vmul.f32 %v4507, 1.442695
        %v4585 = vpow.pop %v4584
        %v4586 = vmul.f32 %v4508, 1.442695
        %v4587 = vpow.pop %v4586
        %v4588 = vmul.f32 %v4509, 1.442695
        %v4589 = vpow.pop %v4588
        %v4590 = vmul.f32 %v4510, 1.442695
        %v4591 = vpow.pop %v4590
        %v4592 = vmul.f32 %v4511, 1.442695
        %v4593 = vpow.pop %v4592
        %v4594 = vmul.f32 %v4512, 1.442695
        %v4595 = vpow.pop %v4594
        %v4596 = vmul.f32 %v4513, 1.442695
        %v4597 = vpow.pop %v4596
        %v4598 = vmul.f32 %v4514, 1.442695
        %v4599 = vpow.pop %v4598
        %v4600 = vmul.f32 %v4515, 1.442695
        %v4601 = vpow.pop %v4600
        %v4602 = vmul.f32 %v4516, 1.442695
        %v4603 = vpow.pop %v4602
        %v4604 = vmul.f32 %v4517, 1.442695
        %v4605 = vpow.pop %v4604
        %v4606 = vmul.f32 %v4518, 1.442695
        %v4607 = vpow.pop %v4606
        %v4608 = vmul.f32 %v4519, 1.442695
        %v4609 = vpow.pop %v4608
        %v4610 = vmul.f32 %v4520, 1.442695
        %v4611 = vpow.pop %v4610
        %v4612 = vmul.f32 %v4521, 1.442695
        %v4613 = vpow.pop %v4612
        %v4614 = vmul.f32 %v4522, 1.442695
        %v4615 = vpow.pop %v4614
        %v4616 = vmul.f32 %v4523, 1.442695
        %v4617 = vpow.pop %v4616
        %v4618 = vmul.f32 %v4524, 1.442695
        %v4619 = vpow.pop %v4618
        %v4620 = vmul.f32 %v4525, 1.442695
        %v4621 = vpow.pop %v4620
        %v4622 = vmul.f32 %v4526, 1.442695
        %v4623 = vpow.pop %v4622
        %v4624 = vmul.f32 %v4527, 1.442695
        %v4625 = vpow.pop %v4624
        %v4626 = vmul.f32 %v4528, 1.442695
        %v4627 = vpow.pop %v4626
        %v4628 = vmul.f32 %v4529, 1.442695
        %v4629 = vpow.pop %v4628
        %v4630 = vmul.f32 %v4530, 1.442695
        %v4631 = vpow.pop %v4630
        %v4632 = vmul.f32 %v4531, 1.442695
        %v4633 = vpow.pop %v4632
        %v4634 = vmul.f32 %v4532, 1.442695
        %v4635 = vpow.pop %v4634
        %v4636 = vmul.f32 %v4533, 1.442695
        %v4637 = vpow.pop %v4636
        %v4638 = vmul.f32 %v4534, 1.442695
        %v4639 = vpow.pop %v4638
        %v4640 = vmul.f32 %v4535, 1.442695
        %v4641 = vpow.pop %v4640
        %v4642 = vmul.f32 %v4536, 1.442695
        %v4643 = vpow.pop %v4642
        %v4644 = vmul.f32 %v4537, 1.442695
        %v4645 = vpow.pop %v4644
        %v4646 = vmul.f32 %v4538, 1.442695
        %v4647 = vpow.pop %v4646
        %v4648 = vmul.f32 %v4539, 1.442695
        %v4649 = vpow.pop %v4648
        %v4650 = vmul.f32 %v4540, 1.442695
        %v4651 = vpow.pop %v4650
        %v4652 = vmul.f32 %v4541, 1.442695
        %v4653 = vpow.pop %v4652
        %v4654 = vmul.f32 %v4542, 1.442695
        %v4655 = vpow.pop %v4654
        %v4656 = vmul.f32 %v4543, 1.442695
        %v4657 = vpow.pop %v4656
        %v4658 = vmul.f32 %v4544, 1.442695
        %v4659 = vpow.pop %v4658
        %v4660 = vmul.f32 %v4545, 1.442695
        %v4661 = vpow.pop %v4660
        %v4662 = vmul.f32 %v4546, 1.442695
        %v4663 = vpow.pop %v4662
        %v4664 = vmul.f32 %v4547, 1.442695
        %v4665 = vpow.pop %v4664
        %v4666 = vmul.f32 %v4548, 1.442695
        %v4667 = vpow.pop %v4666
        %v4668 = vmul.f32 %v4549, 1.442695
        %v4669 = vpow.pop %v4668
        %v4670 = vmul.f32 %v4550, 1.442695
        %v4671 = vpow.pop %v4670
        %v4672 = vmul.f32 %v4551, 1.442695
        %v4673 = vpow.pop %v4672
        %v4674 = vmul.f32 %v4552, 1.442695
        %v4675 = vpow.pop %v4674
        %v4676 = vmul.f32 %v4553, 1.442695
        %v4677 = vpow.pop %v4676
        %v4678 = vmul.f32 %v4554, 1.442695
        %v4679 = vpow.pop %v4678
        %v4680 = vmul.f32 %v4555, 1.442695
        %v4681 = vpow.pop %v4680
        %v4682 = vmul.f32 %v4556, 1.442695
        %v4683 = vpow.pop %v4682
        %v4684 = vmul.f32 %v4557, 1.442695
        %v4685 = vpow.pop %v4684
        %v4686 = vadd.f32 %v4559, 1.0
        %v4687 = vadd.f32 %v4561, 1.0
        %v4688 = vadd.f32 %v4563, 1.0
        %v4689 = vadd.f32 %v4565, 1.0
        %v4690 = vadd.f32 %v4567, 1.0
        %v4691 = vadd.f32 %v4569, 1.0
        %v4692 = vadd.f32 %v4571, 1.0
        %v4693 = vadd.f32 %v4573, 1.0
        %v4694 = vadd.f32 %v4575, 1.0
        %v4695 = vadd.f32 %v4577, 1.0
        %v4696 = vadd.f32 %v4579, 1.0
        %v4697 = vadd.f32 %v4581, 1.0
        %v4698 = vadd.f32 %v4583, 1.0
        %v4699 = vadd.f32 %v4585, 1.0
        %v4700 = vadd.f32 %v4587, 1.0
        %v4701 = vadd.f32 %v4589, 1.0
        %v4702 = vadd.f32 %v4591, 1.0
        %v4703 = vadd.f32 %v4593, 1.0
        %v4704 = vadd.f32 %v4595, 1.0
        %v4705 = vadd.f32 %v4597, 1.0
        %v4706 = vadd.f32 %v4599, 1.0
        %v4707 = vadd.f32 %v4601, 1.0
        %v4708 = vadd.f32 %v4603, 1.0
        %v4709 = vadd.f32 %v4605, 1.0
        %v4710 = vadd.f32 %v4607, 1.0
        %v4711 = vadd.f32 %v4609, 1.0
        %v4712 = vadd.f32 %v4611, 1.0
        %v4713 = vadd.f32 %v4613, 1.0
        %v4714 = vadd.f32 %v4615, 1.0
        %v4715 = vadd.f32 %v4617, 1.0
        %v4716 = vadd.f32 %v4619, 1.0
        %v4717 = vadd.f32 %v4621, 1.0
        %v4718 = vadd.f32 %v4623, 1.0
        %v4719 = vadd.f32 %v4625, 1.0
        %v4720 = vadd.f32 %v4627, 1.0
        %v4721 = vadd.f32 %v4629, 1.0
        %v4722 = vadd.f32 %v4631, 1.0
        %v4723 = vadd.f32 %v4633, 1.0
        %v4724 = vadd.f32 %v4635, 1.0
        %v4725 = vadd.f32 %v4637, 1.0
        %v4726 = vadd.f32 %v4639, 1.0
        %v4727 = vadd.f32 %v4641, 1.0
        %v4728 = vadd.f32 %v4643, 1.0
        %v4729 = vadd.f32 %v4645, 1.0
        %v4730 = vadd.f32 %v4647, 1.0
        %v4731 = vadd.f32 %v4649, 1.0
        %v4732 = vadd.f32 %v4651, 1.0
        %v4733 = vadd.f32 %v4653, 1.0
        %v4734 = vadd.f32 %v4655, 1.0
        %v4735 = vadd.f32 %v4657, 1.0
        %v4736 = vadd.f32 %v4659, 1.0
        %v4737 = vadd.f32 %v4661, 1.0
        %v4738 = vadd.f32 %v4663, 1.0
        %v4739 = vadd.f32 %v4665, 1.0
        %v4740 = vadd.f32 %v4667, 1.0
        %v4741 = vadd.f32 %v4669, 1.0
        %v4742 = vadd.f32 %v4671, 1.0
        %v4743 = vadd.f32 %v4673, 1.0
        %v4744 = vadd.f32 %v4675, 1.0
        %v4745 = vadd.f32 %v4677, 1.0
        %v4746 = vadd.f32 %v4679, 1.0
        %v4747 = vadd.f32 %v4681, 1.0
        %v4748 = vadd.f32 %v4683, 1.0
        %v4749 = vadd.f32 %v4685, 1.0
        %v4750 = vrcp.pop %v4686
        %v4751 = vmul.f32 1.0, %v4750
        %v4752 = vrcp.pop %v4687
        %v4753 = vmul.f32 1.0, %v4752
        %v4754 = vrcp.pop %v4688
        %v4755 = vmul.f32 1.0, %v4754
        %v4756 = vrcp.pop %v4689
        %v4757 = vmul.f32 1.0, %v4756
        %v4758 = vrcp.pop %v4690
        %v4759 = vmul.f32 1.0, %v4758
        %v4760 = vrcp.pop %v4691
        %v4761 = vmul.f32 1.0, %v4760
        %v4762 = vrcp.pop %v4692
        %v4763 = vmul.f32 1.0, %v4762
        %v4764 = vrcp.pop %v4693
        %v4765 = vmul.f32 1.0, %v4764
        %v4766 = vrcp.pop %v4694
        %v4767 = vmul.f32 1.0, %v4766
        %v4768 = vrcp.pop %v4695
        %v4769 = vmul.f32 1.0, %v4768
        %v4770 = vrcp.pop %v4696
        %v4771 = vmul.f32 1.0, %v4770
        %v4772 = vrcp.pop %v4697
        %v4773 = vmul.f32 1.0, %v4772
        %v4774 = vrcp.pop %v4698
        %v4775 = vmul.f32 1.0, %v4774
        %v4776 = vrcp.pop %v4699
        %v4777 = vmul.f32 1.0, %v4776
        %v4778 = vrcp.pop %v4700
        %v4779 = vmul.f32 1.0, %v4778
        %v4780 = vrcp.pop %v4701
        %v4781 = vmul.f32 1.0, %v4780
        %v4782 = vrcp.pop %v4702
        %v4783 = vmul.f32 1.0, %v4782
        %v4784 = vrcp.pop %v4703
        %v4785 = vmul.f32 1.0, %v4784
        %v4786 = vrcp.pop %v4704
        %v4787 = vmul.f32 1.0, %v4786
        %v4788 = vrcp.pop %v4705
        %v4789 = vmul.f32 1.0, %v4788
        %v4790 = vrcp.pop %v4706
        %v4791 = vmul.f32 1.0, %v4790
        %v4792 = vrcp.pop %v4707
        %v4793 = vmul.f32 1.0, %v4792
        %v4794 = vrcp.pop %v4708
        %v4795 = vmul.f32 1.0, %v4794
        %v4796 = vrcp.pop %v4709
        %v4797 = vmul.f32 1.0, %v4796
        %v4798 = vrcp.pop %v4710
        %v4799 = vmul.f32 1.0, %v4798
        %v4800 = vrcp.pop %v4711
        %v4801 = vmul.f32 1.0, %v4800
        %v4802 = vrcp.pop %v4712
        %v4803 = vmul.f32 1.0, %v4802
        %v4804 = vrcp.pop %v4713
        %v4805 = vmul.f32 1.0, %v4804
        %v4806 = vrcp.pop %v4714
        %v4807 = vmul.f32 1.0, %v4806
        %v4808 = vrcp.pop %v4715
        %v4809 = vmul.f32 1.0, %v4808
        %v4810 = vrcp.pop %v4716
        %v4811 = vmul.f32 1.0, %v4810
        %v4812 = vrcp.pop %v4717
        %v4813 = vmul.f32 1.0, %v4812
        %v4814 = vrcp.pop %v4718
        %v4815 = vmul.f32 1.0, %v4814
        %v4816 = vrcp.pop %v4719
        %v4817 = vmul.f32 1.0, %v4816
        %v4818 = vrcp.pop %v4720
        %v4819 = vmul.f32 1.0, %v4818
        %v4820 = vrcp.pop %v4721
        %v4821 = vmul.f32 1.0, %v4820
        %v4822 = vrcp.pop %v4722
        %v4823 = vmul.f32 1.0, %v4822
        %v4824 = vrcp.pop %v4723
        %v4825 = vmul.f32 1.0, %v4824
        %v4826 = vrcp.pop %v4724
        %v4827 = vmul.f32 1.0, %v4826
        %v4828 = vrcp.pop %v4725
        %v4829 = vmul.f32 1.0, %v4828
        %v4830 = vrcp.pop %v4726
        %v4831 = vmul.f32 1.0, %v4830
        %v4832 = vrcp.pop %v4727
        %v4833 = vmul.f32 1.0, %v4832
        %v4834 = vrcp.pop %v4728
        %v4835 = vmul.f32 1.0, %v4834
        %v4836 = vrcp.pop %v4729
        %v4837 = vmul.f32 1.0, %v4836
        %v4838 = vrcp.pop %v4730
        %v4839 = vmul.f32 1.0, %v4838
        %v4840 = vrcp.pop %v4731
        %v4841 = vmul.f32 1.0, %v4840
        %v4842 = vrcp.pop %v4732
        %v4843 = vmul.f32 1.0, %v4842
        %v4844 = vrcp.pop %v4733
        %v4845 = vmul.f32 1.0, %v4844
        %v4846 = vrcp.pop %v4734
        %v4847 = vmul.f32 1.0, %v4846
        %v4848 = vrcp.pop %v4735
        %v4849 = vmul.f32 1.0, %v4848
        %v4850 = vrcp.pop %v4736
        %v4851 = vmul.f32 1.0, %v4850
        %v4852 = vrcp.pop %v4737
        %v4853 = vmul.f32 1.0, %v4852
        %v4854 = vrcp.pop %v4738
        %v4855 = vmul.f32 1.0, %v4854
        %v4856 = vrcp.pop %v4739
        %v4857 = vmul.f32 1.0, %v4856
        %v4858 = vrcp.pop %v4740
        %v4859 = vmul.f32 1.0, %v4858
        %v4860 = vrcp.pop %v4741
        %v4861 = vmul.f32 1.0, %v4860
        %v4862 = vrcp.pop %v4742
        %v4863 = vmul.f32 1.0, %v4862
        %v4864 = vrcp.pop %v4743
        %v4865 = vmul.f32 1.0, %v4864
        %v4866 = vrcp.pop %v4744
        %v4867 = vmul.f32 1.0, %v4866
        %v4868 = vrcp.pop %v4745
        %v4869 = vmul.f32 1.0, %v4868
        %v4870 = vrcp.pop %v4746
        %v4871 = vmul.f32 1.0, %v4870
        %v4872 = vrcp.pop %v4747
        %v4873 = vmul.f32 1.0, %v4872
        %v4874 = vrcp.pop %v4748
        %v4875 = vmul.f32 1.0, %v4874
        %v4876 = vrcp.pop %v4749
        %v4877 = vmul.f32 1.0, %v4876
        %v4878 = vpack.c.bf16 %v2486, %v2483
        %v4879 = vpack.c.bf16 %v2494, %v2491
        %v4880 = vpack.c.bf16 %v2502, %v2499
        %v4881 = vpack.c.bf16 %v2510, %v2507
        %v4882 = vpack.c.bf16 %v2518, %v2515
        %v4883 = vpack.c.bf16 %v2526, %v2523
        %v4884 = vpack.c.bf16 %v2534, %v2531
        %v4885 = vpack.c.bf16 %v2542, %v2539
        %v4886 = vpack.c.bf16 %v2550, %v2547
        %v4887 = vpack.c.bf16 %v2558, %v2555
        %v4888 = vpack.c.bf16 %v2566, %v2563
        %v4889 = vpack.c.bf16 %v2574, %v2571
        %v4890 = vpack.c.bf16 %v2582, %v2579
        %v4891 = vpack.c.bf16 %v2590, %v2587
        %v4892 = vpack.c.bf16 %v2598, %v2595
        %v4893 = vpack.c.bf16 %v2606, %v2603
        %v4894 = vpack.c.bf16 %v2614, %v2611
        %v4895 = vpack.c.bf16 %v2622, %v2619
        %v4896 = vpack.c.bf16 %v2630, %v2627
        %v4897 = vpack.c.bf16 %v2638, %v2635
        %v4898 = vpack.c.bf16 %v2646, %v2643
        %v4899 = vpack.c.bf16 %v2654, %v2651
        %v4900 = vpack.c.bf16 %v2662, %v2659
        %v4901 = vpack.c.bf16 %v2670, %v2667
        %v4902 = vpack.c.bf16 %v2678, %v2675
        %v4903 = vpack.c.bf16 %v2686, %v2683
        %v4904 = vpack.c.bf16 %v2694, %v2691
        %v4905 = vpack.c.bf16 %v2702, %v2699
        %v4906 = vpack.c.bf16 %v2710, %v2707
        %v4907 = vpack.c.bf16 %v2718, %v2715
        %v4908 = vpack.c.bf16 %v2726, %v2723
        %v4909 = vpack.c.bf16 %v2734, %v2731
        %v4910 = vpack.c.bf16 %v4753, %v4751
        %v4911 = vpack.c.bf16 %v4757, %v4755
        %v4912 = vpack.c.bf16 %v4761, %v4759
        %v4913 = vpack.c.bf16 %v4765, %v4763
        %v4914 = vpack.c.bf16 %v4769, %v4767
        %v4915 = vpack.c.bf16 %v4773, %v4771
        %v4916 = vpack.c.bf16 %v4777, %v4775
        %v4917 = vpack.c.bf16 %v4781, %v4779
        %v4918 = vpack.c.bf16 %v4785, %v4783
        %v4919 = vpack.c.bf16 %v4789, %v4787
        %v4920 = vpack.c.bf16 %v4793, %v4791
        %v4921 = vpack.c.bf16 %v4797, %v4795
        %v4922 = vpack.c.bf16 %v4801, %v4799
        %v4923 = vpack.c.bf16 %v4805, %v4803
        %v4924 = vpack.c.bf16 %v4809, %v4807
        %v4925 = vpack.c.bf16 %v4813, %v4811
        %v4926 = vpack.c.bf16 %v4817, %v4815
        %v4927 = vpack.c.bf16 %v4821, %v4819
        %v4928 = vpack.c.bf16 %v4825, %v4823
        %v4929 = vpack.c.bf16 %v4829, %v4827
        %v4930 = vpack.c.bf16 %v4833, %v4831
        %v4931 = vpack.c.bf16 %v4837, %v4835
        %v4932 = vpack.c.bf16 %v4841, %v4839
        %v4933 = vpack.c.bf16 %v4845, %v4843
        %v4934 = vpack.c.bf16 %v4849, %v4847
        %v4935 = vpack.c.bf16 %v4853, %v4851
        %v4936 = vpack.c.bf16 %v4857, %v4855
        %v4937 = vpack.c.bf16 %v4861, %v4859
        %v4938 = vpack.c.bf16 %v4865, %v4863
        %v4939 = vpack.c.bf16 %v4869, %v4867
        %v4940 = vpack.c.bf16 %v4873, %v4871
        %v4941 = vpack.c.bf16 %v4877, %v4875
        %v4942 = vld [vmem:[%s2 + $0x90] sm:$0x3]
        %v4943 = vld [vmem:[%s3 + $0x7] sm:$0x1]
        %v4944 = vlaneseq
        %v4945 = vshrl.u32 %v4944, 7
        %v4946 = vsub.s32 0, %v4945
        %v4947 = vrot.slane %v4943, %v4946
        %v4949 = vsel %vm2967, %v4878, 0
        %v4952 = vsel %vm2967, %v4879, 0
        %v4955 = vsel %vm2967, %v4880, 0
        %v4958 = vsel %vm2967, %v4881, 0
        %v4961 = vsel %vm2967, %v4882, 0
        %v4964 = vsel %vm2967, %v4883, 0
        %v4967 = vsel %vm2967, %v4884, 0
        %v4970 = vsel %vm2967, %v4885, 0
        %v4973 = vsel %vm2967, %v4886, 0
        %v4976 = vsel %vm2967, %v4887, 0
        %v4979 = vsel %vm2967, %v4888, 0
        %v4982 = vsel %vm2967, %v4889, 0
        %v4985 = vsel %vm2967, %v4890, 0
        %v4988 = vsel %vm2967, %v4891, 0
        %v4991 = vsel %vm2967, %v4892, 0
        %v4994 = vsel %vm2967, %v4893, 0
        %v4997 = vsel %vm2967, %v4894, 0
        %v5000 = vsel %vm2967, %v4895, 0
        %v5003 = vsel %vm2967, %v4896, 0
        %v5006 = vsel %vm2967, %v4897, 0
        %v5009 = vsel %vm2967, %v4898, 0
        %v5012 = vsel %vm2967, %v4899, 0
        %v5015 = vsel %vm2967, %v4900, 0
        %v5018 = vsel %vm2967, %v4901, 0
        %v5021 = vsel %vm2967, %v4902, 0
        %v5024 = vsel %vm2967, %v4903, 0
        %v5027 = vsel %vm2967, %v4904, 0
        %v5030 = vsel %vm2967, %v4905, 0
        %v5033 = vsel %vm2967, %v4906, 0
        %v5036 = vsel %vm2967, %v4907, 0
        %v5039 = vsel %vm2967, %v4908, 0
        %v5042 = vsel %vm2967, %v4909, 0
        %v5045 = vsel %vm2967, %v4910, 0
        %v5048 = vsel %vm2967, %v4911, 0
        %v5051 = vsel %vm2967, %v4912, 0
        %v5054 = vsel %vm2967, %v4913, 0
        %v5057 = vsel %vm2967, %v4914, 0
        %v5060 = vsel %vm2967, %v4915, 0
        %v5063 = vsel %vm2967, %v4916, 0
        %v5066 = vsel %vm2967, %v4917, 0
        %v5069 = vsel %vm2967, %v4918, 0
        %v5072 = vsel %vm2967, %v4919, 0
        %v5075 = vsel %vm2967, %v4920, 0
        %v5078 = vsel %vm2967, %v4921, 0
        %v5081 = vsel %vm2967, %v4922, 0
        %v5084 = vsel %vm2967, %v4923, 0
        %v5087 = vsel %vm2967, %v4924, 0
        %v5090 = vsel %vm2967, %v4925, 0
        %v5093 = vsel %vm2967, %v4926, 0
        %v5096 = vsel %vm2967, %v4927, 0
        %v5099 = vsel %vm2967, %v4928, 0
        %v5102 = vsel %vm2967, %v4929, 0
        %v5105 = vsel %vm2967, %v4930, 0
        %v5108 = vsel %vm2967, %v4931, 0
        %v5111 = vsel %vm2967, %v4932, 0
        %v5114 = vsel %vm2967, %v4933, 0
        %v5117 = vsel %vm2967, %v4934, 0
        %v5120 = vsel %vm2967, %v4935, 0
        %v5123 = vsel %vm2967, %v4936, 0
        %v5126 = vsel %vm2967, %v4937, 0
        %v5129 = vsel %vm2967, %v4938, 0
        %v5132 = vsel %vm2967, %v4939, 0
        %v5135 = vsel %vm2967, %v4940, 0
        %v5138 = vsel %vm2967, %v4941, 0
        %v5141 = vsel %vm3064, %v4942, 0
        %5143 = vmatprep.subr.bf16.mxu0 0
        %5144 = vmatpush1.bf16.msra.mxu0 0
        %5145 = vmatprep.subr.bf16.mxu0 0
        %5146 = vmatpush1.bf16.msra.mxu0 0
        %5147 = vmatprep.subr.bf16.mxu0 0
        %5148 = vmatpush1.bf16.msra.mxu0 0
        %5149 = vmatprep.subr.bf16.mxu0 0
        %5150 = vmatpush1.bf16.msra.mxu0 0
        %5151 = vmatprep.subr.bf16.mxu0 0
        %5152 = vmatpush1.bf16.msra.mxu0 0
        %5153 = vmatprep.subr.bf16.mxu0 0
        %5154 = vmatpush1.bf16.msra.mxu0 0
        %5155 = vmatprep.subr.bf16.mxu0 0
        %5156 = vmatpush1.bf16.msra.mxu0 0
        %5157 = vmatprep.subr.bf16.mxu0 0
        %5158 = vmatpush1.bf16.msra.mxu0 %v5141
        %5159 = vmatprep.subr.bf16.mxu0 0
        %5160 = vmatpush2.bf16.msra.mxu0 0
        %5161 = vmatprep.subr.bf16.mxu0 0
        %5162 = vmatpush2.bf16.msra.mxu0 0
        %5163 = vmatprep.subr.bf16.mxu0 0
        %5164 = vmatpush2.bf16.msra.mxu0 0
        %5165 = vmatprep.subr.bf16.mxu0 0
        %5166 = vmatpush2.bf16.msra.mxu0 0
        %5167 = vmatprep.subr.bf16.mxu0 0
        %5168 = vmatpush2.bf16.msra.mxu0 0
        %5169 = vmatprep.subr.bf16.mxu0 0
        %5170 = vmatpush2.bf16.msra.mxu0 0
        %5171 = vmatprep.subr.bf16.mxu0 0
        %5172 = vmatpush2.bf16.msra.mxu0 0
        %5173 = vmatprep.subr.bf16.mxu0 0
        %5174 = vmatpush2.bf16.msra.mxu0 0
        %5175 = vmatprep.mubr.bf16.mxu0 0
        %5176 = vmatmul.mubr.bf16.gmra.mxu0 %v4949
        %v5177 = vpop.f32.mrf.mxu0
        %v5178 = vadd.f32 %v4947, %v5177
        %v5179 = vpop.f32.mrf.mxu0
        %v5180 = vpop.f32.mrf.mxu0
        %v5181 = vadd.f32 %v4947, %v5180
        %v5182 = vpop.f32.mrf.mxu0
        %5183 = vmatprep.mubr.bf16.mxu0 0
        %5184 = vmatmul.mubr.bf16.gmra.mxu0 %v4952
        %v5185 = vpop.f32.mrf.mxu0
        %v5186 = vadd.f32 %v4947, %v5185
        %v5187 = vpop.f32.mrf.mxu0
        %v5188 = vpop.f32.mrf.mxu0
        %v5189 = vadd.f32 %v4947, %v5188
        %v5190 = vpop.f32.mrf.mxu0
        %5191 = vmatprep.mubr.bf16.mxu0 0
        %5192 = vmatmul.mubr.bf16.gmra.mxu0 %v4955
        %v5193 = vpop.f32.mrf.mxu0
        %v5194 = vadd.f32 %v4947, %v5193
        %v5195 = vpop.f32.mrf.mxu0
        %v5196 = vpop.f32.mrf.mxu0
        %v5197 = vadd.f32 %v4947, %v5196
        %v5198 = vpop.f32.mrf.mxu0
        %5199 = vmatprep.mubr.bf16.mxu0 0
        %5200 = vmatmul.mubr.bf16.gmra.mxu0 %v4958
        %v5201 = vpop.f32.mrf.mxu0
        %v5202 = vadd.f32 %v4947, %v5201
        %v5203 = vpop.f32.mrf.mxu0
        %v5204 = vpop.f32.mrf.mxu0
        %v5205 = vadd.f32 %v4947, %v5204
        %v5206 = vpop.f32.mrf.mxu0
        %5207 = vmatprep.mubr.bf16.mxu0 0
        %5208 = vmatmul.mubr.bf16.gmra.mxu0 %v4961
        %v5209 = vpop.f32.mrf.mxu0
        %v5210 = vadd.f32 %v4947, %v5209
        %v5211 = vpop.f32.mrf.mxu0
        %v5212 = vpop.f32.mrf.mxu0
        %v5213 = vadd.f32 %v4947, %v5212
        %v5214 = vpop.f32.mrf.mxu0
        %5215 = vmatprep.mubr.bf16.mxu0 0
        %5216 = vmatmul.mubr.bf16.gmra.mxu0 %v4964
        %v5217 = vpop.f32.mrf.mxu0
        %v5218 = vadd.f32 %v4947, %v5217
        %v5219 = vpop.f32.mrf.mxu0
        %v5220 = vpop.f32.mrf.mxu0
        %v5221 = vadd.f32 %v4947, %v5220
        %v5222 = vpop.f32.mrf.mxu0
        %5223 = vmatprep.mubr.bf16.mxu0 0
        %5224 = vmatmul.mubr.bf16.gmra.mxu0 %v4967
        %v5225 = vpop.f32.mrf.mxu0
        %v5226 = vadd.f32 %v4947, %v5225
        %v5227 = vpop.f32.mrf.mxu0
        %v5228 = vpop.f32.mrf.mxu0
        %v5229 = vadd.f32 %v4947, %v5228
        %v5230 = vpop.f32.mrf.mxu0
        %5231 = vmatprep.mubr.bf16.mxu0 0
        %5232 = vmatmul.mubr.bf16.gmra.mxu0 %v4970
        %v5233 = vpop.f32.mrf.mxu0
        %v5234 = vadd.f32 %v4947, %v5233
        %v5235 = vpop.f32.mrf.mxu0
        %v5236 = vpop.f32.mrf.mxu0
        %v5237 = vadd.f32 %v4947, %v5236
        %v5238 = vpop.f32.mrf.mxu0
        %5239 = vmatprep.mubr.bf16.mxu0 0
        %5240 = vmatmul.mubr.bf16.gmra.mxu0 %v4973
        %v5241 = vpop.f32.mrf.mxu0
        %v5242 = vadd.f32 %v4947, %v5241
        %v5243 = vpop.f32.mrf.mxu0
        %v5244 = vpop.f32.mrf.mxu0
        %v5245 = vadd.f32 %v4947, %v5244
        %v5246 = vpop.f32.mrf.mxu0
        %5247 = vmatprep.mubr.bf16.mxu0 0
        %5248 = vmatmul.mubr.bf16.gmra.mxu0 %v4976
        %v5249 = vpop.f32.mrf.mxu0
        %v5250 = vadd.f32 %v4947, %v5249
        %v5251 = vpop.f32.mrf.mxu0
        %v5252 = vpop.f32.mrf.mxu0
        %v5253 = vadd.f32 %v4947, %v5252
        %v5254 = vpop.f32.mrf.mxu0
        %5255 = vmatprep.mubr.bf16.mxu0 0
        %5256 = vmatmul.mubr.bf16.gmra.mxu0 %v4979
        %v5257 = vpop.f32.mrf.mxu0
        %v5258 = vadd.f32 %v4947, %v5257
        %v5259 = vpop.f32.mrf.mxu0
        %v5260 = vpop.f32.mrf.mxu0
        %v5261 = vadd.f32 %v4947, %v5260
        %v5262 = vpop.f32.mrf.mxu0
        %5263 = vmatprep.mubr.bf16.mxu0 0
        %5264 = vmatmul.mubr.bf16.gmra.mxu0 %v4982
        %v5265 = vpop.f32.mrf.mxu0
        %v5266 = vadd.f32 %v4947, %v5265
        %v5267 = vpop.f32.mrf.mxu0
        %v5268 = vpop.f32.mrf.mxu0
        %v5269 = vadd.f32 %v4947, %v5268
        %v5270 = vpop.f32.mrf.mxu0
        %5271 = vmatprep.mubr.bf16.mxu0 0
        %5272 = vmatmul.mubr.bf16.gmra.mxu0 %v4985
        %v5273 = vpop.f32.mrf.mxu0
        %v5274 = vadd.f32 %v4947, %v5273
        %v5275 = vpop.f32.mrf.mxu0
        %v5276 = vpop.f32.mrf.mxu0
        %v5277 = vadd.f32 %v4947, %v5276
        %v5278 = vpop.f32.mrf.mxu0
        %5279 = vmatprep.mubr.bf16.mxu0 0
        %5280 = vmatmul.mubr.bf16.gmra.mxu0 %v4988
        %v5281 = vpop.f32.mrf.mxu0
        %v5282 = vadd.f32 %v4947, %v5281
        %v5283 = vpop.f32.mrf.mxu0
        %v5284 = vpop.f32.mrf.mxu0
        %v5285 = vadd.f32 %v4947, %v5284
        %v5286 = vpop.f32.mrf.mxu0
        %5287 = vmatprep.mubr.bf16.mxu0 0
        %5288 = vmatmul.mubr.bf16.gmra.mxu0 %v4991
        %v5289 = vpop.f32.mrf.mxu0
        %v5290 = vadd.f32 %v4947, %v5289
        %v5291 = vpop.f32.mrf.mxu0
        %v5292 = vpop.f32.mrf.mxu0
        %v5293 = vadd.f32 %v4947, %v5292
        %v5294 = vpop.f32.mrf.mxu0
        %5295 = vmatprep.mubr.bf16.mxu0 0
        %5296 = vmatmul.mubr.bf16.gmra.mxu0 %v4994
        %v5297 = vpop.f32.mrf.mxu0
        %v5298 = vadd.f32 %v4947, %v5297
        %v5299 = vpop.f32.mrf.mxu0
        %v5300 = vpop.f32.mrf.mxu0
        %v5301 = vadd.f32 %v4947, %v5300
        %v5302 = vpop.f32.mrf.mxu0
        %5303 = vmatprep.mubr.bf16.mxu0 0
        %5304 = vmatmul.mubr.bf16.gmra.mxu0 %v4997
        %v5305 = vpop.f32.mrf.mxu0
        %v5306 = vadd.f32 %v4947, %v5305
        %v5307 = vpop.f32.mrf.mxu0
        %v5308 = vpop.f32.mrf.mxu0
        %v5309 = vadd.f32 %v4947, %v5308
        %v5310 = vpop.f32.mrf.mxu0
        %5311 = vmatprep.mubr.bf16.mxu0 0
        %5312 = vmatmul.mubr.bf16.gmra.mxu0 %v5000
        %v5313 = vpop.f32.mrf.mxu0
        %v5314 = vadd.f32 %v4947, %v5313
        %v5315 = vpop.f32.mrf.mxu0
        %v5316 = vpop.f32.mrf.mxu0
        %v5317 = vadd.f32 %v4947, %v5316
        %v5318 = vpop.f32.mrf.mxu0
        %5319 = vmatprep.mubr.bf16.mxu0 0
        %5320 = vmatmul.mubr.bf16.gmra.mxu0 %v5003
        %v5321 = vpop.f32.mrf.mxu0
        %v5322 = vadd.f32 %v4947, %v5321
        %v5323 = vpop.f32.mrf.mxu0
        %v5324 = vpop.f32.mrf.mxu0
        %v5325 = vadd.f32 %v4947, %v5324
        %v5326 = vpop.f32.mrf.mxu0
        %5327 = vmatprep.mubr.bf16.mxu0 0
        %5328 = vmatmul.mubr.bf16.gmra.mxu0 %v5006
        %v5329 = vpop.f32.mrf.mxu0
        %v5330 = vadd.f32 %v4947, %v5329
        %v5331 = vpop.f32.mrf.mxu0
        %v5332 = vpop.f32.mrf.mxu0
        %v5333 = vadd.f32 %v4947, %v5332
        %v5334 = vpop.f32.mrf.mxu0
        %5335 = vmatprep.mubr.bf16.mxu0 0
        %5336 = vmatmul.mubr.bf16.gmra.mxu0 %v5009
        %v5337 = vpop.f32.mrf.mxu0
        %v5338 = vadd.f32 %v4947, %v5337
        %v5339 = vpop.f32.mrf.mxu0
        %v5340 = vpop.f32.mrf.mxu0
        %v5341 = vadd.f32 %v4947, %v5340
        %v5342 = vpop.f32.mrf.mxu0
        %5343 = vmatprep.mubr.bf16.mxu0 0
        %5344 = vmatmul.mubr.bf16.gmra.mxu0 %v5012
        %v5345 = vpop.f32.mrf.mxu0
        %v5346 = vadd.f32 %v4947, %v5345
        %v5347 = vpop.f32.mrf.mxu0
        %v5348 = vpop.f32.mrf.mxu0
        %v5349 = vadd.f32 %v4947, %v5348
        %v5350 = vpop.f32.mrf.mxu0
        %5351 = vmatprep.mubr.bf16.mxu0 0
        %5352 = vmatmul.mubr.bf16.gmra.mxu0 %v5015
        %v5353 = vpop.f32.mrf.mxu0
        %v5354 = vadd.f32 %v4947, %v5353
        %v5355 = vpop.f32.mrf.mxu0
        %v5356 = vpop.f32.mrf.mxu0
        %v5357 = vadd.f32 %v4947, %v5356
        %v5358 = vpop.f32.mrf.mxu0
        %5359 = vmatprep.mubr.bf16.mxu0 0
        %5360 = vmatmul.mubr.bf16.gmra.mxu0 %v5018
        %v5361 = vpop.f32.mrf.mxu0
        %v5362 = vadd.f32 %v4947, %v5361
        %v5363 = vpop.f32.mrf.mxu0
        %v5364 = vpop.f32.mrf.mxu0
        %v5365 = vadd.f32 %v4947, %v5364
        %v5366 = vpop.f32.mrf.mxu0
        %5367 = vmatprep.mubr.bf16.mxu0 0
        %5368 = vmatmul.mubr.bf16.gmra.mxu0 %v5021
        %v5369 = vpop.f32.mrf.mxu0
        %v5370 = vadd.f32 %v4947, %v5369
        %v5371 = vpop.f32.mrf.mxu0
        %v5372 = vpop.f32.mrf.mxu0
        %v5373 = vadd.f32 %v4947, %v5372
        %v5374 = vpop.f32.mrf.mxu0
        %5375 = vmatprep.mubr.bf16.mxu0 0
        %5376 = vmatmul.mubr.bf16.gmra.mxu0 %v5024
        %v5377 = vpop.f32.mrf.mxu0
        %v5378 = vadd.f32 %v4947, %v5377
        %v5379 = vpop.f32.mrf.mxu0
        %v5380 = vpop.f32.mrf.mxu0
        %v5381 = vadd.f32 %v4947, %v5380
        %v5382 = vpop.f32.mrf.mxu0
        %5383 = vmatprep.mubr.bf16.mxu0 0
        %5384 = vmatmul.mubr.bf16.gmra.mxu0 %v5027
        %v5385 = vpop.f32.mrf.mxu0
        %v5386 = vadd.f32 %v4947, %v5385
        %v5387 = vpop.f32.mrf.mxu0
        %v5388 = vpop.f32.mrf.mxu0
        %v5389 = vadd.f32 %v4947, %v5388
        %v5390 = vpop.f32.mrf.mxu0
        %5391 = vmatprep.mubr.bf16.mxu0 0
        %5392 = vmatmul.mubr.bf16.gmra.mxu0 %v5030
        %v5393 = vpop.f32.mrf.mxu0
        %v5394 = vadd.f32 %v4947, %v5393
        %v5395 = vpop.f32.mrf.mxu0
        %v5396 = vpop.f32.mrf.mxu0
        %v5397 = vadd.f32 %v4947, %v5396
        %v5398 = vpop.f32.mrf.mxu0
        %5399 = vmatprep.mubr.bf16.mxu0 0
        %5400 = vmatmul.mubr.bf16.gmra.mxu0 %v5033
        %v5401 = vpop.f32.mrf.mxu0
        %v5402 = vadd.f32 %v4947, %v5401
        %v5403 = vpop.f32.mrf.mxu0
        %v5404 = vpop.f32.mrf.mxu0
        %v5405 = vadd.f32 %v4947, %v5404
        %v5406 = vpop.f32.mrf.mxu0
        %5407 = vmatprep.mubr.bf16.mxu0 0
        %5408 = vmatmul.mubr.bf16.gmra.mxu0 %v5036
        %v5409 = vpop.f32.mrf.mxu0
        %v5410 = vadd.f32 %v4947, %v5409
        %v5411 = vpop.f32.mrf.mxu0
        %v5412 = vpop.f32.mrf.mxu0
        %v5413 = vadd.f32 %v4947, %v5412
        %v5414 = vpop.f32.mrf.mxu0
        %5415 = vmatprep.mubr.bf16.mxu0 0
        %5416 = vmatmul.mubr.bf16.gmra.mxu0 %v5039
        %v5417 = vpop.f32.mrf.mxu0
        %v5418 = vadd.f32 %v4947, %v5417
        %v5419 = vpop.f32.mrf.mxu0
        %v5420 = vpop.f32.mrf.mxu0
        %v5421 = vadd.f32 %v4947, %v5420
        %v5422 = vpop.f32.mrf.mxu0
        %5423 = vmatprep.mubr.bf16.mxu0 0
        %5424 = vmatmul.mubr.bf16.gmra.mxu0 %v5042
        %v5425 = vpop.f32.mrf.mxu0
        %v5426 = vadd.f32 %v4947, %v5425
        %v5427 = vpop.f32.mrf.mxu0
        %v5428 = vpop.f32.mrf.mxu0
        %v5429 = vadd.f32 %v4947, %v5428
        %v5430 = vpop.f32.mrf.mxu0
        %5431 = vmatprep.mubr.bf16.mxu0 0
        %5432 = vmatmul.mubr.bf16.gmra.mxu0 %v5045
        %v5433 = vpop.f32.mrf.mxu0
        %v5434 = vadd.f32 %v4947, %v5433
        %v5435 = vpop.f32.mrf.mxu0
        %v5436 = vpop.f32.mrf.mxu0
        %v5437 = vadd.f32 %v4947, %v5436
        %v5438 = vpop.f32.mrf.mxu0
        %5439 = vmatprep.mubr.bf16.mxu0 0
        %5440 = vmatmul.mubr.bf16.gmra.mxu0 %v5048
        %v5441 = vpop.f32.mrf.mxu0
        %v5442 = vadd.f32 %v4947, %v5441
        %v5443 = vpop.f32.mrf.mxu0
        %v5444 = vpop.f32.mrf.mxu0
        %v5445 = vadd.f32 %v4947, %v5444
        %v5446 = vpop.f32.mrf.mxu0
        %5447 = vmatprep.mubr.bf16.mxu0 0
        %5448 = vmatmul.mubr.bf16.gmra.mxu0 %v5051
        %v5449 = vpop.f32.mrf.mxu0
        %v5450 = vadd.f32 %v4947, %v5449
        %v5451 = vpop.f32.mrf.mxu0
        %v5452 = vpop.f32.mrf.mxu0
        %v5453 = vadd.f32 %v4947, %v5452
        %v5454 = vpop.f32.mrf.mxu0
        %5455 = vmatprep.mubr.bf16.mxu0 0
        %5456 = vmatmul.mubr.bf16.gmra.mxu0 %v5054
        %v5457 = vpop.f32.mrf.mxu0
        %v5458 = vadd.f32 %v4947, %v5457
        %v5459 = vpop.f32.mrf.mxu0
        %v5460 = vpop.f32.mrf.mxu0
        %v5461 = vadd.f32 %v4947, %v5460
        %v5462 = vpop.f32.mrf.mxu0
        %5463 = vmatprep.mubr.bf16.mxu0 0
        %5464 = vmatmul.mubr.bf16.gmra.mxu0 %v5057
        %v5465 = vpop.f32.mrf.mxu0
        %v5466 = vadd.f32 %v4947, %v5465
        %v5467 = vpop.f32.mrf.mxu0
        %v5468 = vpop.f32.mrf.mxu0
        %v5469 = vadd.f32 %v4947, %v5468
        %v5470 = vpop.f32.mrf.mxu0
        %5471 = vmatprep.mubr.bf16.mxu0 0
        %5472 = vmatmul.mubr.bf16.gmra.mxu0 %v5060
        %v5473 = vpop.f32.mrf.mxu0
        %v5474 = vadd.f32 %v4947, %v5473
        %v5475 = vpop.f32.mrf.mxu0
        %v5476 = vpop.f32.mrf.mxu0
        %v5477 = vadd.f32 %v4947, %v5476
        %v5478 = vpop.f32.mrf.mxu0
        %5479 = vmatprep.mubr.bf16.mxu0 0
        %5480 = vmatmul.mubr.bf16.gmra.mxu0 %v5063
        %v5481 = vpop.f32.mrf.mxu0
        %v5482 = vadd.f32 %v4947, %v5481
        %v5483 = vpop.f32.mrf.mxu0
        %v5484 = vpop.f32.mrf.mxu0
        %v5485 = vadd.f32 %v4947, %v5484
        %v5486 = vpop.f32.mrf.mxu0
        %5487 = vmatprep.mubr.bf16.mxu0 0
        %5488 = vmatmul.mubr.bf16.gmra.mxu0 %v5066
        %v5489 = vpop.f32.mrf.mxu0
        %v5490 = vadd.f32 %v4947, %v5489
        %v5491 = vpop.f32.mrf.mxu0
        %v5492 = vpop.f32.mrf.mxu0
        %v5493 = vadd.f32 %v4947, %v5492
        %v5494 = vpop.f32.mrf.mxu0
        %5495 = vmatprep.mubr.bf16.mxu0 0
        %5496 = vmatmul.mubr.bf16.gmra.mxu0 %v5069
        %v5497 = vpop.f32.mrf.mxu0
        %v5498 = vadd.f32 %v4947, %v5497
        %v5499 = vpop.f32.mrf.mxu0
        %v5500 = vpop.f32.mrf.mxu0
        %v5501 = vadd.f32 %v4947, %v5500
        %v5502 = vpop.f32.mrf.mxu0
        %5503 = vmatprep.mubr.bf16.mxu0 0
        %5504 = vmatmul.mubr.bf16.gmra.mxu0 %v5072
        %v5505 = vpop.f32.mrf.mxu0
        %v5506 = vadd.f32 %v4947, %v5505
        %v5507 = vpop.f32.mrf.mxu0
        %v5508 = vpop.f32.mrf.mxu0
        %v5509 = vadd.f32 %v4947, %v5508
        %v5510 = vpop.f32.mrf.mxu0
        %5511 = vmatprep.mubr.bf16.mxu0 0
        %5512 = vmatmul.mubr.bf16.gmra.mxu0 %v5075
        %v5513 = vpop.f32.mrf.mxu0
        %v5514 = vadd.f32 %v4947, %v5513
        %v5515 = vpop.f32.mrf.mxu0
        %v5516 = vpop.f32.mrf.mxu0
        %v5517 = vadd.f32 %v4947, %v5516
        %v5518 = vpop.f32.mrf.mxu0
        %5519 = vmatprep.mubr.bf16.mxu0 0
        %5520 = vmatmul.mubr.bf16.gmra.mxu0 %v5078
        %v5521 = vpop.f32.mrf.mxu0
        %v5522 = vadd.f32 %v4947, %v5521
        %v5523 = vpop.f32.mrf.mxu0
        %v5524 = vpop.f32.mrf.mxu0
        %v5525 = vadd.f32 %v4947, %v5524
        %v5526 = vpop.f32.mrf.mxu0
        %5527 = vmatprep.mubr.bf16.mxu0 0
        %5528 = vmatmul.mubr.bf16.gmra.mxu0 %v5081
        %v5529 = vpop.f32.mrf.mxu0
        %v5530 = vadd.f32 %v4947, %v5529
        %v5531 = vpop.f32.mrf.mxu0
        %v5532 = vpop.f32.mrf.mxu0
        %v5533 = vadd.f32 %v4947, %v5532
        %v5534 = vpop.f32.mrf.mxu0
        %5535 = vmatprep.mubr.bf16.mxu0 0
        %5536 = vmatmul.mubr.bf16.gmra.mxu0 %v5084
        %v5537 = vpop.f32.mrf.mxu0
        %v5538 = vadd.f32 %v4947, %v5537
        %v5539 = vpop.f32.mrf.mxu0
        %v5540 = vpop.f32.mrf.mxu0
        %v5541 = vadd.f32 %v4947, %v5540
        %v5542 = vpop.f32.mrf.mxu0
        %5543 = vmatprep.mubr.bf16.mxu0 0
        %5544 = vmatmul.mubr.bf16.gmra.mxu0 %v5087
        %v5545 = vpop.f32.mrf.mxu0
        %v5546 = vadd.f32 %v4947, %v5545
        %v5547 = vpop.f32.mrf.mxu0
        %v5548 = vpop.f32.mrf.mxu0
        %v5549 = vadd.f32 %v4947, %v5548
        %v5550 = vpop.f32.mrf.mxu0
        %5551 = vmatprep.mubr.bf16.mxu0 0
        %5552 = vmatmul.mubr.bf16.gmra.mxu0 %v5090
        %v5553 = vpop.f32.mrf.mxu0
        %v5554 = vadd.f32 %v4947, %v5553
        %v5555 = vpop.f32.mrf.mxu0
        %v5556 = vpop.f32.mrf.mxu0
        %v5557 = vadd.f32 %v4947, %v5556
        %v5558 = vpop.f32.mrf.mxu0
        %5559 = vmatprep.mubr.bf16.mxu0 0
        %5560 = vmatmul.mubr.bf16.gmra.mxu0 %v5093
        %v5561 = vpop.f32.mrf.mxu0
        %v5562 = vadd.f32 %v4947, %v5561
        %v5563 = vpop.f32.mrf.mxu0
        %v5564 = vpop.f32.mrf.mxu0
        %v5565 = vadd.f32 %v4947, %v5564
        %v5566 = vpop.f32.mrf.mxu0
        %5567 = vmatprep.mubr.bf16.mxu0 0
        %5568 = vmatmul.mubr.bf16.gmra.mxu0 %v5096
        %v5569 = vpop.f32.mrf.mxu0
        %v5570 = vadd.f32 %v4947, %v5569
        %v5571 = vpop.f32.mrf.mxu0
        %v5572 = vpop.f32.mrf.mxu0
        %v5573 = vadd.f32 %v4947, %v5572
        %v5574 = vpop.f32.mrf.mxu0
        %5575 = vmatprep.mubr.bf16.mxu0 0
        %5576 = vmatmul.mubr.bf16.gmra.mxu0 %v5099
        %v5577 = vpop.f32.mrf.mxu0
        %v5578 = vadd.f32 %v4947, %v5577
        %v5579 = vpop.f32.mrf.mxu0
        %v5580 = vpop.f32.mrf.mxu0
        %v5581 = vadd.f32 %v4947, %v5580
        %v5582 = vpop.f32.mrf.mxu0
        %5583 = vmatprep.mubr.bf16.mxu0 0
        %5584 = vmatmul.mubr.bf16.gmra.mxu0 %v5102
        %v5585 = vpop.f32.mrf.mxu0
        %v5586 = vadd.f32 %v4947, %v5585
        %v5587 = vpop.f32.mrf.mxu0
        %v5588 = vpop.f32.mrf.mxu0
        %v5589 = vadd.f32 %v4947, %v5588
        %v5590 = vpop.f32.mrf.mxu0
        %5591 = vmatprep.mubr.bf16.mxu0 0
        %5592 = vmatmul.mubr.bf16.gmra.mxu0 %v5105
        %v5593 = vpop.f32.mrf.mxu0
        %v5594 = vadd.f32 %v4947, %v5593
        %v5595 = vpop.f32.mrf.mxu0
        %v5596 = vpop.f32.mrf.mxu0
        %v5597 = vadd.f32 %v4947, %v5596
        %v5598 = vpop.f32.mrf.mxu0
        %5599 = vmatprep.mubr.bf16.mxu0 0
        %5600 = vmatmul.mubr.bf16.gmra.mxu0 %v5108
        %v5601 = vpop.f32.mrf.mxu0
        %v5602 = vadd.f32 %v4947, %v5601
        %v5603 = vpop.f32.mrf.mxu0
        %v5604 = vpop.f32.mrf.mxu0
        %v5605 = vadd.f32 %v4947, %v5604
        %v5606 = vpop.f32.mrf.mxu0
        %5607 = vmatprep.mubr.bf16.mxu0 0
        %5608 = vmatmul.mubr.bf16.gmra.mxu0 %v5111
        %v5609 = vpop.f32.mrf.mxu0
        %v5610 = vadd.f32 %v4947, %v5609
        %v5611 = vpop.f32.mrf.mxu0
        %v5612 = vpop.f32.mrf.mxu0
        %v5613 = vadd.f32 %v4947, %v5612
        %v5614 = vpop.f32.mrf.mxu0
        %5615 = vmatprep.mubr.bf16.mxu0 0
        %5616 = vmatmul.mubr.bf16.gmra.mxu0 %v5114
        %v5617 = vpop.f32.mrf.mxu0
        %v5618 = vadd.f32 %v4947, %v5617
        %v5619 = vpop.f32.mrf.mxu0
        %v5620 = vpop.f32.mrf.mxu0
        %v5621 = vadd.f32 %v4947, %v5620
        %v5622 = vpop.f32.mrf.mxu0
        %5623 = vmatprep.mubr.bf16.mxu0 0
        %5624 = vmatmul.mubr.bf16.gmra.mxu0 %v5117
        %v5625 = vpop.f32.mrf.mxu0
        %v5626 = vadd.f32 %v4947, %v5625
        %v5627 = vpop.f32.mrf.mxu0
        %v5628 = vpop.f32.mrf.mxu0
        %v5629 = vadd.f32 %v4947, %v5628
        %v5630 = vpop.f32.mrf.mxu0
        %5631 = vmatprep.mubr.bf16.mxu0 0
        %5632 = vmatmul.mubr.bf16.gmra.mxu0 %v5120
        %v5633 = vpop.f32.mrf.mxu0
        %v5634 = vadd.f32 %v4947, %v5633
        %v5635 = vpop.f32.mrf.mxu0
        %v5636 = vpop.f32.mrf.mxu0
        %v5637 = vadd.f32 %v4947, %v5636
        %v5638 = vpop.f32.mrf.mxu0
        %5639 = vmatprep.mubr.bf16.mxu0 0
        %5640 = vmatmul.mubr.bf16.gmra.mxu0 %v5123
        %v5641 = vpop.f32.mrf.mxu0
        %v5642 = vadd.f32 %v4947, %v5641
        %v5643 = vpop.f32.mrf.mxu0
        %v5644 = vpop.f32.mrf.mxu0
        %v5645 = vadd.f32 %v4947, %v5644
        %v5646 = vpop.f32.mrf.mxu0
        %5647 = vmatprep.mubr.bf16.mxu0 0
        %5648 = vmatmul.mubr.bf16.gmra.mxu0 %v5126
        %v5649 = vpop.f32.mrf.mxu0
        %v5650 = vadd.f32 %v4947, %v5649
        %v5651 = vpop.f32.mrf.mxu0
        %v5652 = vpop.f32.mrf.mxu0
        %v5653 = vadd.f32 %v4947, %v5652
        %v5654 = vpop.f32.mrf.mxu0
        %5655 = vmatprep.mubr.bf16.mxu0 0
        %5656 = vmatmul.mubr.bf16.gmra.mxu0 %v5129
        %v5657 = vpop.f32.mrf.mxu0
        %v5658 = vadd.f32 %v4947, %v5657
        %v5659 = vpop.f32.mrf.mxu0
        %v5660 = vpop.f32.mrf.mxu0
        %v5661 = vadd.f32 %v4947, %v5660
        %v5662 = vpop.f32.mrf.mxu0
        %5663 = vmatprep.mubr.bf16.mxu0 0
        %5664 = vmatmul.mubr.bf16.gmra.mxu0 %v5132
        %v5665 = vpop.f32.mrf.mxu0
        %v5666 = vadd.f32 %v4947, %v5665
        %v5667 = vpop.f32.mrf.mxu0
        %v5668 = vpop.f32.mrf.mxu0
        %v5669 = vadd.f32 %v4947, %v5668
        %v5670 = vpop.f32.mrf.mxu0
        %5671 = vmatprep.mubr.bf16.mxu0 0
        %5672 = vmatmul.mubr.bf16.gmra.mxu0 %v5135
        %v5673 = vpop.f32.mrf.mxu0
        %v5674 = vadd.f32 %v4947, %v5673
        %v5675 = vpop.f32.mrf.mxu0
        %v5676 = vpop.f32.mrf.mxu0
        %v5677 = vadd.f32 %v4947, %v5676
        %v5678 = vpop.f32.mrf.mxu0
        %5679 = vmatprep.mubr.bf16.mxu0 0
        %5680 = vmatmul.mubr.bf16.gmra.mxu0 %v5138
        %v5681 = vpop.f32.mrf.mxu0
        %v5682 = vadd.f32 %v4947, %v5681
        %v5683 = vpop.f32.mrf.mxu0
        %v5684 = vpop.f32.mrf.mxu0
        %v5685 = vadd.f32 %v4947, %v5684
        %v5686 = vpop.f32.mrf.mxu0
        %5687 = vdwg.mxu0
        %v5688 = vlaneseq
        %v5689 = vshrl.u32 %v5688, 7
        %v5690 = vadd.s32 %v5689, 8
        %v5691 = vadd.s32 %v5689, 16
        %v5692 = vadd.s32 %v5689, 24
        %v5693 = vadd.s32 %v5689, 32
        %v5694 = vadd.s32 %v5689, 40
        %v5695 = vadd.s32 %v5689, 48
        %v5696 = vadd.s32 %v5689, 56
        %v5697 = vadd.s32 %v5689, 64
        %v5698 = vadd.s32 %v5689, 72
        %v5699 = vadd.s32 %v5689, 80
        %v5700 = vadd.s32 %v5689, 88
        %v5701 = vadd.s32 %v5689, 96
        %v5702 = vadd.s32 %v5689, 104
        %v5703 = vadd.s32 %v5689, 112
        %v5704 = vadd.s32 %v5689, 120
        %v5705 = vadd.s32 %v5689, 128
        %v5706 = vadd.s32 %v5689, 136
        %v5707 = vadd.s32 %v5689, 144
        %v5708 = vadd.s32 %v5689, 152
        %v5709 = vadd.s32 %v5689, 160
        %v5710 = vadd.s32 %v5689, 168
        %v5711 = vadd.s32 %v5689, 176
        %v5712 = vadd.s32 %v5689, 184
        %v5713 = vadd.s32 %v5689, 192
        %v5714 = vadd.s32 %v5689, 200
        %v5715 = vadd.s32 %v5689, 208
        %v5716 = vadd.s32 %v5689, 216
        %v5717 = vadd.s32 %v5689, 224
        %v5718 = vadd.s32 %v5689, 232
        %v5719 = vadd.s32 %v5689, 240
        %v5720 = vadd.s32 %v5689, 248
        %v5721 = vadd.s32 %v5689, 256
        %v5722 = vadd.s32 %v5689, 264
        %v5723 = vadd.s32 %v5689, 272
        %v5724 = vadd.s32 %v5689, 280
        %v5725 = vadd.s32 %v5689, 288
        %v5726 = vadd.s32 %v5689, 296
        %v5727 = vadd.s32 %v5689, 304
        %v5728 = vadd.s32 %v5689, 312
        %v5729 = vadd.s32 %v5689, 320
        %v5730 = vadd.s32 %v5689, 328
        %v5731 = vadd.s32 %v5689, 336
        %v5732 = vadd.s32 %v5689, 344
        %v5733 = vadd.s32 %v5689, 352
        %v5734 = vadd.s32 %v5689, 360
        %v5735 = vadd.s32 %v5689, 368
        %v5736 = vadd.s32 %v5689, 376
        %v5737 = vadd.s32 %v5689, 384
        %v5738 = vadd.s32 %v5689, 392
        %v5739 = vadd.s32 %v5689, 400
        %v5740 = vadd.s32 %v5689, 408
        %v5741 = vadd.s32 %v5689, 416
        %v5742 = vadd.s32 %v5689, 424
        %v5743 = vadd.s32 %v5689, 432
        %v5744 = vadd.s32 %v5689, 440
        %v5745 = vadd.s32 %v5689, 448
        %v5746 = vadd.s32 %v5689, 456
        %v5747 = vadd.s32 %v5689, 464
        %v5748 = vadd.s32 %v5689, 472
        %v5749 = vadd.s32 %v5689, 480
        %v5750 = vadd.s32 %v5689, 488
        %v5751 = vadd.s32 %v5689, 496
        %v5752 = vadd.s32 %v5689, 504
        %s5753 = smul.u32 %s20, 512
        %v5754 = vstv %s5753
        %v5755 = vadd.s32 %v5689, %v5754
        %v5756 = vadd.s32 %v5690, %v5754
        %v5757 = vadd.s32 %v5691, %v5754
        %v5758 = vadd.s32 %v5692, %v5754
        %v5759 = vadd.s32 %v5693, %v5754
        %v5760 = vadd.s32 %v5694, %v5754
        %v5761 = vadd.s32 %v5695, %v5754
        %v5762 = vadd.s32 %v5696, %v5754
        %v5763 = vadd.s32 %v5697, %v5754
        %v5764 = vadd.s32 %v5698, %v5754
        %v5765 = vadd.s32 %v5699, %v5754
        %v5766 = vadd.s32 %v5700, %v5754
        %v5767 = vadd.s32 %v5701, %v5754
        %v5768 = vadd.s32 %v5702, %v5754
        %v5769 = vadd.s32 %v5703, %v5754
        %v5770 = vadd.s32 %v5704, %v5754
        %v5771 = vadd.s32 %v5705, %v5754
        %v5772 = vadd.s32 %v5706, %v5754
        %v5773 = vadd.s32 %v5707, %v5754
        %v5774 = vadd.s32 %v5708, %v5754
        %v5775 = vadd.s32 %v5709, %v5754
        %v5776 = vadd.s32 %v5710, %v5754
        %v5777 = vadd.s32 %v5711, %v5754
        %v5778 = vadd.s32 %v5712, %v5754
        %v5779 = vadd.s32 %v5713, %v5754
        %v5780 = vadd.s32 %v5714, %v5754
        %v5781 = vadd.s32 %v5715, %v5754
        %v5782 = vadd.s32 %v5716, %v5754
        %v5783 = vadd.s32 %v5717, %v5754
        %v5784 = vadd.s32 %v5718, %v5754
        %v5785 = vadd.s32 %v5719, %v5754
        %v5786 = vadd.s32 %v5720, %v5754
        %v5787 = vadd.s32 %v5721, %v5754
        %v5788 = vadd.s32 %v5722, %v5754
        %v5789 = vadd.s32 %v5723, %v5754
        %v5790 = vadd.s32 %v5724, %v5754
        %v5791 = vadd.s32 %v5725, %v5754
        %v5792 = vadd.s32 %v5726, %v5754
        %v5793 = vadd.s32 %v5727, %v5754
        %v5794 = vadd.s32 %v5728, %v5754
        %v5795 = vadd.s32 %v5729, %v5754
        %v5796 = vadd.s32 %v5730, %v5754
        %v5797 = vadd.s32 %v5731, %v5754
        %v5798 = vadd.s32 %v5732, %v5754
        %v5799 = vadd.s32 %v5733, %v5754
        %v5800 = vadd.s32 %v5734, %v5754
        %v5801 = vadd.s32 %v5735, %v5754
        %v5802 = vadd.s32 %v5736, %v5754
        %v5803 = vadd.s32 %v5737, %v5754
        %v5804 = vadd.s32 %v5738, %v5754
        %v5805 = vadd.s32 %v5739, %v5754
        %v5806 = vadd.s32 %v5740, %v5754
        %v5807 = vadd.s32 %v5741, %v5754
        %v5808 = vadd.s32 %v5742, %v5754
        %v5809 = vadd.s32 %v5743, %v5754
        %v5810 = vadd.s32 %v5744, %v5754
        %v5811 = vadd.s32 %v5745, %v5754
        %v5812 = vadd.s32 %v5746, %v5754
        %v5813 = vadd.s32 %v5747, %v5754
        %v5814 = vadd.s32 %v5748, %v5754
        %v5815 = vadd.s32 %v5749, %v5754
        %v5816 = vadd.s32 %v5750, %v5754
        %v5817 = vadd.s32 %v5751, %v5754
        %v5818 = vadd.s32 %v5752, %v5754
        %vm5819 = vcmp.lt.s32.totalorder %v5755, 1000
        %vm5820 = vcmp.lt.s32.totalorder %v5756, 1000
        %vm5821 = vcmp.lt.s32.totalorder %v5757, 1000
        %vm5822 = vcmp.lt.s32.totalorder %v5758, 1000
        %vm5823 = vcmp.lt.s32.totalorder %v5759, 1000
        %vm5824 = vcmp.lt.s32.totalorder %v5760, 1000
        %vm5825 = vcmp.lt.s32.totalorder %v5761, 1000
        %vm5826 = vcmp.lt.s32.totalorder %v5762, 1000
        %vm5827 = vcmp.lt.s32.totalorder %v5763, 1000
        %vm5828 = vcmp.lt.s32.totalorder %v5764, 1000
        %vm5829 = vcmp.lt.s32.totalorder %v5765, 1000
        %vm5830 = vcmp.lt.s32.totalorder %v5766, 1000
        %vm5831 = vcmp.lt.s32.totalorder %v5767, 1000
        %vm5832 = vcmp.lt.s32.totalorder %v5768, 1000
        %vm5833 = vcmp.lt.s32.totalorder %v5769, 1000
        %vm5834 = vcmp.lt.s32.totalorder %v5770, 1000
        %vm5835 = vcmp.lt.s32.totalorder %v5771, 1000
        %vm5836 = vcmp.lt.s32.totalorder %v5772, 1000
        %vm5837 = vcmp.lt.s32.totalorder %v5773, 1000
        %vm5838 = vcmp.lt.s32.totalorder %v5774, 1000
        %vm5839 = vcmp.lt.s32.totalorder %v5775, 1000
        %vm5840 = vcmp.lt.s32.totalorder %v5776, 1000
        %vm5841 = vcmp.lt.s32.totalorder %v5777, 1000
        %vm5842 = vcmp.lt.s32.totalorder %v5778, 1000
        %vm5843 = vcmp.lt.s32.totalorder %v5779, 1000
        %vm5844 = vcmp.lt.s32.totalorder %v5780, 1000
        %vm5845 = vcmp.lt.s32.totalorder %v5781, 1000
        %vm5846 = vcmp.lt.s32.totalorder %v5782, 1000
        %vm5847 = vcmp.lt.s32.totalorder %v5783, 1000
        %vm5848 = vcmp.lt.s32.totalorder %v5784, 1000
        %vm5849 = vcmp.lt.s32.totalorder %v5785, 1000
        %vm5850 = vcmp.lt.s32.totalorder %v5786, 1000
        %vm5851 = vcmp.lt.s32.totalorder %v5787, 1000
        %vm5852 = vcmp.lt.s32.totalorder %v5788, 1000
        %vm5853 = vcmp.lt.s32.totalorder %v5789, 1000
        %vm5854 = vcmp.lt.s32.totalorder %v5790, 1000
        %vm5855 = vcmp.lt.s32.totalorder %v5791, 1000
        %vm5856 = vcmp.lt.s32.totalorder %v5792, 1000
        %vm5857 = vcmp.lt.s32.totalorder %v5793, 1000
        %vm5858 = vcmp.lt.s32.totalorder %v5794, 1000
        %vm5859 = vcmp.lt.s32.totalorder %v5795, 1000
        %vm5860 = vcmp.lt.s32.totalorder %v5796, 1000
        %vm5861 = vcmp.lt.s32.totalorder %v5797, 1000
        %vm5862 = vcmp.lt.s32.totalorder %v5798, 1000
        %vm5863 = vcmp.lt.s32.totalorder %v5799, 1000
        %vm5864 = vcmp.lt.s32.totalorder %v5800, 1000
        %vm5865 = vcmp.lt.s32.totalorder %v5801, 1000
        %vm5866 = vcmp.lt.s32.totalorder %v5802, 1000
        %vm5867 = vcmp.lt.s32.totalorder %v5803, 1000
        %vm5868 = vcmp.lt.s32.totalorder %v5804, 1000
        %vm5869 = vcmp.lt.s32.totalorder %v5805, 1000
        %vm5870 = vcmp.lt.s32.totalorder %v5806, 1000
        %vm5871 = vcmp.lt.s32.totalorder %v5807, 1000
        %vm5872 = vcmp.lt.s32.totalorder %v5808, 1000
        %vm5873 = vcmp.lt.s32.totalorder %v5809, 1000
        %vm5874 = vcmp.lt.s32.totalorder %v5810, 1000
        %vm5875 = vcmp.lt.s32.totalorder %v5811, 1000
        %vm5876 = vcmp.lt.s32.totalorder %v5812, 1000
        %vm5877 = vcmp.lt.s32.totalorder %v5813, 1000
        %vm5878 = vcmp.lt.s32.totalorder %v5814, 1000
        %vm5879 = vcmp.lt.s32.totalorder %v5815, 1000
        %vm5880 = vcmp.lt.s32.totalorder %v5816, 1000
        %vm5881 = vcmp.lt.s32.totalorder %v5817, 1000
        %vm5882 = vcmp.lt.s32.totalorder %v5818, 1000
        %v5883 = vsel %vm5819, 1, 0
        %v5884 = vsel %vm5820, 1, 0
        %v5885 = vsel %vm5821, 1, 0
        %v5886 = vsel %vm5822, 1, 0
        %v5887 = vsel %vm5823, 1, 0
        %v5888 = vsel %vm5824, 1, 0
        %v5889 = vsel %vm5825, 1, 0
        %v5890 = vsel %vm5826, 1, 0
        %v5891 = vsel %vm5827, 1, 0
        %v5892 = vsel %vm5828, 1, 0
        %v5893 = vsel %vm5829, 1, 0
        %v5894 = vsel %vm5830, 1, 0
        %v5895 = vsel %vm5831, 1, 0
        %v5896 = vsel %vm5832, 1, 0
        %v5897 = vsel %vm5833, 1, 0
        %v5898 = vsel %vm5834, 1, 0
        %v5899 = vsel %vm5835, 1, 0
        %v5900 = vsel %vm5836, 1, 0
        %v5901 = vsel %vm5837, 1, 0
        %v5902 = vsel %vm5838, 1, 0
        %v5903 = vsel %vm5839, 1, 0
        %v5904 = vsel %vm5840, 1, 0
        %v5905 = vsel %vm5841, 1, 0
        %v5906 = vsel %vm5842, 1, 0
        %v5907 = vsel %vm5843, 1, 0
        %v5908 = vsel %vm5844, 1, 0
        %v5909 = vsel %vm5845, 1, 0
        %v5910 = vsel %vm5846, 1, 0
        %v5911 = vsel %vm5847, 1, 0
        %v5912 = vsel %vm5848, 1, 0
        %v5913 = vsel %vm5849, 1, 0
        %v5914 = vsel %vm5850, 1, 0
        %v5915 = vsel %vm5851, 1, 0
        %v5916 = vsel %vm5852, 1, 0
        %v5917 = vsel %vm5853, 1, 0
        %v5918 = vsel %vm5854, 1, 0
        %v5919 = vsel %vm5855, 1, 0
        %v5920 = vsel %vm5856, 1, 0
        %v5921 = vsel %vm5857, 1, 0
        %v5922 = vsel %vm5858, 1, 0
        %v5923 = vsel %vm5859, 1, 0
        %v5924 = vsel %vm5860, 1, 0
        %v5925 = vsel %vm5861, 1, 0
        %v5926 = vsel %vm5862, 1, 0
        %v5927 = vsel %vm5863, 1, 0
        %v5928 = vsel %vm5864, 1, 0
        %v5929 = vsel %vm5865, 1, 0
        %v5930 = vsel %vm5866, 1, 0
        %v5931 = vsel %vm5867, 1, 0
        %v5932 = vsel %vm5868, 1, 0
        %v5933 = vsel %vm5869, 1, 0
        %v5934 = vsel %vm5870, 1, 0
        %v5935 = vsel %vm5871, 1, 0
        %v5936 = vsel %vm5872, 1, 0
        %v5937 = vsel %vm5873, 1, 0
        %v5938 = vsel %vm5874, 1, 0
        %v5939 = vsel %vm5875, 1, 0
        %v5940 = vsel %vm5876, 1, 0
        %v5941 = vsel %vm5877, 1, 0
        %v5942 = vsel %vm5878, 1, 0
        %v5943 = vsel %vm5879, 1, 0
        %v5944 = vsel %vm5880, 1, 0
        %v5945 = vsel %vm5881, 1, 0
        %v5946 = vsel %vm5882, 1, 0
        %v5947 = vcvt.s32.f32 %v5883
        %v5948 = vcvt.s32.f32 %v5884
        %v5949 = vcvt.s32.f32 %v5885
        %v5950 = vcvt.s32.f32 %v5886
        %v5951 = vcvt.s32.f32 %v5887
        %v5952 = vcvt.s32.f32 %v5888
        %v5953 = vcvt.s32.f32 %v5889
        %v5954 = vcvt.s32.f32 %v5890
        %v5955 = vcvt.s32.f32 %v5891
        %v5956 = vcvt.s32.f32 %v5892
        %v5957 = vcvt.s32.f32 %v5893
        %v5958 = vcvt.s32.f32 %v5894
        %v5959 = vcvt.s32.f32 %v5895
        %v5960 = vcvt.s32.f32 %v5896
        %v5961 = vcvt.s32.f32 %v5897
        %v5962 = vcvt.s32.f32 %v5898
        %v5963 = vcvt.s32.f32 %v5899
        %v5964 = vcvt.s32.f32 %v5900
        %v5965 = vcvt.s32.f32 %v5901
        %v5966 = vcvt.s32.f32 %v5902
        %v5967 = vcvt.s32.f32 %v5903
        %v5968 = vcvt.s32.f32 %v5904
        %v5969 = vcvt.s32.f32 %v5905
        %v5970 = vcvt.s32.f32 %v5906
        %v5971 = vcvt.s32.f32 %v5907
        %v5972 = vcvt.s32.f32 %v5908
        %v5973 = vcvt.s32.f32 %v5909
        %v5974 = vcvt.s32.f32 %v5910
        %v5975 = vcvt.s32.f32 %v5911
        %v5976 = vcvt.s32.f32 %v5912
        %v5977 = vcvt.s32.f32 %v5913
        %v5978 = vcvt.s32.f32 %v5914
        %v5979 = vcvt.s32.f32 %v5915
        %v5980 = vcvt.s32.f32 %v5916
        %v5981 = vcvt.s32.f32 %v5917
        %v5982 = vcvt.s32.f32 %v5918
        %v5983 = vcvt.s32.f32 %v5919
        %v5984 = vcvt.s32.f32 %v5920
        %v5985 = vcvt.s32.f32 %v5921
        %v5986 = vcvt.s32.f32 %v5922
        %v5987 = vcvt.s32.f32 %v5923
        %v5988 = vcvt.s32.f32 %v5924
        %v5989 = vcvt.s32.f32 %v5925
        %v5990 = vcvt.s32.f32 %v5926
        %v5991 = vcvt.s32.f32 %v5927
        %v5992 = vcvt.s32.f32 %v5928
        %v5993 = vcvt.s32.f32 %v5929
        %v5994 = vcvt.s32.f32 %v5930
        %v5995 = vcvt.s32.f32 %v5931
        %v5996 = vcvt.s32.f32 %v5932
        %v5997 = vcvt.s32.f32 %v5933
        %v5998 = vcvt.s32.f32 %v5934
        %v5999 = vcvt.s32.f32 %v5935
        %v6000 = vcvt.s32.f32 %v5936
        %v6001 = vcvt.s32.f32 %v5937
        %v6002 = vcvt.s32.f32 %v5938
        %v6003 = vcvt.s32.f32 %v5939
        %v6004 = vcvt.s32.f32 %v5940
        %v6005 = vcvt.s32.f32 %v5941
        %v6006 = vcvt.s32.f32 %v5942
        %v6007 = vcvt.s32.f32 %v5943
        %v6008 = vcvt.s32.f32 %v5944
        %v6009 = vcvt.s32.f32 %v5945
        %v6010 = vcvt.s32.f32 %v5946
        %v6011 = vmul.f32 %v5178, %v5947
        %v6012 = vmul.f32 %v5181, %v5948
        %v6013 = vmul.f32 %v5186, %v5949
        %v6014 = vmul.f32 %v5189, %v5950
        %v6015 = vmul.f32 %v5194, %v5951
        %v6016 = vmul.f32 %v5197, %v5952
        %v6017 = vmul.f32 %v5202, %v5953
        %v6018 = vmul.f32 %v5205, %v5954
        %v6019 = vmul.f32 %v5210, %v5955
        %v6020 = vmul.f32 %v5213, %v5956
        %v6021 = vmul.f32 %v5218, %v5957
        %v6022 = vmul.f32 %v5221, %v5958
        %v6023 = vmul.f32 %v5226, %v5959
        %v6024 = vmul.f32 %v5229, %v5960
        %v6025 = vmul.f32 %v5234, %v5961
        %v6026 = vmul.f32 %v5237, %v5962
        %v6027 = vmul.f32 %v5242, %v5963
        %v6028 = vmul.f32 %v5245, %v5964
        %v6029 = vmul.f32 %v5250, %v5965
        %v6030 = vmul.f32 %v5253, %v5966
        %v6031 = vmul.f32 %v5258, %v5967
        %v6032 = vmul.f32 %v5261, %v5968
        %v6033 = vmul.f32 %v5266, %v5969
        %v6034 = vmul.f32 %v5269, %v5970
        %v6035 = vmul.f32 %v5274, %v5971
        %v6036 = vmul.f32 %v5277, %v5972
        %v6037 = vmul.f32 %v5282, %v5973
        %v6038 = vmul.f32 %v5285, %v5974
        %v6039 = vmul.f32 %v5290, %v5975
        %v6040 = vmul.f32 %v5293, %v5976
        %v6041 = vmul.f32 %v5298, %v5977
        %v6042 = vmul.f32 %v5301, %v5978
        %v6043 = vmul.f32 %v5306, %v5979
        %v6044 = vmul.f32 %v5309, %v5980
        %v6045 = vmul.f32 %v5314, %v5981
        %v6046 = vmul.f32 %v5317, %v5982
        %v6047 = vmul.f32 %v5322, %v5983
        %v6048 = vmul.f32 %v5325, %v5984
        %v6049 = vmul.f32 %v5330, %v5985
        %v6050 = vmul.f32 %v5333, %v5986
        %v6051 = vmul.f32 %v5338, %v5987
        %v6052 = vmul.f32 %v5341, %v5988
        %v6053 = vmul.f32 %v5346, %v5989
        %v6054 = vmul.f32 %v5349, %v5990
        %v6055 = vmul.f32 %v5354, %v5991
        %v6056 = vmul.f32 %v5357, %v5992
        %v6057 = vmul.f32 %v5362, %v5993
        %v6058 = vmul.f32 %v5365, %v5994
        %v6059 = vmul.f32 %v5370, %v5995
        %v6060 = vmul.f32 %v5373, %v5996
        %v6061 = vmul.f32 %v5378, %v5997
        %v6062 = vmul.f32 %v5381, %v5998
        %v6063 = vmul.f32 %v5386, %v5999
        %v6064 = vmul.f32 %v5389, %v6000
        %v6065 = vmul.f32 %v5394, %v6001
        %v6066 = vmul.f32 %v5397, %v6002
        %v6067 = vmul.f32 %v5402, %v6003
        %v6068 = vmul.f32 %v5405, %v6004
        %v6069 = vmul.f32 %v5410, %v6005
        %v6070 = vmul.f32 %v5413, %v6006
        %v6071 = vmul.f32 %v5418, %v6007
        %v6072 = vmul.f32 %v5421, %v6008
        %v6073 = vmul.f32 %v5426, %v6009
        %v6074 = vmul.f32 %v5429, %v6010
        %v6075 = vmul.f32 %v5434, %v5947
        %v6076 = vmul.f32 %v5437, %v5948
        %v6077 = vmul.f32 %v5442, %v5949
        %v6078 = vmul.f32 %v5445, %v5950
        %v6079 = vmul.f32 %v5450, %v5951
        %v6080 = vmul.f32 %v5453, %v5952
        %v6081 = vmul.f32 %v5458, %v5953
        %v6082 = vmul.f32 %v5461, %v5954
        %v6083 = vmul.f32 %v5466, %v5955
        %v6084 = vmul.f32 %v5469, %v5956
        %v6085 = vmul.f32 %v5474, %v5957
        %v6086 = vmul.f32 %v5477, %v5958
        %v6087 = vmul.f32 %v5482, %v5959
        %v6088 = vmul.f32 %v5485, %v5960
        %v6089 = vmul.f32 %v5490, %v5961
        %v6090 = vmul.f32 %v5493, %v5962
        %v6091 = vmul.f32 %v5498, %v5963
        %v6092 = vmul.f32 %v5501, %v5964
        %v6093 = vmul.f32 %v5506, %v5965
        %v6094 = vmul.f32 %v5509, %v5966
        %v6095 = vmul.f32 %v5514, %v5967
        %v6096 = vmul.f32 %v5517, %v5968
        %v6097 = vmul.f32 %v5522, %v5969
        %v6098 = vmul.f32 %v5525, %v5970
        %v6099 = vmul.f32 %v5530, %v5971
        %v6100 = vmul.f32 %v5533, %v5972
        %v6101 = vmul.f32 %v5538, %v5973
        %v6102 = vmul.f32 %v5541, %v5974
        %v6103 = vmul.f32 %v5546, %v5975
        %v6104 = vmul.f32 %v5549, %v5976
        %v6105 = vmul.f32 %v5554, %v5977
        %v6106 = vmul.f32 %v5557, %v5978
        %v6107 = vmul.f32 %v5562, %v5979
        %v6108 = vmul.f32 %v5565, %v5980
        %v6109 = vmul.f32 %v5570, %v5981
        %v6110 = vmul.f32 %v5573, %v5982
        %v6111 = vmul.f32 %v5578, %v5983
        %v6112 = vmul.f32 %v5581, %v5984
        %v6113 = vmul.f32 %v5586, %v5985
        %v6114 = vmul.f32 %v5589, %v5986
        %v6115 = vmul.f32 %v5594, %v5987
        %v6116 = vmul.f32 %v5597, %v5988
        %v6117 = vmul.f32 %v5602, %v5989
        %v6118 = vmul.f32 %v5605, %v5990
        %v6119 = vmul.f32 %v5610, %v5991
        %v6120 = vmul.f32 %v5613, %v5992
        %v6121 = vmul.f32 %v5618, %v5993
        %v6122 = vmul.f32 %v5621, %v5994
        %v6123 = vmul.f32 %v5626, %v5995
        %v6124 = vmul.f32 %v5629, %v5996
        %v6125 = vmul.f32 %v5634, %v5997
        %v6126 = vmul.f32 %v5637, %v5998
        %v6127 = vmul.f32 %v5642, %v5999
        %v6128 = vmul.f32 %v5645, %v6000
        %v6129 = vmul.f32 %v5650, %v6001
        %v6130 = vmul.f32 %v5653, %v6002
        %v6131 = vmul.f32 %v5658, %v6003
        %v6132 = vmul.f32 %v5661, %v6004
        %v6133 = vmul.f32 %v5666, %v6005
        %v6134 = vmul.f32 %v5669, %v6006
        %v6135 = vmul.f32 %v5674, %v6007
        %v6136 = vmul.f32 %v5677, %v6008
        %v6137 = vmul.f32 %v5682, %v6009
        %v6138 = vmul.f32 %v5685, %v6010
        %v6139 = vld [vmem:[#allocation2] sm:$0xf]
        %6140 = vxpose.xlu0.b32.start [1/16] %v6011, 128
        %6141 = vxpose.xlu0.b32.cont [2/16] %v6012, 128
        %6142 = vxpose.xlu0.b32.cont [3/16] %v6013, 128
        %6143 = vxpose.xlu0.b32.cont [4/16] %v6014, 128
        %6144 = vxpose.xlu0.b32.cont [5/16] %v6015, 128
        %6145 = vxpose.xlu0.b32.cont [6/16] %v6016, 128
        %6146 = vxpose.xlu0.b32.cont [7/16] %v6017, 128
        %6147 = vxpose.xlu0.b32.cont [8/16] %v6018, 128
        %6148 = vxpose.xlu0.b32.cont [9/16] %v6019, 128
        %6149 = vxpose.xlu0.b32.cont [10/16] %v6020, 128
        %6150 = vxpose.xlu0.b32.cont [11/16] %v6021, 128
        %6151 = vxpose.xlu0.b32.cont [12/16] %v6022, 128
        %6152 = vxpose.xlu0.b32.cont [13/16] %v6023, 128
        %6153 = vxpose.xlu0.b32.cont [14/16] %v6024, 128
        %6154 = vxpose.xlu0.b32.cont [15/16] %v6025, 128
        %6155 = vxpose.xlu0.b32.end [16/16] %v6026, 128
        %v6156 = vpop.trf.xlu0
        %v6157 = vpop.trf.xlu0
        %v6158 = vpop.trf.xlu0
        %v6159 = vpop.trf.xlu0
        %v6160 = vpop.trf.xlu0
        %v6161 = vpop.trf.xlu0
        %v6162 = vpop.trf.xlu0
        %v6163 = vpop.trf.xlu0
        %v6164 = vpop.trf.xlu0
        %v6165 = vpop.trf.xlu0
        %v6166 = vpop.trf.xlu0
        %v6167 = vpop.trf.xlu0
        %v6168 = vpop.trf.xlu0
        %v6169 = vpop.trf.xlu0
        %v6170 = vpop.trf.xlu0
        %v6171 = vpop.trf.xlu0
        %6172 = vxpose.xlu0.b32.start [1/16] %v6027, 128
        %6173 = vxpose.xlu0.b32.cont [2/16] %v6028, 128
        %6174 = vxpose.xlu0.b32.cont [3/16] %v6029, 128
        %6175 = vxpose.xlu0.b32.cont [4/16] %v6030, 128
        %6176 = vxpose.xlu0.b32.cont [5/16] %v6031, 128
        %6177 = vxpose.xlu0.b32.cont [6/16] %v6032, 128
        %6178 = vxpose.xlu0.b32.cont [7/16] %v6033, 128
        %6179 = vxpose.xlu0.b32.cont [8/16] %v6034, 128
        %6180 = vxpose.xlu0.b32.cont [9/16] %v6035, 128
        %6181 = vxpose.xlu0.b32.cont [10/16] %v6036, 128
        %6182 = vxpose.xlu0.b32.cont [11/16] %v6037, 128
        %6183 = vxpose.xlu0.b32.cont [12/16] %v6038, 128
        %6184 = vxpose.xlu0.b32.cont [13/16] %v6039, 128
        %6185 = vxpose.xlu0.b32.cont [14/16] %v6040, 128
        %6186 = vxpose.xlu0.b32.cont [15/16] %v6041, 128
        %6187 = vxpose.xlu0.b32.end [16/16] %v6042, 128
        %v6188 = vpop.trf.xlu0
        %v6189 = vpop.trf.xlu0
        %v6190 = vpop.trf.xlu0
        %v6191 = vpop.trf.xlu0
        %v6192 = vpop.trf.xlu0
        %v6193 = vpop.trf.xlu0
        %v6194 = vpop.trf.xlu0
        %v6195 = vpop.trf.xlu0
        %v6196 = vpop.trf.xlu0
        %v6197 = vpop.trf.xlu0
        %v6198 = vpop.trf.xlu0
        %v6199 = vpop.trf.xlu0
        %v6200 = vpop.trf.xlu0
        %v6201 = vpop.trf.xlu0
        %v6202 = vpop.trf.xlu0
        %v6203 = vpop.trf.xlu0
        %6204 = vxpose.xlu0.b32.start [1/16] %v6043, 128
        %6205 = vxpose.xlu0.b32.cont [2/16] %v6044, 128
        %6206 = vxpose.xlu0.b32.cont [3/16] %v6045, 128
        %6207 = vxpose.xlu0.b32.cont [4/16] %v6046, 128
        %6208 = vxpose.xlu0.b32.cont [5/16] %v6047, 128
        %6209 = vxpose.xlu0.b32.cont [6/16] %v6048, 128
        %6210 = vxpose.xlu0.b32.cont [7/16] %v6049, 128
        %6211 = vxpose.xlu0.b32.cont [8/16] %v6050, 128
        %6212 = vxpose.xlu0.b32.cont [9/16] %v6051, 128
        %6213 = vxpose.xlu0.b32.cont [10/16] %v6052, 128
        %6214 = vxpose.xlu0.b32.cont [11/16] %v6053, 128
        %6215 = vxpose.xlu0.b32.cont [12/16] %v6054, 128
        %6216 = vxpose.xlu0.b32.cont [13/16] %v6055, 128
        %6217 = vxpose.xlu0.b32.cont [14/16] %v6056, 128
        %6218 = vxpose.xlu0.b32.cont [15/16] %v6057, 128
        %6219 = vxpose.xlu0.b32.end [16/16] %v6058, 128
        %v6220 = vpop.trf.xlu0
        %v6221 = vpop.trf.xlu0
        %v6222 = vpop.trf.xlu0
        %v6223 = vpop.trf.xlu0
        %v6224 = vpop.trf.xlu0
        %v6225 = vpop.trf.xlu0
        %v6226 = vpop.trf.xlu0
        %v6227 = vpop.trf.xlu0
        %v6228 = vpop.trf.xlu0
        %v6229 = vpop.trf.xlu0
        %v6230 = vpop.trf.xlu0
        %v6231 = vpop.trf.xlu0
        %v6232 = vpop.trf.xlu0
        %v6233 = vpop.trf.xlu0
        %v6234 = vpop.trf.xlu0
        %v6235 = vpop.trf.xlu0
        %6236 = vxpose.xlu0.b32.start [1/16] %v6059, 128
        %6237 = vxpose.xlu0.b32.cont [2/16] %v6060, 128
        %6238 = vxpose.xlu0.b32.cont [3/16] %v6061, 128
        %6239 = vxpose.xlu0.b32.cont [4/16] %v6062, 128
        %6240 = vxpose.xlu0.b32.cont [5/16] %v6063, 128
        %6241 = vxpose.xlu0.b32.cont [6/16] %v6064, 128
        %6242 = vxpose.xlu0.b32.cont [7/16] %v6065, 128
        %6243 = vxpose.xlu0.b32.cont [8/16] %v6066, 128
        %6244 = vxpose.xlu0.b32.cont [9/16] %v6067, 128
        %6245 = vxpose.xlu0.b32.cont [10/16] %v6068, 128
        %6246 = vxpose.xlu0.b32.cont [11/16] %v6069, 128
        %6247 = vxpose.xlu0.b32.cont [12/16] %v6070, 128
        %6248 = vxpose.xlu0.b32.cont [13/16] %v6071, 128
        %6249 = vxpose.xlu0.b32.cont [14/16] %v6072, 128
        %6250 = vxpose.xlu0.b32.cont [15/16] %v6073, 128
        %6251 = vxpose.xlu0.b32.end [16/16] %v6074, 128
        %v6252 = vpop.trf.xlu0
        %v6253 = vpop.trf.xlu0
        %v6254 = vpop.trf.xlu0
        %v6255 = vpop.trf.xlu0
        %v6256 = vpop.trf.xlu0
        %v6257 = vpop.trf.xlu0
        %v6258 = vpop.trf.xlu0
        %v6259 = vpop.trf.xlu0
        %v6260 = vpop.trf.xlu0
        %v6261 = vpop.trf.xlu0
        %v6262 = vpop.trf.xlu0
        %v6263 = vpop.trf.xlu0
        %v6264 = vpop.trf.xlu0
        %v6265 = vpop.trf.xlu0
        %v6266 = vpop.trf.xlu0
        %v6267 = vpop.trf.xlu0
        %6268 = vmatprep.subr.mxu0 0.0
        %6269 = vmatpush1.msra.mxu0 %v6026
        %6270 = vmatprep.subr.mxu0 0.0
        %6271 = vmatpush1.msra.mxu0 %v6025
        %6272 = vmatprep.subr.mxu0 0.0
        %6273 = vmatpush1.msra.mxu0 %v6024
        %6274 = vmatprep.subr.mxu0 0.0
        %6275 = vmatpush1.msra.mxu0 %v6023
        %6276 = vmatprep.subr.mxu0 0.0
        %6277 = vmatpush1.msra.mxu0 %v6022
        %6278 = vmatprep.subr.mxu0 0.0
        %6279 = vmatpush1.msra.mxu0 %v6021
        %6280 = vmatprep.subr.mxu0 0.0
        %6281 = vmatpush1.msra.mxu0 %v6020
        %6282 = vmatprep.subr.mxu0 0.0
        %6283 = vmatpush1.msra.mxu0 %v6019
        %6284 = vmatprep.subr.mxu0 0.0
        %6285 = vmatpush1.msra.mxu0 %v6018
        %6286 = vmatprep.subr.mxu0 0.0
        %6287 = vmatpush1.msra.mxu0 %v6017
        %6288 = vmatprep.subr.mxu0 0.0
        %6289 = vmatpush1.msra.mxu0 %v6016
        %6290 = vmatprep.subr.mxu0 0.0
        %6291 = vmatpush1.msra.mxu0 %v6015
        %6292 = vmatprep.subr.mxu0 0.0
        %6293 = vmatpush1.msra.mxu0 %v6014
        %6294 = vmatprep.subr.mxu0 0.0
        %6295 = vmatpush1.msra.mxu0 %v6013
        %6296 = vmatprep.subr.mxu0 0.0
        %6297 = vmatpush1.msra.mxu0 %v6012
        %6298 = vmatprep.subr.mxu0 0.0
        %6299 = vmatpush1.msra.mxu0 %v6011
        %6300 = vmatprep.subr.mxu0 0.0
        %6301 = vmatpush2.msra.mxu0 %v6042
        %6302 = vmatprep.subr.mxu0 0.0
        %6303 = vmatpush2.msra.mxu0 %v6041
        %6304 = vmatprep.subr.mxu0 0.0
        %6305 = vmatpush2.msra.mxu0 %v6040
        %6306 = vmatprep.subr.mxu0 0.0
        %6307 = vmatpush2.msra.mxu0 %v6039
        %6308 = vmatprep.subr.mxu0 0.0
        %6309 = vmatpush2.msra.mxu0 %v6038
        %6310 = vmatprep.subr.mxu0 0.0
        %6311 = vmatpush2.msra.mxu0 %v6037
        %6312 = vmatprep.subr.mxu0 0.0
        %6313 = vmatpush2.msra.mxu0 %v6036
        %6314 = vmatprep.subr.mxu0 0.0
        %6315 = vmatpush2.msra.mxu0 %v6035
        %6316 = vmatprep.subr.mxu0 0.0
        %6317 = vmatpush2.msra.mxu0 %v6034
        %6318 = vmatprep.subr.mxu0 0.0
        %6319 = vmatpush2.msra.mxu0 %v6033
        %6320 = vmatprep.subr.mxu0 0.0
        %6321 = vmatpush2.msra.mxu0 %v6032
        %6322 = vmatprep.subr.mxu0 0.0
        %6323 = vmatpush2.msra.mxu0 %v6031
        %6324 = vmatprep.subr.mxu0 0.0
        %6325 = vmatpush2.msra.mxu0 %v6030
        %6326 = vmatprep.subr.mxu0 0.0
        %6327 = vmatpush2.msra.mxu0 %v6029
        %6328 = vmatprep.subr.mxu0 0.0
        %6329 = vmatpush2.msra.mxu0 %v6028
        %6330 = vmatprep.subr.mxu0 0.0
        %6331 = vmatpush2.msra.mxu0 %v6027
        %6332 = vmatprep.mubr.f32.mxu0 %v6188
        %6333 = vmatmul.mubr.f32.gmra.mxu0 %v6156
        %v6334 = vpop.f32.mrf.mxu0
        %v6335 = vadd.f32 0.0, %v6334
        %v6336 = vpop.f32.mrf.mxu0
        %6337 = vdwg.mxu0
        %6338 = vmatprep.subr.mxu0 0.0
        %6339 = vmatpush1.msra.mxu0 %v6058
        %6340 = vmatprep.subr.mxu0 0.0
        %6341 = vmatpush1.msra.mxu0 %v6057
        %6342 = vmatprep.subr.mxu0 0.0
        %6343 = vmatpush1.msra.mxu0 %v6056
        %6344 = vmatprep.subr.mxu0 0.0
        %6345 = vmatpush1.msra.mxu0 %v6055
        %6346 = vmatprep.subr.mxu0 0.0
        %6347 = vmatpush1.msra.mxu0 %v6054
        %6348 = vmatprep.subr.mxu0 0.0
        %6349 = vmatpush1.msra.mxu0 %v6053
        %6350 = vmatprep.subr.mxu0 0.0
        %6351 = vmatpush1.msra.mxu0 %v6052
        %6352 = vmatprep.subr.mxu0 0.0
        %6353 = vmatpush1.msra.mxu0 %v6051
        %6354 = vmatprep.subr.mxu0 0.0
        %6355 = vmatpush1.msra.mxu0 %v6050
        %6356 = vmatprep.subr.mxu0 0.0
        %6357 = vmatpush1.msra.mxu0 %v6049
        %6358 = vmatprep.subr.mxu0 0.0
        %6359 = vmatpush1.msra.mxu0 %v6048
        %6360 = vmatprep.subr.mxu0 0.0
        %6361 = vmatpush1.msra.mxu0 %v6047
        %6362 = vmatprep.subr.mxu0 0.0
        %6363 = vmatpush1.msra.mxu0 %v6046
        %6364 = vmatprep.subr.mxu0 0.0
        %6365 = vmatpush1.msra.mxu0 %v6045
        %6366 = vmatprep.subr.mxu0 0.0
        %6367 = vmatpush1.msra.mxu0 %v6044
        %6368 = vmatprep.subr.mxu0 0.0
        %6369 = vmatpush1.msra.mxu0 %v6043
        %6370 = vmatprep.subr.mxu0 0.0
        %6371 = vmatpush2.msra.mxu0 %v6074
        %6372 = vmatprep.subr.mxu0 0.0
        %6373 = vmatpush2.msra.mxu0 %v6073
        %6374 = vmatprep.subr.mxu0 0.0
        %6375 = vmatpush2.msra.mxu0 %v6072
        %6376 = vmatprep.subr.mxu0 0.0
        %6377 = vmatpush2.msra.mxu0 %v6071
        %6378 = vmatprep.subr.mxu0 0.0
        %6379 = vmatpush2.msra.mxu0 %v6070
        %6380 = vmatprep.subr.mxu0 0.0
        %6381 = vmatpush2.msra.mxu0 %v6069
        %6382 = vmatprep.subr.mxu0 0.0
        %6383 = vmatpush2.msra.mxu0 %v6068
        %6384 = vmatprep.subr.mxu0 0.0
        %6385 = vmatpush2.msra.mxu0 %v6067
        %6386 = vmatprep.subr.mxu0 0.0
        %6387 = vmatpush2.msra.mxu0 %v6066
        %6388 = vmatprep.subr.mxu0 0.0
        %6389 = vmatpush2.msra.mxu0 %v6065
        %6390 = vmatprep.subr.mxu0 0.0
        %6391 = vmatpush2.msra.mxu0 %v6064
        %6392 = vmatprep.subr.mxu0 0.0
        %6393 = vmatpush2.msra.mxu0 %v6063
        %6394 = vmatprep.subr.mxu0 0.0
        %6395 = vmatpush2.msra.mxu0 %v6062
        %6396 = vmatprep.subr.mxu0 0.0
        %6397 = vmatpush2.msra.mxu0 %v6061
        %6398 = vmatprep.subr.mxu0 0.0
        %6399 = vmatpush2.msra.mxu0 %v6060
        %6400 = vmatprep.subr.mxu0 0.0
        %6401 = vmatpush2.msra.mxu0 %v6059
        %6402 = vmatprep.mubr.f32.mxu0 %v6252
        %6403 = vmatmul.mubr.f32.gmra.mxu0 %v6220
        %v6404 = vpop.f32.mrf.mxu0
        %v6405 = vadd.f32 %v6335, %v6404
        %v6406 = vpop.f32.mrf.mxu0
        %6407 = vdwg.mxu0
        %v6408 = vadd.f32 %v6139, %v6405
        %vm6409 = vcmask 27648
        %6410 = vst.msk [vmem:[#allocation2] sm:$0xf] %vm6409, %v6408
        %v6411 = vld [vmem:[#allocation3] sm:$0xf]
        %6412 = vxpose.xlu0.b32.start [1/16] %v6075, 128
        %6413 = vxpose.xlu0.b32.cont [2/16] %v6076, 128
        %6414 = vxpose.xlu0.b32.cont [3/16] %v6077, 128
        %6415 = vxpose.xlu0.b32.cont [4/16] %v6078, 128
        %6416 = vxpose.xlu0.b32.cont [5/16] %v6079, 128
        %6417 = vxpose.xlu0.b32.cont [6/16] %v6080, 128
        %6418 = vxpose.xlu0.b32.cont [7/16] %v6081, 128
        %6419 = vxpose.xlu0.b32.cont [8/16] %v6082, 128
        %6420 = vxpose.xlu0.b32.cont [9/16] %v6083, 128
        %6421 = vxpose.xlu0.b32.cont [10/16] %v6084, 128
        %6422 = vxpose.xlu0.b32.cont [11/16] %v6085, 128
        %6423 = vxpose.xlu0.b32.cont [12/16] %v6086, 128
        %6424 = vxpose.xlu0.b32.cont [13/16] %v6087, 128
        %6425 = vxpose.xlu0.b32.cont [14/16] %v6088, 128
        %6426 = vxpose.xlu0.b32.cont [15/16] %v6089, 128
        %6427 = vxpose.xlu0.b32.end [16/16] %v6090, 128
        %v6428 = vpop.trf.xlu0
        %v6429 = vpop.trf.xlu0
        %v6430 = vpop.trf.xlu0
        %v6431 = vpop.trf.xlu0
        %v6432 = vpop.trf.xlu0
        %v6433 = vpop.trf.xlu0
        %v6434 = vpop.trf.xlu0
        %v6435 = vpop.trf.xlu0
        %v6436 = vpop.trf.xlu0
        %v6437 = vpop.trf.xlu0
        %v6438 = vpop.trf.xlu0
        %v6439 = vpop.trf.xlu0
        %v6440 = vpop.trf.xlu0
        %v6441 = vpop.trf.xlu0
        %v6442 = vpop.trf.xlu0
        %v6443 = vpop.trf.xlu0
        %6444 = vxpose.xlu0.b32.start [1/16] %v6091, 128
        %6445 = vxpose.xlu0.b32.cont [2/16] %v6092, 128
        %6446 = vxpose.xlu0.b32.cont [3/16] %v6093, 128
        %6447 = vxpose.xlu0.b32.cont [4/16] %v6094, 128
        %6448 = vxpose.xlu0.b32.cont [5/16] %v6095, 128
        %6449 = vxpose.xlu0.b32.cont [6/16] %v6096, 128
        %6450 = vxpose.xlu0.b32.cont [7/16] %v6097, 128
        %6451 = vxpose.xlu0.b32.cont [8/16] %v6098, 128
        %6452 = vxpose.xlu0.b32.cont [9/16] %v6099, 128
        %6453 = vxpose.xlu0.b32.cont [10/16] %v6100, 128
        %6454 = vxpose.xlu0.b32.cont [11/16] %v6101, 128
        %6455 = vxpose.xlu0.b32.cont [12/16] %v6102, 128
        %6456 = vxpose.xlu0.b32.cont [13/16] %v6103, 128
        %6457 = vxpose.xlu0.b32.cont [14/16] %v6104, 128
        %6458 = vxpose.xlu0.b32.cont [15/16] %v6105, 128
        %6459 = vxpose.xlu0.b32.end [16/16] %v6106, 128
        %v6460 = vpop.trf.xlu0
        %v6461 = vpop.trf.xlu0
        %v6462 = vpop.trf.xlu0
        %v6463 = vpop.trf.xlu0
        %v6464 = vpop.trf.xlu0
        %v6465 = vpop.trf.xlu0
        %v6466 = vpop.trf.xlu0
        %v6467 = vpop.trf.xlu0
        %v6468 = vpop.trf.xlu0
        %v6469 = vpop.trf.xlu0
        %v6470 = vpop.trf.xlu0
        %v6471 = vpop.trf.xlu0
        %v6472 = vpop.trf.xlu0
        %v6473 = vpop.trf.xlu0
        %v6474 = vpop.trf.xlu0
        %v6475 = vpop.trf.xlu0
        %6476 = vxpose.xlu0.b32.start [1/16] %v6107, 128
        %6477 = vxpose.xlu0.b32.cont [2/16] %v6108, 128
        %6478 = vxpose.xlu0.b32.cont [3/16] %v6109, 128
        %6479 = vxpose.xlu0.b32.cont [4/16] %v6110, 128
        %6480 = vxpose.xlu0.b32.cont [5/16] %v6111, 128
        %6481 = vxpose.xlu0.b32.cont [6/16] %v6112, 128
        %6482 = vxpose.xlu0.b32.cont [7/16] %v6113, 128
        %6483 = vxpose.xlu0.b32.cont [8/16] %v6114, 128
        %6484 = vxpose.xlu0.b32.cont [9/16] %v6115, 128
        %6485 = vxpose.xlu0.b32.cont [10/16] %v6116, 128
        %6486 = vxpose.xlu0.b32.cont [11/16] %v6117, 128
        %6487 = vxpose.xlu0.b32.cont [12/16] %v6118, 128
        %6488 = vxpose.xlu0.b32.cont [13/16] %v6119, 128
        %6489 = vxpose.xlu0.b32.cont [14/16] %v6120, 128
        %6490 = vxpose.xlu0.b32.cont [15/16] %v6121, 128
        %6491 = vxpose.xlu0.b32.end [16/16] %v6122, 128
        %v6492 = vpop.trf.xlu0
        %v6493 = vpop.trf.xlu0
        %v6494 = vpop.trf.xlu0
        %v6495 = vpop.trf.xlu0
        %v6496 = vpop.trf.xlu0
        %v6497 = vpop.trf.xlu0
        %v6498 = vpop.trf.xlu0
        %v6499 = vpop.trf.xlu0
        %v6500 = vpop.trf.xlu0
        %v6501 = vpop.trf.xlu0
        %v6502 = vpop.trf.xlu0
        %v6503 = vpop.trf.xlu0
        %v6504 = vpop.trf.xlu0
        %v6505 = vpop.trf.xlu0
        %v6506 = vpop.trf.xlu0
        %v6507 = vpop.trf.xlu0
        %6508 = vxpose.xlu0.b32.start [1/16] %v6123, 128
        %6509 = vxpose.xlu0.b32.cont [2/16] %v6124, 128
        %6510 = vxpose.xlu0.b32.cont [3/16] %v6125, 128
        %6511 = vxpose.xlu0.b32.cont [4/16] %v6126, 128
        %6512 = vxpose.xlu0.b32.cont [5/16] %v6127, 128
        %6513 = vxpose.xlu0.b32.cont [6/16] %v6128, 128
        %6514 = vxpose.xlu0.b32.cont [7/16] %v6129, 128
        %6515 = vxpose.xlu0.b32.cont [8/16] %v6130, 128
        %6516 = vxpose.xlu0.b32.cont [9/16] %v6131, 128
        %6517 = vxpose.xlu0.b32.cont [10/16] %v6132, 128
        %6518 = vxpose.xlu0.b32.cont [11/16] %v6133, 128
        %6519 = vxpose.xlu0.b32.cont [12/16] %v6134, 128
        %6520 = vxpose.xlu0.b32.cont [13/16] %v6135, 128
        %6521 = vxpose.xlu0.b32.cont [14/16] %v6136, 128
        %6522 = vxpose.xlu0.b32.cont [15/16] %v6137, 128
        %6523 = vxpose.xlu0.b32.end [16/16] %v6138, 128
        %v6524 = vpop.trf.xlu0
        %v6525 = vpop.trf.xlu0
        %v6526 = vpop.trf.xlu0
        %v6527 = vpop.trf.xlu0
        %v6528 = vpop.trf.xlu0
        %v6529 = vpop.trf.xlu0
        %v6530 = vpop.trf.xlu0
        %v6531 = vpop.trf.xlu0
        %v6532 = vpop.trf.xlu0
        %v6533 = vpop.trf.xlu0
        %v6534 = vpop.trf.xlu0
        %v6535 = vpop.trf.xlu0
        %v6536 = vpop.trf.xlu0
        %v6537 = vpop.trf.xlu0
        %v6538 = vpop.trf.xlu0
        %v6539 = vpop.trf.xlu0
        %6540 = vmatprep.subr.mxu0 0.0
        %6541 = vmatpush1.msra.mxu0 %v6090
        %6542 = vmatprep.subr.mxu0 0.0
        %6543 = vmatpush1.msra.mxu0 %v6089
        %6544 = vmatprep.subr.mxu0 0.0
        %6545 = vmatpush1.msra.mxu0 %v6088
        %6546 = vmatprep.subr.mxu0 0.0
        %6547 = vmatpush1.msra.mxu0 %v6087
        %6548 = vmatprep.subr.mxu0 0.0
        %6549 = vmatpush1.msra.mxu0 %v6086
        %6550 = vmatprep.subr.mxu0 0.0
        %6551 = vmatpush1.msra.mxu0 %v6085
        %6552 = vmatprep.subr.mxu0 0.0
        %6553 = vmatpush1.msra.mxu0 %v6084
        %6554 = vmatprep.subr.mxu0 0.0
        %6555 = vmatpush1.msra.mxu0 %v6083
        %6556 = vmatprep.subr.mxu0 0.0
        %6557 = vmatpush1.msra.mxu0 %v6082
        %6558 = vmatprep.subr.mxu0 0.0
        %6559 = vmatpush1.msra.mxu0 %v6081
        %6560 = vmatprep.subr.mxu0 0.0
        %6561 = vmatpush1.msra.mxu0 %v6080
        %6562 = vmatprep.subr.mxu0 0.0
        %6563 = vmatpush1.msra.mxu0 %v6079
        %6564 = vmatprep.subr.mxu0 0.0
        %6565 = vmatpush1.msra.mxu0 %v6078
        %6566 = vmatprep.subr.mxu0 0.0
        %6567 = vmatpush1.msra.mxu0 %v6077
        %6568 = vmatprep.subr.mxu0 0.0
        %6569 = vmatpush1.msra.mxu0 %v6076
        %6570 = vmatprep.subr.mxu0 0.0
        %6571 = vmatpush1.msra.mxu0 %v6075
        %6572 = vmatprep.subr.mxu0 0.0
        %6573 = vmatpush2.msra.mxu0 %v6106
        %6574 = vmatprep.subr.mxu0 0.0
        %6575 = vmatpush2.msra.mxu0 %v6105
        %6576 = vmatprep.subr.mxu0 0.0
        %6577 = vmatpush2.msra.mxu0 %v6104
        %6578 = vmatprep.subr.mxu0 0.0
        %6579 = vmatpush2.msra.mxu0 %v6103
        %6580 = vmatprep.subr.mxu0 0.0
        %6581 = vmatpush2.msra.mxu0 %v6102
        %6582 = vmatprep.subr.mxu0 0.0
        %6583 = vmatpush2.msra.mxu0 %v6101
        %6584 = vmatprep.subr.mxu0 0.0
        %6585 = vmatpush2.msra.mxu0 %v6100
        %6586 = vmatprep.subr.mxu0 0.0
        %6587 = vmatpush2.msra.mxu0 %v6099
        %6588 = vmatprep.subr.mxu0 0.0
        %6589 = vmatpush2.msra.mxu0 %v6098
        %6590 = vmatprep.subr.mxu0 0.0
        %6591 = vmatpush2.msra.mxu0 %v6097
        %6592 = vmatprep.subr.mxu0 0.0
        %6593 = vmatpush2.msra.mxu0 %v6096
        %6594 = vmatprep.subr.mxu0 0.0
        %6595 = vmatpush2.msra.mxu0 %v6095
        %6596 = vmatprep.subr.mxu0 0.0
        %6597 = vmatpush2.msra.mxu0 %v6094
        %6598 = vmatprep.subr.mxu0 0.0
        %6599 = vmatpush2.msra.mxu0 %v6093
        %6600 = vmatprep.subr.mxu0 0.0
        %6601 = vmatpush2.msra.mxu0 %v6092
        %6602 = vmatprep.subr.mxu0 0.0
        %6603 = vmatpush2.msra.mxu0 %v6091
        %6604 = vmatprep.mubr.f32.mxu0 %v6460
        %6605 = vmatmul.mubr.f32.gmra.mxu0 %v6428
        %v6606 = vpop.f32.mrf.mxu0
        %v6607 = vadd.f32 0.0, %v6606
        %v6608 = vpop.f32.mrf.mxu0
        %6609 = vdwg.mxu0
        %6610 = vmatprep.subr.mxu0 0.0
        %6611 = vmatpush1.msra.mxu0 %v6122
        %6612 = vmatprep.subr.mxu0 0.0
        %6613 = vmatpush1.msra.mxu0 %v6121
        %6614 = vmatprep.subr.mxu0 0.0
        %6615 = vmatpush1.msra.mxu0 %v6120
        %6616 = vmatprep.subr.mxu0 0.0
        %6617 = vmatpush1.msra.mxu0 %v6119
        %6618 = vmatprep.subr.mxu0 0.0
        %6619 = vmatpush1.msra.mxu0 %v6118
        %6620 = vmatprep.subr.mxu0 0.0
        %6621 = vmatpush1.msra.mxu0 %v6117
        %6622 = vmatprep.subr.mxu0 0.0
        %6623 = vmatpush1.msra.mxu0 %v6116
        %6624 = vmatprep.subr.mxu0 0.0
        %6625 = vmatpush1.msra.mxu0 %v6115
        %6626 = vmatprep.subr.mxu0 0.0
        %6627 = vmatpush1.msra.mxu0 %v6114
        %6628 = vmatprep.subr.mxu0 0.0
        %6629 = vmatpush1.msra.mxu0 %v6113
        %6630 = vmatprep.subr.mxu0 0.0
        %6631 = vmatpush1.msra.mxu0 %v6112
        %6632 = vmatprep.subr.mxu0 0.0
        %6633 = vmatpush1.msra.mxu0 %v6111
        %6634 = vmatprep.subr.mxu0 0.0
        %6635 = vmatpush1.msra.mxu0 %v6110
        %6636 = vmatprep.subr.mxu0 0.0
        %6637 = vmatpush1.msra.mxu0 %v6109
        %6638 = vmatprep.subr.mxu0 0.0
        %6639 = vmatpush1.msra.mxu0 %v6108
        %6640 = vmatprep.subr.mxu0 0.0
        %6641 = vmatpush1.msra.mxu0 %v6107
        %6642 = vmatprep.subr.mxu0 0.0
        %6643 = vmatpush2.msra.mxu0 %v6138
        %6644 = vmatprep.subr.mxu0 0.0
        %6645 = vmatpush2.msra.mxu0 %v6137
        %6646 = vmatprep.subr.mxu0 0.0
        %6647 = vmatpush2.msra.mxu0 %v6136
        %6648 = vmatprep.subr.mxu0 0.0
        %6649 = vmatpush2.msra.mxu0 %v6135
        %6650 = vmatprep.subr.mxu0 0.0
        %6651 = vmatpush2.msra.mxu0 %v6134
        %6652 = vmatprep.subr.mxu0 0.0
        %6653 = vmatpush2.msra.mxu0 %v6133
        %6654 = vmatprep.subr.mxu0 0.0
        %6655 = vmatpush2.msra.mxu0 %v6132
        %6656 = vmatprep.subr.mxu0 0.0
        %6657 = vmatpush2.msra.mxu0 %v6131
        %6658 = vmatprep.subr.mxu0 0.0
        %6659 = vmatpush2.msra.mxu0 %v6130
        %6660 = vmatprep.subr.mxu0 0.0
        %6661 = vmatpush2.msra.mxu0 %v6129
        %6662 = vmatprep.subr.mxu0 0.0
        %6663 = vmatpush2.msra.mxu0 %v6128
        %6664 = vmatprep.subr.mxu0 0.0
        %6665 = vmatpush2.msra.mxu0 %v6127
        %6666 = vmatprep.subr.mxu0 0.0
        %6667 = vmatpush2.msra.mxu0 %v6126
        %6668 = vmatprep.subr.mxu0 0.0
        %6669 = vmatpush2.msra.mxu0 %v6125
        %6670 = vmatprep.subr.mxu0 0.0
        %6671 = vmatpush2.msra.mxu0 %v6124
        %6672 = vmatprep.subr.mxu0 0.0
        %6673 = vmatpush2.msra.mxu0 %v6123
        %6674 = vmatprep.mubr.f32.mxu0 %v6524
        %6675 = vmatmul.mubr.f32.gmra.mxu0 %v6492
        %v6676 = vpop.f32.mrf.mxu0
        %v6677 = vadd.f32 %v6607, %v6676
        %v6678 = vpop.f32.mrf.mxu0
        %6679 = vdwg.mxu0
        %v6680 = vadd.f32 %v6411, %v6677
        %6681 = vst.msk [vmem:[#allocation3] sm:$0xf] %vm6409, %v6680
        %6746 = vrot.lane.b32.xlu0 %v4751, 4
        %v6747 = vpop.permute.xlu0 %6746
        %6748 = vrot.lane.b32.xlu0 %v4753, 4
        %v6749 = vpop.permute.xlu0 %6748
        %6750 = vrot.lane.b32.xlu0 %v4755, 4
        %v6751 = vpop.permute.xlu0 %6750
        %6752 = vrot.lane.b32.xlu0 %v4757, 4
        %v6753 = vpop.permute.xlu0 %6752
        %6754 = vrot.lane.b32.xlu0 %v4759, 4
        %v6755 = vpop.permute.xlu0 %6754
        %6756 = vrot.lane.b32.xlu0 %v4761, 4
        %v6757 = vpop.permute.xlu0 %6756
        %6758 = vrot.lane.b32.xlu0 %v4763, 4
        %v6759 = vpop.permute.xlu0 %6758
        %6760 = vrot.lane.b32.xlu0 %v4765, 4
        %v6761 = vpop.permute.xlu0 %6760
        %6762 = vrot.lane.b32.xlu0 %v4767, 4
        %v6763 = vpop.permute.xlu0 %6762
        %6764 = vrot.lane.b32.xlu0 %v4769, 4
        %v6765 = vpop.permute.xlu0 %6764
        %6766 = vrot.lane.b32.xlu0 %v4771, 4
        %v6767 = vpop.permute.xlu0 %6766
        %6768 = vrot.lane.b32.xlu0 %v4773, 4
        %v6769 = vpop.permute.xlu0 %6768
        %6770 = vrot.lane.b32.xlu0 %v4775, 4
        %v6771 = vpop.permute.xlu0 %6770
        %6772 = vrot.lane.b32.xlu0 %v4777, 4
        %v6773 = vpop.permute.xlu0 %6772
        %6774 = vrot.lane.b32.xlu0 %v4779, 4
        %v6775 = vpop.permute.xlu0 %6774
        %6776 = vrot.lane.b32.xlu0 %v4781, 4
        %v6777 = vpop.permute.xlu0 %6776
        %6778 = vrot.lane.b32.xlu0 %v4783, 4
        %v6779 = vpop.permute.xlu0 %6778
        %6780 = vrot.lane.b32.xlu0 %v4785, 4
        %v6781 = vpop.permute.xlu0 %6780
        %6782 = vrot.lane.b32.xlu0 %v4787, 4
        %v6783 = vpop.permute.xlu0 %6782
        %6784 = vrot.lane.b32.xlu0 %v4789, 4
        %v6785 = vpop.permute.xlu0 %6784
        %6786 = vrot.lane.b32.xlu0 %v4791, 4
        %v6787 = vpop.permute.xlu0 %6786
        %6788 = vrot.lane.b32.xlu0 %v4793, 4
        %v6789 = vpop.permute.xlu0 %6788
        %6790 = vrot.lane.b32.xlu0 %v4795, 4
        %v6791 = vpop.permute.xlu0 %6790
        %6792 = vrot.lane.b32.xlu0 %v4797, 4
        %v6793 = vpop.permute.xlu0 %6792
        %6794 = vrot.lane.b32.xlu0 %v4799, 4
        %v6795 = vpop.permute.xlu0 %6794
        %6796 = vrot.lane.b32.xlu0 %v4801, 4
        %v6797 = vpop.permute.xlu0 %6796
        %6798 = vrot.lane.b32.xlu0 %v4803, 4
        %v6799 = vpop.permute.xlu0 %6798
        %6800 = vrot.lane.b32.xlu0 %v4805, 4
        %v6801 = vpop.permute.xlu0 %6800
        %6802 = vrot.lane.b32.xlu0 %v4807, 4
        %v6803 = vpop.permute.xlu0 %6802
        %6804 = vrot.lane.b32.xlu0 %v4809, 4
        %v6805 = vpop.permute.xlu0 %6804
        %6806 = vrot.lane.b32.xlu0 %v4811, 4
        %v6807 = vpop.permute.xlu0 %6806
        %6808 = vrot.lane.b32.xlu0 %v4813, 4
        %v6809 = vpop.permute.xlu0 %6808
        %6810 = vrot.lane.b32.xlu0 %v4815, 4
        %v6811 = vpop.permute.xlu0 %6810
        %6812 = vrot.lane.b32.xlu0 %v4817, 4
        %v6813 = vpop.permute.xlu0 %6812
        %6814 = vrot.lane.b32.xlu0 %v4819, 4
        %v6815 = vpop.permute.xlu0 %6814
        %6816 = vrot.lane.b32.xlu0 %v4821, 4
        %v6817 = vpop.permute.xlu0 %6816
        %6818 = vrot.lane.b32.xlu0 %v4823, 4
        %v6819 = vpop.permute.xlu0 %6818
        %6820 = vrot.lane.b32.xlu0 %v4825, 4
        %v6821 = vpop.permute.xlu0 %6820
        %6822 = vrot.lane.b32.xlu0 %v4827, 4
        %v6823 = vpop.permute.xlu0 %6822
        %6824 = vrot.lane.b32.xlu0 %v4829, 4
        %v6825 = vpop.permute.xlu0 %6824
        %6826 = vrot.lane.b32.xlu0 %v4831, 4
        %v6827 = vpop.permute.xlu0 %6826
        %6828 = vrot.lane.b32.xlu0 %v4833, 4
        %v6829 = vpop.permute.xlu0 %6828
        %6830 = vrot.lane.b32.xlu0 %v4835, 4
        %v6831 = vpop.permute.xlu0 %6830
        %6832 = vrot.lane.b32.xlu0 %v4837, 4
        %v6833 = vpop.permute.xlu0 %6832
        %6834 = vrot.lane.b32.xlu0 %v4839, 4
        %v6835 = vpop.permute.xlu0 %6834
        %6836 = vrot.lane.b32.xlu0 %v4841, 4
        %v6837 = vpop.permute.xlu0 %6836
        %6838 = vrot.lane.b32.xlu0 %v4843, 4
        %v6839 = vpop.permute.xlu0 %6838
        %6840 = vrot.lane.b32.xlu0 %v4845, 4
        %v6841 = vpop.permute.xlu0 %6840
        %6842 = vrot.lane.b32.xlu0 %v4847, 4
        %v6843 = vpop.permute.xlu0 %6842
        %6844 = vrot.lane.b32.xlu0 %v4849, 4
        %v6845 = vpop.permute.xlu0 %6844
        %6846 = vrot.lane.b32.xlu0 %v4851, 4
        %v6847 = vpop.permute.xlu0 %6846
        %6848 = vrot.lane.b32.xlu0 %v4853, 4
        %v6849 = vpop.permute.xlu0 %6848
        %6850 = vrot.lane.b32.xlu0 %v4855, 4
        %v6851 = vpop.permute.xlu0 %6850
        %6852 = vrot.lane.b32.xlu0 %v4857, 4
        %v6853 = vpop.permute.xlu0 %6852
        %6854 = vrot.lane.b32.xlu0 %v4859, 4
        %v6855 = vpop.permute.xlu0 %6854
        %6856 = vrot.lane.b32.xlu0 %v4861, 4
        %v6857 = vpop.permute.xlu0 %6856
        %6858 = vrot.lane.b32.xlu0 %v4863, 4
        %v6859 = vpop.permute.xlu0 %6858
        %6860 = vrot.lane.b32.xlu0 %v4865, 4
        %v6861 = vpop.permute.xlu0 %6860
        %6862 = vrot.lane.b32.xlu0 %v4867, 4
        %v6863 = vpop.permute.xlu0 %6862
        %6864 = vrot.lane.b32.xlu0 %v4869, 4
        %v6865 = vpop.permute.xlu0 %6864
        %6866 = vrot.lane.b32.xlu0 %v4871, 4
        %v6867 = vpop.permute.xlu0 %6866
        %6868 = vrot.lane.b32.xlu0 %v4873, 4
        %v6869 = vpop.permute.xlu0 %6868
        %6870 = vrot.lane.b32.xlu0 %v4875, 4
        %v6871 = vpop.permute.xlu0 %6870
        %6872 = vrot.lane.b32.xlu0 %v4877, 4
        %v6873 = vpop.permute.xlu0 %6872
        %7002 = vrot.lane.b32.xlu0 %v5178, 8
        %v7003 = vpop.permute.xlu0 %7002
        %7004 = vrot.lane.b32.xlu0 %v5181, 8
        %v7005 = vpop.permute.xlu0 %7004
        %7006 = vrot.lane.b32.xlu0 %v5186, 8
        %v7007 = vpop.permute.xlu0 %7006
        %7008 = vrot.lane.b32.xlu0 %v5189, 8
        %v7009 = vpop.permute.xlu0 %7008
        %7010 = vrot.lane.b32.xlu0 %v5194, 8
        %v7011 = vpop.permute.xlu0 %7010
        %7012 = vrot.lane.b32.xlu0 %v5197, 8
        %v7013 = vpop.permute.xlu0 %7012
        %7014 = vrot.lane.b32.xlu0 %v5202, 8
        %v7015 = vpop.permute.xlu0 %7014
        %7016 = vrot.lane.b32.xlu0 %v5205, 8
        %v7017 = vpop.permute.xlu0 %7016
        %7018 = vrot.lane.b32.xlu0 %v5210, 8
        %v7019 = vpop.permute.xlu0 %7018
        %7020 = vrot.lane.b32.xlu0 %v5213, 8
        %v7021 = vpop.permute.xlu0 %7020
        %7022 = vrot.lane.b32.xlu0 %v5218, 8
        %v7023 = vpop.permute.xlu0 %7022
        %7024 = vrot.lane.b32.xlu0 %v5221, 8
        %v7025 = vpop.permute.xlu0 %7024
        %7026 = vrot.lane.b32.xlu0 %v5226, 8
        %v7027 = vpop.permute.xlu0 %7026
        %7028 = vrot.lane.b32.xlu0 %v5229, 8
        %v7029 = vpop.permute.xlu0 %7028
        %7030 = vrot.lane.b32.xlu0 %v5234, 8
        %v7031 = vpop.permute.xlu0 %7030
        %7032 = vrot.lane.b32.xlu0 %v5237, 8
        %v7033 = vpop.permute.xlu0 %7032
        %7034 = vrot.lane.b32.xlu0 %v5242, 8
        %v7035 = vpop.permute.xlu0 %7034
        %7036 = vrot.lane.b32.xlu0 %v5245, 8
        %v7037 = vpop.permute.xlu0 %7036
        %7038 = vrot.lane.b32.xlu0 %v5250, 8
        %v7039 = vpop.permute.xlu0 %7038
        %7040 = vrot.lane.b32.xlu0 %v5253, 8
        %v7041 = vpop.permute.xlu0 %7040
        %7042 = vrot.lane.b32.xlu0 %v5258, 8
        %v7043 = vpop.permute.xlu0 %7042
        %7044 = vrot.lane.b32.xlu0 %v5261, 8
        %v7045 = vpop.permute.xlu0 %7044
        %7046 = vrot.lane.b32.xlu0 %v5266, 8
        %v7047 = vpop.permute.xlu0 %7046
        %7048 = vrot.lane.b32.xlu0 %v5269, 8
        %v7049 = vpop.permute.xlu0 %7048
        %7050 = vrot.lane.b32.xlu0 %v5274, 8
        %v7051 = vpop.permute.xlu0 %7050
        %7052 = vrot.lane.b32.xlu0 %v5277, 8
        %v7053 = vpop.permute.xlu0 %7052
        %7054 = vrot.lane.b32.xlu0 %v5282, 8
        %v7055 = vpop.permute.xlu0 %7054
        %7056 = vrot.lane.b32.xlu0 %v5285, 8
        %v7057 = vpop.permute.xlu0 %7056
        %7058 = vrot.lane.b32.xlu0 %v5290, 8
        %v7059 = vpop.permute.xlu0 %7058
        %7060 = vrot.lane.b32.xlu0 %v5293, 8
        %v7061 = vpop.permute.xlu0 %7060
        %7062 = vrot.lane.b32.xlu0 %v5298, 8
        %v7063 = vpop.permute.xlu0 %7062
        %7064 = vrot.lane.b32.xlu0 %v5301, 8
        %v7065 = vpop.permute.xlu0 %7064
        %7066 = vrot.lane.b32.xlu0 %v5306, 8
        %v7067 = vpop.permute.xlu0 %7066
        %7068 = vrot.lane.b32.xlu0 %v5309, 8
        %v7069 = vpop.permute.xlu0 %7068
        %7070 = vrot.lane.b32.xlu0 %v5314, 8
        %v7071 = vpop.permute.xlu0 %7070
        %7072 = vrot.lane.b32.xlu0 %v5317, 8
        %v7073 = vpop.permute.xlu0 %7072
        %7074 = vrot.lane.b32.xlu0 %v5322, 8
        %v7075 = vpop.permute.xlu0 %7074
        %7076 = vrot.lane.b32.xlu0 %v5325, 8
        %v7077 = vpop.permute.xlu0 %7076
        %7078 = vrot.lane.b32.xlu0 %v5330, 8
        %v7079 = vpop.permute.xlu0 %7078
        %7080 = vrot.lane.b32.xlu0 %v5333, 8
        %v7081 = vpop.permute.xlu0 %7080
        %7082 = vrot.lane.b32.xlu0 %v5338, 8
        %v7083 = vpop.permute.xlu0 %7082
        %7084 = vrot.lane.b32.xlu0 %v5341, 8
        %v7085 = vpop.permute.xlu0 %7084
        %7086 = vrot.lane.b32.xlu0 %v5346, 8
        %v7087 = vpop.permute.xlu0 %7086
        %7088 = vrot.lane.b32.xlu0 %v5349, 8
        %v7089 = vpop.permute.xlu0 %7088
        %7090 = vrot.lane.b32.xlu0 %v5354, 8
        %v7091 = vpop.permute.xlu0 %7090
        %7092 = vrot.lane.b32.xlu0 %v5357, 8
        %v7093 = vpop.permute.xlu0 %7092
        %7094 = vrot.lane.b32.xlu0 %v5362, 8
        %v7095 = vpop.permute.xlu0 %7094
        %7096 = vrot.lane.b32.xlu0 %v5365, 8
        %v7097 = vpop.permute.xlu0 %7096
        %7098 = vrot.lane.b32.xlu0 %v5370, 8
        %v7099 = vpop.permute.xlu0 %7098
        %7100 = vrot.lane.b32.xlu0 %v5373, 8
        %v7101 = vpop.permute.xlu0 %7100
        %7102 = vrot.lane.b32.xlu0 %v5378, 8
        %v7103 = vpop.permute.xlu0 %7102
        %7104 = vrot.lane.b32.xlu0 %v5381, 8
        %v7105 = vpop.permute.xlu0 %7104
        %7106 = vrot.lane.b32.xlu0 %v5386, 8
        %v7107 = vpop.permute.xlu0 %7106
        %7108 = vrot.lane.b32.xlu0 %v5389, 8
        %v7109 = vpop.permute.xlu0 %7108
        %7110 = vrot.lane.b32.xlu0 %v5394, 8
        %v7111 = vpop.permute.xlu0 %7110
        %7112 = vrot.lane.b32.xlu0 %v5397, 8
        %v7113 = vpop.permute.xlu0 %7112
        %7114 = vrot.lane.b32.xlu0 %v5402, 8
        %v7115 = vpop.permute.xlu0 %7114
        %7116 = vrot.lane.b32.xlu0 %v5405, 8
        %v7117 = vpop.permute.xlu0 %7116
        %7118 = vrot.lane.b32.xlu0 %v5410, 8
        %v7119 = vpop.permute.xlu0 %7118
        %7120 = vrot.lane.b32.xlu0 %v5413, 8
        %v7121 = vpop.permute.xlu0 %7120
        %7122 = vrot.lane.b32.xlu0 %v5418, 8
        %v7123 = vpop.permute.xlu0 %7122
        %7124 = vrot.lane.b32.xlu0 %v5421, 8
        %v7125 = vpop.permute.xlu0 %7124
        %7126 = vrot.lane.b32.xlu0 %v5426, 8
        %v7127 = vpop.permute.xlu0 %7126
        %7128 = vrot.lane.b32.xlu0 %v5429, 8
        %v7129 = vpop.permute.xlu0 %7128
        %7258 = vrot.lane.b32.xlu0 %v5434, 12
        %v7259 = vpop.permute.xlu0 %7258
        %7260 = vrot.lane.b32.xlu0 %v5437, 12
        %v7261 = vpop.permute.xlu0 %7260
        %7262 = vrot.lane.b32.xlu0 %v5442, 12
        %v7263 = vpop.permute.xlu0 %7262
        %7264 = vrot.lane.b32.xlu0 %v5445, 12
        %v7265 = vpop.permute.xlu0 %7264
        %7266 = vrot.lane.b32.xlu0 %v5450, 12
        %v7267 = vpop.permute.xlu0 %7266
        %7268 = vrot.lane.b32.xlu0 %v5453, 12
        %v7269 = vpop.permute.xlu0 %7268
        %7270 = vrot.lane.b32.xlu0 %v5458, 12
        %v7271 = vpop.permute.xlu0 %7270
        %7272 = vrot.lane.b32.xlu0 %v5461, 12
        %v7273 = vpop.permute.xlu0 %7272
        %7274 = vrot.lane.b32.xlu0 %v5466, 12
        %v7275 = vpop.permute.xlu0 %7274
        %7276 = vrot.lane.b32.xlu0 %v5469, 12
        %v7277 = vpop.permute.xlu0 %7276
        %7278 = vrot.lane.b32.xlu0 %v5474, 12
        %v7279 = vpop.permute.xlu0 %7278
        %7280 = vrot.lane.b32.xlu0 %v5477, 12
        %v7281 = vpop.permute.xlu0 %7280
        %7282 = vrot.lane.b32.xlu0 %v5482, 12
        %v7283 = vpop.permute.xlu0 %7282
        %7284 = vrot.lane.b32.xlu0 %v5485, 12
        %v7285 = vpop.permute.xlu0 %7284
        %7286 = vrot.lane.b32.xlu0 %v5490, 12
        %v7287 = vpop.permute.xlu0 %7286
        %7288 = vrot.lane.b32.xlu0 %v5493, 12
        %v7289 = vpop.permute.xlu0 %7288
        %7290 = vrot.lane.b32.xlu0 %v5498, 12
        %v7291 = vpop.permute.xlu0 %7290
        %7292 = vrot.lane.b32.xlu0 %v5501, 12
        %v7293 = vpop.permute.xlu0 %7292
        %7294 = vrot.lane.b32.xlu0 %v5506, 12
        %v7295 = vpop.permute.xlu0 %7294
        %7296 = vrot.lane.b32.xlu0 %v5509, 12
        %v7297 = vpop.permute.xlu0 %7296
        %7298 = vrot.lane.b32.xlu0 %v5514, 12
        %v7299 = vpop.permute.xlu0 %7298
        %7300 = vrot.lane.b32.xlu0 %v5517, 12
        %v7301 = vpop.permute.xlu0 %7300
        %7302 = vrot.lane.b32.xlu0 %v5522, 12
        %v7303 = vpop.permute.xlu0 %7302
        %7304 = vrot.lane.b32.xlu0 %v5525, 12
        %v7305 = vpop.permute.xlu0 %7304
        %7306 = vrot.lane.b32.xlu0 %v5530, 12
        %v7307 = vpop.permute.xlu0 %7306
        %7308 = vrot.lane.b32.xlu0 %v5533, 12
        %v7309 = vpop.permute.xlu0 %7308
        %7310 = vrot.lane.b32.xlu0 %v5538, 12
        %v7311 = vpop.permute.xlu0 %7310
        %7312 = vrot.lane.b32.xlu0 %v5541, 12
        %v7313 = vpop.permute.xlu0 %7312
        %7314 = vrot.lane.b32.xlu0 %v5546, 12
        %v7315 = vpop.permute.xlu0 %7314
        %7316 = vrot.lane.b32.xlu0 %v5549, 12
        %v7317 = vpop.permute.xlu0 %7316
        %7318 = vrot.lane.b32.xlu0 %v5554, 12
        %v7319 = vpop.permute.xlu0 %7318
        %7320 = vrot.lane.b32.xlu0 %v5557, 12
        %v7321 = vpop.permute.xlu0 %7320
        %7322 = vrot.lane.b32.xlu0 %v5562, 12
        %v7323 = vpop.permute.xlu0 %7322
        %7324 = vrot.lane.b32.xlu0 %v5565, 12
        %v7325 = vpop.permute.xlu0 %7324
        %7326 = vrot.lane.b32.xlu0 %v5570, 12
        %v7327 = vpop.permute.xlu0 %7326
        %7328 = vrot.lane.b32.xlu0 %v5573, 12
        %v7329 = vpop.permute.xlu0 %7328
        %7330 = vrot.lane.b32.xlu0 %v5578, 12
        %v7331 = vpop.permute.xlu0 %7330
        %7332 = vrot.lane.b32.xlu0 %v5581, 12
        %v7333 = vpop.permute.xlu0 %7332
        %7334 = vrot.lane.b32.xlu0 %v5586, 12
        %v7335 = vpop.permute.xlu0 %7334
        %7336 = vrot.lane.b32.xlu0 %v5589, 12
        %v7337 = vpop.permute.xlu0 %7336
        %7338 = vrot.lane.b32.xlu0 %v5594, 12
        %v7339 = vpop.permute.xlu0 %7338
        %7340 = vrot.lane.b32.xlu0 %v5597, 12
        %v7341 = vpop.permute.xlu0 %7340
        %7342 = vrot.lane.b32.xlu0 %v5602, 12
        %v7343 = vpop.permute.xlu0 %7342
        %7344 = vrot.lane.b32.xlu0 %v5605, 12
        %v7345 = vpop.permute.xlu0 %7344
        %7346 = vrot.lane.b32.xlu0 %v5610, 12
        %v7347 = vpop.permute.xlu0 %7346
        %7348 = vrot.lane.b32.xlu0 %v5613, 12
        %v7349 = vpop.permute.xlu0 %7348
        %7350 = vrot.lane.b32.xlu0 %v5618, 12
        %v7351 = vpop.permute.xlu0 %7350
        %7352 = vrot.lane.b32.xlu0 %v5621, 12
        %v7353 = vpop.permute.xlu0 %7352
        %7354 = vrot.lane.b32.xlu0 %v5626, 12
        %v7355 = vpop.permute.xlu0 %7354
        %7356 = vrot.lane.b32.xlu0 %v5629, 12
        %v7357 = vpop.permute.xlu0 %7356
        %7358 = vrot.lane.b32.xlu0 %v5634, 12
        %v7359 = vpop.permute.xlu0 %7358
        %7360 = vrot.lane.b32.xlu0 %v5637, 12
        %v7361 = vpop.permute.xlu0 %7360
        %7362 = vrot.lane.b32.xlu0 %v5642, 12
        %v7363 = vpop.permute.xlu0 %7362
        %7364 = vrot.lane.b32.xlu0 %v5645, 12
        %v7365 = vpop.permute.xlu0 %7364
        %7366 = vrot.lane.b32.xlu0 %v5650, 12
        %v7367 = vpop.permute.xlu0 %7366
        %7368 = vrot.lane.b32.xlu0 %v5653, 12
        %v7369 = vpop.permute.xlu0 %7368
        %7370 = vrot.lane.b32.xlu0 %v5658, 12
        %v7371 = vpop.permute.xlu0 %7370
        %7372 = vrot.lane.b32.xlu0 %v5661, 12
        %v7373 = vpop.permute.xlu0 %7372
        %7374 = vrot.lane.b32.xlu0 %v5666, 12
        %v7375 = vpop.permute.xlu0 %7374
        %7376 = vrot.lane.b32.xlu0 %v5669, 12
        %v7377 = vpop.permute.xlu0 %7376
        %7378 = vrot.lane.b32.xlu0 %v5674, 12
        %v7379 = vpop.permute.xlu0 %7378
        %7380 = vrot.lane.b32.xlu0 %v5677, 12
        %v7381 = vpop.permute.xlu0 %7380
        %7382 = vrot.lane.b32.xlu0 %v5682, 12
        %v7383 = vpop.permute.xlu0 %7382
        %7384 = vrot.lane.b32.xlu0 %v5685, 12
        %v7385 = vpop.permute.xlu0 %7384
        %v7450 = vsel %vm2967, %v2483, %v6747
        %v7451 = vsel %vm2967, %v2486, %v6749
        %v7452 = vsel %vm2967, %v2491, %v6751
        %v7453 = vsel %vm2967, %v2494, %v6753
        %v7454 = vsel %vm2967, %v2499, %v6755
        %v7455 = vsel %vm2967, %v2502, %v6757
        %v7456 = vsel %vm2967, %v2507, %v6759
        %v7457 = vsel %vm2967, %v2510, %v6761
        %v7458 = vsel %vm2967, %v2515, %v6763
        %v7459 = vsel %vm2967, %v2518, %v6765
        %v7460 = vsel %vm2967, %v2523, %v6767
        %v7461 = vsel %vm2967, %v2526, %v6769
        %v7462 = vsel %vm2967, %v2531, %v6771
        %v7463 = vsel %vm2967, %v2534, %v6773
        %v7464 = vsel %vm2967, %v2539, %v6775
        %v7465 = vsel %vm2967, %v2542, %v6777
        %v7466 = vsel %vm2967, %v2547, %v6779
        %v7467 = vsel %vm2967, %v2550, %v6781
        %v7468 = vsel %vm2967, %v2555, %v6783
        %v7469 = vsel %vm2967, %v2558, %v6785
        %v7470 = vsel %vm2967, %v2563, %v6787
        %v7471 = vsel %vm2967, %v2566, %v6789
        %v7472 = vsel %vm2967, %v2571, %v6791
        %v7473 = vsel %vm2967, %v2574, %v6793
        %v7474 = vsel %vm2967, %v2579, %v6795
        %v7475 = vsel %vm2967, %v2582, %v6797
        %v7476 = vsel %vm2967, %v2587, %v6799
        %v7477 = vsel %vm2967, %v2590, %v6801
        %v7478 = vsel %vm2967, %v2595, %v6803
        %v7479 = vsel %vm2967, %v2598, %v6805
        %v7480 = vsel %vm2967, %v2603, %v6807
        %v7481 = vsel %vm2967, %v2606, %v6809
        %v7482 = vsel %vm2967, %v2611, %v6811
        %v7483 = vsel %vm2967, %v2614, %v6813
        %v7484 = vsel %vm2967, %v2619, %v6815
        %v7485 = vsel %vm2967, %v2622, %v6817
        %v7486 = vsel %vm2967, %v2627, %v6819
        %v7487 = vsel %vm2967, %v2630, %v6821
        %v7488 = vsel %vm2967, %v2635, %v6823
        %v7489 = vsel %vm2967, %v2638, %v6825
        %v7490 = vsel %vm2967, %v2643, %v6827
        %v7491 = vsel %vm2967, %v2646, %v6829
        %v7492 = vsel %vm2967, %v2651, %v6831
        %v7493 = vsel %vm2967, %v2654, %v6833
        %v7494 = vsel %vm2967, %v2659, %v6835
        %v7495 = vsel %vm2967, %v2662, %v6837
        %v7496 = vsel %vm2967, %v2667, %v6839
        %v7497 = vsel %vm2967, %v2670, %v6841
        %v7498 = vsel %vm2967, %v2675, %v6843
        %v7499 = vsel %vm2967, %v2678, %v6845
        %v7500 = vsel %vm2967, %v2683, %v6847
        %v7501 = vsel %vm2967, %v2686, %v6849
        %v7502 = vsel %vm2967, %v2691, %v6851
        %v7503 = vsel %vm2967, %v2694, %v6853
        %v7504 = vsel %vm2967, %v2699, %v6855
        %v7505 = vsel %vm2967, %v2702, %v6857
        %v7506 = vsel %vm2967, %v2707, %v6859
        %v7507 = vsel %vm2967, %v2710, %v6861
        %v7508 = vsel %vm2967, %v2715, %v6863
        %v7509 = vsel %vm2967, %v2718, %v6865
        %v7510 = vsel %vm2967, %v2723, %v6867
        %v7511 = vsel %vm2967, %v2726, %v6869
        %v7512 = vsel %vm2967, %v2731, %v6871
        %v7513 = vsel %vm2967, %v2734, %v6873
        %vm7514 = vcmask 64512
        %v7515 = vsel %vm7514, %v7450, %v7003
        %v7516 = vsel %vm7514, %v7451, %v7005
        %v7517 = vsel %vm7514, %v7452, %v7007
        %v7518 = vsel %vm7514, %v7453, %v7009
        %v7519 = vsel %vm7514, %v7454, %v7011
        %v7520 = vsel %vm7514, %v7455, %v7013
        %v7521 = vsel %vm7514, %v7456, %v7015
        %v7522 = vsel %vm7514, %v7457, %v7017
        %v7523 = vsel %vm7514, %v7458, %v7019
        %v7524 = vsel %vm7514, %v7459, %v7021
        %v7525 = vsel %vm7514, %v7460, %v7023
        %v7526 = vsel %vm7514, %v7461, %v7025
        %v7527 = vsel %vm7514, %v7462, %v7027
        %v7528 = vsel %vm7514, %v7463, %v7029
        %v7529 = vsel %vm7514, %v7464, %v7031
        %v7530 = vsel %vm7514, %v7465, %v7033
        %v7531 = vsel %vm7514, %v7466, %v7035
        %v7532 = vsel %vm7514, %v7467, %v7037
        %v7533 = vsel %vm7514, %v7468, %v7039
        %v7534 = vsel %vm7514, %v7469, %v7041
        %v7535 = vsel %vm7514, %v7470, %v7043
        %v7536 = vsel %vm7514, %v7471, %v7045
        %v7537 = vsel %vm7514, %v7472, %v7047
        %v7538 = vsel %vm7514, %v7473, %v7049
        %v7539 = vsel %vm7514, %v7474, %v7051
        %v7540 = vsel %vm7514, %v7475, %v7053
        %v7541 = vsel %vm7514, %v7476, %v7055
        %v7542 = vsel %vm7514, %v7477, %v7057
        %v7543 = vsel %vm7514, %v7478, %v7059
        %v7544 = vsel %vm7514, %v7479, %v7061
        %v7545 = vsel %vm7514, %v7480, %v7063
        %v7546 = vsel %vm7514, %v7481, %v7065
        %v7547 = vsel %vm7514, %v7482, %v7067
        %v7548 = vsel %vm7514, %v7483, %v7069
        %v7549 = vsel %vm7514, %v7484, %v7071
        %v7550 = vsel %vm7514, %v7485, %v7073
        %v7551 = vsel %vm7514, %v7486, %v7075
        %v7552 = vsel %vm7514, %v7487, %v7077
        %v7553 = vsel %vm7514, %v7488, %v7079
        %v7554 = vsel %vm7514, %v7489, %v7081
        %v7555 = vsel %vm7514, %v7490, %v7083
        %v7556 = vsel %vm7514, %v7491, %v7085
        %v7557 = vsel %vm7514, %v7492, %v7087
        %v7558 = vsel %vm7514, %v7493, %v7089
        %v7559 = vsel %vm7514, %v7494, %v7091
        %v7560 = vsel %vm7514, %v7495, %v7093
        %v7561 = vsel %vm7514, %v7496, %v7095
        %v7562 = vsel %vm7514, %v7497, %v7097
        %v7563 = vsel %vm7514, %v7498, %v7099
        %v7564 = vsel %vm7514, %v7499, %v7101
        %v7565 = vsel %vm7514, %v7500, %v7103
        %v7566 = vsel %vm7514, %v7501, %v7105
        %v7567 = vsel %vm7514, %v7502, %v7107
        %v7568 = vsel %vm7514, %v7503, %v7109
        %v7569 = vsel %vm7514, %v7504, %v7111
        %v7570 = vsel %vm7514, %v7505, %v7113
        %v7571 = vsel %vm7514, %v7506, %v7115
        %v7572 = vsel %vm7514, %v7507, %v7117
        %v7573 = vsel %vm7514, %v7508, %v7119
        %v7574 = vsel %vm7514, %v7509, %v7121
        %v7575 = vsel %vm7514, %v7510, %v7123
        %v7576 = vsel %vm7514, %v7511, %v7125
        %v7577 = vsel %vm7514, %v7512, %v7127
        %v7578 = vsel %vm7514, %v7513, %v7129
        %vm7579 = vcmask 97280
        %v7580 = vsel %vm7579, %v7515, %v7259
        %v7581 = vsel %vm7579, %v7516, %v7261
        %v7582 = vsel %vm7579, %v7517, %v7263
        %v7583 = vsel %vm7579, %v7518, %v7265
        %v7584 = vsel %vm7579, %v7519, %v7267
        %v7585 = vsel %vm7579, %v7520, %v7269
        %v7586 = vsel %vm7579, %v7521, %v7271
        %v7587 = vsel %vm7579, %v7522, %v7273
        %v7588 = vsel %vm7579, %v7523, %v7275
        %v7589 = vsel %vm7579, %v7524, %v7277
        %v7590 = vsel %vm7579, %v7525, %v7279
        %v7591 = vsel %vm7579, %v7526, %v7281
        %v7592 = vsel %vm7579, %v7527, %v7283
        %v7593 = vsel %vm7579, %v7528, %v7285
        %v7594 = vsel %vm7579, %v7529, %v7287
        %v7595 = vsel %vm7579, %v7530, %v7289
        %v7596 = vsel %vm7579, %v7531, %v7291
        %v7597 = vsel %vm7579, %v7532, %v7293
        %v7598 = vsel %vm7579, %v7533, %v7295
        %v7599 = vsel %vm7579, %v7534, %v7297
        %v7600 = vsel %vm7579, %v7535, %v7299
        %v7601 = vsel %vm7579, %v7536, %v7301
        %v7602 = vsel %vm7579, %v7537, %v7303
        %v7603 = vsel %vm7579, %v7538, %v7305
        %v7604 = vsel %vm7579, %v7539, %v7307
        %v7605 = vsel %vm7579, %v7540, %v7309
        %v7606 = vsel %vm7579, %v7541, %v7311
        %v7607 = vsel %vm7579, %v7542, %v7313
        %v7608 = vsel %vm7579, %v7543, %v7315
        %v7609 = vsel %vm7579, %v7544, %v7317
        %v7610 = vsel %vm7579, %v7545, %v7319
        %v7611 = vsel %vm7579, %v7546, %v7321
        %v7612 = vsel %vm7579, %v7547, %v7323
        %v7613 = vsel %vm7579, %v7548, %v7325
        %v7614 = vsel %vm7579, %v7549, %v7327
        %v7615 = vsel %vm7579, %v7550, %v7329
        %v7616 = vsel %vm7579, %v7551, %v7331
        %v7617 = vsel %vm7579, %v7552, %v7333
        %v7618 = vsel %vm7579, %v7553, %v7335
        %v7619 = vsel %vm7579, %v7554, %v7337
        %v7620 = vsel %vm7579, %v7555, %v7339
        %v7621 = vsel %vm7579, %v7556, %v7341
        %v7622 = vsel %vm7579, %v7557, %v7343
        %v7623 = vsel %vm7579, %v7558, %v7345
        %v7624 = vsel %vm7579, %v7559, %v7347
        %v7625 = vsel %vm7579, %v7560, %v7349
        %v7626 = vsel %vm7579, %v7561, %v7351
        %v7627 = vsel %vm7579, %v7562, %v7353
        %v7628 = vsel %vm7579, %v7563, %v7355
        %v7629 = vsel %vm7579, %v7564, %v7357
        %v7630 = vsel %vm7579, %v7565, %v7359
        %v7631 = vsel %vm7579, %v7566, %v7361
        %v7632 = vsel %vm7579, %v7567, %v7363
        %v7633 = vsel %vm7579, %v7568, %v7365
        %v7634 = vsel %vm7579, %v7569, %v7367
        %v7635 = vsel %vm7579, %v7570, %v7369
        %v7636 = vsel %vm7579, %v7571, %v7371
        %v7637 = vsel %vm7579, %v7572, %v7373
        %v7638 = vsel %vm7579, %v7573, %v7375
        %v7639 = vsel %vm7579, %v7574, %v7377
        %v7640 = vsel %vm7579, %v7575, %v7379
        %v7641 = vsel %vm7579, %v7576, %v7381
        %v7642 = vsel %vm7579, %v7577, %v7383
        %v7643 = vsel %vm7579, %v7578, %v7385
        %v7644 = vsel %vm2351, %v7580, 0.0
        %v7645 = vsel %vm2351, %v7581, 0.0
        %v7646 = vsel %vm2351, %v7582, 0.0
        %v7647 = vsel %vm2351, %v7583, 0.0
        %v7648 = vsel %vm2351, %v7584, 0.0
        %v7649 = vsel %vm2351, %v7585, 0.0
        %v7650 = vsel %vm2351, %v7586, 0.0
        %v7651 = vsel %vm2351, %v7587, 0.0
        %v7652 = vsel %vm2351, %v7588, 0.0
        %v7653 = vsel %vm2351, %v7589, 0.0
        %v7654 = vsel %vm2351, %v7590, 0.0
        %v7655 = vsel %vm2351, %v7591, 0.0
        %v7656 = vsel %vm2351, %v7592, 0.0
        %v7657 = vsel %vm2351, %v7593, 0.0
        %v7658 = vsel %vm2351, %v7594, 0.0
        %v7659 = vsel %vm2351, %v7595, 0.0
        %v7660 = vsel %vm2351, %v7596, 0.0
        %v7661 = vsel %vm2351, %v7597, 0.0
        %v7662 = vsel %vm2351, %v7598, 0.0
        %v7663 = vsel %vm2351, %v7599, 0.0
        %v7664 = vsel %vm2351, %v7600, 0.0
        %v7665 = vsel %vm2351, %v7601, 0.0
        %v7666 = vsel %vm2351, %v7602, 0.0
        %v7667 = vsel %vm2351, %v7603, 0.0
        %v7668 = vsel %vm2351, %v7604, 0.0
        %v7669 = vsel %vm2351, %v7605, 0.0
        %v7670 = vsel %vm2351, %v7606, 0.0
        %v7671 = vsel %vm2351, %v7607, 0.0
        %v7672 = vsel %vm2351, %v7608, 0.0
        %v7673 = vsel %vm2351, %v7609, 0.0
        %v7674 = vsel %vm2351, %v7610, 0.0
        %v7675 = vsel %vm2351, %v7611, 0.0
        %v7676 = vsel %vm2351, %v7612, 0.0
        %v7677 = vsel %vm2351, %v7613, 0.0
        %v7678 = vsel %vm2351, %v7614, 0.0
        %v7679 = vsel %vm2351, %v7615, 0.0
        %v7680 = vsel %vm2351, %v7616, 0.0
        %v7681 = vsel %vm2351, %v7617, 0.0
        %v7682 = vsel %vm2351, %v7618, 0.0
        %v7683 = vsel %vm2351, %v7619, 0.0
        %v7684 = vsel %vm2351, %v7620, 0.0
        %v7685 = vsel %vm2351, %v7621, 0.0
        %v7686 = vsel %vm2351, %v7622, 0.0
        %v7687 = vsel %vm2351, %v7623, 0.0
        %v7688 = vsel %vm2351, %v7624, 0.0
        %v7689 = vsel %vm2351, %v7625, 0.0
        %v7690 = vsel %vm2351, %v7626, 0.0
        %v7691 = vsel %vm2351, %v7627, 0.0
        %v7692 = vsel %vm2351, %v7628, 0.0
        %v7693 = vsel %vm2351, %v7629, 0.0
        %v7694 = vsel %vm2351, %v7630, 0.0
        %v7695 = vsel %vm2351, %v7631, 0.0
        %v7696 = vsel %vm2351, %v7632, 0.0
        %v7697 = vsel %vm2351, %v7633, 0.0
        %v7698 = vsel %vm2351, %v7634, 0.0
        %v7699 = vsel %vm2351, %v7635, 0.0
        %v7700 = vsel %vm2351, %v7636, 0.0
        %v7701 = vsel %vm2351, %v7637, 0.0
        %v7702 = vsel %vm2351, %v7638, 0.0
        %v7703 = vsel %vm2351, %v7639, 0.0
        %v7704 = vsel %vm2351, %v7640, 0.0
        %v7705 = vsel %vm2351, %v7641, 0.0
        %v7706 = vsel %vm2351, %v7642, 0.0
        %v7707 = vsel %vm2351, %v7643, 0.0
        %7708 = vst [vmem:[%s230] sm:$0xff] %v7644
        %7709 = vst [vmem:[%s230 + $0x8] sm:$0xff] %v7645
        %7710 = vst [vmem:[%s230 + $0x10] sm:$0xff] %v7646
        %7711 = vst [vmem:[%s230 + $0x18] sm:$0xff] %v7647
        %7712 = vst [vmem:[%s230 + $0x20] sm:$0xff] %v7648
        %7713 = vst [vmem:[%s230 + $0x28] sm:$0xff] %v7649
        %7714 = vst [vmem:[%s230 + $0x30] sm:$0xff] %v7650
        %7715 = vst [vmem:[%s230 + $0x38] sm:$0xff] %v7651
        %7716 = vst [vmem:[%s230 + $0x40] sm:$0xff] %v7652
        %7717 = vst [vmem:[%s230 + $0x48] sm:$0xff] %v7653
        %7718 = vst [vmem:[%s230 + $0x50] sm:$0xff] %v7654
        %7719 = vst [vmem:[%s230 + $0x58] sm:$0xff] %v7655
        %7720 = vst [vmem:[%s230 + $0x60] sm:$0xff] %v7656
        %7721 = vst [vmem:[%s230 + $0x68] sm:$0xff] %v7657
        %7722 = vst [vmem:[%s230 + $0x70] sm:$0xff] %v7658
        %7723 = vst [vmem:[%s230 + $0x78] sm:$0xff] %v7659
        %7724 = vst [vmem:[%s230 + $0x80] sm:$0xff] %v7660
        %7725 = vst [vmem:[%s230 + $0x88] sm:$0xff] %v7661
        %7726 = vst [vmem:[%s230 + $0x90] sm:$0xff] %v7662
        %7727 = vst [vmem:[%s230 + $0x98] sm:$0xff] %v7663
        %7728 = vst [vmem:[%s230 + $0xa0] sm:$0xff] %v7664
        %7729 = vst [vmem:[%s230 + $0xa8] sm:$0xff] %v7665
        %7730 = vst [vmem:[%s230 + $0xb0] sm:$0xff] %v7666
        %7731 = vst [vmem:[%s230 + $0xb8] sm:$0xff] %v7667
        %7732 = vst [vmem:[%s230 + $0xc0] sm:$0xff] %v7668
        %7733 = vst [vmem:[%s230 + $0xc8] sm:$0xff] %v7669
        %7734 = vst [vmem:[%s230 + $0xd0] sm:$0xff] %v7670
        %7735 = vst [vmem:[%s230 + $0xd8] sm:$0xff] %v7671
        %7736 = vst [vmem:[%s230 + $0xe0] sm:$0xff] %v7672
        %7737 = vst [vmem:[%s230 + $0xe8] sm:$0xff] %v7673
        %7738 = vst [vmem:[%s230 + $0xf0] sm:$0xff] %v7674
        %7739 = vst [vmem:[%s230 + $0xf8] sm:$0xff] %v7675
        %7740 = vst [vmem:[%s230 + $0x100] sm:$0xff] %v7676
        %7741 = vst [vmem:[%s230 + $0x108] sm:$0xff] %v7677
        %7742 = vst [vmem:[%s230 + $0x110] sm:$0xff] %v7678
        %7743 = vst [vmem:[%s230 + $0x118] sm:$0xff] %v7679
        %7744 = vst [vmem:[%s230 + $0x120] sm:$0xff] %v7680
        %7745 = vst [vmem:[%s230 + $0x128] sm:$0xff] %v7681
        %7746 = vst [vmem:[%s230 + $0x130] sm:$0xff] %v7682
        %7747 = vst [vmem:[%s230 + $0x138] sm:$0xff] %v7683
        %7748 = vst [vmem:[%s230 + $0x140] sm:$0xff] %v7684
        %7749 = vst [vmem:[%s230 + $0x148] sm:$0xff] %v7685
        %7750 = vst [vmem:[%s230 + $0x150] sm:$0xff] %v7686
        %7751 = vst [vmem:[%s230 + $0x158] sm:$0xff] %v7687
        %7752 = vst [vmem:[%s230 + $0x160] sm:$0xff] %v7688
        %7753 = vst [vmem:[%s230 + $0x168] sm:$0xff] %v7689
        %7754 = vst [vmem:[%s230 + $0x170] sm:$0xff] %v7690
        %7755 = vst [vmem:[%s230 + $0x178] sm:$0xff] %v7691
        %7756 = vst [vmem:[%s230 + $0x180] sm:$0xff] %v7692
        %7757 = vst [vmem:[%s230 + $0x188] sm:$0xff] %v7693
        %7758 = vst [vmem:[%s230 + $0x190] sm:$0xff] %v7694
        %7759 = vst [vmem:[%s230 + $0x198] sm:$0xff] %v7695
        %7760 = vst [vmem:[%s230 + $0x1a0] sm:$0xff] %v7696
        %7761 = vst [vmem:[%s230 + $0x1a8] sm:$0xff] %v7697
        %7762 = vst [vmem:[%s230 + $0x1b0] sm:$0xff] %v7698
        %7763 = vst [vmem:[%s230 + $0x1b8] sm:$0xff] %v7699
        %7764 = vst [vmem:[%s230 + $0x1c0] sm:$0xff] %v7700
        %7765 = vst [vmem:[%s230 + $0x1c8] sm:$0xff] %v7701
        %7766 = vst [vmem:[%s230 + $0x1d0] sm:$0xff] %v7702
        %7767 = vst [vmem:[%s230 + $0x1d8] sm:$0xff] %v7703
        %7768 = vst [vmem:[%s230 + $0x1e0] sm:$0xff] %v7704
        %7769 = vst [vmem:[%s230 + $0x1e8] sm:$0xff] %v7705
        %7770 = vst [vmem:[%s230 + $0x1f0] sm:$0xff] %v7706
        %7771 = vst [vmem:[%s230 + $0x1f8] sm:$0xff] %v7707
        %p7772 = scmp.eq.s32.totalorder %s20, 1
        // Predicated region
        $region41: #{tpu_custom_call.1} parent=35 // pred_check
          %p7773 = pneg %p7772
        $region42: #{tpu_custom_call.1} parent=35 // pred_check_branch
          %7775 = sbr.rel (%p7773) target = $region44
        $region43: #{tpu_custom_call.1} parent=35 // pred_region
          %v7776 = vld [vmem:[#allocation2] sm:$0xf]
          %v7777 = vsel %vm6409, %v7776, -inf
          %7778 = vmax.xlane.f32.xlu0 %v7777
          %v7779 = vpop.xlane.xlu0 %7778
          %v7780 = vsub.f32 %v7776, %v7779
          %v7781 = vmul.f32 %v7780, 1.442695
          %v7782 = vpow.pop %v7781
          %v7783 = vsel %vm6409, %v7782, 0.0
          %7784 = vadd.xlane.f32.xlu0 %v7783
          %v7785 = vpop.xlane.xlu0 %7784
          %v7786 = vrcp.pop %v7785
          %v7787 = vmul.f32 %v7782, %v7786
          %v7788 = vld [vmem:[#allocation3] sm:$0xf]
          %v7789 = vsel %vm6409, %v7788, -inf
          %7790 = vmax.xlane.f32.xlu0 %v7789
          %v7791 = vpop.xlane.xlu0 %7790
          %v7792 = vsub.f32 %v7788, %v7791
          %v7793 = vmul.f32 %v7792, 1.442695
          %v7794 = vpow.pop %v7793
          %v7795 = vsel %vm6409, %v7794, 0.0
          %7796 = vadd.xlane.f32.xlu0 %v7795
          %v7797 = vpop.xlane.xlu0 %7796
          %v7798 = vrcp.pop %v7797
          %v7799 = vmul.f32 %v7794, %v7798
          %v7801 = vrot.slane %v7799, 4
          %vm7803 = vcmask 1043456
          %v7804 = vsel %vm7803, %v7787, %v7801
          %7805 = vst.msk [vmem:[%s5] sm:$0xff] %vm2967, %v7804
        $region44: #{tpu_custom_call.1} parent=35 // pred_fallthru
          _
        %s7806 = sand.u32 %s122, 1
        %s7807 = scalar_lea.sflag [#allocation5], %s7806
        %s7808 = sand.u32 %s122, 1
        %s7809 = smul.addr %s7808, 512
        %s7810 = scalar_lea.vmem [#allocation4], %s7809
        // Predicated region
        $region45: #{tpu_custom_call.1} parent=35 // pred_check
          %p7811 = pneg %p132
        $region46: #{tpu_custom_call.1} parent=35 // pred_check_branch
          %7813 = sbr.rel (%p7811) target = $region48
        $region47: #{tpu_custom_call.1} parent=35 // pred_region
          %s7814 = smul.u32 64, %s20
          %s7816 = ssub.s32 8192, 8192
          %7817 = vsyncadd %s7807, %s7816
          %s7818 = smul.addr %s7814, 128
          %s7819 = scalar_lea.hbm %s4, %s7818
          %s7820 = sshll.u32 %s7810, 4
          %s7821 = int_to_ptr.vmem [resolvable:$true] %s7820
          %7826 = dma.vmem_to_hbm [thread:$0]  %s7821, 8192, %s7819, %s7807, 128, 128, 8
        $region48: #{tpu_custom_call.1} parent=35 // pred_fallthru
          _
        // Predicated region
        $region49: #{tpu_custom_call.1} parent=35 // pred_check
          %p7827 = pneg %p153
        $region50: #{tpu_custom_call.1} parent=35 // pred_check_branch
          %7829 = sbr.rel (%p7827) target = $region52
        $region51: #{tpu_custom_call.1} parent=35 // pred_region
          _
        $region52: #{tpu_custom_call.1} parent=35 // pred_fallthru
          _
        // Predicated region
        $region53: #{tpu_custom_call.1} parent=35 // pred_check
          %p7830 = pneg %p153
        $region54: #{tpu_custom_call.1} parent=35 // pred_check_branch
          %7832 = sbr.rel (%p7830) target = $region56
        $region55: #{tpu_custom_call.1} parent=35 // pred_region
          _
        $region56: #{tpu_custom_call.1} parent=35 // pred_fallthru
          _
      $region36: #{tpu_custom_call.1} parent=5 // pred_fallthru
        _
      %p7833 = scmp.le.s32.totalorder 2, %s15
      // Predicated region
      $region57: #{tpu_custom_call.1} parent=5 // pred_check
        %p7834 = pneg %p7833
      $region58: #{tpu_custom_call.1} parent=5 // pred_check_branch
        %7836 = sbr.rel (%p7834) target = $region60
      $region59: #{tpu_custom_call.1} parent=5 // pred_region
        %s7837 = ssub.s32 %s15, 2
        // Predicated region
        $region61: #{tpu_custom_call.1} parent=59 // pred_check
          %p7838 = pneg %p138
        $region62: #{tpu_custom_call.1} parent=59 // pred_check_branch
          %7840 = sbr.rel (%p7838) target = $region64
        $region63: #{tpu_custom_call.1} parent=59 // pred_region
          %s7841 = sand.u32 %s123, 1
          %s7842 = scalar_lea.sflag [#allocation5], %s7841
          %s7843 = sand.u32 %s123, 1
          %s7844 = smul.addr %s7843, 512
          %s7845 = scalar_lea.vmem [#allocation4], %s7844
          %7846 = dma.done %s7842, 8192
        $region64: #{tpu_custom_call.1} parent=59 // pred_fallthru
          _
      $region60: #{tpu_custom_call.1} parent=5 // pred_fallthru
        _
    $region6: #{tpu_custom_call.1} parent=1 // loop_footer
      %s19 = sadd.s32 1, %s15
    $region7: #{tpu_custom_call.1} parent=1 // loop_footer_branch
      %14 = sbr.rel target = $region3
    $region8: #{tpu_custom_call.1} parent=1 // loop_exit
      _
    %7847 = vsyncpa [#allocation5], 1
    %s7848 = scalar_lea.sflag [#allocation5], 1
    %7849 = vsyncpa %s7848, 1

</llo_original>
